<compile_context>
chip_gen: v7x
topology: tpu7x:2x2x1
jax: 0.10.0
libtpu: 0.0.40
codegen_flags: <defaults>
</compile_context>

<pallas_src>
import math
import functools

import jax
import jax.numpy as jnp
from jax.experimental import pallas as pl
from jax.experimental.pallas import tpu as pltpu


# ----------------------------------------------------------------------------
# Positional encoding (matches PositionalEncoding buffer), returns (C, V).
# ----------------------------------------------------------------------------
def positional_encoding(channel, joint_num):
    pos = jnp.arange(joint_num, dtype=jnp.float32)[:, None]                  # (V, 1)
    div = jnp.exp(jnp.arange(0, channel, 2, dtype=jnp.float32)
                  * -(math.log(10000.0) / channel))                          # (C//2,)
    pe = jnp.zeros((joint_num, channel), dtype=jnp.float32)
    pe = pe.at[:, 0::2].set(jnp.sin(pos * div))
    pe = pe.at[:, 1::2].set(jnp.cos(pos * div))
    return pe.T                                                              # (C, V)


# ----------------------------------------------------------------------------
# One-time parameter preparation (folds / transposes / slab packing).
# Done at parameter-construction time, NOT in the per-call wrapper.
# ----------------------------------------------------------------------------
def prepare_params(raw, *, num_head, inter_channels, num_node):
    H, Ci, V = num_head, inter_channels, num_node
    C = raw["w_in"].shape[1]
    Cout = raw["w_out"].shape[0]

    # eval-mode BatchNorm1d folded to a per-channel affine.
    bn_scale = raw["gamma"] / jnp.sqrt(raw["var"] + raw["eps"])              # (Cout,)
    bn_shift = raw["beta"] - raw["mean"] * bn_scale

    # fold 1/inter_channels into the q-half of the in_nets conv (+ its bias).
    scale = jnp.concatenate([jnp.full((H * Ci,), 1.0 / Ci, jnp.float32),
                             jnp.ones((H * Ci,), jnp.float32)])
    w_in_t = (raw["w_in"] * scale[:, None]).T                                # (C, 2*H*Ci)
    b_in_s = raw["b_in"] * scale                                             # (2*H*Ci,)
    # fold the positional encoding into a per-vertex bias: (x+pe)@W == x@W + pe@W.
    b_in_pe = raw["pe"].T @ w_in_t + b_in_s[None, :]                         # (V, 2*H*Ci)

    # fold BN scale into the out_nets conv; keep transposed for right-multiply.
    w_out_t = (raw["w_out"] * bn_scale[:, None]).T                           # (H*C, Cout)
    # summed-over-heads column blocks with the global 1/V factor folded in
    # (used by the hoisted global-attention term).
    w_outsum_t = w_out_t.reshape(H, C, Cout).sum(axis=0) / V                 # (C, Cout)
    b_out_r = (raw["b_out"] * bn_scale + bn_shift)[None, :]                  # (1, Cout)

    # Pack constants into two slabs -> two prologue DMAs instead of five.
    slab_in = jnp.concatenate([w_in_t, b_in_pe], axis=0)                     # (C+V, 2*H*Ci)
    slab_out = jnp.concatenate([w_out_t, w_outsum_t, b_out_r], axis=0)       # (H*C+C+1, Cout)
    return dict(slab_in=slab_in, slab_out=slab_out)


# ----------------------------------------------------------------------------
# Pallas kernel: one batch tile (b_tile elements) per grid step.
# ----------------------------------------------------------------------------
def _gt_layer_kernel(num_head, inter_channels, b_tile, num_node, in_channels,
                     out_channels, x_ref, slab_in_ref, slab_out_ref, o_ref):
    H, Ci, B, V = num_head, inter_channels, b_tile, num_node
    C, Cout = in_channels, out_channels
    BV = B * V

    x2 = x_ref[...]                                            # (B*V, C) row-major
    x3 = x2.reshape(B, V, C)                                   # leading-dim split: free

    # constant slabs: static, sublane-aligned ref slices (no full materialize).
    w_in = slab_in_ref[0:C, :]                                 # (C, 2*H*Ci), q-half 1/Ci-scaled
    b_pe = slab_in_ref[C:C + V, :]                             # (V, 2*H*Ci), PE+bias folded

    # in_nets 1x1 conv; PE is already inside the per-vertex bias.
    qk = jnp.dot(x2, w_in, preferred_element_type=jnp.float32)               # (BV, 2*H*Ci)
    qk3 = qk.reshape(B, V, 2 * H * Ci) + b_pe[None, :, :]

    acc = jnp.zeros((BV, Cout), jnp.float32)
    for h in range(H):                                         # unrolled (H is small)
        q_h = qk3[:, :, h * Ci:(h + 1) * Ci]                   # (B, V, Ci)
        k_h = qk3[:, :, (H + h) * Ci:(H + h + 1) * Ci]         # (B, V, Ci)
        # s_t[b, v, u] == scores[b, u, v]; torch Softmax(dim=-2) over u is the
        # last axis here -> flash-style einsums, no explicit transposes.
        s_t = jnp.einsum('bvc,buc->bvu', k_h, q_h,
                         preferred_element_type=jnp.float32)
        m = jnp.max(s_t, axis=-1, keepdims=True)
        e = jnp.exp(s_t - m)
        attn_t = e * pl.reciprocal(jnp.sum(e, axis=-1, keepdims=True), approx=False)
        # z_h[b, v, c] = sum_u attn[b, u, v] * x[b, c, u]  (ORIGINAL x, no PE)
        z_h = jnp.einsum('bvu,buc->bvc', attn_t, x3,
                         preferred_element_type=jnp.float32)   # (B, V, C)
        # accumulate straight into the output projection via a per-head
        # static ref slice of the BN-folded W_out (no concatenate, no full load).
        acc = acc + jnp.dot(z_h.reshape(BV, C),
                            slab_out_ref[h * C:(h + 1) * C, :],
                            preferred_element_type=jnp.float32)

    # hoisted global-attention (ones/V) term, identical for every head:
    # row-sum of x contracted once with the summed W_out blocks (1/V prefolded),
    # combined with the BN-folded output bias into one per-batch add.
    xsum = jnp.sum(x3, axis=1)                                 # (B, C)
    g = jnp.dot(xsum, slab_out_ref[H * C:H * C + C, :],
                preferred_element_type=jnp.float32)            # (B, Cout)
    gb = g + slab_out_ref[H * C + C:H * C + C + 1, :]          # + b_out, (B, Cout)

    out3 = acc.reshape(B, V, Cout) + gb[:, None, :]            # (B, V, Cout)
    # residual (downs1 == identity: in_ch == out_ch, stride == 1) + ReLU.
    y = jnp.maximum(x3 + out3, 0.0)
    o_ref[...] = y.reshape(BV, Cout)                           # leading-dim merge: free


# ----------------------------------------------------------------------------
# Wrapper (no transposes; only free leading-dim reshapes).
# ----------------------------------------------------------------------------
def graph_transformer_layer(x, params, *, num_head, inter_channels, b_tile):
    N, V, C = x.shape
    Cout = params["slab_out"].shape[1]
    assert C == Cout, "identity residual path requires in_channels == out_channels"
    assert N % b_tile == 0
    BV = b_tile * V

    x2 = x.reshape(N * V, C).astype(jnp.float32)               # free reshape

    kernel = functools.partial(_gt_layer_kernel, num_head, inter_channels,
                               b_tile, V, C, Cout)

    out2 = pl.pallas_call(
        kernel,
        out_shape=jax.ShapeDtypeStruct((N * V, Cout), jnp.float32),
        grid_spec=pltpu.PrefetchScalarGridSpec(
            num_scalar_prefetch=0,
            grid=(N // b_tile,),
            in_specs=[
                pl.BlockSpec((BV, C), lambda i: (i, 0)),                   # x slab
                pl.BlockSpec(params["slab_in"].shape, lambda i: (0, 0)),   # W_in^T | PE+bias
                pl.BlockSpec(params["slab_out"].shape, lambda i: (0, 0)),  # W_out^T | sum/V | b_out
            ],
            out_specs=pl.BlockSpec((BV, Cout), lambda i: (i, 0)),          # (B*V, Cout) slab
        ),
        compiler_params=pltpu.CompilerParams(
            dimension_semantics=("parallel",)),
    )(x2, params["slab_in"], params["slab_out"])

    return out2.reshape(N, V, Cout)                            # free reshape


# ----------------------------------------------------------------------------
# Pure-JAX, torch-faithful reference (from RAW parameters) for verification.
# ----------------------------------------------------------------------------
def reference(x, raw, *, num_head, inter_channels):
    N, V, C = x.shape
    H, Ci = num_head, inter_channels
    xc = jnp.transpose(x, (0, 2, 1))                                          # (N, C, V)
    y = xc + raw["pe"][None]
    qk = jnp.einsum('oc,ncv->nov', raw["w_in"], y) + raw["b_in"][None, :, None]
    qk = qk.reshape(N, 2 * H, Ci, V)
    q, k = qk[:, :H], qk[:, H:]
    scores = jnp.einsum('nhcu,nhcv->nhuv', q, k) / Ci
    attn = jax.nn.softmax(scores, axis=-2) + 1.0 / V             # atts == 0, global == 1/V
    y2 = jnp.einsum('ncu,nhuv->nhcv', xc, attn).reshape(N, H * C, V)
    out = jnp.einsum('oc,ncv->nov', raw["w_out"], y2) + raw["b_out"][None, :, None]
    bn_scale = raw["gamma"] / jnp.sqrt(raw["var"] + raw["eps"])
    bn_shift = raw["beta"] - raw["mean"] * bn_scale
    out = out * bn_scale[None, :, None] + bn_shift[None, :, None]
    out = jnp.maximum(xc + out, 0.0)
    return jnp.transpose(out, (0, 2, 1))


# ----------------------------------------------------------------------------
# Main
# ----------------------------------------------------------------------------
if __name__ == "__main__":
    # module config: in_channels == out_channels, stride == 1 -> downs1 identity.
    N, V = 16, 16                    # batch, num_node
    C_in = C_out = 32
    inter_channels = 16
    num_head = 3

    # v5e/v6e have one TensorCore -> a single grid step (B_TILE = N) removes the
    # per-step pipeline overhead; v7x has 2 TCs -> keep 2 parallel steps.
    dev_kind = jax.devices()[0].device_kind.lower()
    B_TILE = N // 2 if ("v7" in dev_kind or "7x" in dev_kind) else N

    key = jax.random.PRNGKey(0)
    ks = jax.random.split(key, 9)

    x = jax.random.normal(ks[0], (N, V, C_in), dtype=jnp.float32)

    raw = dict(
        pe=positional_encoding(C_in, V),                                           # (C, V)
        w_in=jax.random.normal(ks[1], (2 * num_head * inter_channels, C_in),
                               jnp.float32) * 0.05,
        b_in=jax.random.normal(ks[2], (2 * num_head * inter_channels,),
                               jnp.float32) * 0.05,
        w_out=jax.random.normal(ks[3], (C_out, num_head * C_in), jnp.float32) * 0.05,
        b_out=jax.random.normal(ks[4], (C_out,), jnp.float32) * 0.05,
        # eval-mode BatchNorm1d buffers (non-trivial, to exercise the folding).
        # TODO(synk): training-mode BatchNorm (batch statistics) not reproduced.
        gamma=1.0 + 0.1 * jax.random.normal(ks[5], (C_out,), jnp.float32),
        beta=0.1 * jax.random.normal(ks[6], (C_out,), jnp.float32),
        mean=0.1 * jax.random.normal(ks[7], (C_out,), jnp.float32),
        var=1.0 + 0.1 * jax.random.uniform(ks[8], (C_out,), jnp.float32),
        eps=1e-5,
    )

    params = prepare_params(raw, num_head=num_head,
                            inter_channels=inter_channels, num_node=V)

    out = graph_transformer_layer(x, params, num_head=num_head,
                                  inter_channels=inter_channels, b_tile=B_TILE)
    out = jax.block_until_ready(out)

    ref = reference(x, raw, num_head=num_head, inter_channels=inter_channels)
    assert out.shape == (N, V, C_out), out.shape
    max_err = float(jnp.max(jnp.abs(out - ref)))
    assert jnp.allclose(out, ref, atol=1e-4, rtol=1e-4), max_err

    print("KERNEL_OK")
</pallas_src>

<mosaic_0001>
module attributes {stable_mosaic.version = 11 : i64} {
  func.func @_gt_layer_kernel(%arg0: i32, %arg1: memref<256x32xf32, #tpu.memory_space<vmem>>, %arg2: memref<48x96xf32, #tpu.memory_space<vmem>>, %arg3: memref<129x32xf32, #tpu.memory_space<vmem>>, %arg4: memref<256x32xf32, #tpu.memory_space<vmem>>) attributes {dimension_semantics = [#tpu.dimension_semantics<parallel>], iteration_bounds = array<i64: 1>, scalar_prefetch = 0 : i64, scratch_operands = 0 : i64, tpu.core_type = #tpu.core_type<tc>, window_params = [{transform_indices = @transform_0, window_bounds = array<i64: 256, 32>}, {pipeline_mode = #tpu.pipeline_mode<synchronous>, transform_indices = @transform_1, window_bounds = array<i64: 48, 96>}, {pipeline_mode = #tpu.pipeline_mode<synchronous>, transform_indices = @transform_2, window_bounds = array<i64: 129, 32>}, {transform_indices = @transform_3, window_bounds = array<i64: 256, 32>}]} {
    %c0 = arith.constant 0 : index
    %c0_0 = arith.constant 0 : index
    %0 = vector.load %arg1[%c0, %c0_0] : memref<256x32xf32, #tpu.memory_space<vmem>>, vector<256x32xf32>
    %1 = vector.shape_cast %0 : vector<256x32xf32> to vector<16x16x32xf32>
    %c0_1 = arith.constant 0 : index
    %c0_2 = arith.constant 0 : index
    %2 = vector.load %arg2[%c0_1, %c0_2] : memref<48x96xf32, #tpu.memory_space<vmem>>, vector<32x96xf32>
    %c32 = arith.constant 32 : index
    %c0_3 = arith.constant 0 : index
    %3 = vector.load %arg2[%c32, %c0_3] : memref<48x96xf32, #tpu.memory_space<vmem>>, vector<16x96xf32>
    %cst = arith.constant dense<0.000000e+00> : vector<256x96xf32>
    %4 = tpu.matmul %0, %2, %cst {dimension_numbers = #tpu.dot_dimension_numbers<[1], [0], [0], [1], [0, 0, 1, 1], [], []>} : vector<256x32xf32>, vector<32x96xf32>, vector<256x96xf32> -> vector<256x96xf32>
    %5 = vector.shape_cast %4 : vector<256x96xf32> to vector<16x16x96xf32>
    %6 = vector.shape_cast %3 : vector<16x96xf32> to vector<1x16x96xf32>
    %7 = vector.broadcast %6 : vector<1x16x96xf32> to vector<16x16x96xf32>
    %8 = arith.addf %5, %7 : vector<16x16x96xf32>
    %cst_4 = arith.constant 0.000000e+00 : f32
    %9 = vector.broadcast %cst_4 : f32 to vector<256x32xf32>
    %10 = vector.extract_strided_slice %8 {offsets = [0, 0, 0], sizes = [16, 16, 16], strides = [1, 1, 1]} : vector<16x16x96xf32> to vector<16x16x16xf32>
    %11 = vector.extract_strided_slice %8 {offsets = [0, 0, 48], sizes = [16, 16, 16], strides = [1, 1, 1]} : vector<16x16x96xf32> to vector<16x16x16xf32>
    "tpu.trace_start"() <{level = 10 : i32, message = "bvc,buc->bvu"}> : () -> ()
    %cst_5 = arith.constant dense<0.000000e+00> : vector<16x16x16xf32>
    %12 = tpu.matmul %11, %10, %cst_5 {dimension_numbers = #tpu.dot_dimension_numbers<[2], [2], [1], [1], [0, 0, 0, 1, 1, 1], [0], [0]>} : vector<16x16x16xf32>, vector<16x16x16xf32>, vector<16x16x16xf32> -> vector<16x16x16xf32>
    "tpu.trace_stop"() : () -> ()
    %cst_6 = arith.constant dense<0xFF800000> : vector<16x16xf32>
    %13 = vector.multi_reduction <maximumf>, %12, %cst_6 [2] : vector<16x16x16xf32> to vector<16x16xf32>
    %14 = vector.shape_cast %13 : vector<16x16xf32> to vector<16x16x1xf32>
    %15 = vector.broadcast %14 : vector<16x16x1xf32> to vector<16x16x16xf32>
    %16 = arith.subf %12, %15 : vector<16x16x16xf32>
    %17 = math.exp %16 : vector<16x16x16xf32>
    %cst_7 = arith.constant dense<0.000000e+00> : vector<16x16xf32>
    %18 = vector.multi_reduction <add>, %17, %cst_7 [2] : vector<16x16x16xf32> to vector<16x16xf32>
    %19 = vector.shape_cast %18 : vector<16x16xf32> to vector<16x16x1xf32>
    %20 = tpu.reciprocal %19 : vector<16x16x1xf32> -> vector<16x16x1xf32>
    %21 = vector.broadcast %20 : vector<16x16x1xf32> to vector<16x16x16xf32>
    %22 = arith.mulf %17, %21 : vector<16x16x16xf32>
    "tpu.trace_start"() <{level = 10 : i32, message = "bvu,buc->bvc"}> : () -> ()
    %cst_8 = arith.constant dense<0.000000e+00> : vector<16x16x32xf32>
    %23 = tpu.matmul %22, %1, %cst_8 {dimension_numbers = #tpu.dot_dimension_numbers<[2], [1], [1], [2], [0, 0, 0, 1, 1, 2], [0], [0]>} : vector<16x16x16xf32>, vector<16x16x32xf32>, vector<16x16x32xf32> -> vector<16x16x32xf32>
    "tpu.trace_stop"() : () -> ()
    %24 = vector.shape_cast %23 : vector<16x16x32xf32> to vector<256x32xf32>
    %c0_9 = arith.constant 0 : index
    %c0_10 = arith.constant 0 : index
    %25 = vector.load %arg3[%c0_9, %c0_10] : memref<129x32xf32, #tpu.memory_space<vmem>>, vector<32x32xf32>
    %cst_11 = arith.constant dense<0.000000e+00> : vector<256x32xf32>
    %26 = tpu.matmul %24, %25, %cst_11 {dimension_numbers = #tpu.dot_dimension_numbers<[1], [0], [0], [1], [0, 0, 1, 1], [], []>} : vector<256x32xf32>, vector<32x32xf32>, vector<256x32xf32> -> vector<256x32xf32>
    %27 = arith.addf %9, %26 : vector<256x32xf32>
    %28 = vector.extract_strided_slice %8 {offsets = [0, 0, 16], sizes = [16, 16, 16], strides = [1, 1, 1]} : vector<16x16x96xf32> to vector<16x16x16xf32>
    %29 = vector.extract_strided_slice %8 {offsets = [0, 0, 64], sizes = [16, 16, 16], strides = [1, 1, 1]} : vector<16x16x96xf32> to vector<16x16x16xf32>
    "tpu.trace_start"() <{level = 10 : i32, message = "bvc,buc->bvu"}> : () -> ()
    %cst_12 = arith.constant dense<0.000000e+00> : vector<16x16x16xf32>
    %30 = tpu.matmul %29, %28, %cst_12 {dimension_numbers = #tpu.dot_dimension_numbers<[2], [2], [1], [1], [0, 0, 0, 1, 1, 1], [0], [0]>} : vector<16x16x16xf32>, vector<16x16x16xf32>, vector<16x16x16xf32> -> vector<16x16x16xf32>
    "tpu.trace_stop"() : () -> ()
    %cst_13 = arith.constant dense<0xFF800000> : vector<16x16xf32>
    %31 = vector.multi_reduction <maximumf>, %30, %cst_13 [2] : vector<16x16x16xf32> to vector<16x16xf32>
    %32 = vector.shape_cast %31 : vector<16x16xf32> to vector<16x16x1xf32>
    %33 = vector.broadcast %32 : vector<16x16x1xf32> to vector<16x16x16xf32>
    %34 = arith.subf %30, %33 : vector<16x16x16xf32>
    %35 = math.exp %34 : vector<16x16x16xf32>
    %cst_14 = arith.constant dense<0.000000e+00> : vector<16x16xf32>
    %36 = vector.multi_reduction <add>, %35, %cst_14 [2] : vector<16x16x16xf32> to vector<16x16xf32>
    %37 = vector.shape_cast %36 : vector<16x16xf32> to vector<16x16x1xf32>
    %38 = tpu.reciprocal %37 : vector<16x16x1xf32> -> vector<16x16x1xf32>
    %39 = vector.broadcast %38 : vector<16x16x1xf32> to vector<16x16x16xf32>
    %40 = arith.mulf %35, %39 : vector<16x16x16xf32>
    "tpu.trace_start"() <{level = 10 : i32, message = "bvu,buc->bvc"}> : () -> ()
    %cst_15 = arith.constant dense<0.000000e+00> : vector<16x16x32xf32>
    %41 = tpu.matmul %40, %1, %cst_15 {dimension_numbers = #tpu.dot_dimension_numbers<[2], [1], [1], [2], [0, 0, 0, 1, 1, 2], [0], [0]>} : vector<16x16x16xf32>, vector<16x16x32xf32>, vector<16x16x32xf32> -> vector<16x16x32xf32>
    "tpu.trace_stop"() : () -> ()
    %42 = vector.shape_cast %41 : vector<16x16x32xf32> to vector<256x32xf32>
    %c32_16 = arith.constant 32 : index
    %c0_17 = arith.constant 0 : index
    %43 = vector.load %arg3[%c32_16, %c0_17] : memref<129x32xf32, #tpu.memory_space<vmem>>, vector<32x32xf32>
    %cst_18 = arith.constant dense<0.000000e+00> : vector<256x32xf32>
    %44 = tpu.matmul %42, %43, %cst_18 {dimension_numbers = #tpu.dot_dimension_numbers<[1], [0], [0], [1], [0, 0, 1, 1], [], []>} : vector<256x32xf32>, vector<32x32xf32>, vector<256x32xf32> -> vector<256x32xf32>
    %45 = arith.addf %27, %44 : vector<256x32xf32>
    %46 = vector.extract_strided_slice %8 {offsets = [0, 0, 32], sizes = [16, 16, 16], strides = [1, 1, 1]} : vector<16x16x96xf32> to vector<16x16x16xf32>
    %47 = vector.extract_strided_slice %8 {offsets = [0, 0, 80], sizes = [16, 16, 16], strides = [1, 1, 1]} : vector<16x16x96xf32> to vector<16x16x16xf32>
    "tpu.trace_start"() <{level = 10 : i32, message = "bvc,buc->bvu"}> : () -> ()
    %cst_19 = arith.constant dense<0.000000e+00> : vector<16x16x16xf32>
    %48 = tpu.matmul %47, %46, %cst_19 {dimension_numbers = #tpu.dot_dimension_numbers<[2], [2], [1], [1], [0, 0, 0, 1, 1, 1], [0], [0]>} : vector<16x16x16xf32>, vector<16x16x16xf32>, vector<16x16x16xf32> -> vector<16x16x16xf32>
    "tpu.trace_stop"() : () -> ()
    %cst_20 = arith.constant dense<0xFF800000> : vector<16x16xf32>
    %49 = vector.multi_reduction <maximumf>, %48, %cst_20 [2] : vector<16x16x16xf32> to vector<16x16xf32>
    %50 = vector.shape_cast %49 : vector<16x16xf32> to vector<16x16x1xf32>
    %51 = vector.broadcast %50 : vector<16x16x1xf32> to vector<16x16x16xf32>
    %52 = arith.subf %48, %51 : vector<16x16x16xf32>
    %53 = math.exp %52 : vector<16x16x16xf32>
    %cst_21 = arith.constant dense<0.000000e+00> : vector<16x16xf32>
    %54 = vector.multi_reduction <add>, %53, %cst_21 [2] : vector<16x16x16xf32> to vector<16x16xf32>
    %55 = vector.shape_cast %54 : vector<16x16xf32> to vector<16x16x1xf32>
    %56 = tpu.reciprocal %55 : vector<16x16x1xf32> -> vector<16x16x1xf32>
    %57 = vector.broadcast %56 : vector<16x16x1xf32> to vector<16x16x16xf32>
    %58 = arith.mulf %53, %57 : vector<16x16x16xf32>
    "tpu.trace_start"() <{level = 10 : i32, message = "bvu,buc->bvc"}> : () -> ()
    %cst_22 = arith.constant dense<0.000000e+00> : vector<16x16x32xf32>
    %59 = tpu.matmul %58, %1, %cst_22 {dimension_numbers = #tpu.dot_dimension_numbers<[2], [1], [1], [2], [0, 0, 0, 1, 1, 2], [0], [0]>} : vector<16x16x16xf32>, vector<16x16x32xf32>, vector<16x16x32xf32> -> vector<16x16x32xf32>
    "tpu.trace_stop"() : () -> ()
    %60 = vector.shape_cast %59 : vector<16x16x32xf32> to vector<256x32xf32>
    %c64 = arith.constant 64 : index
    %c0_23 = arith.constant 0 : index
    %61 = vector.load %arg3[%c64, %c0_23] : memref<129x32xf32, #tpu.memory_space<vmem>>, vector<32x32xf32>
    %cst_24 = arith.constant dense<0.000000e+00> : vector<256x32xf32>
    %62 = tpu.matmul %60, %61, %cst_24 {dimension_numbers = #tpu.dot_dimension_numbers<[1], [0], [0], [1], [0, 0, 1, 1], [], []>} : vector<256x32xf32>, vector<32x32xf32>, vector<256x32xf32> -> vector<256x32xf32>
    %63 = arith.addf %45, %62 : vector<256x32xf32>
    %cst_25 = arith.constant dense<0.000000e+00> : vector<16x32xf32>
    %64 = vector.multi_reduction <add>, %1, %cst_25 [1] : vector<16x16x32xf32> to vector<16x32xf32>
    %c96 = arith.constant 96 : index
    %c0_26 = arith.constant 0 : index
    %65 = vector.load %arg3[%c96, %c0_26] : memref<129x32xf32, #tpu.memory_space<vmem>>, vector<32x32xf32>
    %cst_27 = arith.constant dense<0.000000e+00> : vector<16x32xf32>
    %66 = tpu.matmul %64, %65, %cst_27 {dimension_numbers = #tpu.dot_dimension_numbers<[1], [0], [0], [1], [0, 0, 1, 1], [], []>} : vector<16x32xf32>, vector<32x32xf32>, vector<16x32xf32> -> vector<16x32xf32>
    %c128 = arith.constant 128 : index
    %c0_28 = arith.constant 0 : index
    %67 = vector.load %arg3[%c128, %c0_28] : memref<129x32xf32, #tpu.memory_space<vmem>>, vector<1x32xf32>
    %68 = vector.broadcast %67 : vector<1x32xf32> to vector<16x32xf32>
    %69 = arith.addf %66, %68 : vector<16x32xf32>
    %70 = vector.shape_cast %63 : vector<256x32xf32> to vector<16x16x32xf32>
    %71 = vector.shape_cast %69 : vector<16x32xf32> to vector<16x1x32xf32>
    %72 = vector.broadcast %71 : vector<16x1x32xf32> to vector<16x16x32xf32>
    %73 = arith.addf %70, %72 : vector<16x16x32xf32>
    %74 = arith.addf %1, %73 : vector<16x16x32xf32>
    %cst_29 = arith.constant 0.000000e+00 : f32
    %75 = vector.broadcast %cst_29 : f32 to vector<16x16x32xf32>
    %76 = arith.maximumf %74, %75 : vector<16x16x32xf32>
    %77 = vector.shape_cast %76 : vector<16x16x32xf32> to vector<256x32xf32>
    %c0_30 = arith.constant 0 : index
    %c0_31 = arith.constant 0 : index
    %78 = vector.load %arg4[%c0_30, %c0_31] : memref<256x32xf32, #tpu.memory_space<vmem>>, vector<256x32xf32>
    tpu.vector_store %arg4[%c0_30, %c0_31], %77 {strides = array<i32>} : memref<256x32xf32, #tpu.memory_space<vmem>>, vector<256x32xf32>,
    return
  }
  func.func @transform_0(%arg0: i32) -> (i32, i32) {
    %c0_i32 = arith.constant 0 : i32
    %c0_i32_0 = arith.constant 0 : i32
    return %arg0, %c0_i32 : i32, i32
  }
  func.func @transform_1(%arg0: i32) -> (i32, i32) {
    %c0_i32 = arith.constant 0 : i32
    %c0_i32_0 = arith.constant 0 : i32
    %c0_i32_1 = arith.constant 0 : i32
    return %c0_i32, %c0_i32_0 : i32, i32
  }
  func.func @transform_2(%arg0: i32) -> (i32, i32) {
    %c0_i32 = arith.constant 0 : i32
    %c0_i32_0 = arith.constant 0 : i32
    %c0_i32_1 = arith.constant 0 : i32
    return %c0_i32, %c0_i32_0 : i32, i32
  }
  func.func @transform_3(%arg0: i32) -> (i32, i32) {
    %c0_i32 = arith.constant 0 : i32
    %c0_i32_0 = arith.constant 0 : i32
    return %arg0, %c0_i32 : i32, i32
  }
}

</mosaic_0001>

<llo_original>
// kernel: tpu_custom_call.1
$region0: #{tpu_custom_call.1}
  #allocation0 [shape = 'u32[]', space=smem, size = 0x4, offset = 0x4, fixed_abs, tag = 'smem constant byte address 0x4 - core index']
  #allocation1 [shape = 'u32[144,128]{1,0:T(1,128)}', space=vmem, size = 0x12000, scoped, tag = 'internal scratch']
  %s0 = inlined_call_operand.vmem [shape: f32[256,32], index: 0, kind: input, shape index: {}]
  %s1 = inlined_call_operand.vmem [shape: f32[48,96], index: 1, kind: input, shape index: {}]
  %s2 = inlined_call_operand.vmem [shape: f32[129,32], index: 2, kind: input, shape index: {}]
  %s3 = inlined_call_operand.vmem [shape: f32[256,32], index: 3, kind: output, shape index: {}]
  %s4 = sld [smem:[#allocation0]]
  $region22: #{tpu_custom_call.1} parent=0
    _
  %s6 = ssub.s32 1, %s4
  %s7 = scalar_select 0, %s6, %s4
  // Predicated region
  $region2: #{tpu_custom_call.1} parent=0 // pred_check
    _
  $region3: #{tpu_custom_call.1} parent=0 // pred_check_branch
    %9 = sbr.rel (0) target = $region5
  $region4: #{tpu_custom_call.1} parent=0 // pred_region
    _
  $region5: #{tpu_custom_call.1} parent=0 // pred_fallthru
    _
  // Predicated region
  $region6: #{tpu_custom_call.1} parent=0 // pred_check
    _
  $region7: #{tpu_custom_call.1} parent=0 // pred_check_branch
    %11 = sbr.rel (0) target = $region9
  $region8: #{tpu_custom_call.1} parent=0 // pred_region
    _
  $region9: #{tpu_custom_call.1} parent=0 // pred_fallthru
    _
  // Predicated region
  $region10: #{tpu_custom_call.1} parent=0 // pred_check
    _
  $region11: #{tpu_custom_call.1} parent=0 // pred_check_branch
    %13 = sbr.rel (0) target = $region13
  $region12: #{tpu_custom_call.1} parent=0 // pred_region
    _
  $region13: #{tpu_custom_call.1} parent=0 // pred_fallthru
    _
  %v14 = vld [vmem:[%s0] sm:$0xff]
  %v15 = vld [vmem:[%s0 + $0x8] sm:$0xff]
  %v16 = vld [vmem:[%s0 + $0x10] sm:$0xff]
  %v17 = vld [vmem:[%s0 + $0x18] sm:$0xff]
  %v18 = vld [vmem:[%s0 + $0x20] sm:$0xff]
  %v19 = vld [vmem:[%s0 + $0x28] sm:$0xff]
  %v20 = vld [vmem:[%s0 + $0x30] sm:$0xff]
  %v21 = vld [vmem:[%s0 + $0x38] sm:$0xff]
  %v22 = vld [vmem:[%s0 + $0x40] sm:$0xff]
  %v23 = vld [vmem:[%s0 + $0x48] sm:$0xff]
  %v24 = vld [vmem:[%s0 + $0x50] sm:$0xff]
  %v25 = vld [vmem:[%s0 + $0x58] sm:$0xff]
  %v26 = vld [vmem:[%s0 + $0x60] sm:$0xff]
  %v27 = vld [vmem:[%s0 + $0x68] sm:$0xff]
  %v28 = vld [vmem:[%s0 + $0x70] sm:$0xff]
  %v29 = vld [vmem:[%s0 + $0x78] sm:$0xff]
  %v30 = vld [vmem:[%s0 + $0x80] sm:$0xff]
  %v31 = vld [vmem:[%s0 + $0x88] sm:$0xff]
  %v32 = vld [vmem:[%s0 + $0x90] sm:$0xff]
  %v33 = vld [vmem:[%s0 + $0x98] sm:$0xff]
  %v34 = vld [vmem:[%s0 + $0xa0] sm:$0xff]
  %v35 = vld [vmem:[%s0 + $0xa8] sm:$0xff]
  %v36 = vld [vmem:[%s0 + $0xb0] sm:$0xff]
  %v37 = vld [vmem:[%s0 + $0xb8] sm:$0xff]
  %v38 = vld [vmem:[%s0 + $0xc0] sm:$0xff]
  %v39 = vld [vmem:[%s0 + $0xc8] sm:$0xff]
  %v40 = vld [vmem:[%s0 + $0xd0] sm:$0xff]
  %v41 = vld [vmem:[%s0 + $0xd8] sm:$0xff]
  %v42 = vld [vmem:[%s0 + $0xe0] sm:$0xff]
  %v43 = vld [vmem:[%s0 + $0xe8] sm:$0xff]
  %v44 = vld [vmem:[%s0 + $0xf0] sm:$0xff]
  %v45 = vld [vmem:[%s0 + $0xf8] sm:$0xff]
  %v46 = vld [vmem:[%s1] sm:$0xff]
  %v47 = vld [vmem:[%s1 + $0x8] sm:$0xff]
  %v48 = vld [vmem:[%s1 + $0x10] sm:$0xff]
  %v49 = vld [vmem:[%s1 + $0x18] sm:$0xff]
  %v50 = vld [vmem:[%s1 + $0x20] sm:$0xff]
  %v51 = vld [vmem:[%s1 + $0x28] sm:$0xff]
  %vm52 = vcmask 261120
  %v54 = vsel %vm52, %v14, 0
  %v57 = vsel %vm52, %v15, 0
  %v60 = vsel %vm52, %v16, 0
  %v63 = vsel %vm52, %v17, 0
  %v66 = vsel %vm52, %v18, 0
  %v69 = vsel %vm52, %v19, 0
  %v72 = vsel %vm52, %v20, 0
  %v75 = vsel %vm52, %v21, 0
  %v78 = vsel %vm52, %v22, 0
  %v81 = vsel %vm52, %v23, 0
  %v84 = vsel %vm52, %v24, 0
  %v87 = vsel %vm52, %v25, 0
  %v90 = vsel %vm52, %v26, 0
  %v93 = vsel %vm52, %v27, 0
  %v96 = vsel %vm52, %v28, 0
  %v99 = vsel %vm52, %v29, 0
  %v102 = vsel %vm52, %v30, 0
  %v105 = vsel %vm52, %v31, 0
  %v108 = vsel %vm52, %v32, 0
  %v111 = vsel %vm52, %v33, 0
  %v114 = vsel %vm52, %v34, 0
  %v117 = vsel %vm52, %v35, 0
  %v120 = vsel %vm52, %v36, 0
  %v123 = vsel %vm52, %v37, 0
  %v126 = vsel %vm52, %v38, 0
  %v129 = vsel %vm52, %v39, 0
  %v132 = vsel %vm52, %v40, 0
  %v135 = vsel %vm52, %v41, 0
  %v138 = vsel %vm52, %v42, 0
  %v141 = vsel %vm52, %v43, 0
  %v144 = vsel %vm52, %v44, 0
  %v147 = vsel %vm52, %v45, 0
  %149 = vmatprep.subr.mxu0 0.0
  %150 = vmatpush1.msra.mxu0 %v46
  %151 = vmatprep.subr.mxu0 0.0
  %152 = vmatpush1.msra.mxu0 %v47
  %153 = vmatprep.subr.mxu0 0.0
  %154 = vmatpush1.msra.mxu0 %v48
  %155 = vmatprep.subr.mxu0 0.0
  %156 = vmatpush1.msra.mxu0 %v49
  %157 = vmatprep.subr.mxu0 0.0
  %158 = vmatpush1.msra.mxu0 0.0
  %159 = vmatprep.subr.mxu0 0.0
  %160 = vmatpush1.msra.mxu0 0.0
  %161 = vmatprep.subr.mxu0 0.0
  %162 = vmatpush1.msra.mxu0 0.0
  %163 = vmatprep.subr.mxu0 0.0
  %164 = vmatpush1.msra.mxu0 0.0
  %165 = vmatprep.subr.mxu0 0.0
  %166 = vmatpush1.msra.mxu0 0.0
  %167 = vmatprep.subr.mxu0 0.0
  %168 = vmatpush1.msra.mxu0 0.0
  %169 = vmatprep.subr.mxu0 0.0
  %170 = vmatpush1.msra.mxu0 0.0
  %171 = vmatprep.subr.mxu0 0.0
  %172 = vmatpush1.msra.mxu0 0.0
  %173 = vmatprep.subr.mxu0 0.0
  %174 = vmatpush1.msra.mxu0 0.0
  %175 = vmatprep.subr.mxu0 0.0
  %176 = vmatpush1.msra.mxu0 0.0
  %177 = vmatprep.subr.mxu0 0.0
  %178 = vmatpush1.msra.mxu0 0.0
  %179 = vmatprep.subr.mxu0 0.0
  %180 = vmatpush1.msra.mxu0 0.0
  %181 = vmatprep.subr.mxu0 0.0
  %182 = vmatpush1.msra.mxu0 0.0
  %183 = vmatprep.subr.mxu0 0.0
  %184 = vmatpush1.msra.mxu0 0.0
  %185 = vmatprep.subr.mxu0 0.0
  %186 = vmatpush1.msra.mxu0 0.0
  %187 = vmatprep.subr.mxu0 0.0
  %188 = vmatpush1.msra.mxu0 0.0
  %189 = vmatprep.subr.mxu0 0.0
  %190 = vmatpush1.msra.mxu0 0.0
  %191 = vmatprep.subr.mxu0 0.0
  %192 = vmatpush1.msra.mxu0 0.0
  %193 = vmatprep.subr.mxu0 0.0
  %194 = vmatpush1.msra.mxu0 0.0
  %195 = vmatprep.subr.mxu0 0.0
  %196 = vmatpush1.msra.mxu0 0.0
  %197 = vmatprep.subr.mxu0 0.0
  %198 = vmatpush1.msra.mxu0 0.0
  %199 = vmatprep.subr.mxu0 0.0
  %200 = vmatpush1.msra.mxu0 0.0
  %201 = vmatprep.subr.mxu0 0.0
  %202 = vmatpush1.msra.mxu0 0.0
  %203 = vmatprep.subr.mxu0 0.0
  %204 = vmatpush1.msra.mxu0 0.0
  %205 = vmatprep.subr.mxu0 0.0
  %206 = vmatpush1.msra.mxu0 0.0
  %207 = vmatprep.subr.mxu0 0.0
  %208 = vmatpush1.msra.mxu0 0.0
  %209 = vmatprep.subr.mxu0 0.0
  %210 = vmatpush1.msra.mxu0 0.0
  %211 = vmatprep.subr.mxu0 0.0
  %212 = vmatpush1.msra.mxu0 0.0
  %213 = vmatprep.mubr.f32.mxu0 0.0
  %214 = vmatmul.mubr.f32.gmra.mrb[0].mxu0 %v54
  %v215 = vpop.f32.mrb[0].mxu0
  %v216 = vadd.f32 0.0, %v215
  %v217 = vpop.f32.mrb[0].mxu0
  %218 = vmatprep.mubr.f32.mxu0 0.0
  %219 = vmatmul.mubr.f32.gmra.mrb[0].mxu0 %v57
  %v220 = vpop.f32.mrb[0].mxu0
  %v221 = vadd.f32 0.0, %v220
  %v222 = vpop.f32.mrb[0].mxu0
  %223 = vmatprep.mubr.f32.mxu0 0.0
  %224 = vmatmul.mubr.f32.gmra.mrb[0].mxu0 %v60
  %v225 = vpop.f32.mrb[0].mxu0
  %v226 = vadd.f32 0.0, %v225
  %v227 = vpop.f32.mrb[0].mxu0
  %228 = vmatprep.mubr.f32.mxu0 0.0
  %229 = vmatmul.mubr.f32.gmra.mrb[0].mxu0 %v63
  %v230 = vpop.f32.mrb[0].mxu0
  %v231 = vadd.f32 0.0, %v230
  %v232 = vpop.f32.mrb[0].mxu0
  %233 = vmatprep.mubr.f32.mxu0 0.0
  %234 = vmatmul.mubr.f32.gmra.mrb[0].mxu0 %v66
  %v235 = vpop.f32.mrb[0].mxu0
  %v236 = vadd.f32 0.0, %v235
  %v237 = vpop.f32.mrb[0].mxu0
  %238 = vmatprep.mubr.f32.mxu0 0.0
  %239 = vmatmul.mubr.f32.gmra.mrb[0].mxu0 %v69
  %v240 = vpop.f32.mrb[0].mxu0
  %v241 = vadd.f32 0.0, %v240
  %v242 = vpop.f32.mrb[0].mxu0
  %243 = vmatprep.mubr.f32.mxu0 0.0
  %244 = vmatmul.mubr.f32.gmra.mrb[0].mxu0 %v72
  %v245 = vpop.f32.mrb[0].mxu0
  %v246 = vadd.f32 0.0, %v245
  %v247 = vpop.f32.mrb[0].mxu0
  %248 = vmatprep.mubr.f32.mxu0 0.0
  %249 = vmatmul.mubr.f32.gmra.mrb[0].mxu0 %v75
  %v250 = vpop.f32.mrb[0].mxu0
  %v251 = vadd.f32 0.0, %v250
  %v252 = vpop.f32.mrb[0].mxu0
  %253 = vmatprep.mubr.f32.mxu0 0.0
  %254 = vmatmul.mubr.f32.gmra.mrb[0].mxu0 %v78
  %v255 = vpop.f32.mrb[0].mxu0
  %v256 = vadd.f32 0.0, %v255
  %v257 = vpop.f32.mrb[0].mxu0
  %258 = vmatprep.mubr.f32.mxu0 0.0
  %259 = vmatmul.mubr.f32.gmra.mrb[0].mxu0 %v81
  %v260 = vpop.f32.mrb[0].mxu0
  %v261 = vadd.f32 0.0, %v260
  %v262 = vpop.f32.mrb[0].mxu0
  %263 = vmatprep.mubr.f32.mxu0 0.0
  %264 = vmatmul.mubr.f32.gmra.mrb[0].mxu0 %v84
  %v265 = vpop.f32.mrb[0].mxu0
  %v266 = vadd.f32 0.0, %v265
  %v267 = vpop.f32.mrb[0].mxu0
  %268 = vmatprep.mubr.f32.mxu0 0.0
  %269 = vmatmul.mubr.f32.gmra.mrb[0].mxu0 %v87
  %v270 = vpop.f32.mrb[0].mxu0
  %v271 = vadd.f32 0.0, %v270
  %v272 = vpop.f32.mrb[0].mxu0
  %273 = vmatprep.mubr.f32.mxu0 0.0
  %274 = vmatmul.mubr.f32.gmra.mrb[0].mxu0 %v90
  %v275 = vpop.f32.mrb[0].mxu0
  %v276 = vadd.f32 0.0, %v275
  %v277 = vpop.f32.mrb[0].mxu0
  %278 = vmatprep.mubr.f32.mxu0 0.0
  %279 = vmatmul.mubr.f32.gmra.mrb[0].mxu0 %v93
  %v280 = vpop.f32.mrb[0].mxu0
  %v281 = vadd.f32 0.0, %v280
  %v282 = vpop.f32.mrb[0].mxu0
  %283 = vmatprep.mubr.f32.mxu0 0.0
  %284 = vmatmul.mubr.f32.gmra.mrb[0].mxu0 %v96
  %v285 = vpop.f32.mrb[0].mxu0
  %v286 = vadd.f32 0.0, %v285
  %v287 = vpop.f32.mrb[0].mxu0
  %288 = vmatprep.mubr.f32.mxu0 0.0
  %289 = vmatmul.mubr.f32.gmra.mrb[0].mxu0 %v99
  %v290 = vpop.f32.mrb[0].mxu0
  %v291 = vadd.f32 0.0, %v290
  %v292 = vpop.f32.mrb[0].mxu0
  %293 = vmatprep.mubr.f32.mxu0 0.0
  %294 = vmatmul.mubr.f32.gmra.mrb[0].mxu0 %v102
  %v295 = vpop.f32.mrb[0].mxu0
  %v296 = vadd.f32 0.0, %v295
  %v297 = vpop.f32.mrb[0].mxu0
  %298 = vmatprep.mubr.f32.mxu0 0.0
  %299 = vmatmul.mubr.f32.gmra.mrb[0].mxu0 %v105
  %v300 = vpop.f32.mrb[0].mxu0
  %v301 = vadd.f32 0.0, %v300
  %v302 = vpop.f32.mrb[0].mxu0
  %303 = vmatprep.mubr.f32.mxu0 0.0
  %304 = vmatmul.mubr.f32.gmra.mrb[0].mxu0 %v108
  %v305 = vpop.f32.mrb[0].mxu0
  %v306 = vadd.f32 0.0, %v305
  %v307 = vpop.f32.mrb[0].mxu0
  %308 = vmatprep.mubr.f32.mxu0 0.0
  %309 = vmatmul.mubr.f32.gmra.mrb[0].mxu0 %v111
  %v310 = vpop.f32.mrb[0].mxu0
  %v311 = vadd.f32 0.0, %v310
  %v312 = vpop.f32.mrb[0].mxu0
  %313 = vmatprep.mubr.f32.mxu0 0.0
  %314 = vmatmul.mubr.f32.gmra.mrb[0].mxu0 %v114
  %v315 = vpop.f32.mrb[0].mxu0
  %v316 = vadd.f32 0.0, %v315
  %v317 = vpop.f32.mrb[0].mxu0
  %318 = vmatprep.mubr.f32.mxu0 0.0
  %319 = vmatmul.mubr.f32.gmra.mrb[0].mxu0 %v117
  %v320 = vpop.f32.mrb[0].mxu0
  %v321 = vadd.f32 0.0, %v320
  %v322 = vpop.f32.mrb[0].mxu0
  %323 = vmatprep.mubr.f32.mxu0 0.0
  %324 = vmatmul.mubr.f32.gmra.mrb[0].mxu0 %v120
  %v325 = vpop.f32.mrb[0].mxu0
  %v326 = vadd.f32 0.0, %v325
  %v327 = vpop.f32.mrb[0].mxu0
  %328 = vmatprep.mubr.f32.mxu0 0.0
  %329 = vmatmul.mubr.f32.gmra.mrb[0].mxu0 %v123
  %v330 = vpop.f32.mrb[0].mxu0
  %v331 = vadd.f32 0.0, %v330
  %v332 = vpop.f32.mrb[0].mxu0
  %333 = vmatprep.mubr.f32.mxu0 0.0
  %334 = vmatmul.mubr.f32.gmra.mrb[0].mxu0 %v126
  %v335 = vpop.f32.mrb[0].mxu0
  %v336 = vadd.f32 0.0, %v335
  %v337 = vpop.f32.mrb[0].mxu0
  %338 = vmatprep.mubr.f32.mxu0 0.0
  %339 = vmatmul.mubr.f32.gmra.mrb[0].mxu0 %v129
  %v340 = vpop.f32.mrb[0].mxu0
  %v341 = vadd.f32 0.0, %v340
  %v342 = vpop.f32.mrb[0].mxu0
  %343 = vmatprep.mubr.f32.mxu0 0.0
  %344 = vmatmul.mubr.f32.gmra.mrb[0].mxu0 %v132
  %v345 = vpop.f32.mrb[0].mxu0
  %v346 = vadd.f32 0.0, %v345
  %v347 = vpop.f32.mrb[0].mxu0
  %348 = vmatprep.mubr.f32.mxu0 0.0
  %349 = vmatmul.mubr.f32.gmra.mrb[0].mxu0 %v135
  %v350 = vpop.f32.mrb[0].mxu0
  %v351 = vadd.f32 0.0, %v350
  %v352 = vpop.f32.mrb[0].mxu0
  %353 = vmatprep.mubr.f32.mxu0 0.0
  %354 = vmatmul.mubr.f32.gmra.mrb[0].mxu0 %v138
  %v355 = vpop.f32.mrb[0].mxu0
  %v356 = vadd.f32 0.0, %v355
  %v357 = vpop.f32.mrb[0].mxu0
  %358 = vmatprep.mubr.f32.mxu0 0.0
  %359 = vmatmul.mubr.f32.gmra.mrb[0].mxu0 %v141
  %v360 = vpop.f32.mrb[0].mxu0
  %v361 = vadd.f32 0.0, %v360
  %v362 = vpop.f32.mrb[0].mxu0
  %363 = vmatprep.mubr.f32.mxu0 0.0
  %364 = vmatmul.mubr.f32.gmra.mrb[0].mxu0 %v144
  %v365 = vpop.f32.mrb[0].mxu0
  %v366 = vadd.f32 0.0, %v365
  %v367 = vpop.f32.mrb[0].mxu0
  %368 = vmatprep.mubr.f32.mxu0 0.0
  %369 = vmatmul.mubr.f32.gmra.mrb[0].mxu0 %v147
  %v370 = vpop.f32.mrb[0].mxu0
  %v371 = vadd.f32 0.0, %v370
  %v372 = vpop.f32.mrb[0].mxu0
  %373 = vdwg.mxu0
  %v374 = vadd.f32 %v216, %v50
  %v375 = vadd.f32 %v221, %v51
  %v376 = vadd.f32 %v226, %v50
  %v377 = vadd.f32 %v231, %v51
  %v378 = vadd.f32 %v236, %v50
  %v379 = vadd.f32 %v241, %v51
  %v380 = vadd.f32 %v246, %v50
  %v381 = vadd.f32 %v251, %v51
  %v382 = vadd.f32 %v256, %v50
  %v383 = vadd.f32 %v261, %v51
  %v384 = vadd.f32 %v266, %v50
  %v385 = vadd.f32 %v271, %v51
  %v386 = vadd.f32 %v276, %v50
  %v387 = vadd.f32 %v281, %v51
  %v388 = vadd.f32 %v286, %v50
  %v389 = vadd.f32 %v291, %v51
  %v390 = vadd.f32 %v296, %v50
  %v391 = vadd.f32 %v301, %v51
  %v392 = vadd.f32 %v306, %v50
  %v393 = vadd.f32 %v311, %v51
  %v394 = vadd.f32 %v316, %v50
  %v395 = vadd.f32 %v321, %v51
  %v396 = vadd.f32 %v326, %v50
  %v397 = vadd.f32 %v331, %v51
  %v398 = vadd.f32 %v336, %v50
  %v399 = vadd.f32 %v341, %v51
  %v400 = vadd.f32 %v346, %v50
  %v401 = vadd.f32 %v351, %v51
  %v402 = vadd.f32 %v356, %v50
  %v403 = vadd.f32 %v361, %v51
  %v404 = vadd.f32 %v366, %v50
  %v405 = vadd.f32 %v371, %v51
  %408 = vrot.lane.b32.xlu0 %v374, 80
  %v409 = vpop.permute.xlu0 %408
  %410 = vrot.lane.b32.xlu0 %v375, 80
  %v411 = vpop.permute.xlu0 %410
  %vm412 = vcmask 130048
  %v413 = vsel %vm412, %v409, 0
  %v415 = vsel %vm412, %v411, 0
  %v417 = vsel %vm412, %v374, 0
  %v419 = vsel %vm412, %v375, 0
  %421 = vmatprep.subr.mxu0 0.0
  %422 = vmatpush1.xpose.msra.mxu0 %v417
  %423 = vmatprep.subr.mxu0 0.0
  %424 = vmatpush1.xpose.msra.mxu0 %v419
  %425 = vmatprep.subr.mxu0 0.0
  %426 = vmatpush1.xpose.msra.mxu0 0.0
  %427 = vmatprep.subr.mxu0 0.0
  %428 = vmatpush1.xpose.msra.mxu0 0.0
  %429 = vmatprep.subr.mxu0 0.0
  %430 = vmatpush1.xpose.msra.mxu0 0.0
  %431 = vmatprep.subr.mxu0 0.0
  %432 = vmatpush1.xpose.msra.mxu0 0.0
  %433 = vmatprep.subr.mxu0 0.0
  %434 = vmatpush1.xpose.msra.mxu0 0.0
  %435 = vmatprep.subr.mxu0 0.0
  %436 = vmatpush1.xpose.msra.mxu0 0.0
  %437 = vmatprep.subr.mxu0 0.0
  %438 = vmatpush1.xpose.msra.mxu0 0.0
  %439 = vmatprep.subr.mxu0 0.0
  %440 = vmatpush1.xpose.msra.mxu0 0.0
  %441 = vmatprep.subr.mxu0 0.0
  %442 = vmatpush1.xpose.msra.mxu0 0.0
  %443 = vmatprep.subr.mxu0 0.0
  %444 = vmatpush1.xpose.msra.mxu0 0.0
  %445 = vmatprep.subr.mxu0 0.0
  %446 = vmatpush1.xpose.msra.mxu0 0.0
  %447 = vmatprep.subr.mxu0 0.0
  %448 = vmatpush1.xpose.msra.mxu0 0.0
  %449 = vmatprep.subr.mxu0 0.0
  %450 = vmatpush1.xpose.msra.mxu0 0.0
  %451 = vmatprep.subr.mxu0 0.0
  %452 = vmatpush1.xpose.msra.mxu0 0.0
  %453 = vmatprep.subr.mxu0 0.0
  %454 = vmatpush1.xpose.msra.mxu0 0.0
  %455 = vmatprep.subr.mxu0 0.0
  %456 = vmatpush1.xpose.msra.mxu0 0.0
  %457 = vmatprep.subr.mxu0 0.0
  %458 = vmatpush1.xpose.msra.mxu0 0.0
  %459 = vmatprep.subr.mxu0 0.0
  %460 = vmatpush1.xpose.msra.mxu0 0.0
  %461 = vmatprep.subr.mxu0 0.0
  %462 = vmatpush1.xpose.msra.mxu0 0.0
  %463 = vmatprep.subr.mxu0 0.0
  %464 = vmatpush1.xpose.msra.mxu0 0.0
  %465 = vmatprep.subr.mxu0 0.0
  %466 = vmatpush1.xpose.msra.mxu0 0.0
  %467 = vmatprep.subr.mxu0 0.0
  %468 = vmatpush1.xpose.msra.mxu0 0.0
  %469 = vmatprep.subr.mxu0 0.0
  %470 = vmatpush1.xpose.msra.mxu0 0.0
  %471 = vmatprep.subr.mxu0 0.0
  %472 = vmatpush1.xpose.msra.mxu0 0.0
  %473 = vmatprep.subr.mxu0 0.0
  %474 = vmatpush1.xpose.msra.mxu0 0.0
  %475 = vmatprep.subr.mxu0 0.0
  %476 = vmatpush1.xpose.msra.mxu0 0.0
  %477 = vmatprep.subr.mxu0 0.0
  %478 = vmatpush1.xpose.msra.mxu0 0.0
  %479 = vmatprep.subr.mxu0 0.0
  %480 = vmatpush1.xpose.msra.mxu0 0.0
  %481 = vmatprep.subr.mxu0 0.0
  %482 = vmatpush1.xpose.msra.mxu0 0.0
  %483 = vmatprep.subr.mxu0 0.0
  %484 = vmatpush1.xpose.msra.mxu0 0.0
  %485 = vmatprep.mubr.f32.mxu0 0.0
  %486 = vmatmul.mubr.f32.gmra.mrb[0].mxu0 %v413
  %v487 = vpop.f32.mrb[0].mxu0
  %v488 = vadd.f32 0.0, %v487
  %v489 = vpop.f32.mrb[0].mxu0
  %490 = vmatprep.mubr.f32.mxu0 0.0
  %491 = vmatmul.mubr.f32.gmra.mrb[0].mxu0 %v415
  %v492 = vpop.f32.mrb[0].mxu0
  %v493 = vadd.f32 0.0, %v492
  %v494 = vpop.f32.mrb[0].mxu0
  %495 = vdwg.mxu0
  %498 = vrot.lane.b32.xlu0 %v376, 80
  %v499 = vpop.permute.xlu0 %498
  %500 = vrot.lane.b32.xlu0 %v377, 80
  %v501 = vpop.permute.xlu0 %500
  %v502 = vsel %vm412, %v499, 0
  %v504 = vsel %vm412, %v501, 0
  %v506 = vsel %vm412, %v376, 0
  %v508 = vsel %vm412, %v377, 0
  %510 = vmatprep.subr.mxu0 0.0
  %511 = vmatpush1.xpose.msra.mxu0 %v506
  %512 = vmatprep.subr.mxu0 0.0
  %513 = vmatpush1.xpose.msra.mxu0 %v508
  %514 = vmatprep.subr.mxu0 0.0
  %515 = vmatpush1.xpose.msra.mxu0 0.0
  %516 = vmatprep.subr.mxu0 0.0
  %517 = vmatpush1.xpose.msra.mxu0 0.0
  %518 = vmatprep.subr.mxu0 0.0
  %519 = vmatpush1.xpose.msra.mxu0 0.0
  %520 = vmatprep.subr.mxu0 0.0
  %521 = vmatpush1.xpose.msra.mxu0 0.0
  %522 = vmatprep.subr.mxu0 0.0
  %523 = vmatpush1.xpose.msra.mxu0 0.0
  %524 = vmatprep.subr.mxu0 0.0
  %525 = vmatpush1.xpose.msra.mxu0 0.0
  %526 = vmatprep.subr.mxu0 0.0
  %527 = vmatpush1.xpose.msra.mxu0 0.0
  %528 = vmatprep.subr.mxu0 0.0
  %529 = vmatpush1.xpose.msra.mxu0 0.0
  %530 = vmatprep.subr.mxu0 0.0
  %531 = vmatpush1.xpose.msra.mxu0 0.0
  %532 = vmatprep.subr.mxu0 0.0
  %533 = vmatpush1.xpose.msra.mxu0 0.0
  %534 = vmatprep.subr.mxu0 0.0
  %535 = vmatpush1.xpose.msra.mxu0 0.0
  %536 = vmatprep.subr.mxu0 0.0
  %537 = vmatpush1.xpose.msra.mxu0 0.0
  %538 = vmatprep.subr.mxu0 0.0
  %539 = vmatpush1.xpose.msra.mxu0 0.0
  %540 = vmatprep.subr.mxu0 0.0
  %541 = vmatpush1.xpose.msra.mxu0 0.0
  %542 = vmatprep.subr.mxu0 0.0
  %543 = vmatpush1.xpose.msra.mxu0 0.0
  %544 = vmatprep.subr.mxu0 0.0
  %545 = vmatpush1.xpose.msra.mxu0 0.0
  %546 = vmatprep.subr.mxu0 0.0
  %547 = vmatpush1.xpose.msra.mxu0 0.0
  %548 = vmatprep.subr.mxu0 0.0
  %549 = vmatpush1.xpose.msra.mxu0 0.0
  %550 = vmatprep.subr.mxu0 0.0
  %551 = vmatpush1.xpose.msra.mxu0 0.0
  %552 = vmatprep.subr.mxu0 0.0
  %553 = vmatpush1.xpose.msra.mxu0 0.0
  %554 = vmatprep.subr.mxu0 0.0
  %555 = vmatpush1.xpose.msra.mxu0 0.0
  %556 = vmatprep.subr.mxu0 0.0
  %557 = vmatpush1.xpose.msra.mxu0 0.0
  %558 = vmatprep.subr.mxu0 0.0
  %559 = vmatpush1.xpose.msra.mxu0 0.0
  %560 = vmatprep.subr.mxu0 0.0
  %561 = vmatpush1.xpose.msra.mxu0 0.0
  %562 = vmatprep.subr.mxu0 0.0
  %563 = vmatpush1.xpose.msra.mxu0 0.0
  %564 = vmatprep.subr.mxu0 0.0
  %565 = vmatpush1.xpose.msra.mxu0 0.0
  %566 = vmatprep.subr.mxu0 0.0
  %567 = vmatpush1.xpose.msra.mxu0 0.0
  %568 = vmatprep.subr.mxu0 0.0
  %569 = vmatpush1.xpose.msra.mxu0 0.0
  %570 = vmatprep.subr.mxu0 0.0
  %571 = vmatpush1.xpose.msra.mxu0 0.0
  %572 = vmatprep.subr.mxu0 0.0
  %573 = vmatpush1.xpose.msra.mxu0 0.0
  %574 = vmatprep.mubr.f32.mxu0 0.0
  %575 = vmatmul.mubr.f32.gmra.mrb[0].mxu0 %v502
  %v576 = vpop.f32.mrb[0].mxu0
  %v577 = vadd.f32 0.0, %v576
  %v578 = vpop.f32.mrb[0].mxu0
  %579 = vmatprep.mubr.f32.mxu0 0.0
  %580 = vmatmul.mubr.f32.gmra.mrb[0].mxu0 %v504
  %v581 = vpop.f32.mrb[0].mxu0
  %v582 = vadd.f32 0.0, %v581
  %v583 = vpop.f32.mrb[0].mxu0
  %584 = vdwg.mxu0
  %587 = vrot.lane.b32.xlu0 %v378, 80
  %v588 = vpop.permute.xlu0 %587
  %589 = vrot.lane.b32.xlu0 %v379, 80
  %v590 = vpop.permute.xlu0 %589
  %v591 = vsel %vm412, %v588, 0
  %v593 = vsel %vm412, %v590, 0
  %v595 = vsel %vm412, %v378, 0
  %v597 = vsel %vm412, %v379, 0
  %599 = vmatprep.subr.mxu0 0.0
  %600 = vmatpush1.xpose.msra.mxu0 %v595
  %601 = vmatprep.subr.mxu0 0.0
  %602 = vmatpush1.xpose.msra.mxu0 %v597
  %603 = vmatprep.subr.mxu0 0.0
  %604 = vmatpush1.xpose.msra.mxu0 0.0
  %605 = vmatprep.subr.mxu0 0.0
  %606 = vmatpush1.xpose.msra.mxu0 0.0
  %607 = vmatprep.subr.mxu0 0.0
  %608 = vmatpush1.xpose.msra.mxu0 0.0
  %609 = vmatprep.subr.mxu0 0.0
  %610 = vmatpush1.xpose.msra.mxu0 0.0
  %611 = vmatprep.subr.mxu0 0.0
  %612 = vmatpush1.xpose.msra.mxu0 0.0
  %613 = vmatprep.subr.mxu0 0.0
  %614 = vmatpush1.xpose.msra.mxu0 0.0
  %615 = vmatprep.subr.mxu0 0.0
  %616 = vmatpush1.xpose.msra.mxu0 0.0
  %617 = vmatprep.subr.mxu0 0.0
  %618 = vmatpush1.xpose.msra.mxu0 0.0
  %619 = vmatprep.subr.mxu0 0.0
  %620 = vmatpush1.xpose.msra.mxu0 0.0
  %621 = vmatprep.subr.mxu0 0.0
  %622 = vmatpush1.xpose.msra.mxu0 0.0
  %623 = vmatprep.subr.mxu0 0.0
  %624 = vmatpush1.xpose.msra.mxu0 0.0
  %625 = vmatprep.subr.mxu0 0.0
  %626 = vmatpush1.xpose.msra.mxu0 0.0
  %627 = vmatprep.subr.mxu0 0.0
  %628 = vmatpush1.xpose.msra.mxu0 0.0
  %629 = vmatprep.subr.mxu0 0.0
  %630 = vmatpush1.xpose.msra.mxu0 0.0
  %631 = vmatprep.subr.mxu0 0.0
  %632 = vmatpush1.xpose.msra.mxu0 0.0
  %633 = vmatprep.subr.mxu0 0.0
  %634 = vmatpush1.xpose.msra.mxu0 0.0
  %635 = vmatprep.subr.mxu0 0.0
  %636 = vmatpush1.xpose.msra.mxu0 0.0
  %637 = vmatprep.subr.mxu0 0.0
  %638 = vmatpush1.xpose.msra.mxu0 0.0
  %639 = vmatprep.subr.mxu0 0.0
  %640 = vmatpush1.xpose.msra.mxu0 0.0
  %641 = vmatprep.subr.mxu0 0.0
  %642 = vmatpush1.xpose.msra.mxu0 0.0
  %643 = vmatprep.subr.mxu0 0.0
  %644 = vmatpush1.xpose.msra.mxu0 0.0
  %645 = vmatprep.subr.mxu0 0.0
  %646 = vmatpush1.xpose.msra.mxu0 0.0
  %647 = vmatprep.subr.mxu0 0.0
  %648 = vmatpush1.xpose.msra.mxu0 0.0
  %649 = vmatprep.subr.mxu0 0.0
  %650 = vmatpush1.xpose.msra.mxu0 0.0
  %651 = vmatprep.subr.mxu0 0.0
  %652 = vmatpush1.xpose.msra.mxu0 0.0
  %653 = vmatprep.subr.mxu0 0.0
  %654 = vmatpush1.xpose.msra.mxu0 0.0
  %655 = vmatprep.subr.mxu0 0.0
  %656 = vmatpush1.xpose.msra.mxu0 0.0
  %657 = vmatprep.subr.mxu0 0.0
  %658 = vmatpush1.xpose.msra.mxu0 0.0
  %659 = vmatprep.subr.mxu0 0.0
  %660 = vmatpush1.xpose.msra.mxu0 0.0
  %661 = vmatprep.subr.mxu0 0.0
  %662 = vmatpush1.xpose.msra.mxu0 0.0
  %663 = vmatprep.mubr.f32.mxu0 0.0
  %664 = vmatmul.mubr.f32.gmra.mrb[0].mxu0 %v591
  %v665 = vpop.f32.mrb[0].mxu0
  %v666 = vadd.f32 0.0, %v665
  %v667 = vpop.f32.mrb[0].mxu0
  %668 = vmatprep.mubr.f32.mxu0 0.0
  %669 = vmatmul.mubr.f32.gmra.mrb[0].mxu0 %v593
  %v670 = vpop.f32.mrb[0].mxu0
  %v671 = vadd.f32 0.0, %v670
  %v672 = vpop.f32.mrb[0].mxu0
  %673 = vdwg.mxu0
  %676 = vrot.lane.b32.xlu0 %v380, 80
  %v677 = vpop.permute.xlu0 %676
  %678 = vrot.lane.b32.xlu0 %v381, 80
  %v679 = vpop.permute.xlu0 %678
  %v680 = vsel %vm412, %v677, 0
  %v682 = vsel %vm412, %v679, 0
  %v684 = vsel %vm412, %v380, 0
  %v686 = vsel %vm412, %v381, 0
  %688 = vmatprep.subr.mxu0 0.0
  %689 = vmatpush1.xpose.msra.mxu0 %v684
  %690 = vmatprep.subr.mxu0 0.0
  %691 = vmatpush1.xpose.msra.mxu0 %v686
  %692 = vmatprep.subr.mxu0 0.0
  %693 = vmatpush1.xpose.msra.mxu0 0.0
  %694 = vmatprep.subr.mxu0 0.0
  %695 = vmatpush1.xpose.msra.mxu0 0.0
  %696 = vmatprep.subr.mxu0 0.0
  %697 = vmatpush1.xpose.msra.mxu0 0.0
  %698 = vmatprep.subr.mxu0 0.0
  %699 = vmatpush1.xpose.msra.mxu0 0.0
  %700 = vmatprep.subr.mxu0 0.0
  %701 = vmatpush1.xpose.msra.mxu0 0.0
  %702 = vmatprep.subr.mxu0 0.0
  %703 = vmatpush1.xpose.msra.mxu0 0.0
  %704 = vmatprep.subr.mxu0 0.0
  %705 = vmatpush1.xpose.msra.mxu0 0.0
  %706 = vmatprep.subr.mxu0 0.0
  %707 = vmatpush1.xpose.msra.mxu0 0.0
  %708 = vmatprep.subr.mxu0 0.0
  %709 = vmatpush1.xpose.msra.mxu0 0.0
  %710 = vmatprep.subr.mxu0 0.0
  %711 = vmatpush1.xpose.msra.mxu0 0.0
  %712 = vmatprep.subr.mxu0 0.0
  %713 = vmatpush1.xpose.msra.mxu0 0.0
  %714 = vmatprep.subr.mxu0 0.0
  %715 = vmatpush1.xpose.msra.mxu0 0.0
  %716 = vmatprep.subr.mxu0 0.0
  %717 = vmatpush1.xpose.msra.mxu0 0.0
  %718 = vmatprep.subr.mxu0 0.0
  %719 = vmatpush1.xpose.msra.mxu0 0.0
  %720 = vmatprep.subr.mxu0 0.0
  %721 = vmatpush1.xpose.msra.mxu0 0.0
  %722 = vmatprep.subr.mxu0 0.0
  %723 = vmatpush1.xpose.msra.mxu0 0.0
  %724 = vmatprep.subr.mxu0 0.0
  %725 = vmatpush1.xpose.msra.mxu0 0.0
  %726 = vmatprep.subr.mxu0 0.0
  %727 = vmatpush1.xpose.msra.mxu0 0.0
  %728 = vmatprep.subr.mxu0 0.0
  %729 = vmatpush1.xpose.msra.mxu0 0.0
  %730 = vmatprep.subr.mxu0 0.0
  %731 = vmatpush1.xpose.msra.mxu0 0.0
  %732 = vmatprep.subr.mxu0 0.0
  %733 = vmatpush1.xpose.msra.mxu0 0.0
  %734 = vmatprep.subr.mxu0 0.0
  %735 = vmatpush1.xpose.msra.mxu0 0.0
  %736 = vmatprep.subr.mxu0 0.0
  %737 = vmatpush1.xpose.msra.mxu0 0.0
  %738 = vmatprep.subr.mxu0 0.0
  %739 = vmatpush1.xpose.msra.mxu0 0.0
  %740 = vmatprep.subr.mxu0 0.0
  %741 = vmatpush1.xpose.msra.mxu0 0.0
  %742 = vmatprep.subr.mxu0 0.0
  %743 = vmatpush1.xpose.msra.mxu0 0.0
  %744 = vmatprep.subr.mxu0 0.0
  %745 = vmatpush1.xpose.msra.mxu0 0.0
  %746 = vmatprep.subr.mxu0 0.0
  %747 = vmatpush1.xpose.msra.mxu0 0.0
  %748 = vmatprep.subr.mxu0 0.0
  %749 = vmatpush1.xpose.msra.mxu0 0.0
  %750 = vmatprep.subr.mxu0 0.0
  %751 = vmatpush1.xpose.msra.mxu0 0.0
  %752 = vmatprep.mubr.f32.mxu0 0.0
  %753 = vmatmul.mubr.f32.gmra.mrb[0].mxu0 %v680
  %v754 = vpop.f32.mrb[0].mxu0
  %v755 = vadd.f32 0.0, %v754
  %v756 = vpop.f32.mrb[0].mxu0
  %757 = vmatprep.mubr.f32.mxu0 0.0
  %758 = vmatmul.mubr.f32.gmra.mrb[0].mxu0 %v682
  %v759 = vpop.f32.mrb[0].mxu0
  %v760 = vadd.f32 0.0, %v759
  %v761 = vpop.f32.mrb[0].mxu0
  %762 = vdwg.mxu0
  %765 = vrot.lane.b32.xlu0 %v382, 80
  %v766 = vpop.permute.xlu0 %765
  %767 = vrot.lane.b32.xlu0 %v383, 80
  %v768 = vpop.permute.xlu0 %767
  %v769 = vsel %vm412, %v766, 0
  %v771 = vsel %vm412, %v768, 0
  %v773 = vsel %vm412, %v382, 0
  %v775 = vsel %vm412, %v383, 0
  %777 = vmatprep.subr.mxu0 0.0
  %778 = vmatpush1.xpose.msra.mxu0 %v773
  %779 = vmatprep.subr.mxu0 0.0
  %780 = vmatpush1.xpose.msra.mxu0 %v775
  %781 = vmatprep.subr.mxu0 0.0
  %782 = vmatpush1.xpose.msra.mxu0 0.0
  %783 = vmatprep.subr.mxu0 0.0
  %784 = vmatpush1.xpose.msra.mxu0 0.0
  %785 = vmatprep.subr.mxu0 0.0
  %786 = vmatpush1.xpose.msra.mxu0 0.0
  %787 = vmatprep.subr.mxu0 0.0
  %788 = vmatpush1.xpose.msra.mxu0 0.0
  %789 = vmatprep.subr.mxu0 0.0
  %790 = vmatpush1.xpose.msra.mxu0 0.0
  %791 = vmatprep.subr.mxu0 0.0
  %792 = vmatpush1.xpose.msra.mxu0 0.0
  %793 = vmatprep.subr.mxu0 0.0
  %794 = vmatpush1.xpose.msra.mxu0 0.0
  %795 = vmatprep.subr.mxu0 0.0
  %796 = vmatpush1.xpose.msra.mxu0 0.0
  %797 = vmatprep.subr.mxu0 0.0
  %798 = vmatpush1.xpose.msra.mxu0 0.0
  %799 = vmatprep.subr.mxu0 0.0
  %800 = vmatpush1.xpose.msra.mxu0 0.0
  %801 = vmatprep.subr.mxu0 0.0
  %802 = vmatpush1.xpose.msra.mxu0 0.0
  %803 = vmatprep.subr.mxu0 0.0
  %804 = vmatpush1.xpose.msra.mxu0 0.0
  %805 = vmatprep.subr.mxu0 0.0
  %806 = vmatpush1.xpose.msra.mxu0 0.0
  %807 = vmatprep.subr.mxu0 0.0
  %808 = vmatpush1.xpose.msra.mxu0 0.0
  %809 = vmatprep.subr.mxu0 0.0
  %810 = vmatpush1.xpose.msra.mxu0 0.0
  %811 = vmatprep.subr.mxu0 0.0
  %812 = vmatpush1.xpose.msra.mxu0 0.0
  %813 = vmatprep.subr.mxu0 0.0
  %814 = vmatpush1.xpose.msra.mxu0 0.0
  %815 = vmatprep.subr.mxu0 0.0
  %816 = vmatpush1.xpose.msra.mxu0 0.0
  %817 = vmatprep.subr.mxu0 0.0
  %818 = vmatpush1.xpose.msra.mxu0 0.0
  %819 = vmatprep.subr.mxu0 0.0
  %820 = vmatpush1.xpose.msra.mxu0 0.0
  %821 = vmatprep.subr.mxu0 0.0
  %822 = vmatpush1.xpose.msra.mxu0 0.0
  %823 = vmatprep.subr.mxu0 0.0
  %824 = vmatpush1.xpose.msra.mxu0 0.0
  %825 = vmatprep.subr.mxu0 0.0
  %826 = vmatpush1.xpose.msra.mxu0 0.0
  %827 = vmatprep.subr.mxu0 0.0
  %828 = vmatpush1.xpose.msra.mxu0 0.0
  %829 = vmatprep.subr.mxu0 0.0
  %830 = vmatpush1.xpose.msra.mxu0 0.0
  %831 = vmatprep.subr.mxu0 0.0
  %832 = vmatpush1.xpose.msra.mxu0 0.0
  %833 = vmatprep.subr.mxu0 0.0
  %834 = vmatpush1.xpose.msra.mxu0 0.0
  %835 = vmatprep.subr.mxu0 0.0
  %836 = vmatpush1.xpose.msra.mxu0 0.0
  %837 = vmatprep.subr.mxu0 0.0
  %838 = vmatpush1.xpose.msra.mxu0 0.0
  %839 = vmatprep.subr.mxu0 0.0
  %840 = vmatpush1.xpose.msra.mxu0 0.0
  %841 = vmatprep.mubr.f32.mxu0 0.0
  %842 = vmatmul.mubr.f32.gmra.mrb[0].mxu0 %v769
  %v843 = vpop.f32.mrb[0].mxu0
  %v844 = vadd.f32 0.0, %v843
  %v845 = vpop.f32.mrb[0].mxu0
  %846 = vmatprep.mubr.f32.mxu0 0.0
  %847 = vmatmul.mubr.f32.gmra.mrb[0].mxu0 %v771
  %v848 = vpop.f32.mrb[0].mxu0
  %v849 = vadd.f32 0.0, %v848
  %v850 = vpop.f32.mrb[0].mxu0
  %851 = vdwg.mxu0
  %854 = vrot.lane.b32.xlu0 %v384, 80
  %v855 = vpop.permute.xlu0 %854
  %856 = vrot.lane.b32.xlu0 %v385, 80
  %v857 = vpop.permute.xlu0 %856
  %v858 = vsel %vm412, %v855, 0
  %v860 = vsel %vm412, %v857, 0
  %v862 = vsel %vm412, %v384, 0
  %v864 = vsel %vm412, %v385, 0
  %866 = vmatprep.subr.mxu0 0.0
  %867 = vmatpush1.xpose.msra.mxu0 %v862
  %868 = vmatprep.subr.mxu0 0.0
  %869 = vmatpush1.xpose.msra.mxu0 %v864
  %870 = vmatprep.subr.mxu0 0.0
  %871 = vmatpush1.xpose.msra.mxu0 0.0
  %872 = vmatprep.subr.mxu0 0.0
  %873 = vmatpush1.xpose.msra.mxu0 0.0
  %874 = vmatprep.subr.mxu0 0.0
  %875 = vmatpush1.xpose.msra.mxu0 0.0
  %876 = vmatprep.subr.mxu0 0.0
  %877 = vmatpush1.xpose.msra.mxu0 0.0
  %878 = vmatprep.subr.mxu0 0.0
  %879 = vmatpush1.xpose.msra.mxu0 0.0
  %880 = vmatprep.subr.mxu0 0.0
  %881 = vmatpush1.xpose.msra.mxu0 0.0
  %882 = vmatprep.subr.mxu0 0.0
  %883 = vmatpush1.xpose.msra.mxu0 0.0
  %884 = vmatprep.subr.mxu0 0.0
  %885 = vmatpush1.xpose.msra.mxu0 0.0
  %886 = vmatprep.subr.mxu0 0.0
  %887 = vmatpush1.xpose.msra.mxu0 0.0
  %888 = vmatprep.subr.mxu0 0.0
  %889 = vmatpush1.xpose.msra.mxu0 0.0
  %890 = vmatprep.subr.mxu0 0.0
  %891 = vmatpush1.xpose.msra.mxu0 0.0
  %892 = vmatprep.subr.mxu0 0.0
  %893 = vmatpush1.xpose.msra.mxu0 0.0
  %894 = vmatprep.subr.mxu0 0.0
  %895 = vmatpush1.xpose.msra.mxu0 0.0
  %896 = vmatprep.subr.mxu0 0.0
  %897 = vmatpush1.xpose.msra.mxu0 0.0
  %898 = vmatprep.subr.mxu0 0.0
  %899 = vmatpush1.xpose.msra.mxu0 0.0
  %900 = vmatprep.subr.mxu0 0.0
  %901 = vmatpush1.xpose.msra.mxu0 0.0
  %902 = vmatprep.subr.mxu0 0.0
  %903 = vmatpush1.xpose.msra.mxu0 0.0
  %904 = vmatprep.subr.mxu0 0.0
  %905 = vmatpush1.xpose.msra.mxu0 0.0
  %906 = vmatprep.subr.mxu0 0.0
  %907 = vmatpush1.xpose.msra.mxu0 0.0
  %908 = vmatprep.subr.mxu0 0.0
  %909 = vmatpush1.xpose.msra.mxu0 0.0
  %910 = vmatprep.subr.mxu0 0.0
  %911 = vmatpush1.xpose.msra.mxu0 0.0
  %912 = vmatprep.subr.mxu0 0.0
  %913 = vmatpush1.xpose.msra.mxu0 0.0
  %914 = vmatprep.subr.mxu0 0.0
  %915 = vmatpush1.xpose.msra.mxu0 0.0
  %916 = vmatprep.subr.mxu0 0.0
  %917 = vmatpush1.xpose.msra.mxu0 0.0
  %918 = vmatprep.subr.mxu0 0.0
  %919 = vmatpush1.xpose.msra.mxu0 0.0
  %920 = vmatprep.subr.mxu0 0.0
  %921 = vmatpush1.xpose.msra.mxu0 0.0
  %922 = vmatprep.subr.mxu0 0.0
  %923 = vmatpush1.xpose.msra.mxu0 0.0
  %924 = vmatprep.subr.mxu0 0.0
  %925 = vmatpush1.xpose.msra.mxu0 0.0
  %926 = vmatprep.subr.mxu0 0.0
  %927 = vmatpush1.xpose.msra.mxu0 0.0
  %928 = vmatprep.subr.mxu0 0.0
  %929 = vmatpush1.xpose.msra.mxu0 0.0
  %930 = vmatprep.mubr.f32.mxu0 0.0
  %931 = vmatmul.mubr.f32.gmra.mrb[0].mxu0 %v858
  %v932 = vpop.f32.mrb[0].mxu0
  %v933 = vadd.f32 0.0, %v932
  %v934 = vpop.f32.mrb[0].mxu0
  %935 = vmatprep.mubr.f32.mxu0 0.0
  %936 = vmatmul.mubr.f32.gmra.mrb[0].mxu0 %v860
  %v937 = vpop.f32.mrb[0].mxu0
  %v938 = vadd.f32 0.0, %v937
  %v939 = vpop.f32.mrb[0].mxu0
  %940 = vdwg.mxu0
  %943 = vrot.lane.b32.xlu0 %v386, 80
  %v944 = vpop.permute.xlu0 %943
  %945 = vrot.lane.b32.xlu0 %v387, 80
  %v946 = vpop.permute.xlu0 %945
  %v947 = vsel %vm412, %v944, 0
  %v949 = vsel %vm412, %v946, 0
  %v951 = vsel %vm412, %v386, 0
  %v953 = vsel %vm412, %v387, 0
  %955 = vmatprep.subr.mxu0 0.0
  %956 = vmatpush1.xpose.msra.mxu0 %v951
  %957 = vmatprep.subr.mxu0 0.0
  %958 = vmatpush1.xpose.msra.mxu0 %v953
  %959 = vmatprep.subr.mxu0 0.0
  %960 = vmatpush1.xpose.msra.mxu0 0.0
  %961 = vmatprep.subr.mxu0 0.0
  %962 = vmatpush1.xpose.msra.mxu0 0.0
  %963 = vmatprep.subr.mxu0 0.0
  %964 = vmatpush1.xpose.msra.mxu0 0.0
  %965 = vmatprep.subr.mxu0 0.0
  %966 = vmatpush1.xpose.msra.mxu0 0.0
  %967 = vmatprep.subr.mxu0 0.0
  %968 = vmatpush1.xpose.msra.mxu0 0.0
  %969 = vmatprep.subr.mxu0 0.0
  %970 = vmatpush1.xpose.msra.mxu0 0.0
  %971 = vmatprep.subr.mxu0 0.0
  %972 = vmatpush1.xpose.msra.mxu0 0.0
  %973 = vmatprep.subr.mxu0 0.0
  %974 = vmatpush1.xpose.msra.mxu0 0.0
  %975 = vmatprep.subr.mxu0 0.0
  %976 = vmatpush1.xpose.msra.mxu0 0.0
  %977 = vmatprep.subr.mxu0 0.0
  %978 = vmatpush1.xpose.msra.mxu0 0.0
  %979 = vmatprep.subr.mxu0 0.0
  %980 = vmatpush1.xpose.msra.mxu0 0.0
  %981 = vmatprep.subr.mxu0 0.0
  %982 = vmatpush1.xpose.msra.mxu0 0.0
  %983 = vmatprep.subr.mxu0 0.0
  %984 = vmatpush1.xpose.msra.mxu0 0.0
  %985 = vmatprep.subr.mxu0 0.0
  %986 = vmatpush1.xpose.msra.mxu0 0.0
  %987 = vmatprep.subr.mxu0 0.0
  %988 = vmatpush1.xpose.msra.mxu0 0.0
  %989 = vmatprep.subr.mxu0 0.0
  %990 = vmatpush1.xpose.msra.mxu0 0.0
  %991 = vmatprep.subr.mxu0 0.0
  %992 = vmatpush1.xpose.msra.mxu0 0.0
  %993 = vmatprep.subr.mxu0 0.0
  %994 = vmatpush1.xpose.msra.mxu0 0.0
  %995 = vmatprep.subr.mxu0 0.0
  %996 = vmatpush1.xpose.msra.mxu0 0.0
  %997 = vmatprep.subr.mxu0 0.0
  %998 = vmatpush1.xpose.msra.mxu0 0.0
  %999 = vmatprep.subr.mxu0 0.0
  %1000 = vmatpush1.xpose.msra.mxu0 0.0
  %1001 = vmatprep.subr.mxu0 0.0
  %1002 = vmatpush1.xpose.msra.mxu0 0.0
  %1003 = vmatprep.subr.mxu0 0.0
  %1004 = vmatpush1.xpose.msra.mxu0 0.0
  %1005 = vmatprep.subr.mxu0 0.0
  %1006 = vmatpush1.xpose.msra.mxu0 0.0
  %1007 = vmatprep.subr.mxu0 0.0
  %1008 = vmatpush1.xpose.msra.mxu0 0.0
  %1009 = vmatprep.subr.mxu0 0.0
  %1010 = vmatpush1.xpose.msra.mxu0 0.0
  %1011 = vmatprep.subr.mxu0 0.0
  %1012 = vmatpush1.xpose.msra.mxu0 0.0
  %1013 = vmatprep.subr.mxu0 0.0
  %1014 = vmatpush1.xpose.msra.mxu0 0.0
  %1015 = vmatprep.subr.mxu0 0.0
  %1016 = vmatpush1.xpose.msra.mxu0 0.0
  %1017 = vmatprep.subr.mxu0 0.0
  %1018 = vmatpush1.xpose.msra.mxu0 0.0
  %1019 = vmatprep.mubr.f32.mxu0 0.0
  %1020 = vmatmul.mubr.f32.gmra.mrb[0].mxu0 %v947
  %v1021 = vpop.f32.mrb[0].mxu0
  %v1022 = vadd.f32 0.0, %v1021
  %v1023 = vpop.f32.mrb[0].mxu0
  %1024 = vmatprep.mubr.f32.mxu0 0.0
  %1025 = vmatmul.mubr.f32.gmra.mrb[0].mxu0 %v949
  %v1026 = vpop.f32.mrb[0].mxu0
  %v1027 = vadd.f32 0.0, %v1026
  %v1028 = vpop.f32.mrb[0].mxu0
  %1029 = vdwg.mxu0
  %1032 = vrot.lane.b32.xlu0 %v388, 80
  %v1033 = vpop.permute.xlu0 %1032
  %1034 = vrot.lane.b32.xlu0 %v389, 80
  %v1035 = vpop.permute.xlu0 %1034
  %v1036 = vsel %vm412, %v1033, 0
  %v1038 = vsel %vm412, %v1035, 0
  %v1040 = vsel %vm412, %v388, 0
  %v1042 = vsel %vm412, %v389, 0
  %1044 = vmatprep.subr.mxu0 0.0
  %1045 = vmatpush1.xpose.msra.mxu0 %v1040
  %1046 = vmatprep.subr.mxu0 0.0
  %1047 = vmatpush1.xpose.msra.mxu0 %v1042
  %1048 = vmatprep.subr.mxu0 0.0
  %1049 = vmatpush1.xpose.msra.mxu0 0.0
  %1050 = vmatprep.subr.mxu0 0.0
  %1051 = vmatpush1.xpose.msra.mxu0 0.0
  %1052 = vmatprep.subr.mxu0 0.0
  %1053 = vmatpush1.xpose.msra.mxu0 0.0
  %1054 = vmatprep.subr.mxu0 0.0
  %1055 = vmatpush1.xpose.msra.mxu0 0.0
  %1056 = vmatprep.subr.mxu0 0.0
  %1057 = vmatpush1.xpose.msra.mxu0 0.0
  %1058 = vmatprep.subr.mxu0 0.0
  %1059 = vmatpush1.xpose.msra.mxu0 0.0
  %1060 = vmatprep.subr.mxu0 0.0
  %1061 = vmatpush1.xpose.msra.mxu0 0.0
  %1062 = vmatprep.subr.mxu0 0.0
  %1063 = vmatpush1.xpose.msra.mxu0 0.0
  %1064 = vmatprep.subr.mxu0 0.0
  %1065 = vmatpush1.xpose.msra.mxu0 0.0
  %1066 = vmatprep.subr.mxu0 0.0
  %1067 = vmatpush1.xpose.msra.mxu0 0.0
  %1068 = vmatprep.subr.mxu0 0.0
  %1069 = vmatpush1.xpose.msra.mxu0 0.0
  %1070 = vmatprep.subr.mxu0 0.0
  %1071 = vmatpush1.xpose.msra.mxu0 0.0
  %1072 = vmatprep.subr.mxu0 0.0
  %1073 = vmatpush1.xpose.msra.mxu0 0.0
  %1074 = vmatprep.subr.mxu0 0.0
  %1075 = vmatpush1.xpose.msra.mxu0 0.0
  %1076 = vmatprep.subr.mxu0 0.0
  %1077 = vmatpush1.xpose.msra.mxu0 0.0
  %1078 = vmatprep.subr.mxu0 0.0
  %1079 = vmatpush1.xpose.msra.mxu0 0.0
  %1080 = vmatprep.subr.mxu0 0.0
  %1081 = vmatpush1.xpose.msra.mxu0 0.0
  %1082 = vmatprep.subr.mxu0 0.0
  %1083 = vmatpush1.xpose.msra.mxu0 0.0
  %1084 = vmatprep.subr.mxu0 0.0
  %1085 = vmatpush1.xpose.msra.mxu0 0.0
  %1086 = vmatprep.subr.mxu0 0.0
  %1087 = vmatpush1.xpose.msra.mxu0 0.0
  %1088 = vmatprep.subr.mxu0 0.0
  %1089 = vmatpush1.xpose.msra.mxu0 0.0
  %1090 = vmatprep.subr.mxu0 0.0
  %1091 = vmatpush1.xpose.msra.mxu0 0.0
  %1092 = vmatprep.subr.mxu0 0.0
  %1093 = vmatpush1.xpose.msra.mxu0 0.0
  %1094 = vmatprep.subr.mxu0 0.0
  %1095 = vmatpush1.xpose.msra.mxu0 0.0
  %1096 = vmatprep.subr.mxu0 0.0
  %1097 = vmatpush1.xpose.msra.mxu0 0.0
  %1098 = vmatprep.subr.mxu0 0.0
  %1099 = vmatpush1.xpose.msra.mxu0 0.0
  %1100 = vmatprep.subr.mxu0 0.0
  %1101 = vmatpush1.xpose.msra.mxu0 0.0
  %1102 = vmatprep.subr.mxu0 0.0
  %1103 = vmatpush1.xpose.msra.mxu0 0.0
  %1104 = vmatprep.subr.mxu0 0.0
  %1105 = vmatpush1.xpose.msra.mxu0 0.0
  %1106 = vmatprep.subr.mxu0 0.0
  %1107 = vmatpush1.xpose.msra.mxu0 0.0
  %1108 = vmatprep.mubr.f32.mxu0 0.0
  %1109 = vmatmul.mubr.f32.gmra.mrb[0].mxu0 %v1036
  %v1110 = vpop.f32.mrb[0].mxu0
  %v1111 = vadd.f32 0.0, %v1110
  %v1112 = vpop.f32.mrb[0].mxu0
  %1113 = vmatprep.mubr.f32.mxu0 0.0
  %1114 = vmatmul.mubr.f32.gmra.mrb[0].mxu0 %v1038
  %v1115 = vpop.f32.mrb[0].mxu0
  %v1116 = vadd.f32 0.0, %v1115
  %v1117 = vpop.f32.mrb[0].mxu0
  %1118 = vdwg.mxu0
  %1121 = vrot.lane.b32.xlu0 %v390, 80
  %v1122 = vpop.permute.xlu0 %1121
  %1123 = vrot.lane.b32.xlu0 %v391, 80
  %v1124 = vpop.permute.xlu0 %1123
  %v1125 = vsel %vm412, %v1122, 0
  %v1127 = vsel %vm412, %v1124, 0
  %v1129 = vsel %vm412, %v390, 0
  %v1131 = vsel %vm412, %v391, 0
  %1133 = vmatprep.subr.mxu0 0.0
  %1134 = vmatpush1.xpose.msra.mxu0 %v1129
  %1135 = vmatprep.subr.mxu0 0.0
  %1136 = vmatpush1.xpose.msra.mxu0 %v1131
  %1137 = vmatprep.subr.mxu0 0.0
  %1138 = vmatpush1.xpose.msra.mxu0 0.0
  %1139 = vmatprep.subr.mxu0 0.0
  %1140 = vmatpush1.xpose.msra.mxu0 0.0
  %1141 = vmatprep.subr.mxu0 0.0
  %1142 = vmatpush1.xpose.msra.mxu0 0.0
  %1143 = vmatprep.subr.mxu0 0.0
  %1144 = vmatpush1.xpose.msra.mxu0 0.0
  %1145 = vmatprep.subr.mxu0 0.0
  %1146 = vmatpush1.xpose.msra.mxu0 0.0
  %1147 = vmatprep.subr.mxu0 0.0
  %1148 = vmatpush1.xpose.msra.mxu0 0.0
  %1149 = vmatprep.subr.mxu0 0.0
  %1150 = vmatpush1.xpose.msra.mxu0 0.0
  %1151 = vmatprep.subr.mxu0 0.0
  %1152 = vmatpush1.xpose.msra.mxu0 0.0
  %1153 = vmatprep.subr.mxu0 0.0
  %1154 = vmatpush1.xpose.msra.mxu0 0.0
  %1155 = vmatprep.subr.mxu0 0.0
  %1156 = vmatpush1.xpose.msra.mxu0 0.0
  %1157 = vmatprep.subr.mxu0 0.0
  %1158 = vmatpush1.xpose.msra.mxu0 0.0
  %1159 = vmatprep.subr.mxu0 0.0
  %1160 = vmatpush1.xpose.msra.mxu0 0.0
  %1161 = vmatprep.subr.mxu0 0.0
  %1162 = vmatpush1.xpose.msra.mxu0 0.0
  %1163 = vmatprep.subr.mxu0 0.0
  %1164 = vmatpush1.xpose.msra.mxu0 0.0
  %1165 = vmatprep.subr.mxu0 0.0
  %1166 = vmatpush1.xpose.msra.mxu0 0.0
  %1167 = vmatprep.subr.mxu0 0.0
  %1168 = vmatpush1.xpose.msra.mxu0 0.0
  %1169 = vmatprep.subr.mxu0 0.0
  %1170 = vmatpush1.xpose.msra.mxu0 0.0
  %1171 = vmatprep.subr.mxu0 0.0
  %1172 = vmatpush1.xpose.msra.mxu0 0.0
  %1173 = vmatprep.subr.mxu0 0.0
  %1174 = vmatpush1.xpose.msra.mxu0 0.0
  %1175 = vmatprep.subr.mxu0 0.0
  %1176 = vmatpush1.xpose.msra.mxu0 0.0
  %1177 = vmatprep.subr.mxu0 0.0
  %1178 = vmatpush1.xpose.msra.mxu0 0.0
  %1179 = vmatprep.subr.mxu0 0.0
  %1180 = vmatpush1.xpose.msra.mxu0 0.0
  %1181 = vmatprep.subr.mxu0 0.0
  %1182 = vmatpush1.xpose.msra.mxu0 0.0
  %1183 = vmatprep.subr.mxu0 0.0
  %1184 = vmatpush1.xpose.msra.mxu0 0.0
  %1185 = vmatprep.subr.mxu0 0.0
  %1186 = vmatpush1.xpose.msra.mxu0 0.0
  %1187 = vmatprep.subr.mxu0 0.0
  %1188 = vmatpush1.xpose.msra.mxu0 0.0
  %1189 = vmatprep.subr.mxu0 0.0
  %1190 = vmatpush1.xpose.msra.mxu0 0.0
  %1191 = vmatprep.subr.mxu0 0.0
  %1192 = vmatpush1.xpose.msra.mxu0 0.0
  %1193 = vmatprep.subr.mxu0 0.0
  %1194 = vmatpush1.xpose.msra.mxu0 0.0
  %1195 = vmatprep.subr.mxu0 0.0
  %1196 = vmatpush1.xpose.msra.mxu0 0.0
  %1197 = vmatprep.mubr.f32.mxu0 0.0
  %1198 = vmatmul.mubr.f32.gmra.mrb[0].mxu0 %v1125
  %v1199 = vpop.f32.mrb[0].mxu0
  %v1200 = vadd.f32 0.0, %v1199
  %v1201 = vpop.f32.mrb[0].mxu0
  %1202 = vmatprep.mubr.f32.mxu0 0.0
  %1203 = vmatmul.mubr.f32.gmra.mrb[0].mxu0 %v1127
  %v1204 = vpop.f32.mrb[0].mxu0
  %v1205 = vadd.f32 0.0, %v1204
  %v1206 = vpop.f32.mrb[0].mxu0
  %1207 = vdwg.mxu0
  %1210 = vrot.lane.b32.xlu0 %v392, 80
  %v1211 = vpop.permute.xlu0 %1210
  %1212 = vrot.lane.b32.xlu0 %v393, 80
  %v1213 = vpop.permute.xlu0 %1212
  %v1214 = vsel %vm412, %v1211, 0
  %v1216 = vsel %vm412, %v1213, 0
  %v1218 = vsel %vm412, %v392, 0
  %v1220 = vsel %vm412, %v393, 0
  %1222 = vmatprep.subr.mxu0 0.0
  %1223 = vmatpush1.xpose.msra.mxu0 %v1218
  %1224 = vmatprep.subr.mxu0 0.0
  %1225 = vmatpush1.xpose.msra.mxu0 %v1220
  %1226 = vmatprep.subr.mxu0 0.0
  %1227 = vmatpush1.xpose.msra.mxu0 0.0
  %1228 = vmatprep.subr.mxu0 0.0
  %1229 = vmatpush1.xpose.msra.mxu0 0.0
  %1230 = vmatprep.subr.mxu0 0.0
  %1231 = vmatpush1.xpose.msra.mxu0 0.0
  %1232 = vmatprep.subr.mxu0 0.0
  %1233 = vmatpush1.xpose.msra.mxu0 0.0
  %1234 = vmatprep.subr.mxu0 0.0
  %1235 = vmatpush1.xpose.msra.mxu0 0.0
  %1236 = vmatprep.subr.mxu0 0.0
  %1237 = vmatpush1.xpose.msra.mxu0 0.0
  %1238 = vmatprep.subr.mxu0 0.0
  %1239 = vmatpush1.xpose.msra.mxu0 0.0
  %1240 = vmatprep.subr.mxu0 0.0
  %1241 = vmatpush1.xpose.msra.mxu0 0.0
  %1242 = vmatprep.subr.mxu0 0.0
  %1243 = vmatpush1.xpose.msra.mxu0 0.0
  %1244 = vmatprep.subr.mxu0 0.0
  %1245 = vmatpush1.xpose.msra.mxu0 0.0
  %1246 = vmatprep.subr.mxu0 0.0
  %1247 = vmatpush1.xpose.msra.mxu0 0.0
  %1248 = vmatprep.subr.mxu0 0.0
  %1249 = vmatpush1.xpose.msra.mxu0 0.0
  %1250 = vmatprep.subr.mxu0 0.0
  %1251 = vmatpush1.xpose.msra.mxu0 0.0
  %1252 = vmatprep.subr.mxu0 0.0
  %1253 = vmatpush1.xpose.msra.mxu0 0.0
  %1254 = vmatprep.subr.mxu0 0.0
  %1255 = vmatpush1.xpose.msra.mxu0 0.0
  %1256 = vmatprep.subr.mxu0 0.0
  %1257 = vmatpush1.xpose.msra.mxu0 0.0
  %1258 = vmatprep.subr.mxu0 0.0
  %1259 = vmatpush1.xpose.msra.mxu0 0.0
  %1260 = vmatprep.subr.mxu0 0.0
  %1261 = vmatpush1.xpose.msra.mxu0 0.0
  %1262 = vmatprep.subr.mxu0 0.0
  %1263 = vmatpush1.xpose.msra.mxu0 0.0
  %1264 = vmatprep.subr.mxu0 0.0
  %1265 = vmatpush1.xpose.msra.mxu0 0.0
  %1266 = vmatprep.subr.mxu0 0.0
  %1267 = vmatpush1.xpose.msra.mxu0 0.0
  %1268 = vmatprep.subr.mxu0 0.0
  %1269 = vmatpush1.xpose.msra.mxu0 0.0
  %1270 = vmatprep.subr.mxu0 0.0
  %1271 = vmatpush1.xpose.msra.mxu0 0.0
  %1272 = vmatprep.subr.mxu0 0.0
  %1273 = vmatpush1.xpose.msra.mxu0 0.0
  %1274 = vmatprep.subr.mxu0 0.0
  %1275 = vmatpush1.xpose.msra.mxu0 0.0
  %1276 = vmatprep.subr.mxu0 0.0
  %1277 = vmatpush1.xpose.msra.mxu0 0.0
  %1278 = vmatprep.subr.mxu0 0.0
  %1279 = vmatpush1.xpose.msra.mxu0 0.0
  %1280 = vmatprep.subr.mxu0 0.0
  %1281 = vmatpush1.xpose.msra.mxu0 0.0
  %1282 = vmatprep.subr.mxu0 0.0
  %1283 = vmatpush1.xpose.msra.mxu0 0.0
  %1284 = vmatprep.subr.mxu0 0.0
  %1285 = vmatpush1.xpose.msra.mxu0 0.0
  %1286 = vmatprep.mubr.f32.mxu0 0.0
  %1287 = vmatmul.mubr.f32.gmra.mrb[0].mxu0 %v1214
  %v1288 = vpop.f32.mrb[0].mxu0
  %v1289 = vadd.f32 0.0, %v1288
  %v1290 = vpop.f32.mrb[0].mxu0
  %1291 = vmatprep.mubr.f32.mxu0 0.0
  %1292 = vmatmul.mubr.f32.gmra.mrb[0].mxu0 %v1216
  %v1293 = vpop.f32.mrb[0].mxu0
  %v1294 = vadd.f32 0.0, %v1293
  %v1295 = vpop.f32.mrb[0].mxu0
  %1296 = vdwg.mxu0
  %1299 = vrot.lane.b32.xlu0 %v394, 80
  %v1300 = vpop.permute.xlu0 %1299
  %1301 = vrot.lane.b32.xlu0 %v395, 80
  %v1302 = vpop.permute.xlu0 %1301
  %v1303 = vsel %vm412, %v1300, 0
  %v1305 = vsel %vm412, %v1302, 0
  %v1307 = vsel %vm412, %v394, 0
  %v1309 = vsel %vm412, %v395, 0
  %1311 = vmatprep.subr.mxu0 0.0
  %1312 = vmatpush1.xpose.msra.mxu0 %v1307
  %1313 = vmatprep.subr.mxu0 0.0
  %1314 = vmatpush1.xpose.msra.mxu0 %v1309
  %1315 = vmatprep.subr.mxu0 0.0
  %1316 = vmatpush1.xpose.msra.mxu0 0.0
  %1317 = vmatprep.subr.mxu0 0.0
  %1318 = vmatpush1.xpose.msra.mxu0 0.0
  %1319 = vmatprep.subr.mxu0 0.0
  %1320 = vmatpush1.xpose.msra.mxu0 0.0
  %1321 = vmatprep.subr.mxu0 0.0
  %1322 = vmatpush1.xpose.msra.mxu0 0.0
  %1323 = vmatprep.subr.mxu0 0.0
  %1324 = vmatpush1.xpose.msra.mxu0 0.0
  %1325 = vmatprep.subr.mxu0 0.0
  %1326 = vmatpush1.xpose.msra.mxu0 0.0
  %1327 = vmatprep.subr.mxu0 0.0
  %1328 = vmatpush1.xpose.msra.mxu0 0.0
  %1329 = vmatprep.subr.mxu0 0.0
  %1330 = vmatpush1.xpose.msra.mxu0 0.0
  %1331 = vmatprep.subr.mxu0 0.0
  %1332 = vmatpush1.xpose.msra.mxu0 0.0
  %1333 = vmatprep.subr.mxu0 0.0
  %1334 = vmatpush1.xpose.msra.mxu0 0.0
  %1335 = vmatprep.subr.mxu0 0.0
  %1336 = vmatpush1.xpose.msra.mxu0 0.0
  %1337 = vmatprep.subr.mxu0 0.0
  %1338 = vmatpush1.xpose.msra.mxu0 0.0
  %1339 = vmatprep.subr.mxu0 0.0
  %1340 = vmatpush1.xpose.msra.mxu0 0.0
  %1341 = vmatprep.subr.mxu0 0.0
  %1342 = vmatpush1.xpose.msra.mxu0 0.0
  %1343 = vmatprep.subr.mxu0 0.0
  %1344 = vmatpush1.xpose.msra.mxu0 0.0
  %1345 = vmatprep.subr.mxu0 0.0
  %1346 = vmatpush1.xpose.msra.mxu0 0.0
  %1347 = vmatprep.subr.mxu0 0.0
  %1348 = vmatpush1.xpose.msra.mxu0 0.0
  %1349 = vmatprep.subr.mxu0 0.0
  %1350 = vmatpush1.xpose.msra.mxu0 0.0
  %1351 = vmatprep.subr.mxu0 0.0
  %1352 = vmatpush1.xpose.msra.mxu0 0.0
  %1353 = vmatprep.subr.mxu0 0.0
  %1354 = vmatpush1.xpose.msra.mxu0 0.0
  %1355 = vmatprep.subr.mxu0 0.0
  %1356 = vmatpush1.xpose.msra.mxu0 0.0
  %1357 = vmatprep.subr.mxu0 0.0
  %1358 = vmatpush1.xpose.msra.mxu0 0.0
  %1359 = vmatprep.subr.mxu0 0.0
  %1360 = vmatpush1.xpose.msra.mxu0 0.0
  %1361 = vmatprep.subr.mxu0 0.0
  %1362 = vmatpush1.xpose.msra.mxu0 0.0
  %1363 = vmatprep.subr.mxu0 0.0
  %1364 = vmatpush1.xpose.msra.mxu0 0.0
  %1365 = vmatprep.subr.mxu0 0.0
  %1366 = vmatpush1.xpose.msra.mxu0 0.0
  %1367 = vmatprep.subr.mxu0 0.0
  %1368 = vmatpush1.xpose.msra.mxu0 0.0
  %1369 = vmatprep.subr.mxu0 0.0
  %1370 = vmatpush1.xpose.msra.mxu0 0.0
  %1371 = vmatprep.subr.mxu0 0.0
  %1372 = vmatpush1.xpose.msra.mxu0 0.0
  %1373 = vmatprep.subr.mxu0 0.0
  %1374 = vmatpush1.xpose.msra.mxu0 0.0
  %1375 = vmatprep.mubr.f32.mxu0 0.0
  %1376 = vmatmul.mubr.f32.gmra.mrb[0].mxu0 %v1303
  %v1377 = vpop.f32.mrb[0].mxu0
  %v1378 = vadd.f32 0.0, %v1377
  %v1379 = vpop.f32.mrb[0].mxu0
  %1380 = vmatprep.mubr.f32.mxu0 0.0
  %1381 = vmatmul.mubr.f32.gmra.mrb[0].mxu0 %v1305
  %v1382 = vpop.f32.mrb[0].mxu0
  %v1383 = vadd.f32 0.0, %v1382
  %v1384 = vpop.f32.mrb[0].mxu0
  %1385 = vdwg.mxu0
  %1388 = vrot.lane.b32.xlu0 %v396, 80
  %v1389 = vpop.permute.xlu0 %1388
  %1390 = vrot.lane.b32.xlu0 %v397, 80
  %v1391 = vpop.permute.xlu0 %1390
  %v1392 = vsel %vm412, %v1389, 0
  %v1394 = vsel %vm412, %v1391, 0
  %v1396 = vsel %vm412, %v396, 0
  %v1398 = vsel %vm412, %v397, 0
  %1400 = vmatprep.subr.mxu0 0.0
  %1401 = vmatpush1.xpose.msra.mxu0 %v1396
  %1402 = vmatprep.subr.mxu0 0.0
  %1403 = vmatpush1.xpose.msra.mxu0 %v1398
  %1404 = vmatprep.subr.mxu0 0.0
  %1405 = vmatpush1.xpose.msra.mxu0 0.0
  %1406 = vmatprep.subr.mxu0 0.0
  %1407 = vmatpush1.xpose.msra.mxu0 0.0
  %1408 = vmatprep.subr.mxu0 0.0
  %1409 = vmatpush1.xpose.msra.mxu0 0.0
  %1410 = vmatprep.subr.mxu0 0.0
  %1411 = vmatpush1.xpose.msra.mxu0 0.0
  %1412 = vmatprep.subr.mxu0 0.0
  %1413 = vmatpush1.xpose.msra.mxu0 0.0
  %1414 = vmatprep.subr.mxu0 0.0
  %1415 = vmatpush1.xpose.msra.mxu0 0.0
  %1416 = vmatprep.subr.mxu0 0.0
  %1417 = vmatpush1.xpose.msra.mxu0 0.0
  %1418 = vmatprep.subr.mxu0 0.0
  %1419 = vmatpush1.xpose.msra.mxu0 0.0
  %1420 = vmatprep.subr.mxu0 0.0
  %1421 = vmatpush1.xpose.msra.mxu0 0.0
  %1422 = vmatprep.subr.mxu0 0.0
  %1423 = vmatpush1.xpose.msra.mxu0 0.0
  %1424 = vmatprep.subr.mxu0 0.0
  %1425 = vmatpush1.xpose.msra.mxu0 0.0
  %1426 = vmatprep.subr.mxu0 0.0
  %1427 = vmatpush1.xpose.msra.mxu0 0.0
  %1428 = vmatprep.subr.mxu0 0.0
  %1429 = vmatpush1.xpose.msra.mxu0 0.0
  %1430 = vmatprep.subr.mxu0 0.0
  %1431 = vmatpush1.xpose.msra.mxu0 0.0
  %1432 = vmatprep.subr.mxu0 0.0
  %1433 = vmatpush1.xpose.msra.mxu0 0.0
  %1434 = vmatprep.subr.mxu0 0.0
  %1435 = vmatpush1.xpose.msra.mxu0 0.0
  %1436 = vmatprep.subr.mxu0 0.0
  %1437 = vmatpush1.xpose.msra.mxu0 0.0
  %1438 = vmatprep.subr.mxu0 0.0
  %1439 = vmatpush1.xpose.msra.mxu0 0.0
  %1440 = vmatprep.subr.mxu0 0.0
  %1441 = vmatpush1.xpose.msra.mxu0 0.0
  %1442 = vmatprep.subr.mxu0 0.0
  %1443 = vmatpush1.xpose.msra.mxu0 0.0
  %1444 = vmatprep.subr.mxu0 0.0
  %1445 = vmatpush1.xpose.msra.mxu0 0.0
  %1446 = vmatprep.subr.mxu0 0.0
  %1447 = vmatpush1.xpose.msra.mxu0 0.0
  %1448 = vmatprep.subr.mxu0 0.0
  %1449 = vmatpush1.xpose.msra.mxu0 0.0
  %1450 = vmatprep.subr.mxu0 0.0
  %1451 = vmatpush1.xpose.msra.mxu0 0.0
  %1452 = vmatprep.subr.mxu0 0.0
  %1453 = vmatpush1.xpose.msra.mxu0 0.0
  %1454 = vmatprep.subr.mxu0 0.0
  %1455 = vmatpush1.xpose.msra.mxu0 0.0
  %1456 = vmatprep.subr.mxu0 0.0
  %1457 = vmatpush1.xpose.msra.mxu0 0.0
  %1458 = vmatprep.subr.mxu0 0.0
  %1459 = vmatpush1.xpose.msra.mxu0 0.0
  %1460 = vmatprep.subr.mxu0 0.0
  %1461 = vmatpush1.xpose.msra.mxu0 0.0
  %1462 = vmatprep.subr.mxu0 0.0
  %1463 = vmatpush1.xpose.msra.mxu0 0.0
  %1464 = vmatprep.mubr.f32.mxu0 0.0
  %1465 = vmatmul.mubr.f32.gmra.mrb[0].mxu0 %v1392
  %v1466 = vpop.f32.mrb[0].mxu0
  %v1467 = vadd.f32 0.0, %v1466
  %v1468 = vpop.f32.mrb[0].mxu0
  %1469 = vmatprep.mubr.f32.mxu0 0.0
  %1470 = vmatmul.mubr.f32.gmra.mrb[0].mxu0 %v1394
  %v1471 = vpop.f32.mrb[0].mxu0
  %v1472 = vadd.f32 0.0, %v1471
  %v1473 = vpop.f32.mrb[0].mxu0
  %1474 = vdwg.mxu0
  %1477 = vrot.lane.b32.xlu0 %v398, 80
  %v1478 = vpop.permute.xlu0 %1477
  %1479 = vrot.lane.b32.xlu0 %v399, 80
  %v1480 = vpop.permute.xlu0 %1479
  %v1481 = vsel %vm412, %v1478, 0
  %v1483 = vsel %vm412, %v1480, 0
  %v1485 = vsel %vm412, %v398, 0
  %v1487 = vsel %vm412, %v399, 0
  %1489 = vmatprep.subr.mxu0 0.0
  %1490 = vmatpush1.xpose.msra.mxu0 %v1485
  %1491 = vmatprep.subr.mxu0 0.0
  %1492 = vmatpush1.xpose.msra.mxu0 %v1487
  %1493 = vmatprep.subr.mxu0 0.0
  %1494 = vmatpush1.xpose.msra.mxu0 0.0
  %1495 = vmatprep.subr.mxu0 0.0
  %1496 = vmatpush1.xpose.msra.mxu0 0.0
  %1497 = vmatprep.subr.mxu0 0.0
  %1498 = vmatpush1.xpose.msra.mxu0 0.0
  %1499 = vmatprep.subr.mxu0 0.0
  %1500 = vmatpush1.xpose.msra.mxu0 0.0
  %1501 = vmatprep.subr.mxu0 0.0
  %1502 = vmatpush1.xpose.msra.mxu0 0.0
  %1503 = vmatprep.subr.mxu0 0.0
  %1504 = vmatpush1.xpose.msra.mxu0 0.0
  %1505 = vmatprep.subr.mxu0 0.0
  %1506 = vmatpush1.xpose.msra.mxu0 0.0
  %1507 = vmatprep.subr.mxu0 0.0
  %1508 = vmatpush1.xpose.msra.mxu0 0.0
  %1509 = vmatprep.subr.mxu0 0.0
  %1510 = vmatpush1.xpose.msra.mxu0 0.0
  %1511 = vmatprep.subr.mxu0 0.0
  %1512 = vmatpush1.xpose.msra.mxu0 0.0
  %1513 = vmatprep.subr.mxu0 0.0
  %1514 = vmatpush1.xpose.msra.mxu0 0.0
  %1515 = vmatprep.subr.mxu0 0.0
  %1516 = vmatpush1.xpose.msra.mxu0 0.0
  %1517 = vmatprep.subr.mxu0 0.0
  %1518 = vmatpush1.xpose.msra.mxu0 0.0
  %1519 = vmatprep.subr.mxu0 0.0
  %1520 = vmatpush1.xpose.msra.mxu0 0.0
  %1521 = vmatprep.subr.mxu0 0.0
  %1522 = vmatpush1.xpose.msra.mxu0 0.0
  %1523 = vmatprep.subr.mxu0 0.0
  %1524 = vmatpush1.xpose.msra.mxu0 0.0
  %1525 = vmatprep.subr.mxu0 0.0
  %1526 = vmatpush1.xpose.msra.mxu0 0.0
  %1527 = vmatprep.subr.mxu0 0.0
  %1528 = vmatpush1.xpose.msra.mxu0 0.0
  %1529 = vmatprep.subr.mxu0 0.0
  %1530 = vmatpush1.xpose.msra.mxu0 0.0
  %1531 = vmatprep.subr.mxu0 0.0
  %1532 = vmatpush1.xpose.msra.mxu0 0.0
  %1533 = vmatprep.subr.mxu0 0.0
  %1534 = vmatpush1.xpose.msra.mxu0 0.0
  %1535 = vmatprep.subr.mxu0 0.0
  %1536 = vmatpush1.xpose.msra.mxu0 0.0
  %1537 = vmatprep.subr.mxu0 0.0
  %1538 = vmatpush1.xpose.msra.mxu0 0.0
  %1539 = vmatprep.subr.mxu0 0.0
  %1540 = vmatpush1.xpose.msra.mxu0 0.0
  %1541 = vmatprep.subr.mxu0 0.0
  %1542 = vmatpush1.xpose.msra.mxu0 0.0
  %1543 = vmatprep.subr.mxu0 0.0
  %1544 = vmatpush1.xpose.msra.mxu0 0.0
  %1545 = vmatprep.subr.mxu0 0.0
  %1546 = vmatpush1.xpose.msra.mxu0 0.0
  %1547 = vmatprep.subr.mxu0 0.0
  %1548 = vmatpush1.xpose.msra.mxu0 0.0
  %1549 = vmatprep.subr.mxu0 0.0
  %1550 = vmatpush1.xpose.msra.mxu0 0.0
  %1551 = vmatprep.subr.mxu0 0.0
  %1552 = vmatpush1.xpose.msra.mxu0 0.0
  %1553 = vmatprep.mubr.f32.mxu0 0.0
  %1554 = vmatmul.mubr.f32.gmra.mrb[0].mxu0 %v1481
  %v1555 = vpop.f32.mrb[0].mxu0
  %v1556 = vadd.f32 0.0, %v1555
  %v1557 = vpop.f32.mrb[0].mxu0
  %1558 = vmatprep.mubr.f32.mxu0 0.0
  %1559 = vmatmul.mubr.f32.gmra.mrb[0].mxu0 %v1483
  %v1560 = vpop.f32.mrb[0].mxu0
  %v1561 = vadd.f32 0.0, %v1560
  %v1562 = vpop.f32.mrb[0].mxu0
  %1563 = vdwg.mxu0
  %1566 = vrot.lane.b32.xlu0 %v400, 80
  %v1567 = vpop.permute.xlu0 %1566
  %1568 = vrot.lane.b32.xlu0 %v401, 80
  %v1569 = vpop.permute.xlu0 %1568
  %v1570 = vsel %vm412, %v1567, 0
  %v1572 = vsel %vm412, %v1569, 0
  %v1574 = vsel %vm412, %v400, 0
  %v1576 = vsel %vm412, %v401, 0
  %1578 = vmatprep.subr.mxu0 0.0
  %1579 = vmatpush1.xpose.msra.mxu0 %v1574
  %1580 = vmatprep.subr.mxu0 0.0
  %1581 = vmatpush1.xpose.msra.mxu0 %v1576
  %1582 = vmatprep.subr.mxu0 0.0
  %1583 = vmatpush1.xpose.msra.mxu0 0.0
  %1584 = vmatprep.subr.mxu0 0.0
  %1585 = vmatpush1.xpose.msra.mxu0 0.0
  %1586 = vmatprep.subr.mxu0 0.0
  %1587 = vmatpush1.xpose.msra.mxu0 0.0
  %1588 = vmatprep.subr.mxu0 0.0
  %1589 = vmatpush1.xpose.msra.mxu0 0.0
  %1590 = vmatprep.subr.mxu0 0.0
  %1591 = vmatpush1.xpose.msra.mxu0 0.0
  %1592 = vmatprep.subr.mxu0 0.0
  %1593 = vmatpush1.xpose.msra.mxu0 0.0
  %1594 = vmatprep.subr.mxu0 0.0
  %1595 = vmatpush1.xpose.msra.mxu0 0.0
  %1596 = vmatprep.subr.mxu0 0.0
  %1597 = vmatpush1.xpose.msra.mxu0 0.0
  %1598 = vmatprep.subr.mxu0 0.0
  %1599 = vmatpush1.xpose.msra.mxu0 0.0
  %1600 = vmatprep.subr.mxu0 0.0
  %1601 = vmatpush1.xpose.msra.mxu0 0.0
  %1602 = vmatprep.subr.mxu0 0.0
  %1603 = vmatpush1.xpose.msra.mxu0 0.0
  %1604 = vmatprep.subr.mxu0 0.0
  %1605 = vmatpush1.xpose.msra.mxu0 0.0
  %1606 = vmatprep.subr.mxu0 0.0
  %1607 = vmatpush1.xpose.msra.mxu0 0.0
  %1608 = vmatprep.subr.mxu0 0.0
  %1609 = vmatpush1.xpose.msra.mxu0 0.0
  %1610 = vmatprep.subr.mxu0 0.0
  %1611 = vmatpush1.xpose.msra.mxu0 0.0
  %1612 = vmatprep.subr.mxu0 0.0
  %1613 = vmatpush1.xpose.msra.mxu0 0.0
  %1614 = vmatprep.subr.mxu0 0.0
  %1615 = vmatpush1.xpose.msra.mxu0 0.0
  %1616 = vmatprep.subr.mxu0 0.0
  %1617 = vmatpush1.xpose.msra.mxu0 0.0
  %1618 = vmatprep.subr.mxu0 0.0
  %1619 = vmatpush1.xpose.msra.mxu0 0.0
  %1620 = vmatprep.subr.mxu0 0.0
  %1621 = vmatpush1.xpose.msra.mxu0 0.0
  %1622 = vmatprep.subr.mxu0 0.0
  %1623 = vmatpush1.xpose.msra.mxu0 0.0
  %1624 = vmatprep.subr.mxu0 0.0
  %1625 = vmatpush1.xpose.msra.mxu0 0.0
  %1626 = vmatprep.subr.mxu0 0.0
  %1627 = vmatpush1.xpose.msra.mxu0 0.0
  %1628 = vmatprep.subr.mxu0 0.0
  %1629 = vmatpush1.xpose.msra.mxu0 0.0
  %1630 = vmatprep.subr.mxu0 0.0
  %1631 = vmatpush1.xpose.msra.mxu0 0.0
  %1632 = vmatprep.subr.mxu0 0.0
  %1633 = vmatpush1.xpose.msra.mxu0 0.0
  %1634 = vmatprep.subr.mxu0 0.0
  %1635 = vmatpush1.xpose.msra.mxu0 0.0
  %1636 = vmatprep.subr.mxu0 0.0
  %1637 = vmatpush1.xpose.msra.mxu0 0.0
  %1638 = vmatprep.subr.mxu0 0.0
  %1639 = vmatpush1.xpose.msra.mxu0 0.0
  %1640 = vmatprep.subr.mxu0 0.0
  %1641 = vmatpush1.xpose.msra.mxu0 0.0
  %1642 = vmatprep.mubr.f32.mxu0 0.0
  %1643 = vmatmul.mubr.f32.gmra.mrb[0].mxu0 %v1570
  %v1644 = vpop.f32.mrb[0].mxu0
  %v1645 = vadd.f32 0.0, %v1644
  %v1646 = vpop.f32.mrb[0].mxu0
  %1647 = vmatprep.mubr.f32.mxu0 0.0
  %1648 = vmatmul.mubr.f32.gmra.mrb[0].mxu0 %v1572
  %v1649 = vpop.f32.mrb[0].mxu0
  %v1650 = vadd.f32 0.0, %v1649
  %v1651 = vpop.f32.mrb[0].mxu0
  %1652 = vdwg.mxu0
  %1655 = vrot.lane.b32.xlu0 %v402, 80
  %v1656 = vpop.permute.xlu0 %1655
  %1657 = vrot.lane.b32.xlu0 %v403, 80
  %v1658 = vpop.permute.xlu0 %1657
  %v1659 = vsel %vm412, %v1656, 0
  %v1661 = vsel %vm412, %v1658, 0
  %v1663 = vsel %vm412, %v402, 0
  %v1665 = vsel %vm412, %v403, 0
  %1667 = vmatprep.subr.mxu0 0.0
  %1668 = vmatpush1.xpose.msra.mxu0 %v1663
  %1669 = vmatprep.subr.mxu0 0.0
  %1670 = vmatpush1.xpose.msra.mxu0 %v1665
  %1671 = vmatprep.subr.mxu0 0.0
  %1672 = vmatpush1.xpose.msra.mxu0 0.0
  %1673 = vmatprep.subr.mxu0 0.0
  %1674 = vmatpush1.xpose.msra.mxu0 0.0
  %1675 = vmatprep.subr.mxu0 0.0
  %1676 = vmatpush1.xpose.msra.mxu0 0.0
  %1677 = vmatprep.subr.mxu0 0.0
  %1678 = vmatpush1.xpose.msra.mxu0 0.0
  %1679 = vmatprep.subr.mxu0 0.0
  %1680 = vmatpush1.xpose.msra.mxu0 0.0
  %1681 = vmatprep.subr.mxu0 0.0
  %1682 = vmatpush1.xpose.msra.mxu0 0.0
  %1683 = vmatprep.subr.mxu0 0.0
  %1684 = vmatpush1.xpose.msra.mxu0 0.0
  %1685 = vmatprep.subr.mxu0 0.0
  %1686 = vmatpush1.xpose.msra.mxu0 0.0
  %1687 = vmatprep.subr.mxu0 0.0
  %1688 = vmatpush1.xpose.msra.mxu0 0.0
  %1689 = vmatprep.subr.mxu0 0.0
  %1690 = vmatpush1.xpose.msra.mxu0 0.0
  %1691 = vmatprep.subr.mxu0 0.0
  %1692 = vmatpush1.xpose.msra.mxu0 0.0
  %1693 = vmatprep.subr.mxu0 0.0
  %1694 = vmatpush1.xpose.msra.mxu0 0.0
  %1695 = vmatprep.subr.mxu0 0.0
  %1696 = vmatpush1.xpose.msra.mxu0 0.0
  %1697 = vmatprep.subr.mxu0 0.0
  %1698 = vmatpush1.xpose.msra.mxu0 0.0
  %1699 = vmatprep.subr.mxu0 0.0
  %1700 = vmatpush1.xpose.msra.mxu0 0.0
  %1701 = vmatprep.subr.mxu0 0.0
  %1702 = vmatpush1.xpose.msra.mxu0 0.0
  %1703 = vmatprep.subr.mxu0 0.0
  %1704 = vmatpush1.xpose.msra.mxu0 0.0
  %1705 = vmatprep.subr.mxu0 0.0
  %1706 = vmatpush1.xpose.msra.mxu0 0.0
  %1707 = vmatprep.subr.mxu0 0.0
  %1708 = vmatpush1.xpose.msra.mxu0 0.0
  %1709 = vmatprep.subr.mxu0 0.0
  %1710 = vmatpush1.xpose.msra.mxu0 0.0
  %1711 = vmatprep.subr.mxu0 0.0
  %1712 = vmatpush1.xpose.msra.mxu0 0.0
  %1713 = vmatprep.subr.mxu0 0.0
  %1714 = vmatpush1.xpose.msra.mxu0 0.0
  %1715 = vmatprep.subr.mxu0 0.0
  %1716 = vmatpush1.xpose.msra.mxu0 0.0
  %1717 = vmatprep.subr.mxu0 0.0
  %1718 = vmatpush1.xpose.msra.mxu0 0.0
  %1719 = vmatprep.subr.mxu0 0.0
  %1720 = vmatpush1.xpose.msra.mxu0 0.0
  %1721 = vmatprep.subr.mxu0 0.0
  %1722 = vmatpush1.xpose.msra.mxu0 0.0
  %1723 = vmatprep.subr.mxu0 0.0
  %1724 = vmatpush1.xpose.msra.mxu0 0.0
  %1725 = vmatprep.subr.mxu0 0.0
  %1726 = vmatpush1.xpose.msra.mxu0 0.0
  %1727 = vmatprep.subr.mxu0 0.0
  %1728 = vmatpush1.xpose.msra.mxu0 0.0
  %1729 = vmatprep.subr.mxu0 0.0
  %1730 = vmatpush1.xpose.msra.mxu0 0.0
  %1731 = vmatprep.mubr.f32.mxu0 0.0
  %1732 = vmatmul.mubr.f32.gmra.mrb[0].mxu0 %v1659
  %v1733 = vpop.f32.mrb[0].mxu0
  %v1734 = vadd.f32 0.0, %v1733
  %v1735 = vpop.f32.mrb[0].mxu0
  %1736 = vmatprep.mubr.f32.mxu0 0.0
  %1737 = vmatmul.mubr.f32.gmra.mrb[0].mxu0 %v1661
  %v1738 = vpop.f32.mrb[0].mxu0
  %v1739 = vadd.f32 0.0, %v1738
  %v1740 = vpop.f32.mrb[0].mxu0
  %1741 = vdwg.mxu0
  %1744 = vrot.lane.b32.xlu0 %v404, 80
  %v1745 = vpop.permute.xlu0 %1744
  %1746 = vrot.lane.b32.xlu0 %v405, 80
  %v1747 = vpop.permute.xlu0 %1746
  %v1748 = vsel %vm412, %v1745, 0
  %v1750 = vsel %vm412, %v1747, 0
  %v1752 = vsel %vm412, %v404, 0
  %v1754 = vsel %vm412, %v405, 0
  %1756 = vmatprep.subr.mxu0 0.0
  %1757 = vmatpush1.xpose.msra.mxu0 %v1752
  %1758 = vmatprep.subr.mxu0 0.0
  %1759 = vmatpush1.xpose.msra.mxu0 %v1754
  %1760 = vmatprep.subr.mxu0 0.0
  %1761 = vmatpush1.xpose.msra.mxu0 0.0
  %1762 = vmatprep.subr.mxu0 0.0
  %1763 = vmatpush1.xpose.msra.mxu0 0.0
  %1764 = vmatprep.subr.mxu0 0.0
  %1765 = vmatpush1.xpose.msra.mxu0 0.0
  %1766 = vmatprep.subr.mxu0 0.0
  %1767 = vmatpush1.xpose.msra.mxu0 0.0
  %1768 = vmatprep.subr.mxu0 0.0
  %1769 = vmatpush1.xpose.msra.mxu0 0.0
  %1770 = vmatprep.subr.mxu0 0.0
  %1771 = vmatpush1.xpose.msra.mxu0 0.0
  %1772 = vmatprep.subr.mxu0 0.0
  %1773 = vmatpush1.xpose.msra.mxu0 0.0
  %1774 = vmatprep.subr.mxu0 0.0
  %1775 = vmatpush1.xpose.msra.mxu0 0.0
  %1776 = vmatprep.subr.mxu0 0.0
  %1777 = vmatpush1.xpose.msra.mxu0 0.0
  %1778 = vmatprep.subr.mxu0 0.0
  %1779 = vmatpush1.xpose.msra.mxu0 0.0
  %1780 = vmatprep.subr.mxu0 0.0
  %1781 = vmatpush1.xpose.msra.mxu0 0.0
  %1782 = vmatprep.subr.mxu0 0.0
  %1783 = vmatpush1.xpose.msra.mxu0 0.0
  %1784 = vmatprep.subr.mxu0 0.0
  %1785 = vmatpush1.xpose.msra.mxu0 0.0
  %1786 = vmatprep.subr.mxu0 0.0
  %1787 = vmatpush1.xpose.msra.mxu0 0.0
  %1788 = vmatprep.subr.mxu0 0.0
  %1789 = vmatpush1.xpose.msra.mxu0 0.0
  %1790 = vmatprep.subr.mxu0 0.0
  %1791 = vmatpush1.xpose.msra.mxu0 0.0
  %1792 = vmatprep.subr.mxu0 0.0
  %1793 = vmatpush1.xpose.msra.mxu0 0.0
  %1794 = vmatprep.subr.mxu0 0.0
  %1795 = vmatpush1.xpose.msra.mxu0 0.0
  %1796 = vmatprep.subr.mxu0 0.0
  %1797 = vmatpush1.xpose.msra.mxu0 0.0
  %1798 = vmatprep.subr.mxu0 0.0
  %1799 = vmatpush1.xpose.msra.mxu0 0.0
  %1800 = vmatprep.subr.mxu0 0.0
  %1801 = vmatpush1.xpose.msra.mxu0 0.0
  %1802 = vmatprep.subr.mxu0 0.0
  %1803 = vmatpush1.xpose.msra.mxu0 0.0
  %1804 = vmatprep.subr.mxu0 0.0
  %1805 = vmatpush1.xpose.msra.mxu0 0.0
  %1806 = vmatprep.subr.mxu0 0.0
  %1807 = vmatpush1.xpose.msra.mxu0 0.0
  %1808 = vmatprep.subr.mxu0 0.0
  %1809 = vmatpush1.xpose.msra.mxu0 0.0
  %1810 = vmatprep.subr.mxu0 0.0
  %1811 = vmatpush1.xpose.msra.mxu0 0.0
  %1812 = vmatprep.subr.mxu0 0.0
  %1813 = vmatpush1.xpose.msra.mxu0 0.0
  %1814 = vmatprep.subr.mxu0 0.0
  %1815 = vmatpush1.xpose.msra.mxu0 0.0
  %1816 = vmatprep.subr.mxu0 0.0
  %1817 = vmatpush1.xpose.msra.mxu0 0.0
  %1818 = vmatprep.subr.mxu0 0.0
  %1819 = vmatpush1.xpose.msra.mxu0 0.0
  %1820 = vmatprep.mubr.f32.mxu0 0.0
  %1821 = vmatmul.mubr.f32.gmra.mrb[0].mxu0 %v1748
  %v1822 = vpop.f32.mrb[0].mxu0
  %v1823 = vadd.f32 0.0, %v1822
  %v1824 = vpop.f32.mrb[0].mxu0
  %1825 = vmatprep.mubr.f32.mxu0 0.0
  %1826 = vmatmul.mubr.f32.gmra.mrb[0].mxu0 %v1750
  %v1827 = vpop.f32.mrb[0].mxu0
  %v1828 = vadd.f32 0.0, %v1827
  %v1829 = vpop.f32.mrb[0].mxu0
  %1830 = vdwg.mxu0
  %v1831 = vsel %vm412, %v488, -inf
  %1832 = vmax.xlane.f32.xlu0 %v1831
  %v1833 = vpop.xlane.xlu0 %1832
  %v1834 = vsel %vm412, %v493, -inf
  %1835 = vmax.xlane.f32.xlu0 %v1834
  %v1836 = vpop.xlane.xlu0 %1835
  %v1837 = vsel %vm412, %v577, -inf
  %1838 = vmax.xlane.f32.xlu0 %v1837
  %v1839 = vpop.xlane.xlu0 %1838
  %v1840 = vsel %vm412, %v582, -inf
  %1841 = vmax.xlane.f32.xlu0 %v1840
  %v1842 = vpop.xlane.xlu0 %1841
  %v1843 = vsel %vm412, %v666, -inf
  %1844 = vmax.xlane.f32.xlu0 %v1843
  %v1845 = vpop.xlane.xlu0 %1844
  %v1846 = vsel %vm412, %v671, -inf
  %1847 = vmax.xlane.f32.xlu0 %v1846
  %v1848 = vpop.xlane.xlu0 %1847
  %v1849 = vsel %vm412, %v755, -inf
  %1850 = vmax.xlane.f32.xlu0 %v1849
  %v1851 = vpop.xlane.xlu0 %1850
  %v1852 = vsel %vm412, %v760, -inf
  %1853 = vmax.xlane.f32.xlu0 %v1852
  %v1854 = vpop.xlane.xlu0 %1853
  %v1855 = vsel %vm412, %v844, -inf
  %1856 = vmax.xlane.f32.xlu0 %v1855
  %v1857 = vpop.xlane.xlu0 %1856
  %v1858 = vsel %vm412, %v849, -inf
  %1859 = vmax.xlane.f32.xlu0 %v1858
  %v1860 = vpop.xlane.xlu0 %1859
  %v1861 = vsel %vm412, %v933, -inf
  %1862 = vmax.xlane.f32.xlu0 %v1861
  %v1863 = vpop.xlane.xlu0 %1862
  %v1864 = vsel %vm412, %v938, -inf
  %1865 = vmax.xlane.f32.xlu0 %v1864
  %v1866 = vpop.xlane.xlu0 %1865
  %v1867 = vsel %vm412, %v1022, -inf
  %1868 = vmax.xlane.f32.xlu0 %v1867
  %v1869 = vpop.xlane.xlu0 %1868
  %v1870 = vsel %vm412, %v1027, -inf
  %1871 = vmax.xlane.f32.xlu0 %v1870
  %v1872 = vpop.xlane.xlu0 %1871
  %v1873 = vsel %vm412, %v1111, -inf
  %1874 = vmax.xlane.f32.xlu0 %v1873
  %v1875 = vpop.xlane.xlu0 %1874
  %v1876 = vsel %vm412, %v1116, -inf
  %1877 = vmax.xlane.f32.xlu0 %v1876
  %v1878 = vpop.xlane.xlu0 %1877
  %v1879 = vsel %vm412, %v1200, -inf
  %1880 = vmax.xlane.f32.xlu0 %v1879
  %v1881 = vpop.xlane.xlu0 %1880
  %v1882 = vsel %vm412, %v1205, -inf
  %1883 = vmax.xlane.f32.xlu0 %v1882
  %v1884 = vpop.xlane.xlu0 %1883
  %v1885 = vsel %vm412, %v1289, -inf
  %1886 = vmax.xlane.f32.xlu0 %v1885
  %v1887 = vpop.xlane.xlu0 %1886
  %v1888 = vsel %vm412, %v1294, -inf
  %1889 = vmax.xlane.f32.xlu0 %v1888
  %v1890 = vpop.xlane.xlu0 %1889
  %v1891 = vsel %vm412, %v1378, -inf
  %1892 = vmax.xlane.f32.xlu0 %v1891
  %v1893 = vpop.xlane.xlu0 %1892
  %v1894 = vsel %vm412, %v1383, -inf
  %1895 = vmax.xlane.f32.xlu0 %v1894
  %v1896 = vpop.xlane.xlu0 %1895
  %v1897 = vsel %vm412, %v1467, -inf
  %1898 = vmax.xlane.f32.xlu0 %v1897
  %v1899 = vpop.xlane.xlu0 %1898
  %v1900 = vsel %vm412, %v1472, -inf
  %1901 = vmax.xlane.f32.xlu0 %v1900
  %v1902 = vpop.xlane.xlu0 %1901
  %v1903 = vsel %vm412, %v1556, -inf
  %1904 = vmax.xlane.f32.xlu0 %v1903
  %v1905 = vpop.xlane.xlu0 %1904
  %v1906 = vsel %vm412, %v1561, -inf
  %1907 = vmax.xlane.f32.xlu0 %v1906
  %v1908 = vpop.xlane.xlu0 %1907
  %v1909 = vsel %vm412, %v1645, -inf
  %1910 = vmax.xlane.f32.xlu0 %v1909
  %v1911 = vpop.xlane.xlu0 %1910
  %v1912 = vsel %vm412, %v1650, -inf
  %1913 = vmax.xlane.f32.xlu0 %v1912
  %v1914 = vpop.xlane.xlu0 %1913
  %v1915 = vsel %vm412, %v1734, -inf
  %1916 = vmax.xlane.f32.xlu0 %v1915
  %v1917 = vpop.xlane.xlu0 %1916
  %v1918 = vsel %vm412, %v1739, -inf
  %1919 = vmax.xlane.f32.xlu0 %v1918
  %v1920 = vpop.xlane.xlu0 %1919
  %v1921 = vsel %vm412, %v1823, -inf
  %1922 = vmax.xlane.f32.xlu0 %v1921
  %v1923 = vpop.xlane.xlu0 %1922
  %v1924 = vsel %vm412, %v1828, -inf
  %1925 = vmax.xlane.f32.xlu0 %v1924
  %v1926 = vpop.xlane.xlu0 %1925
  %v1927 = vsub.f32 %v488, %v1833
  %v1928 = vsub.f32 %v493, %v1836
  %v1929 = vsub.f32 %v577, %v1839
  %v1930 = vsub.f32 %v582, %v1842
  %v1931 = vsub.f32 %v666, %v1845
  %v1932 = vsub.f32 %v671, %v1848
  %v1933 = vsub.f32 %v755, %v1851
  %v1934 = vsub.f32 %v760, %v1854
  %v1935 = vsub.f32 %v844, %v1857
  %v1936 = vsub.f32 %v849, %v1860
  %v1937 = vsub.f32 %v933, %v1863
  %v1938 = vsub.f32 %v938, %v1866
  %v1939 = vsub.f32 %v1022, %v1869
  %v1940 = vsub.f32 %v1027, %v1872
  %v1941 = vsub.f32 %v1111, %v1875
  %v1942 = vsub.f32 %v1116, %v1878
  %v1943 = vsub.f32 %v1200, %v1881
  %v1944 = vsub.f32 %v1205, %v1884
  %v1945 = vsub.f32 %v1289, %v1887
  %v1946 = vsub.f32 %v1294, %v1890
  %v1947 = vsub.f32 %v1378, %v1893
  %v1948 = vsub.f32 %v1383, %v1896
  %v1949 = vsub.f32 %v1467, %v1899
  %v1950 = vsub.f32 %v1472, %v1902
  %v1951 = vsub.f32 %v1556, %v1905
  %v1952 = vsub.f32 %v1561, %v1908
  %v1953 = vsub.f32 %v1645, %v1911
  %v1954 = vsub.f32 %v1650, %v1914
  %v1955 = vsub.f32 %v1734, %v1917
  %v1956 = vsub.f32 %v1739, %v1920
  %v1957 = vsub.f32 %v1823, %v1923
  %v1958 = vsub.f32 %v1828, %v1926
  %v1959 = vmul.f32 %v1927, 1.442695
  %v1960 = vpow.pop %v1959
  %v1961 = vmul.f32 %v1928, 1.442695
  %v1962 = vpow.pop %v1961
  %v1963 = vmul.f32 %v1929, 1.442695
  %v1964 = vpow.pop %v1963
  %v1965 = vmul.f32 %v1930, 1.442695
  %v1966 = vpow.pop %v1965
  %v1967 = vmul.f32 %v1931, 1.442695
  %v1968 = vpow.pop %v1967
  %v1969 = vmul.f32 %v1932, 1.442695
  %v1970 = vpow.pop %v1969
  %v1971 = vmul.f32 %v1933, 1.442695
  %v1972 = vpow.pop %v1971
  %v1973 = vmul.f32 %v1934, 1.442695
  %v1974 = vpow.pop %v1973
  %v1975 = vmul.f32 %v1935, 1.442695
  %v1976 = vpow.pop %v1975
  %v1977 = vmul.f32 %v1936, 1.442695
  %v1978 = vpow.pop %v1977
  %v1979 = vmul.f32 %v1937, 1.442695
  %v1980 = vpow.pop %v1979
  %v1981 = vmul.f32 %v1938, 1.442695
  %v1982 = vpow.pop %v1981
  %v1983 = vmul.f32 %v1939, 1.442695
  %v1984 = vpow.pop %v1983
  %v1985 = vmul.f32 %v1940, 1.442695
  %v1986 = vpow.pop %v1985
  %v1987 = vmul.f32 %v1941, 1.442695
  %v1988 = vpow.pop %v1987
  %v1989 = vmul.f32 %v1942, 1.442695
  %v1990 = vpow.pop %v1989
  %v1991 = vmul.f32 %v1943, 1.442695
  %v1992 = vpow.pop %v1991
  %v1993 = vmul.f32 %v1944, 1.442695
  %v1994 = vpow.pop %v1993
  %v1995 = vmul.f32 %v1945, 1.442695
  %v1996 = vpow.pop %v1995
  %v1997 = vmul.f32 %v1946, 1.442695
  %v1998 = vpow.pop %v1997
  %v1999 = vmul.f32 %v1947, 1.442695
  %v2000 = vpow.pop %v1999
  %v2001 = vmul.f32 %v1948, 1.442695
  %v2002 = vpow.pop %v2001
  %v2003 = vmul.f32 %v1949, 1.442695
  %v2004 = vpow.pop %v2003
  %v2005 = vmul.f32 %v1950, 1.442695
  %v2006 = vpow.pop %v2005
  %v2007 = vmul.f32 %v1951, 1.442695
  %v2008 = vpow.pop %v2007
  %v2009 = vmul.f32 %v1952, 1.442695
  %v2010 = vpow.pop %v2009
  %v2011 = vmul.f32 %v1953, 1.442695
  %v2012 = vpow.pop %v2011
  %v2013 = vmul.f32 %v1954, 1.442695
  %v2014 = vpow.pop %v2013
  %v2015 = vmul.f32 %v1955, 1.442695
  %v2016 = vpow.pop %v2015
  %v2017 = vmul.f32 %v1956, 1.442695
  %v2018 = vpow.pop %v2017
  %v2019 = vmul.f32 %v1957, 1.442695
  %v2020 = vpow.pop %v2019
  %v2021 = vmul.f32 %v1958, 1.442695
  %v2022 = vpow.pop %v2021
  %v2023 = vsel %vm412, %v1960, 0.0
  %2024 = vadd.xlane.f32.xlu0 %v2023
  %v2025 = vpop.xlane.xlu0 %2024
  %v2026 = vsel %vm412, %v1962, 0.0
  %2027 = vadd.xlane.f32.xlu0 %v2026
  %v2028 = vpop.xlane.xlu0 %2027
  %v2029 = vsel %vm412, %v1964, 0.0
  %2030 = vadd.xlane.f32.xlu0 %v2029
  %v2031 = vpop.xlane.xlu0 %2030
  %v2032 = vsel %vm412, %v1966, 0.0
  %2033 = vadd.xlane.f32.xlu0 %v2032
  %v2034 = vpop.xlane.xlu0 %2033
  %v2035 = vsel %vm412, %v1968, 0.0
  %2036 = vadd.xlane.f32.xlu0 %v2035
  %v2037 = vpop.xlane.xlu0 %2036
  %v2038 = vsel %vm412, %v1970, 0.0
  %2039 = vadd.xlane.f32.xlu0 %v2038
  %v2040 = vpop.xlane.xlu0 %2039
  %v2041 = vsel %vm412, %v1972, 0.0
  %2042 = vadd.xlane.f32.xlu0 %v2041
  %v2043 = vpop.xlane.xlu0 %2042
  %v2044 = vsel %vm412, %v1974, 0.0
  %2045 = vadd.xlane.f32.xlu0 %v2044
  %v2046 = vpop.xlane.xlu0 %2045
  %v2047 = vsel %vm412, %v1976, 0.0
  %2048 = vadd.xlane.f32.xlu0 %v2047
  %v2049 = vpop.xlane.xlu0 %2048
  %v2050 = vsel %vm412, %v1978, 0.0
  %2051 = vadd.xlane.f32.xlu0 %v2050
  %v2052 = vpop.xlane.xlu0 %2051
  %v2053 = vsel %vm412, %v1980, 0.0
  %2054 = vadd.xlane.f32.xlu0 %v2053
  %v2055 = vpop.xlane.xlu0 %2054
  %v2056 = vsel %vm412, %v1982, 0.0
  %2057 = vadd.xlane.f32.xlu0 %v2056
  %v2058 = vpop.xlane.xlu0 %2057
  %v2059 = vsel %vm412, %v1984, 0.0
  %2060 = vadd.xlane.f32.xlu0 %v2059
  %v2061 = vpop.xlane.xlu0 %2060
  %v2062 = vsel %vm412, %v1986, 0.0
  %2063 = vadd.xlane.f32.xlu0 %v2062
  %v2064 = vpop.xlane.xlu0 %2063
  %v2065 = vsel %vm412, %v1988, 0.0
  %2066 = vadd.xlane.f32.xlu0 %v2065
  %v2067 = vpop.xlane.xlu0 %2066
  %v2068 = vsel %vm412, %v1990, 0.0
  %2069 = vadd.xlane.f32.xlu0 %v2068
  %v2070 = vpop.xlane.xlu0 %2069
  %v2071 = vsel %vm412, %v1992, 0.0
  %2072 = vadd.xlane.f32.xlu0 %v2071
  %v2073 = vpop.xlane.xlu0 %2072
  %v2074 = vsel %vm412, %v1994, 0.0
  %2075 = vadd.xlane.f32.xlu0 %v2074
  %v2076 = vpop.xlane.xlu0 %2075
  %v2077 = vsel %vm412, %v1996, 0.0
  %2078 = vadd.xlane.f32.xlu0 %v2077
  %v2079 = vpop.xlane.xlu0 %2078
  %v2080 = vsel %vm412, %v1998, 0.0
  %2081 = vadd.xlane.f32.xlu0 %v2080
  %v2082 = vpop.xlane.xlu0 %2081
  %v2083 = vsel %vm412, %v2000, 0.0
  %2084 = vadd.xlane.f32.xlu0 %v2083
  %v2085 = vpop.xlane.xlu0 %2084
  %v2086 = vsel %vm412, %v2002, 0.0
  %2087 = vadd.xlane.f32.xlu0 %v2086
  %v2088 = vpop.xlane.xlu0 %2087
  %v2089 = vsel %vm412, %v2004, 0.0
  %2090 = vadd.xlane.f32.xlu0 %v2089
  %v2091 = vpop.xlane.xlu0 %2090
  %v2092 = vsel %vm412, %v2006, 0.0
  %2093 = vadd.xlane.f32.xlu0 %v2092
  %v2094 = vpop.xlane.xlu0 %2093
  %v2095 = vsel %vm412, %v2008, 0.0
  %2096 = vadd.xlane.f32.xlu0 %v2095
  %v2097 = vpop.xlane.xlu0 %2096
  %v2098 = vsel %vm412, %v2010, 0.0
  %2099 = vadd.xlane.f32.xlu0 %v2098
  %v2100 = vpop.xlane.xlu0 %2099
  %v2101 = vsel %vm412, %v2012, 0.0
  %2102 = vadd.xlane.f32.xlu0 %v2101
  %v2103 = vpop.xlane.xlu0 %2102
  %v2104 = vsel %vm412, %v2014, 0.0
  %2105 = vadd.xlane.f32.xlu0 %v2104
  %v2106 = vpop.xlane.xlu0 %2105
  %v2107 = vsel %vm412, %v2016, 0.0
  %2108 = vadd.xlane.f32.xlu0 %v2107
  %v2109 = vpop.xlane.xlu0 %2108
  %v2110 = vsel %vm412, %v2018, 0.0
  %2111 = vadd.xlane.f32.xlu0 %v2110
  %v2112 = vpop.xlane.xlu0 %2111
  %v2113 = vsel %vm412, %v2020, 0.0
  %2114 = vadd.xlane.f32.xlu0 %v2113
  %v2115 = vpop.xlane.xlu0 %2114
  %v2116 = vsel %vm412, %v2022, 0.0
  %2117 = vadd.xlane.f32.xlu0 %v2116
  %v2118 = vpop.xlane.xlu0 %2117
  %v2119 = vrcp.pop %v2025
  %v2120 = vrcp.pop %v2028
  %v2121 = vrcp.pop %v2031
  %v2122 = vrcp.pop %v2034
  %v2123 = vrcp.pop %v2037
  %v2124 = vrcp.pop %v2040
  %v2125 = vrcp.pop %v2043
  %v2126 = vrcp.pop %v2046
  %v2127 = vrcp.pop %v2049
  %v2128 = vrcp.pop %v2052
  %v2129 = vrcp.pop %v2055
  %v2130 = vrcp.pop %v2058
  %v2131 = vrcp.pop %v2061
  %v2132 = vrcp.pop %v2064
  %v2133 = vrcp.pop %v2067
  %v2134 = vrcp.pop %v2070
  %v2135 = vrcp.pop %v2073
  %v2136 = vrcp.pop %v2076
  %v2137 = vrcp.pop %v2079
  %v2138 = vrcp.pop %v2082
  %v2139 = vrcp.pop %v2085
  %v2140 = vrcp.pop %v2088
  %v2141 = vrcp.pop %v2091
  %v2142 = vrcp.pop %v2094
  %v2143 = vrcp.pop %v2097
  %v2144 = vrcp.pop %v2100
  %v2145 = vrcp.pop %v2103
  %v2146 = vrcp.pop %v2106
  %v2147 = vrcp.pop %v2109
  %v2148 = vrcp.pop %v2112
  %v2149 = vrcp.pop %v2115
  %v2150 = vrcp.pop %v2118
  %v2151 = vmul.f32 %v1960, %v2119
  %v2152 = vmul.f32 %v1962, %v2120
  %v2153 = vmul.f32 %v1964, %v2121
  %v2154 = vmul.f32 %v1966, %v2122
  %v2155 = vmul.f32 %v1968, %v2123
  %v2156 = vmul.f32 %v1970, %v2124
  %v2157 = vmul.f32 %v1972, %v2125
  %v2158 = vmul.f32 %v1974, %v2126
  %v2159 = vmul.f32 %v1976, %v2127
  %v2160 = vmul.f32 %v1978, %v2128
  %v2161 = vmul.f32 %v1980, %v2129
  %v2162 = vmul.f32 %v1982, %v2130
  %v2163 = vmul.f32 %v1984, %v2131
  %v2164 = vmul.f32 %v1986, %v2132
  %v2165 = vmul.f32 %v1988, %v2133
  %v2166 = vmul.f32 %v1990, %v2134
  %v2167 = vmul.f32 %v1992, %v2135
  %v2168 = vmul.f32 %v1994, %v2136
  %v2169 = vmul.f32 %v1996, %v2137
  %v2170 = vmul.f32 %v1998, %v2138
  %v2171 = vmul.f32 %v2000, %v2139
  %v2172 = vmul.f32 %v2002, %v2140
  %v2173 = vmul.f32 %v2004, %v2141
  %v2174 = vmul.f32 %v2006, %v2142
  %v2175 = vmul.f32 %v2008, %v2143
  %v2176 = vmul.f32 %v2010, %v2144
  %v2177 = vmul.f32 %v2012, %v2145
  %v2178 = vmul.f32 %v2014, %v2146
  %v2179 = vmul.f32 %v2016, %v2147
  %v2180 = vmul.f32 %v2018, %v2148
  %v2181 = vmul.f32 %v2020, %v2149
  %v2182 = vmul.f32 %v2022, %v2150
  %v2184 = vsel %vm412, %v2151, 0
  %v2187 = vsel %vm412, %v2152, 0
  %2189 = vmatprep.subr.mxu0 0.0
  %2190 = vmatpush1.msra.mxu0 %v14
  %2191 = vmatprep.subr.mxu0 0.0
  %2192 = vmatpush1.msra.mxu0 %v15
  %2193 = vmatprep.subr.mxu0 0.0
  %2194 = vmatpush1.msra.mxu0 0.0
  %2195 = vmatprep.subr.mxu0 0.0
  %2196 = vmatpush1.msra.mxu0 0.0
  %2197 = vmatprep.subr.mxu0 0.0
  %2198 = vmatpush1.msra.mxu0 0.0
  %2199 = vmatprep.subr.mxu0 0.0
  %2200 = vmatpush1.msra.mxu0 0.0
  %2201 = vmatprep.subr.mxu0 0.0
  %2202 = vmatpush1.msra.mxu0 0.0
  %2203 = vmatprep.subr.mxu0 0.0
  %2204 = vmatpush1.msra.mxu0 0.0
  %2205 = vmatprep.subr.mxu0 0.0
  %2206 = vmatpush1.msra.mxu0 0.0
  %2207 = vmatprep.subr.mxu0 0.0
  %2208 = vmatpush1.msra.mxu0 0.0
  %2209 = vmatprep.subr.mxu0 0.0
  %2210 = vmatpush1.msra.mxu0 0.0
  %2211 = vmatprep.subr.mxu0 0.0
  %2212 = vmatpush1.msra.mxu0 0.0
  %2213 = vmatprep.subr.mxu0 0.0
  %2214 = vmatpush1.msra.mxu0 0.0
  %2215 = vmatprep.subr.mxu0 0.0
  %2216 = vmatpush1.msra.mxu0 0.0
  %2217 = vmatprep.subr.mxu0 0.0
  %2218 = vmatpush1.msra.mxu0 0.0
  %2219 = vmatprep.subr.mxu0 0.0
  %2220 = vmatpush1.msra.mxu0 0.0
  %2221 = vmatprep.subr.mxu0 0.0
  %2222 = vmatpush1.msra.mxu0 0.0
  %2223 = vmatprep.subr.mxu0 0.0
  %2224 = vmatpush1.msra.mxu0 0.0
  %2225 = vmatprep.subr.mxu0 0.0
  %2226 = vmatpush1.msra.mxu0 0.0
  %2227 = vmatprep.subr.mxu0 0.0
  %2228 = vmatpush1.msra.mxu0 0.0
  %2229 = vmatprep.subr.mxu0 0.0
  %2230 = vmatpush1.msra.mxu0 0.0
  %2231 = vmatprep.subr.mxu0 0.0
  %2232 = vmatpush1.msra.mxu0 0.0
  %2233 = vmatprep.subr.mxu0 0.0
  %2234 = vmatpush1.msra.mxu0 0.0
  %2235 = vmatprep.subr.mxu0 0.0
  %2236 = vmatpush1.msra.mxu0 0.0
  %2237 = vmatprep.subr.mxu0 0.0
  %2238 = vmatpush1.msra.mxu0 0.0
  %2239 = vmatprep.subr.mxu0 0.0
  %2240 = vmatpush1.msra.mxu0 0.0
  %2241 = vmatprep.subr.mxu0 0.0
  %2242 = vmatpush1.msra.mxu0 0.0
  %2243 = vmatprep.subr.mxu0 0.0
  %2244 = vmatpush1.msra.mxu0 0.0
  %2245 = vmatprep.subr.mxu0 0.0
  %2246 = vmatpush1.msra.mxu0 0.0
  %2247 = vmatprep.subr.mxu0 0.0
  %2248 = vmatpush1.msra.mxu0 0.0
  %2249 = vmatprep.subr.mxu0 0.0
  %2250 = vmatpush1.msra.mxu0 0.0
  %2251 = vmatprep.subr.mxu0 0.0
  %2252 = vmatpush1.msra.mxu0 0.0
  %2253 = vmatprep.mubr.f32.mxu0 0.0
  %2254 = vmatmul.mubr.f32.gmra.mrb[0].mxu0 %v2184
  %v2255 = vpop.f32.mrb[0].mxu0
  %v2256 = vadd.f32 0.0, %v2255
  %v2257 = vpop.f32.mrb[0].mxu0
  %2258 = vmatprep.mubr.f32.mxu0 0.0
  %2259 = vmatmul.mubr.f32.gmra.mrb[0].mxu0 %v2187
  %v2260 = vpop.f32.mrb[0].mxu0
  %v2261 = vadd.f32 0.0, %v2260
  %v2262 = vpop.f32.mrb[0].mxu0
  %2263 = vdwg.mxu0
  %v2265 = vsel %vm412, %v2153, 0
  %v2268 = vsel %vm412, %v2154, 0
  %2270 = vmatprep.subr.mxu0 0.0
  %2271 = vmatpush1.msra.mxu0 %v16
  %2272 = vmatprep.subr.mxu0 0.0
  %2273 = vmatpush1.msra.mxu0 %v17
  %2274 = vmatprep.subr.mxu0 0.0
  %2275 = vmatpush1.msra.mxu0 0.0
  %2276 = vmatprep.subr.mxu0 0.0
  %2277 = vmatpush1.msra.mxu0 0.0
  %2278 = vmatprep.subr.mxu0 0.0
  %2279 = vmatpush1.msra.mxu0 0.0
  %2280 = vmatprep.subr.mxu0 0.0
  %2281 = vmatpush1.msra.mxu0 0.0
  %2282 = vmatprep.subr.mxu0 0.0
  %2283 = vmatpush1.msra.mxu0 0.0
  %2284 = vmatprep.subr.mxu0 0.0
  %2285 = vmatpush1.msra.mxu0 0.0
  %2286 = vmatprep.subr.mxu0 0.0
  %2287 = vmatpush1.msra.mxu0 0.0
  %2288 = vmatprep.subr.mxu0 0.0
  %2289 = vmatpush1.msra.mxu0 0.0
  %2290 = vmatprep.subr.mxu0 0.0
  %2291 = vmatpush1.msra.mxu0 0.0
  %2292 = vmatprep.subr.mxu0 0.0
  %2293 = vmatpush1.msra.mxu0 0.0
  %2294 = vmatprep.subr.mxu0 0.0
  %2295 = vmatpush1.msra.mxu0 0.0
  %2296 = vmatprep.subr.mxu0 0.0
  %2297 = vmatpush1.msra.mxu0 0.0
  %2298 = vmatprep.subr.mxu0 0.0
  %2299 = vmatpush1.msra.mxu0 0.0
  %2300 = vmatprep.subr.mxu0 0.0
  %2301 = vmatpush1.msra.mxu0 0.0
  %2302 = vmatprep.subr.mxu0 0.0
  %2303 = vmatpush1.msra.mxu0 0.0
  %2304 = vmatprep.subr.mxu0 0.0
  %2305 = vmatpush1.msra.mxu0 0.0
  %2306 = vmatprep.subr.mxu0 0.0
  %2307 = vmatpush1.msra.mxu0 0.0
  %2308 = vmatprep.subr.mxu0 0.0
  %2309 = vmatpush1.msra.mxu0 0.0
  %2310 = vmatprep.subr.mxu0 0.0
  %2311 = vmatpush1.msra.mxu0 0.0
  %2312 = vmatprep.subr.mxu0 0.0
  %2313 = vmatpush1.msra.mxu0 0.0
  %2314 = vmatprep.subr.mxu0 0.0
  %2315 = vmatpush1.msra.mxu0 0.0
  %2316 = vmatprep.subr.mxu0 0.0
  %2317 = vmatpush1.msra.mxu0 0.0
  %2318 = vmatprep.subr.mxu0 0.0
  %2319 = vmatpush1.msra.mxu0 0.0
  %2320 = vmatprep.subr.mxu0 0.0
  %2321 = vmatpush1.msra.mxu0 0.0
  %2322 = vmatprep.subr.mxu0 0.0
  %2323 = vmatpush1.msra.mxu0 0.0
  %2324 = vmatprep.subr.mxu0 0.0
  %2325 = vmatpush1.msra.mxu0 0.0
  %2326 = vmatprep.subr.mxu0 0.0
  %2327 = vmatpush1.msra.mxu0 0.0
  %2328 = vmatprep.subr.mxu0 0.0
  %2329 = vmatpush1.msra.mxu0 0.0
  %2330 = vmatprep.subr.mxu0 0.0
  %2331 = vmatpush1.msra.mxu0 0.0
  %2332 = vmatprep.subr.mxu0 0.0
  %2333 = vmatpush1.msra.mxu0 0.0
  %2334 = vmatprep.mubr.f32.mxu0 0.0
  %2335 = vmatmul.mubr.f32.gmra.mrb[0].mxu0 %v2265
  %v2336 = vpop.f32.mrb[0].mxu0
  %v2337 = vadd.f32 0.0, %v2336
  %v2338 = vpop.f32.mrb[0].mxu0
  %2339 = vmatprep.mubr.f32.mxu0 0.0
  %2340 = vmatmul.mubr.f32.gmra.mrb[0].mxu0 %v2268
  %v2341 = vpop.f32.mrb[0].mxu0
  %v2342 = vadd.f32 0.0, %v2341
  %v2343 = vpop.f32.mrb[0].mxu0
  %2344 = vdwg.mxu0
  %v2346 = vsel %vm412, %v2155, 0
  %v2349 = vsel %vm412, %v2156, 0
  %2351 = vmatprep.subr.mxu0 0.0
  %2352 = vmatpush1.msra.mxu0 %v18
  %2353 = vmatprep.subr.mxu0 0.0
  %2354 = vmatpush1.msra.mxu0 %v19
  %2355 = vmatprep.subr.mxu0 0.0
  %2356 = vmatpush1.msra.mxu0 0.0
  %2357 = vmatprep.subr.mxu0 0.0
  %2358 = vmatpush1.msra.mxu0 0.0
  %2359 = vmatprep.subr.mxu0 0.0
  %2360 = vmatpush1.msra.mxu0 0.0
  %2361 = vmatprep.subr.mxu0 0.0
  %2362 = vmatpush1.msra.mxu0 0.0
  %2363 = vmatprep.subr.mxu0 0.0
  %2364 = vmatpush1.msra.mxu0 0.0
  %2365 = vmatprep.subr.mxu0 0.0
  %2366 = vmatpush1.msra.mxu0 0.0
  %2367 = vmatprep.subr.mxu0 0.0
  %2368 = vmatpush1.msra.mxu0 0.0
  %2369 = vmatprep.subr.mxu0 0.0
  %2370 = vmatpush1.msra.mxu0 0.0
  %2371 = vmatprep.subr.mxu0 0.0
  %2372 = vmatpush1.msra.mxu0 0.0
  %2373 = vmatprep.subr.mxu0 0.0
  %2374 = vmatpush1.msra.mxu0 0.0
  %2375 = vmatprep.subr.mxu0 0.0
  %2376 = vmatpush1.msra.mxu0 0.0
  %2377 = vmatprep.subr.mxu0 0.0
  %2378 = vmatpush1.msra.mxu0 0.0
  %2379 = vmatprep.subr.mxu0 0.0
  %2380 = vmatpush1.msra.mxu0 0.0
  %2381 = vmatprep.subr.mxu0 0.0
  %2382 = vmatpush1.msra.mxu0 0.0
  %2383 = vmatprep.subr.mxu0 0.0
  %2384 = vmatpush1.msra.mxu0 0.0
  %2385 = vmatprep.subr.mxu0 0.0
  %2386 = vmatpush1.msra.mxu0 0.0
  %2387 = vmatprep.subr.mxu0 0.0
  %2388 = vmatpush1.msra.mxu0 0.0
  %2389 = vmatprep.subr.mxu0 0.0
  %2390 = vmatpush1.msra.mxu0 0.0
  %2391 = vmatprep.subr.mxu0 0.0
  %2392 = vmatpush1.msra.mxu0 0.0
  %2393 = vmatprep.subr.mxu0 0.0
  %2394 = vmatpush1.msra.mxu0 0.0
  %2395 = vmatprep.subr.mxu0 0.0
  %2396 = vmatpush1.msra.mxu0 0.0
  %2397 = vmatprep.subr.mxu0 0.0
  %2398 = vmatpush1.msra.mxu0 0.0
  %2399 = vmatprep.subr.mxu0 0.0
  %2400 = vmatpush1.msra.mxu0 0.0
  %2401 = vmatprep.subr.mxu0 0.0
  %2402 = vmatpush1.msra.mxu0 0.0
  %2403 = vmatprep.subr.mxu0 0.0
  %2404 = vmatpush1.msra.mxu0 0.0
  %2405 = vmatprep.subr.mxu0 0.0
  %2406 = vmatpush1.msra.mxu0 0.0
  %2407 = vmatprep.subr.mxu0 0.0
  %2408 = vmatpush1.msra.mxu0 0.0
  %2409 = vmatprep.subr.mxu0 0.0
  %2410 = vmatpush1.msra.mxu0 0.0
  %2411 = vmatprep.subr.mxu0 0.0
  %2412 = vmatpush1.msra.mxu0 0.0
  %2413 = vmatprep.subr.mxu0 0.0
  %2414 = vmatpush1.msra.mxu0 0.0
  %2415 = vmatprep.mubr.f32.mxu0 0.0
  %2416 = vmatmul.mubr.f32.gmra.mrb[0].mxu0 %v2346
  %v2417 = vpop.f32.mrb[0].mxu0
  %v2418 = vadd.f32 0.0, %v2417
  %v2419 = vpop.f32.mrb[0].mxu0
  %2420 = vmatprep.mubr.f32.mxu0 0.0
  %2421 = vmatmul.mubr.f32.gmra.mrb[0].mxu0 %v2349
  %v2422 = vpop.f32.mrb[0].mxu0
  %v2423 = vadd.f32 0.0, %v2422
  %v2424 = vpop.f32.mrb[0].mxu0
  %2425 = vdwg.mxu0
  %v2427 = vsel %vm412, %v2157, 0
  %v2430 = vsel %vm412, %v2158, 0
  %2432 = vmatprep.subr.mxu0 0.0
  %2433 = vmatpush1.msra.mxu0 %v20
  %2434 = vmatprep.subr.mxu0 0.0
  %2435 = vmatpush1.msra.mxu0 %v21
  %2436 = vmatprep.subr.mxu0 0.0
  %2437 = vmatpush1.msra.mxu0 0.0
  %2438 = vmatprep.subr.mxu0 0.0
  %2439 = vmatpush1.msra.mxu0 0.0
  %2440 = vmatprep.subr.mxu0 0.0
  %2441 = vmatpush1.msra.mxu0 0.0
  %2442 = vmatprep.subr.mxu0 0.0
  %2443 = vmatpush1.msra.mxu0 0.0
  %2444 = vmatprep.subr.mxu0 0.0
  %2445 = vmatpush1.msra.mxu0 0.0
  %2446 = vmatprep.subr.mxu0 0.0
  %2447 = vmatpush1.msra.mxu0 0.0
  %2448 = vmatprep.subr.mxu0 0.0
  %2449 = vmatpush1.msra.mxu0 0.0
  %2450 = vmatprep.subr.mxu0 0.0
  %2451 = vmatpush1.msra.mxu0 0.0
  %2452 = vmatprep.subr.mxu0 0.0
  %2453 = vmatpush1.msra.mxu0 0.0
  %2454 = vmatprep.subr.mxu0 0.0
  %2455 = vmatpush1.msra.mxu0 0.0
  %2456 = vmatprep.subr.mxu0 0.0
  %2457 = vmatpush1.msra.mxu0 0.0
  %2458 = vmatprep.subr.mxu0 0.0
  %2459 = vmatpush1.msra.mxu0 0.0
  %2460 = vmatprep.subr.mxu0 0.0
  %2461 = vmatpush1.msra.mxu0 0.0
  %2462 = vmatprep.subr.mxu0 0.0
  %2463 = vmatpush1.msra.mxu0 0.0
  %2464 = vmatprep.subr.mxu0 0.0
  %2465 = vmatpush1.msra.mxu0 0.0
  %2466 = vmatprep.subr.mxu0 0.0
  %2467 = vmatpush1.msra.mxu0 0.0
  %2468 = vmatprep.subr.mxu0 0.0
  %2469 = vmatpush1.msra.mxu0 0.0
  %2470 = vmatprep.subr.mxu0 0.0
  %2471 = vmatpush1.msra.mxu0 0.0
  %2472 = vmatprep.subr.mxu0 0.0
  %2473 = vmatpush1.msra.mxu0 0.0
  %2474 = vmatprep.subr.mxu0 0.0
  %2475 = vmatpush1.msra.mxu0 0.0
  %2476 = vmatprep.subr.mxu0 0.0
  %2477 = vmatpush1.msra.mxu0 0.0
  %2478 = vmatprep.subr.mxu0 0.0
  %2479 = vmatpush1.msra.mxu0 0.0
  %2480 = vmatprep.subr.mxu0 0.0
  %2481 = vmatpush1.msra.mxu0 0.0
  %2482 = vmatprep.subr.mxu0 0.0
  %2483 = vmatpush1.msra.mxu0 0.0
  %2484 = vmatprep.subr.mxu0 0.0
  %2485 = vmatpush1.msra.mxu0 0.0
  %2486 = vmatprep.subr.mxu0 0.0
  %2487 = vmatpush1.msra.mxu0 0.0
  %2488 = vmatprep.subr.mxu0 0.0
  %2489 = vmatpush1.msra.mxu0 0.0
  %2490 = vmatprep.subr.mxu0 0.0
  %2491 = vmatpush1.msra.mxu0 0.0
  %2492 = vmatprep.subr.mxu0 0.0
  %2493 = vmatpush1.msra.mxu0 0.0
  %2494 = vmatprep.subr.mxu0 0.0
  %2495 = vmatpush1.msra.mxu0 0.0
  %2496 = vmatprep.mubr.f32.mxu0 0.0
  %2497 = vmatmul.mubr.f32.gmra.mrb[0].mxu0 %v2427
  %v2498 = vpop.f32.mrb[0].mxu0
  %v2499 = vadd.f32 0.0, %v2498
  %v2500 = vpop.f32.mrb[0].mxu0
  %2501 = vmatprep.mubr.f32.mxu0 0.0
  %2502 = vmatmul.mubr.f32.gmra.mrb[0].mxu0 %v2430
  %v2503 = vpop.f32.mrb[0].mxu0
  %v2504 = vadd.f32 0.0, %v2503
  %v2505 = vpop.f32.mrb[0].mxu0
  %2506 = vdwg.mxu0
  %v2508 = vsel %vm412, %v2159, 0
  %v2511 = vsel %vm412, %v2160, 0
  %2513 = vmatprep.subr.mxu0 0.0
  %2514 = vmatpush1.msra.mxu0 %v22
  %2515 = vmatprep.subr.mxu0 0.0
  %2516 = vmatpush1.msra.mxu0 %v23
  %2517 = vmatprep.subr.mxu0 0.0
  %2518 = vmatpush1.msra.mxu0 0.0
  %2519 = vmatprep.subr.mxu0 0.0
  %2520 = vmatpush1.msra.mxu0 0.0
  %2521 = vmatprep.subr.mxu0 0.0
  %2522 = vmatpush1.msra.mxu0 0.0
  %2523 = vmatprep.subr.mxu0 0.0
  %2524 = vmatpush1.msra.mxu0 0.0
  %2525 = vmatprep.subr.mxu0 0.0
  %2526 = vmatpush1.msra.mxu0 0.0
  %2527 = vmatprep.subr.mxu0 0.0
  %2528 = vmatpush1.msra.mxu0 0.0
  %2529 = vmatprep.subr.mxu0 0.0
  %2530 = vmatpush1.msra.mxu0 0.0
  %2531 = vmatprep.subr.mxu0 0.0
  %2532 = vmatpush1.msra.mxu0 0.0
  %2533 = vmatprep.subr.mxu0 0.0
  %2534 = vmatpush1.msra.mxu0 0.0
  %2535 = vmatprep.subr.mxu0 0.0
  %2536 = vmatpush1.msra.mxu0 0.0
  %2537 = vmatprep.subr.mxu0 0.0
  %2538 = vmatpush1.msra.mxu0 0.0
  %2539 = vmatprep.subr.mxu0 0.0
  %2540 = vmatpush1.msra.mxu0 0.0
  %2541 = vmatprep.subr.mxu0 0.0
  %2542 = vmatpush1.msra.mxu0 0.0
  %2543 = vmatprep.subr.mxu0 0.0
  %2544 = vmatpush1.msra.mxu0 0.0
  %2545 = vmatprep.subr.mxu0 0.0
  %2546 = vmatpush1.msra.mxu0 0.0
  %2547 = vmatprep.subr.mxu0 0.0
  %2548 = vmatpush1.msra.mxu0 0.0
  %2549 = vmatprep.subr.mxu0 0.0
  %2550 = vmatpush1.msra.mxu0 0.0
  %2551 = vmatprep.subr.mxu0 0.0
  %2552 = vmatpush1.msra.mxu0 0.0
  %2553 = vmatprep.subr.mxu0 0.0
  %2554 = vmatpush1.msra.mxu0 0.0
  %2555 = vmatprep.subr.mxu0 0.0
  %2556 = vmatpush1.msra.mxu0 0.0
  %2557 = vmatprep.subr.mxu0 0.0
  %2558 = vmatpush1.msra.mxu0 0.0
  %2559 = vmatprep.subr.mxu0 0.0
  %2560 = vmatpush1.msra.mxu0 0.0
  %2561 = vmatprep.subr.mxu0 0.0
  %2562 = vmatpush1.msra.mxu0 0.0
  %2563 = vmatprep.subr.mxu0 0.0
  %2564 = vmatpush1.msra.mxu0 0.0
  %2565 = vmatprep.subr.mxu0 0.0
  %2566 = vmatpush1.msra.mxu0 0.0
  %2567 = vmatprep.subr.mxu0 0.0
  %2568 = vmatpush1.msra.mxu0 0.0
  %2569 = vmatprep.subr.mxu0 0.0
  %2570 = vmatpush1.msra.mxu0 0.0
  %2571 = vmatprep.subr.mxu0 0.0
  %2572 = vmatpush1.msra.mxu0 0.0
  %2573 = vmatprep.subr.mxu0 0.0
  %2574 = vmatpush1.msra.mxu0 0.0
  %2575 = vmatprep.subr.mxu0 0.0
  %2576 = vmatpush1.msra.mxu0 0.0
  %2577 = vmatprep.mubr.f32.mxu0 0.0
  %2578 = vmatmul.mubr.f32.gmra.mrb[0].mxu0 %v2508
  %v2579 = vpop.f32.mrb[0].mxu0
  %v2580 = vadd.f32 0.0, %v2579
  %v2581 = vpop.f32.mrb[0].mxu0
  %2582 = vmatprep.mubr.f32.mxu0 0.0
  %2583 = vmatmul.mubr.f32.gmra.mrb[0].mxu0 %v2511
  %v2584 = vpop.f32.mrb[0].mxu0
  %v2585 = vadd.f32 0.0, %v2584
  %v2586 = vpop.f32.mrb[0].mxu0
  %2587 = vdwg.mxu0
  %v2589 = vsel %vm412, %v2161, 0
  %v2592 = vsel %vm412, %v2162, 0
  %2594 = vmatprep.subr.mxu0 0.0
  %2595 = vmatpush1.msra.mxu0 %v24
  %2596 = vmatprep.subr.mxu0 0.0
  %2597 = vmatpush1.msra.mxu0 %v25
  %2598 = vmatprep.subr.mxu0 0.0
  %2599 = vmatpush1.msra.mxu0 0.0
  %2600 = vmatprep.subr.mxu0 0.0
  %2601 = vmatpush1.msra.mxu0 0.0
  %2602 = vmatprep.subr.mxu0 0.0
  %2603 = vmatpush1.msra.mxu0 0.0
  %2604 = vmatprep.subr.mxu0 0.0
  %2605 = vmatpush1.msra.mxu0 0.0
  %2606 = vmatprep.subr.mxu0 0.0
  %2607 = vmatpush1.msra.mxu0 0.0
  %2608 = vmatprep.subr.mxu0 0.0
  %2609 = vmatpush1.msra.mxu0 0.0
  %2610 = vmatprep.subr.mxu0 0.0
  %2611 = vmatpush1.msra.mxu0 0.0
  %2612 = vmatprep.subr.mxu0 0.0
  %2613 = vmatpush1.msra.mxu0 0.0
  %2614 = vmatprep.subr.mxu0 0.0
  %2615 = vmatpush1.msra.mxu0 0.0
  %2616 = vmatprep.subr.mxu0 0.0
  %2617 = vmatpush1.msra.mxu0 0.0
  %2618 = vmatprep.subr.mxu0 0.0
  %2619 = vmatpush1.msra.mxu0 0.0
  %2620 = vmatprep.subr.mxu0 0.0
  %2621 = vmatpush1.msra.mxu0 0.0
  %2622 = vmatprep.subr.mxu0 0.0
  %2623 = vmatpush1.msra.mxu0 0.0
  %2624 = vmatprep.subr.mxu0 0.0
  %2625 = vmatpush1.msra.mxu0 0.0
  %2626 = vmatprep.subr.mxu0 0.0
  %2627 = vmatpush1.msra.mxu0 0.0
  %2628 = vmatprep.subr.mxu0 0.0
  %2629 = vmatpush1.msra.mxu0 0.0
  %2630 = vmatprep.subr.mxu0 0.0
  %2631 = vmatpush1.msra.mxu0 0.0
  %2632 = vmatprep.subr.mxu0 0.0
  %2633 = vmatpush1.msra.mxu0 0.0
  %2634 = vmatprep.subr.mxu0 0.0
  %2635 = vmatpush1.msra.mxu0 0.0
  %2636 = vmatprep.subr.mxu0 0.0
  %2637 = vmatpush1.msra.mxu0 0.0
  %2638 = vmatprep.subr.mxu0 0.0
  %2639 = vmatpush1.msra.mxu0 0.0
  %2640 = vmatprep.subr.mxu0 0.0
  %2641 = vmatpush1.msra.mxu0 0.0
  %2642 = vmatprep.subr.mxu0 0.0
  %2643 = vmatpush1.msra.mxu0 0.0
  %2644 = vmatprep.subr.mxu0 0.0
  %2645 = vmatpush1.msra.mxu0 0.0
  %2646 = vmatprep.subr.mxu0 0.0
  %2647 = vmatpush1.msra.mxu0 0.0
  %2648 = vmatprep.subr.mxu0 0.0
  %2649 = vmatpush1.msra.mxu0 0.0
  %2650 = vmatprep.subr.mxu0 0.0
  %2651 = vmatpush1.msra.mxu0 0.0
  %2652 = vmatprep.subr.mxu0 0.0
  %2653 = vmatpush1.msra.mxu0 0.0
  %2654 = vmatprep.subr.mxu0 0.0
  %2655 = vmatpush1.msra.mxu0 0.0
  %2656 = vmatprep.subr.mxu0 0.0
  %2657 = vmatpush1.msra.mxu0 0.0
  %2658 = vmatprep.mubr.f32.mxu0 0.0
  %2659 = vmatmul.mubr.f32.gmra.mrb[0].mxu0 %v2589
  %v2660 = vpop.f32.mrb[0].mxu0
  %v2661 = vadd.f32 0.0, %v2660
  %v2662 = vpop.f32.mrb[0].mxu0
  %2663 = vmatprep.mubr.f32.mxu0 0.0
  %2664 = vmatmul.mubr.f32.gmra.mrb[0].mxu0 %v2592
  %v2665 = vpop.f32.mrb[0].mxu0
  %v2666 = vadd.f32 0.0, %v2665
  %v2667 = vpop.f32.mrb[0].mxu0
  %2668 = vdwg.mxu0
  %v2670 = vsel %vm412, %v2163, 0
  %v2673 = vsel %vm412, %v2164, 0
  %2675 = vmatprep.subr.mxu0 0.0
  %2676 = vmatpush1.msra.mxu0 %v26
  %2677 = vmatprep.subr.mxu0 0.0
  %2678 = vmatpush1.msra.mxu0 %v27
  %2679 = vmatprep.subr.mxu0 0.0
  %2680 = vmatpush1.msra.mxu0 0.0
  %2681 = vmatprep.subr.mxu0 0.0
  %2682 = vmatpush1.msra.mxu0 0.0
  %2683 = vmatprep.subr.mxu0 0.0
  %2684 = vmatpush1.msra.mxu0 0.0
  %2685 = vmatprep.subr.mxu0 0.0
  %2686 = vmatpush1.msra.mxu0 0.0
  %2687 = vmatprep.subr.mxu0 0.0
  %2688 = vmatpush1.msra.mxu0 0.0
  %2689 = vmatprep.subr.mxu0 0.0
  %2690 = vmatpush1.msra.mxu0 0.0
  %2691 = vmatprep.subr.mxu0 0.0
  %2692 = vmatpush1.msra.mxu0 0.0
  %2693 = vmatprep.subr.mxu0 0.0
  %2694 = vmatpush1.msra.mxu0 0.0
  %2695 = vmatprep.subr.mxu0 0.0
  %2696 = vmatpush1.msra.mxu0 0.0
  %2697 = vmatprep.subr.mxu0 0.0
  %2698 = vmatpush1.msra.mxu0 0.0
  %2699 = vmatprep.subr.mxu0 0.0
  %2700 = vmatpush1.msra.mxu0 0.0
  %2701 = vmatprep.subr.mxu0 0.0
  %2702 = vmatpush1.msra.mxu0 0.0
  %2703 = vmatprep.subr.mxu0 0.0
  %2704 = vmatpush1.msra.mxu0 0.0
  %2705 = vmatprep.subr.mxu0 0.0
  %2706 = vmatpush1.msra.mxu0 0.0
  %2707 = vmatprep.subr.mxu0 0.0
  %2708 = vmatpush1.msra.mxu0 0.0
  %2709 = vmatprep.subr.mxu0 0.0
  %2710 = vmatpush1.msra.mxu0 0.0
  %2711 = vmatprep.subr.mxu0 0.0
  %2712 = vmatpush1.msra.mxu0 0.0
  %2713 = vmatprep.subr.mxu0 0.0
  %2714 = vmatpush1.msra.mxu0 0.0
  %2715 = vmatprep.subr.mxu0 0.0
  %2716 = vmatpush1.msra.mxu0 0.0
  %2717 = vmatprep.subr.mxu0 0.0
  %2718 = vmatpush1.msra.mxu0 0.0
  %2719 = vmatprep.subr.mxu0 0.0
  %2720 = vmatpush1.msra.mxu0 0.0
  %2721 = vmatprep.subr.mxu0 0.0
  %2722 = vmatpush1.msra.mxu0 0.0
  %2723 = vmatprep.subr.mxu0 0.0
  %2724 = vmatpush1.msra.mxu0 0.0
  %2725 = vmatprep.subr.mxu0 0.0
  %2726 = vmatpush1.msra.mxu0 0.0
  %2727 = vmatprep.subr.mxu0 0.0
  %2728 = vmatpush1.msra.mxu0 0.0
  %2729 = vmatprep.subr.mxu0 0.0
  %2730 = vmatpush1.msra.mxu0 0.0
  %2731 = vmatprep.subr.mxu0 0.0
  %2732 = vmatpush1.msra.mxu0 0.0
  %2733 = vmatprep.subr.mxu0 0.0
  %2734 = vmatpush1.msra.mxu0 0.0
  %2735 = vmatprep.subr.mxu0 0.0
  %2736 = vmatpush1.msra.mxu0 0.0
  %2737 = vmatprep.subr.mxu0 0.0
  %2738 = vmatpush1.msra.mxu0 0.0
  %2739 = vmatprep.mubr.f32.mxu0 0.0
  %2740 = vmatmul.mubr.f32.gmra.mrb[0].mxu0 %v2670
  %v2741 = vpop.f32.mrb[0].mxu0
  %v2742 = vadd.f32 0.0, %v2741
  %v2743 = vpop.f32.mrb[0].mxu0
  %2744 = vmatprep.mubr.f32.mxu0 0.0
  %2745 = vmatmul.mubr.f32.gmra.mrb[0].mxu0 %v2673
  %v2746 = vpop.f32.mrb[0].mxu0
  %v2747 = vadd.f32 0.0, %v2746
  %v2748 = vpop.f32.mrb[0].mxu0
  %2749 = vdwg.mxu0
  %v2751 = vsel %vm412, %v2165, 0
  %v2754 = vsel %vm412, %v2166, 0
  %2756 = vmatprep.subr.mxu0 0.0
  %2757 = vmatpush1.msra.mxu0 %v28
  %2758 = vmatprep.subr.mxu0 0.0
  %2759 = vmatpush1.msra.mxu0 %v29
  %2760 = vmatprep.subr.mxu0 0.0
  %2761 = vmatpush1.msra.mxu0 0.0
  %2762 = vmatprep.subr.mxu0 0.0
  %2763 = vmatpush1.msra.mxu0 0.0
  %2764 = vmatprep.subr.mxu0 0.0
  %2765 = vmatpush1.msra.mxu0 0.0
  %2766 = vmatprep.subr.mxu0 0.0
  %2767 = vmatpush1.msra.mxu0 0.0
  %2768 = vmatprep.subr.mxu0 0.0
  %2769 = vmatpush1.msra.mxu0 0.0
  %2770 = vmatprep.subr.mxu0 0.0
  %2771 = vmatpush1.msra.mxu0 0.0
  %2772 = vmatprep.subr.mxu0 0.0
  %2773 = vmatpush1.msra.mxu0 0.0
  %2774 = vmatprep.subr.mxu0 0.0
  %2775 = vmatpush1.msra.mxu0 0.0
  %2776 = vmatprep.subr.mxu0 0.0
  %2777 = vmatpush1.msra.mxu0 0.0
  %2778 = vmatprep.subr.mxu0 0.0
  %2779 = vmatpush1.msra.mxu0 0.0
  %2780 = vmatprep.subr.mxu0 0.0
  %2781 = vmatpush1.msra.mxu0 0.0
  %2782 = vmatprep.subr.mxu0 0.0
  %2783 = vmatpush1.msra.mxu0 0.0
  %2784 = vmatprep.subr.mxu0 0.0
  %2785 = vmatpush1.msra.mxu0 0.0
  %2786 = vmatprep.subr.mxu0 0.0
  %2787 = vmatpush1.msra.mxu0 0.0
  %2788 = vmatprep.subr.mxu0 0.0
  %2789 = vmatpush1.msra.mxu0 0.0
  %2790 = vmatprep.subr.mxu0 0.0
  %2791 = vmatpush1.msra.mxu0 0.0
  %2792 = vmatprep.subr.mxu0 0.0
  %2793 = vmatpush1.msra.mxu0 0.0
  %2794 = vmatprep.subr.mxu0 0.0
  %2795 = vmatpush1.msra.mxu0 0.0
  %2796 = vmatprep.subr.mxu0 0.0
  %2797 = vmatpush1.msra.mxu0 0.0
  %2798 = vmatprep.subr.mxu0 0.0
  %2799 = vmatpush1.msra.mxu0 0.0
  %2800 = vmatprep.subr.mxu0 0.0
  %2801 = vmatpush1.msra.mxu0 0.0
  %2802 = vmatprep.subr.mxu0 0.0
  %2803 = vmatpush1.msra.mxu0 0.0
  %2804 = vmatprep.subr.mxu0 0.0
  %2805 = vmatpush1.msra.mxu0 0.0
  %2806 = vmatprep.subr.mxu0 0.0
  %2807 = vmatpush1.msra.mxu0 0.0
  %2808 = vmatprep.subr.mxu0 0.0
  %2809 = vmatpush1.msra.mxu0 0.0
  %2810 = vmatprep.subr.mxu0 0.0
  %2811 = vmatpush1.msra.mxu0 0.0
  %2812 = vmatprep.subr.mxu0 0.0
  %2813 = vmatpush1.msra.mxu0 0.0
  %2814 = vmatprep.subr.mxu0 0.0
  %2815 = vmatpush1.msra.mxu0 0.0
  %2816 = vmatprep.subr.mxu0 0.0
  %2817 = vmatpush1.msra.mxu0 0.0
  %2818 = vmatprep.subr.mxu0 0.0
  %2819 = vmatpush1.msra.mxu0 0.0
  %2820 = vmatprep.mubr.f32.mxu0 0.0
  %2821 = vmatmul.mubr.f32.gmra.mrb[0].mxu0 %v2751
  %v2822 = vpop.f32.mrb[0].mxu0
  %v2823 = vadd.f32 0.0, %v2822
  %v2824 = vpop.f32.mrb[0].mxu0
  %2825 = vmatprep.mubr.f32.mxu0 0.0
  %2826 = vmatmul.mubr.f32.gmra.mrb[0].mxu0 %v2754
  %v2827 = vpop.f32.mrb[0].mxu0
  %v2828 = vadd.f32 0.0, %v2827
  %v2829 = vpop.f32.mrb[0].mxu0
  %2830 = vdwg.mxu0
  %v2832 = vsel %vm412, %v2167, 0
  %v2835 = vsel %vm412, %v2168, 0
  %2837 = vmatprep.subr.mxu0 0.0
  %2838 = vmatpush1.msra.mxu0 %v30
  %2839 = vmatprep.subr.mxu0 0.0
  %2840 = vmatpush1.msra.mxu0 %v31
  %2841 = vmatprep.subr.mxu0 0.0
  %2842 = vmatpush1.msra.mxu0 0.0
  %2843 = vmatprep.subr.mxu0 0.0
  %2844 = vmatpush1.msra.mxu0 0.0
  %2845 = vmatprep.subr.mxu0 0.0
  %2846 = vmatpush1.msra.mxu0 0.0
  %2847 = vmatprep.subr.mxu0 0.0
  %2848 = vmatpush1.msra.mxu0 0.0
  %2849 = vmatprep.subr.mxu0 0.0
  %2850 = vmatpush1.msra.mxu0 0.0
  %2851 = vmatprep.subr.mxu0 0.0
  %2852 = vmatpush1.msra.mxu0 0.0
  %2853 = vmatprep.subr.mxu0 0.0
  %2854 = vmatpush1.msra.mxu0 0.0
  %2855 = vmatprep.subr.mxu0 0.0
  %2856 = vmatpush1.msra.mxu0 0.0
  %2857 = vmatprep.subr.mxu0 0.0
  %2858 = vmatpush1.msra.mxu0 0.0
  %2859 = vmatprep.subr.mxu0 0.0
  %2860 = vmatpush1.msra.mxu0 0.0
  %2861 = vmatprep.subr.mxu0 0.0
  %2862 = vmatpush1.msra.mxu0 0.0
  %2863 = vmatprep.subr.mxu0 0.0
  %2864 = vmatpush1.msra.mxu0 0.0
  %2865 = vmatprep.subr.mxu0 0.0
  %2866 = vmatpush1.msra.mxu0 0.0
  %2867 = vmatprep.subr.mxu0 0.0
  %2868 = vmatpush1.msra.mxu0 0.0
  %2869 = vmatprep.subr.mxu0 0.0
  %2870 = vmatpush1.msra.mxu0 0.0
  %2871 = vmatprep.subr.mxu0 0.0
  %2872 = vmatpush1.msra.mxu0 0.0
  %2873 = vmatprep.subr.mxu0 0.0
  %2874 = vmatpush1.msra.mxu0 0.0
  %2875 = vmatprep.subr.mxu0 0.0
  %2876 = vmatpush1.msra.mxu0 0.0
  %2877 = vmatprep.subr.mxu0 0.0
  %2878 = vmatpush1.msra.mxu0 0.0
  %2879 = vmatprep.subr.mxu0 0.0
  %2880 = vmatpush1.msra.mxu0 0.0
  %2881 = vmatprep.subr.mxu0 0.0
  %2882 = vmatpush1.msra.mxu0 0.0
  %2883 = vmatprep.subr.mxu0 0.0
  %2884 = vmatpush1.msra.mxu0 0.0
  %2885 = vmatprep.subr.mxu0 0.0
  %2886 = vmatpush1.msra.mxu0 0.0
  %2887 = vmatprep.subr.mxu0 0.0
  %2888 = vmatpush1.msra.mxu0 0.0
  %2889 = vmatprep.subr.mxu0 0.0
  %2890 = vmatpush1.msra.mxu0 0.0
  %2891 = vmatprep.subr.mxu0 0.0
  %2892 = vmatpush1.msra.mxu0 0.0
  %2893 = vmatprep.subr.mxu0 0.0
  %2894 = vmatpush1.msra.mxu0 0.0
  %2895 = vmatprep.subr.mxu0 0.0
  %2896 = vmatpush1.msra.mxu0 0.0
  %2897 = vmatprep.subr.mxu0 0.0
  %2898 = vmatpush1.msra.mxu0 0.0
  %2899 = vmatprep.subr.mxu0 0.0
  %2900 = vmatpush1.msra.mxu0 0.0
  %2901 = vmatprep.mubr.f32.mxu0 0.0
  %2902 = vmatmul.mubr.f32.gmra.mrb[0].mxu0 %v2832
  %v2903 = vpop.f32.mrb[0].mxu0
  %v2904 = vadd.f32 0.0, %v2903
  %v2905 = vpop.f32.mrb[0].mxu0
  %2906 = vmatprep.mubr.f32.mxu0 0.0
  %2907 = vmatmul.mubr.f32.gmra.mrb[0].mxu0 %v2835
  %v2908 = vpop.f32.mrb[0].mxu0
  %v2909 = vadd.f32 0.0, %v2908
  %v2910 = vpop.f32.mrb[0].mxu0
  %2911 = vdwg.mxu0
  %v2913 = vsel %vm412, %v2169, 0
  %v2916 = vsel %vm412, %v2170, 0
  %2918 = vmatprep.subr.mxu0 0.0
  %2919 = vmatpush1.msra.mxu0 %v32
  %2920 = vmatprep.subr.mxu0 0.0
  %2921 = vmatpush1.msra.mxu0 %v33
  %2922 = vmatprep.subr.mxu0 0.0
  %2923 = vmatpush1.msra.mxu0 0.0
  %2924 = vmatprep.subr.mxu0 0.0
  %2925 = vmatpush1.msra.mxu0 0.0
  %2926 = vmatprep.subr.mxu0 0.0
  %2927 = vmatpush1.msra.mxu0 0.0
  %2928 = vmatprep.subr.mxu0 0.0
  %2929 = vmatpush1.msra.mxu0 0.0
  %2930 = vmatprep.subr.mxu0 0.0
  %2931 = vmatpush1.msra.mxu0 0.0
  %2932 = vmatprep.subr.mxu0 0.0
  %2933 = vmatpush1.msra.mxu0 0.0
  %2934 = vmatprep.subr.mxu0 0.0
  %2935 = vmatpush1.msra.mxu0 0.0
  %2936 = vmatprep.subr.mxu0 0.0
  %2937 = vmatpush1.msra.mxu0 0.0
  %2938 = vmatprep.subr.mxu0 0.0
  %2939 = vmatpush1.msra.mxu0 0.0
  %2940 = vmatprep.subr.mxu0 0.0
  %2941 = vmatpush1.msra.mxu0 0.0
  %2942 = vmatprep.subr.mxu0 0.0
  %2943 = vmatpush1.msra.mxu0 0.0
  %2944 = vmatprep.subr.mxu0 0.0
  %2945 = vmatpush1.msra.mxu0 0.0
  %2946 = vmatprep.subr.mxu0 0.0
  %2947 = vmatpush1.msra.mxu0 0.0
  %2948 = vmatprep.subr.mxu0 0.0
  %2949 = vmatpush1.msra.mxu0 0.0
  %2950 = vmatprep.subr.mxu0 0.0
  %2951 = vmatpush1.msra.mxu0 0.0
  %2952 = vmatprep.subr.mxu0 0.0
  %2953 = vmatpush1.msra.mxu0 0.0
  %2954 = vmatprep.subr.mxu0 0.0
  %2955 = vmatpush1.msra.mxu0 0.0
  %2956 = vmatprep.subr.mxu0 0.0
  %2957 = vmatpush1.msra.mxu0 0.0
  %2958 = vmatprep.subr.mxu0 0.0
  %2959 = vmatpush1.msra.mxu0 0.0
  %2960 = vmatprep.subr.mxu0 0.0
  %2961 = vmatpush1.msra.mxu0 0.0
  %2962 = vmatprep.subr.mxu0 0.0
  %2963 = vmatpush1.msra.mxu0 0.0
  %2964 = vmatprep.subr.mxu0 0.0
  %2965 = vmatpush1.msra.mxu0 0.0
  %2966 = vmatprep.subr.mxu0 0.0
  %2967 = vmatpush1.msra.mxu0 0.0
  %2968 = vmatprep.subr.mxu0 0.0
  %2969 = vmatpush1.msra.mxu0 0.0
  %2970 = vmatprep.subr.mxu0 0.0
  %2971 = vmatpush1.msra.mxu0 0.0
  %2972 = vmatprep.subr.mxu0 0.0
  %2973 = vmatpush1.msra.mxu0 0.0
  %2974 = vmatprep.subr.mxu0 0.0
  %2975 = vmatpush1.msra.mxu0 0.0
  %2976 = vmatprep.subr.mxu0 0.0
  %2977 = vmatpush1.msra.mxu0 0.0
  %2978 = vmatprep.subr.mxu0 0.0
  %2979 = vmatpush1.msra.mxu0 0.0
  %2980 = vmatprep.subr.mxu0 0.0
  %2981 = vmatpush1.msra.mxu0 0.0
  %2982 = vmatprep.mubr.f32.mxu0 0.0
  %2983 = vmatmul.mubr.f32.gmra.mrb[0].mxu0 %v2913
  %v2984 = vpop.f32.mrb[0].mxu0
  %v2985 = vadd.f32 0.0, %v2984
  %v2986 = vpop.f32.mrb[0].mxu0
  %2987 = vmatprep.mubr.f32.mxu0 0.0
  %2988 = vmatmul.mubr.f32.gmra.mrb[0].mxu0 %v2916
  %v2989 = vpop.f32.mrb[0].mxu0
  %v2990 = vadd.f32 0.0, %v2989
  %v2991 = vpop.f32.mrb[0].mxu0
  %2992 = vdwg.mxu0
  %v2994 = vsel %vm412, %v2171, 0
  %v2997 = vsel %vm412, %v2172, 0
  %2999 = vmatprep.subr.mxu0 0.0
  %3000 = vmatpush1.msra.mxu0 %v34
  %3001 = vmatprep.subr.mxu0 0.0
  %3002 = vmatpush1.msra.mxu0 %v35
  %3003 = vmatprep.subr.mxu0 0.0
  %3004 = vmatpush1.msra.mxu0 0.0
  %3005 = vmatprep.subr.mxu0 0.0
  %3006 = vmatpush1.msra.mxu0 0.0
  %3007 = vmatprep.subr.mxu0 0.0
  %3008 = vmatpush1.msra.mxu0 0.0
  %3009 = vmatprep.subr.mxu0 0.0
  %3010 = vmatpush1.msra.mxu0 0.0
  %3011 = vmatprep.subr.mxu0 0.0
  %3012 = vmatpush1.msra.mxu0 0.0
  %3013 = vmatprep.subr.mxu0 0.0
  %3014 = vmatpush1.msra.mxu0 0.0
  %3015 = vmatprep.subr.mxu0 0.0
  %3016 = vmatpush1.msra.mxu0 0.0
  %3017 = vmatprep.subr.mxu0 0.0
  %3018 = vmatpush1.msra.mxu0 0.0
  %3019 = vmatprep.subr.mxu0 0.0
  %3020 = vmatpush1.msra.mxu0 0.0
  %3021 = vmatprep.subr.mxu0 0.0
  %3022 = vmatpush1.msra.mxu0 0.0
  %3023 = vmatprep.subr.mxu0 0.0
  %3024 = vmatpush1.msra.mxu0 0.0
  %3025 = vmatprep.subr.mxu0 0.0
  %3026 = vmatpush1.msra.mxu0 0.0
  %3027 = vmatprep.subr.mxu0 0.0
  %3028 = vmatpush1.msra.mxu0 0.0
  %3029 = vmatprep.subr.mxu0 0.0
  %3030 = vmatpush1.msra.mxu0 0.0
  %3031 = vmatprep.subr.mxu0 0.0
  %3032 = vmatpush1.msra.mxu0 0.0
  %3033 = vmatprep.subr.mxu0 0.0
  %3034 = vmatpush1.msra.mxu0 0.0
  %3035 = vmatprep.subr.mxu0 0.0
  %3036 = vmatpush1.msra.mxu0 0.0
  %3037 = vmatprep.subr.mxu0 0.0
  %3038 = vmatpush1.msra.mxu0 0.0
  %3039 = vmatprep.subr.mxu0 0.0
  %3040 = vmatpush1.msra.mxu0 0.0
  %3041 = vmatprep.subr.mxu0 0.0
  %3042 = vmatpush1.msra.mxu0 0.0
  %3043 = vmatprep.subr.mxu0 0.0
  %3044 = vmatpush1.msra.mxu0 0.0
  %3045 = vmatprep.subr.mxu0 0.0
  %3046 = vmatpush1.msra.mxu0 0.0
  %3047 = vmatprep.subr.mxu0 0.0
  %3048 = vmatpush1.msra.mxu0 0.0
  %3049 = vmatprep.subr.mxu0 0.0
  %3050 = vmatpush1.msra.mxu0 0.0
  %3051 = vmatprep.subr.mxu0 0.0
  %3052 = vmatpush1.msra.mxu0 0.0
  %3053 = vmatprep.subr.mxu0 0.0
  %3054 = vmatpush1.msra.mxu0 0.0
  %3055 = vmatprep.subr.mxu0 0.0
  %3056 = vmatpush1.msra.mxu0 0.0
  %3057 = vmatprep.subr.mxu0 0.0
  %3058 = vmatpush1.msra.mxu0 0.0
  %3059 = vmatprep.subr.mxu0 0.0
  %3060 = vmatpush1.msra.mxu0 0.0
  %3061 = vmatprep.subr.mxu0 0.0
  %3062 = vmatpush1.msra.mxu0 0.0
  %3063 = vmatprep.mubr.f32.mxu0 0.0
  %3064 = vmatmul.mubr.f32.gmra.mrb[0].mxu0 %v2994
  %v3065 = vpop.f32.mrb[0].mxu0
  %v3066 = vadd.f32 0.0, %v3065
  %v3067 = vpop.f32.mrb[0].mxu0
  %3068 = vmatprep.mubr.f32.mxu0 0.0
  %3069 = vmatmul.mubr.f32.gmra.mrb[0].mxu0 %v2997
  %v3070 = vpop.f32.mrb[0].mxu0
  %v3071 = vadd.f32 0.0, %v3070
  %v3072 = vpop.f32.mrb[0].mxu0
  %3073 = vdwg.mxu0
  %v3075 = vsel %vm412, %v2173, 0
  %v3078 = vsel %vm412, %v2174, 0
  %3080 = vmatprep.subr.mxu0 0.0
  %3081 = vmatpush1.msra.mxu0 %v36
  %3082 = vmatprep.subr.mxu0 0.0
  %3083 = vmatpush1.msra.mxu0 %v37
  %3084 = vmatprep.subr.mxu0 0.0
  %3085 = vmatpush1.msra.mxu0 0.0
  %3086 = vmatprep.subr.mxu0 0.0
  %3087 = vmatpush1.msra.mxu0 0.0
  %3088 = vmatprep.subr.mxu0 0.0
  %3089 = vmatpush1.msra.mxu0 0.0
  %3090 = vmatprep.subr.mxu0 0.0
  %3091 = vmatpush1.msra.mxu0 0.0
  %3092 = vmatprep.subr.mxu0 0.0
  %3093 = vmatpush1.msra.mxu0 0.0
  %3094 = vmatprep.subr.mxu0 0.0
  %3095 = vmatpush1.msra.mxu0 0.0
  %3096 = vmatprep.subr.mxu0 0.0
  %3097 = vmatpush1.msra.mxu0 0.0
  %3098 = vmatprep.subr.mxu0 0.0
  %3099 = vmatpush1.msra.mxu0 0.0
  %3100 = vmatprep.subr.mxu0 0.0
  %3101 = vmatpush1.msra.mxu0 0.0
  %3102 = vmatprep.subr.mxu0 0.0
  %3103 = vmatpush1.msra.mxu0 0.0
  %3104 = vmatprep.subr.mxu0 0.0
  %3105 = vmatpush1.msra.mxu0 0.0
  %3106 = vmatprep.subr.mxu0 0.0
  %3107 = vmatpush1.msra.mxu0 0.0
  %3108 = vmatprep.subr.mxu0 0.0
  %3109 = vmatpush1.msra.mxu0 0.0
  %3110 = vmatprep.subr.mxu0 0.0
  %3111 = vmatpush1.msra.mxu0 0.0
  %3112 = vmatprep.subr.mxu0 0.0
  %3113 = vmatpush1.msra.mxu0 0.0
  %3114 = vmatprep.subr.mxu0 0.0
  %3115 = vmatpush1.msra.mxu0 0.0
  %3116 = vmatprep.subr.mxu0 0.0
  %3117 = vmatpush1.msra.mxu0 0.0
  %3118 = vmatprep.subr.mxu0 0.0
  %3119 = vmatpush1.msra.mxu0 0.0
  %3120 = vmatprep.subr.mxu0 0.0
  %3121 = vmatpush1.msra.mxu0 0.0
  %3122 = vmatprep.subr.mxu0 0.0
  %3123 = vmatpush1.msra.mxu0 0.0
  %3124 = vmatprep.subr.mxu0 0.0
  %3125 = vmatpush1.msra.mxu0 0.0
  %3126 = vmatprep.subr.mxu0 0.0
  %3127 = vmatpush1.msra.mxu0 0.0
  %3128 = vmatprep.subr.mxu0 0.0
  %3129 = vmatpush1.msra.mxu0 0.0
  %3130 = vmatprep.subr.mxu0 0.0
  %3131 = vmatpush1.msra.mxu0 0.0
  %3132 = vmatprep.subr.mxu0 0.0
  %3133 = vmatpush1.msra.mxu0 0.0
  %3134 = vmatprep.subr.mxu0 0.0
  %3135 = vmatpush1.msra.mxu0 0.0
  %3136 = vmatprep.subr.mxu0 0.0
  %3137 = vmatpush1.msra.mxu0 0.0
  %3138 = vmatprep.subr.mxu0 0.0
  %3139 = vmatpush1.msra.mxu0 0.0
  %3140 = vmatprep.subr.mxu0 0.0
  %3141 = vmatpush1.msra.mxu0 0.0
  %3142 = vmatprep.subr.mxu0 0.0
  %3143 = vmatpush1.msra.mxu0 0.0
  %3144 = vmatprep.mubr.f32.mxu0 0.0
  %3145 = vmatmul.mubr.f32.gmra.mrb[0].mxu0 %v3075
  %v3146 = vpop.f32.mrb[0].mxu0
  %v3147 = vadd.f32 0.0, %v3146
  %v3148 = vpop.f32.mrb[0].mxu0
  %3149 = vmatprep.mubr.f32.mxu0 0.0
  %3150 = vmatmul.mubr.f32.gmra.mrb[0].mxu0 %v3078
  %v3151 = vpop.f32.mrb[0].mxu0
  %v3152 = vadd.f32 0.0, %v3151
  %v3153 = vpop.f32.mrb[0].mxu0
  %3154 = vdwg.mxu0
  %v3156 = vsel %vm412, %v2175, 0
  %v3159 = vsel %vm412, %v2176, 0
  %3161 = vmatprep.subr.mxu0 0.0
  %3162 = vmatpush1.msra.mxu0 %v38
  %3163 = vmatprep.subr.mxu0 0.0
  %3164 = vmatpush1.msra.mxu0 %v39
  %3165 = vmatprep.subr.mxu0 0.0
  %3166 = vmatpush1.msra.mxu0 0.0
  %3167 = vmatprep.subr.mxu0 0.0
  %3168 = vmatpush1.msra.mxu0 0.0
  %3169 = vmatprep.subr.mxu0 0.0
  %3170 = vmatpush1.msra.mxu0 0.0
  %3171 = vmatprep.subr.mxu0 0.0
  %3172 = vmatpush1.msra.mxu0 0.0
  %3173 = vmatprep.subr.mxu0 0.0
  %3174 = vmatpush1.msra.mxu0 0.0
  %3175 = vmatprep.subr.mxu0 0.0
  %3176 = vmatpush1.msra.mxu0 0.0
  %3177 = vmatprep.subr.mxu0 0.0
  %3178 = vmatpush1.msra.mxu0 0.0
  %3179 = vmatprep.subr.mxu0 0.0
  %3180 = vmatpush1.msra.mxu0 0.0
  %3181 = vmatprep.subr.mxu0 0.0
  %3182 = vmatpush1.msra.mxu0 0.0
  %3183 = vmatprep.subr.mxu0 0.0
  %3184 = vmatpush1.msra.mxu0 0.0
  %3185 = vmatprep.subr.mxu0 0.0
  %3186 = vmatpush1.msra.mxu0 0.0
  %3187 = vmatprep.subr.mxu0 0.0
  %3188 = vmatpush1.msra.mxu0 0.0
  %3189 = vmatprep.subr.mxu0 0.0
  %3190 = vmatpush1.msra.mxu0 0.0
  %3191 = vmatprep.subr.mxu0 0.0
  %3192 = vmatpush1.msra.mxu0 0.0
  %3193 = vmatprep.subr.mxu0 0.0
  %3194 = vmatpush1.msra.mxu0 0.0
  %3195 = vmatprep.subr.mxu0 0.0
  %3196 = vmatpush1.msra.mxu0 0.0
  %3197 = vmatprep.subr.mxu0 0.0
  %3198 = vmatpush1.msra.mxu0 0.0
  %3199 = vmatprep.subr.mxu0 0.0
  %3200 = vmatpush1.msra.mxu0 0.0
  %3201 = vmatprep.subr.mxu0 0.0
  %3202 = vmatpush1.msra.mxu0 0.0
  %3203 = vmatprep.subr.mxu0 0.0
  %3204 = vmatpush1.msra.mxu0 0.0
  %3205 = vmatprep.subr.mxu0 0.0
  %3206 = vmatpush1.msra.mxu0 0.0
  %3207 = vmatprep.subr.mxu0 0.0
  %3208 = vmatpush1.msra.mxu0 0.0
  %3209 = vmatprep.subr.mxu0 0.0
  %3210 = vmatpush1.msra.mxu0 0.0
  %3211 = vmatprep.subr.mxu0 0.0
  %3212 = vmatpush1.msra.mxu0 0.0
  %3213 = vmatprep.subr.mxu0 0.0
  %3214 = vmatpush1.msra.mxu0 0.0
  %3215 = vmatprep.subr.mxu0 0.0
  %3216 = vmatpush1.msra.mxu0 0.0
  %3217 = vmatprep.subr.mxu0 0.0
  %3218 = vmatpush1.msra.mxu0 0.0
  %3219 = vmatprep.subr.mxu0 0.0
  %3220 = vmatpush1.msra.mxu0 0.0
  %3221 = vmatprep.subr.mxu0 0.0
  %3222 = vmatpush1.msra.mxu0 0.0
  %3223 = vmatprep.subr.mxu0 0.0
  %3224 = vmatpush1.msra.mxu0 0.0
  %3225 = vmatprep.mubr.f32.mxu0 0.0
  %3226 = vmatmul.mubr.f32.gmra.mrb[0].mxu0 %v3156
  %v3227 = vpop.f32.mrb[0].mxu0
  %v3228 = vadd.f32 0.0, %v3227
  %v3229 = vpop.f32.mrb[0].mxu0
  %3230 = vmatprep.mubr.f32.mxu0 0.0
  %3231 = vmatmul.mubr.f32.gmra.mrb[0].mxu0 %v3159
  %v3232 = vpop.f32.mrb[0].mxu0
  %v3233 = vadd.f32 0.0, %v3232
  %v3234 = vpop.f32.mrb[0].mxu0
  %3235 = vdwg.mxu0
  %v3237 = vsel %vm412, %v2177, 0
  %v3240 = vsel %vm412, %v2178, 0
  %3242 = vmatprep.subr.mxu0 0.0
  %3243 = vmatpush1.msra.mxu0 %v40
  %3244 = vmatprep.subr.mxu0 0.0
  %3245 = vmatpush1.msra.mxu0 %v41
  %3246 = vmatprep.subr.mxu0 0.0
  %3247 = vmatpush1.msra.mxu0 0.0
  %3248 = vmatprep.subr.mxu0 0.0
  %3249 = vmatpush1.msra.mxu0 0.0
  %3250 = vmatprep.subr.mxu0 0.0
  %3251 = vmatpush1.msra.mxu0 0.0
  %3252 = vmatprep.subr.mxu0 0.0
  %3253 = vmatpush1.msra.mxu0 0.0
  %3254 = vmatprep.subr.mxu0 0.0
  %3255 = vmatpush1.msra.mxu0 0.0
  %3256 = vmatprep.subr.mxu0 0.0
  %3257 = vmatpush1.msra.mxu0 0.0
  %3258 = vmatprep.subr.mxu0 0.0
  %3259 = vmatpush1.msra.mxu0 0.0
  %3260 = vmatprep.subr.mxu0 0.0
  %3261 = vmatpush1.msra.mxu0 0.0
  %3262 = vmatprep.subr.mxu0 0.0
  %3263 = vmatpush1.msra.mxu0 0.0
  %3264 = vmatprep.subr.mxu0 0.0
  %3265 = vmatpush1.msra.mxu0 0.0
  %3266 = vmatprep.subr.mxu0 0.0
  %3267 = vmatpush1.msra.mxu0 0.0
  %3268 = vmatprep.subr.mxu0 0.0
  %3269 = vmatpush1.msra.mxu0 0.0
  %3270 = vmatprep.subr.mxu0 0.0
  %3271 = vmatpush1.msra.mxu0 0.0
  %3272 = vmatprep.subr.mxu0 0.0
  %3273 = vmatpush1.msra.mxu0 0.0
  %3274 = vmatprep.subr.mxu0 0.0
  %3275 = vmatpush1.msra.mxu0 0.0
  %3276 = vmatprep.subr.mxu0 0.0
  %3277 = vmatpush1.msra.mxu0 0.0
  %3278 = vmatprep.subr.mxu0 0.0
  %3279 = vmatpush1.msra.mxu0 0.0
  %3280 = vmatprep.subr.mxu0 0.0
  %3281 = vmatpush1.msra.mxu0 0.0
  %3282 = vmatprep.subr.mxu0 0.0
  %3283 = vmatpush1.msra.mxu0 0.0
  %3284 = vmatprep.subr.mxu0 0.0
  %3285 = vmatpush1.msra.mxu0 0.0
  %3286 = vmatprep.subr.mxu0 0.0
  %3287 = vmatpush1.msra.mxu0 0.0
  %3288 = vmatprep.subr.mxu0 0.0
  %3289 = vmatpush1.msra.mxu0 0.0
  %3290 = vmatprep.subr.mxu0 0.0
  %3291 = vmatpush1.msra.mxu0 0.0
  %3292 = vmatprep.subr.mxu0 0.0
  %3293 = vmatpush1.msra.mxu0 0.0
  %3294 = vmatprep.subr.mxu0 0.0
  %3295 = vmatpush1.msra.mxu0 0.0
  %3296 = vmatprep.subr.mxu0 0.0
  %3297 = vmatpush1.msra.mxu0 0.0
  %3298 = vmatprep.subr.mxu0 0.0
  %3299 = vmatpush1.msra.mxu0 0.0
  %3300 = vmatprep.subr.mxu0 0.0
  %3301 = vmatpush1.msra.mxu0 0.0
  %3302 = vmatprep.subr.mxu0 0.0
  %3303 = vmatpush1.msra.mxu0 0.0
  %3304 = vmatprep.subr.mxu0 0.0
  %3305 = vmatpush1.msra.mxu0 0.0
  %3306 = vmatprep.mubr.f32.mxu0 0.0
  %3307 = vmatmul.mubr.f32.gmra.mrb[0].mxu0 %v3237
  %v3308 = vpop.f32.mrb[0].mxu0
  %v3309 = vadd.f32 0.0, %v3308
  %v3310 = vpop.f32.mrb[0].mxu0
  %3311 = vmatprep.mubr.f32.mxu0 0.0
  %3312 = vmatmul.mubr.f32.gmra.mrb[0].mxu0 %v3240
  %v3313 = vpop.f32.mrb[0].mxu0
  %v3314 = vadd.f32 0.0, %v3313
  %v3315 = vpop.f32.mrb[0].mxu0
  %3316 = vdwg.mxu0
  %v3318 = vsel %vm412, %v2179, 0
  %v3321 = vsel %vm412, %v2180, 0
  %3323 = vmatprep.subr.mxu0 0.0
  %3324 = vmatpush1.msra.mxu0 %v42
  %3325 = vmatprep.subr.mxu0 0.0
  %3326 = vmatpush1.msra.mxu0 %v43
  %3327 = vmatprep.subr.mxu0 0.0
  %3328 = vmatpush1.msra.mxu0 0.0
  %3329 = vmatprep.subr.mxu0 0.0
  %3330 = vmatpush1.msra.mxu0 0.0
  %3331 = vmatprep.subr.mxu0 0.0
  %3332 = vmatpush1.msra.mxu0 0.0
  %3333 = vmatprep.subr.mxu0 0.0
  %3334 = vmatpush1.msra.mxu0 0.0
  %3335 = vmatprep.subr.mxu0 0.0
  %3336 = vmatpush1.msra.mxu0 0.0
  %3337 = vmatprep.subr.mxu0 0.0
  %3338 = vmatpush1.msra.mxu0 0.0
  %3339 = vmatprep.subr.mxu0 0.0
  %3340 = vmatpush1.msra.mxu0 0.0
  %3341 = vmatprep.subr.mxu0 0.0
  %3342 = vmatpush1.msra.mxu0 0.0
  %3343 = vmatprep.subr.mxu0 0.0
  %3344 = vmatpush1.msra.mxu0 0.0
  %3345 = vmatprep.subr.mxu0 0.0
  %3346 = vmatpush1.msra.mxu0 0.0
  %3347 = vmatprep.subr.mxu0 0.0
  %3348 = vmatpush1.msra.mxu0 0.0
  %3349 = vmatprep.subr.mxu0 0.0
  %3350 = vmatpush1.msra.mxu0 0.0
  %3351 = vmatprep.subr.mxu0 0.0
  %3352 = vmatpush1.msra.mxu0 0.0
  %3353 = vmatprep.subr.mxu0 0.0
  %3354 = vmatpush1.msra.mxu0 0.0
  %3355 = vmatprep.subr.mxu0 0.0
  %3356 = vmatpush1.msra.mxu0 0.0
  %3357 = vmatprep.subr.mxu0 0.0
  %3358 = vmatpush1.msra.mxu0 0.0
  %3359 = vmatprep.subr.mxu0 0.0
  %3360 = vmatpush1.msra.mxu0 0.0
  %3361 = vmatprep.subr.mxu0 0.0
  %3362 = vmatpush1.msra.mxu0 0.0
  %3363 = vmatprep.subr.mxu0 0.0
  %3364 = vmatpush1.msra.mxu0 0.0
  %3365 = vmatprep.subr.mxu0 0.0
  %3366 = vmatpush1.msra.mxu0 0.0
  %3367 = vmatprep.subr.mxu0 0.0
  %3368 = vmatpush1.msra.mxu0 0.0
  %3369 = vmatprep.subr.mxu0 0.0
  %3370 = vmatpush1.msra.mxu0 0.0
  %3371 = vmatprep.subr.mxu0 0.0
  %3372 = vmatpush1.msra.mxu0 0.0
  %3373 = vmatprep.subr.mxu0 0.0
  %3374 = vmatpush1.msra.mxu0 0.0
  %3375 = vmatprep.subr.mxu0 0.0
  %3376 = vmatpush1.msra.mxu0 0.0
  %3377 = vmatprep.subr.mxu0 0.0
  %3378 = vmatpush1.msra.mxu0 0.0
  %3379 = vmatprep.subr.mxu0 0.0
  %3380 = vmatpush1.msra.mxu0 0.0
  %3381 = vmatprep.subr.mxu0 0.0
  %3382 = vmatpush1.msra.mxu0 0.0
  %3383 = vmatprep.subr.mxu0 0.0
  %3384 = vmatpush1.msra.mxu0 0.0
  %3385 = vmatprep.subr.mxu0 0.0
  %3386 = vmatpush1.msra.mxu0 0.0
  %3387 = vmatprep.mubr.f32.mxu0 0.0
  %3388 = vmatmul.mubr.f32.gmra.mrb[0].mxu0 %v3318
  %v3389 = vpop.f32.mrb[0].mxu0
  %v3390 = vadd.f32 0.0, %v3389
  %v3391 = vpop.f32.mrb[0].mxu0
  %3392 = vmatprep.mubr.f32.mxu0 0.0
  %3393 = vmatmul.mubr.f32.gmra.mrb[0].mxu0 %v3321
  %v3394 = vpop.f32.mrb[0].mxu0
  %v3395 = vadd.f32 0.0, %v3394
  %v3396 = vpop.f32.mrb[0].mxu0
  %3397 = vdwg.mxu0
  %v3399 = vsel %vm412, %v2181, 0
  %v3402 = vsel %vm412, %v2182, 0
  %3404 = vmatprep.subr.mxu0 0.0
  %3405 = vmatpush1.msra.mxu0 %v44
  %3406 = vmatprep.subr.mxu0 0.0
  %3407 = vmatpush1.msra.mxu0 %v45
  %3408 = vmatprep.subr.mxu0 0.0
  %3409 = vmatpush1.msra.mxu0 0.0
  %3410 = vmatprep.subr.mxu0 0.0
  %3411 = vmatpush1.msra.mxu0 0.0
  %3412 = vmatprep.subr.mxu0 0.0
  %3413 = vmatpush1.msra.mxu0 0.0
  %3414 = vmatprep.subr.mxu0 0.0
  %3415 = vmatpush1.msra.mxu0 0.0
  %3416 = vmatprep.subr.mxu0 0.0
  %3417 = vmatpush1.msra.mxu0 0.0
  %3418 = vmatprep.subr.mxu0 0.0
  %3419 = vmatpush1.msra.mxu0 0.0
  %3420 = vmatprep.subr.mxu0 0.0
  %3421 = vmatpush1.msra.mxu0 0.0
  %3422 = vmatprep.subr.mxu0 0.0
  %3423 = vmatpush1.msra.mxu0 0.0
  %3424 = vmatprep.subr.mxu0 0.0
  %3425 = vmatpush1.msra.mxu0 0.0
  %3426 = vmatprep.subr.mxu0 0.0
  %3427 = vmatpush1.msra.mxu0 0.0
  %3428 = vmatprep.subr.mxu0 0.0
  %3429 = vmatpush1.msra.mxu0 0.0
  %3430 = vmatprep.subr.mxu0 0.0
  %3431 = vmatpush1.msra.mxu0 0.0
  %3432 = vmatprep.subr.mxu0 0.0
  %3433 = vmatpush1.msra.mxu0 0.0
  %3434 = vmatprep.subr.mxu0 0.0
  %3435 = vmatpush1.msra.mxu0 0.0
  %3436 = vmatprep.subr.mxu0 0.0
  %3437 = vmatpush1.msra.mxu0 0.0
  %3438 = vmatprep.subr.mxu0 0.0
  %3439 = vmatpush1.msra.mxu0 0.0
  %3440 = vmatprep.subr.mxu0 0.0
  %3441 = vmatpush1.msra.mxu0 0.0
  %3442 = vmatprep.subr.mxu0 0.0
  %3443 = vmatpush1.msra.mxu0 0.0
  %3444 = vmatprep.subr.mxu0 0.0
  %3445 = vmatpush1.msra.mxu0 0.0
  %3446 = vmatprep.subr.mxu0 0.0
  %3447 = vmatpush1.msra.mxu0 0.0
  %3448 = vmatprep.subr.mxu0 0.0
  %3449 = vmatpush1.msra.mxu0 0.0
  %3450 = vmatprep.subr.mxu0 0.0
  %3451 = vmatpush1.msra.mxu0 0.0
  %3452 = vmatprep.subr.mxu0 0.0
  %3453 = vmatpush1.msra.mxu0 0.0
  %3454 = vmatprep.subr.mxu0 0.0
  %3455 = vmatpush1.msra.mxu0 0.0
  %3456 = vmatprep.subr.mxu0 0.0
  %3457 = vmatpush1.msra.mxu0 0.0
  %3458 = vmatprep.subr.mxu0 0.0
  %3459 = vmatpush1.msra.mxu0 0.0
  %3460 = vmatprep.subr.mxu0 0.0
  %3461 = vmatpush1.msra.mxu0 0.0
  %3462 = vmatprep.subr.mxu0 0.0
  %3463 = vmatpush1.msra.mxu0 0.0
  %3464 = vmatprep.subr.mxu0 0.0
  %3465 = vmatpush1.msra.mxu0 0.0
  %3466 = vmatprep.subr.mxu0 0.0
  %3467 = vmatpush1.msra.mxu0 0.0
  %3468 = vmatprep.mubr.f32.mxu0 0.0
  %3469 = vmatmul.mubr.f32.gmra.mrb[0].mxu0 %v3399
  %v3470 = vpop.f32.mrb[0].mxu0
  %v3471 = vadd.f32 0.0, %v3470
  %v3472 = vpop.f32.mrb[0].mxu0
  %3473 = vmatprep.mubr.f32.mxu0 0.0
  %3474 = vmatmul.mubr.f32.gmra.mrb[0].mxu0 %v3402
  %v3475 = vpop.f32.mrb[0].mxu0
  %v3476 = vadd.f32 0.0, %v3475
  %v3477 = vpop.f32.mrb[0].mxu0
  %3478 = vdwg.mxu0
  %v3479 = vld [vmem:[%s2] sm:$0xff]
  %v3480 = vld [vmem:[%s2 + $0x8] sm:$0xff]
  %v3481 = vld [vmem:[%s2 + $0x10] sm:$0xff]
  %v3482 = vld [vmem:[%s2 + $0x18] sm:$0xff]
  %3483 = vrot.lane.b32.xlu0 %v374, 64
  %v3484 = vpop.permute.xlu0 %3483
  %3485 = vrot.lane.b32.xlu0 %v375, 64
  %v3486 = vpop.permute.xlu0 %3485
  %3487 = vrot.lane.b32.xlu0 %v374, 112
  %v3488 = vpop.permute.xlu0 %3487
  %3489 = vrot.lane.b32.xlu0 %v375, 112
  %v3490 = vpop.permute.xlu0 %3489
  %v3491 = vsel %vm412, %v3484, 0
  %v3493 = vsel %vm412, %v3486, 0
  %v3495 = vsel %vm412, %v3488, 0
  %v3497 = vsel %vm412, %v3490, 0
  %3499 = vmatprep.subr.mxu0 0.0
  %3500 = vmatpush1.xpose.msra.mxu0 %v3495
  %3501 = vmatprep.subr.mxu0 0.0
  %3502 = vmatpush1.xpose.msra.mxu0 %v3497
  %3503 = vmatprep.subr.mxu0 0.0
  %3504 = vmatpush1.xpose.msra.mxu0 0.0
  %3505 = vmatprep.subr.mxu0 0.0
  %3506 = vmatpush1.xpose.msra.mxu0 0.0
  %3507 = vmatprep.subr.mxu0 0.0
  %3508 = vmatpush1.xpose.msra.mxu0 0.0
  %3509 = vmatprep.subr.mxu0 0.0
  %3510 = vmatpush1.xpose.msra.mxu0 0.0
  %3511 = vmatprep.subr.mxu0 0.0
  %3512 = vmatpush1.xpose.msra.mxu0 0.0
  %3513 = vmatprep.subr.mxu0 0.0
  %3514 = vmatpush1.xpose.msra.mxu0 0.0
  %3515 = vmatprep.subr.mxu0 0.0
  %3516 = vmatpush1.xpose.msra.mxu0 0.0
  %3517 = vmatprep.subr.mxu0 0.0
  %3518 = vmatpush1.xpose.msra.mxu0 0.0
  %3519 = vmatprep.subr.mxu0 0.0
  %3520 = vmatpush1.xpose.msra.mxu0 0.0
  %3521 = vmatprep.subr.mxu0 0.0
  %3522 = vmatpush1.xpose.msra.mxu0 0.0
  %3523 = vmatprep.subr.mxu0 0.0
  %3524 = vmatpush1.xpose.msra.mxu0 0.0
  %3525 = vmatprep.subr.mxu0 0.0
  %3526 = vmatpush1.xpose.msra.mxu0 0.0
  %3527 = vmatprep.subr.mxu0 0.0
  %3528 = vmatpush1.xpose.msra.mxu0 0.0
  %3529 = vmatprep.subr.mxu0 0.0
  %3530 = vmatpush1.xpose.msra.mxu0 0.0
  %3531 = vmatprep.subr.mxu0 0.0
  %3532 = vmatpush1.xpose.msra.mxu0 0.0
  %3533 = vmatprep.subr.mxu0 0.0
  %3534 = vmatpush1.xpose.msra.mxu0 0.0
  %3535 = vmatprep.subr.mxu0 0.0
  %3536 = vmatpush1.xpose.msra.mxu0 0.0
  %3537 = vmatprep.subr.mxu0 0.0
  %3538 = vmatpush1.xpose.msra.mxu0 0.0
  %3539 = vmatprep.subr.mxu0 0.0
  %3540 = vmatpush1.xpose.msra.mxu0 0.0
  %3541 = vmatprep.subr.mxu0 0.0
  %3542 = vmatpush1.xpose.msra.mxu0 0.0
  %3543 = vmatprep.subr.mxu0 0.0
  %3544 = vmatpush1.xpose.msra.mxu0 0.0
  %3545 = vmatprep.subr.mxu0 0.0
  %3546 = vmatpush1.xpose.msra.mxu0 0.0
  %3547 = vmatprep.subr.mxu0 0.0
  %3548 = vmatpush1.xpose.msra.mxu0 0.0
  %3549 = vmatprep.subr.mxu0 0.0
  %3550 = vmatpush1.xpose.msra.mxu0 0.0
  %3551 = vmatprep.subr.mxu0 0.0
  %3552 = vmatpush1.xpose.msra.mxu0 0.0
  %3553 = vmatprep.subr.mxu0 0.0
  %3554 = vmatpush1.xpose.msra.mxu0 0.0
  %3555 = vmatprep.subr.mxu0 0.0
  %3556 = vmatpush1.xpose.msra.mxu0 0.0
  %3557 = vmatprep.subr.mxu0 0.0
  %3558 = vmatpush1.xpose.msra.mxu0 0.0
  %3559 = vmatprep.subr.mxu0 0.0
  %3560 = vmatpush1.xpose.msra.mxu0 0.0
  %3561 = vmatprep.subr.mxu0 0.0
  %3562 = vmatpush1.xpose.msra.mxu0 0.0
  %3563 = vmatprep.mubr.f32.mxu0 0.0
  %3564 = vmatmul.mubr.f32.gmra.mrb[0].mxu0 %v3491
  %v3565 = vpop.f32.mrb[0].mxu0
  %v3566 = vadd.f32 0.0, %v3565
  %v3567 = vpop.f32.mrb[0].mxu0
  %3568 = vmatprep.mubr.f32.mxu0 0.0
  %3569 = vmatmul.mubr.f32.gmra.mrb[0].mxu0 %v3493
  %v3570 = vpop.f32.mrb[0].mxu0
  %v3571 = vadd.f32 0.0, %v3570
  %v3572 = vpop.f32.mrb[0].mxu0
  %3573 = vdwg.mxu0
  %3574 = vrot.lane.b32.xlu0 %v376, 64
  %v3575 = vpop.permute.xlu0 %3574
  %3576 = vrot.lane.b32.xlu0 %v377, 64
  %v3577 = vpop.permute.xlu0 %3576
  %3578 = vrot.lane.b32.xlu0 %v376, 112
  %v3579 = vpop.permute.xlu0 %3578
  %3580 = vrot.lane.b32.xlu0 %v377, 112
  %v3581 = vpop.permute.xlu0 %3580
  %v3582 = vsel %vm412, %v3575, 0
  %v3584 = vsel %vm412, %v3577, 0
  %v3586 = vsel %vm412, %v3579, 0
  %v3588 = vsel %vm412, %v3581, 0
  %3590 = vmatprep.subr.mxu0 0.0
  %3591 = vmatpush1.xpose.msra.mxu0 %v3586
  %3592 = vmatprep.subr.mxu0 0.0
  %3593 = vmatpush1.xpose.msra.mxu0 %v3588
  %3594 = vmatprep.subr.mxu0 0.0
  %3595 = vmatpush1.xpose.msra.mxu0 0.0
  %3596 = vmatprep.subr.mxu0 0.0
  %3597 = vmatpush1.xpose.msra.mxu0 0.0
  %3598 = vmatprep.subr.mxu0 0.0
  %3599 = vmatpush1.xpose.msra.mxu0 0.0
  %3600 = vmatprep.subr.mxu0 0.0
  %3601 = vmatpush1.xpose.msra.mxu0 0.0
  %3602 = vmatprep.subr.mxu0 0.0
  %3603 = vmatpush1.xpose.msra.mxu0 0.0
  %3604 = vmatprep.subr.mxu0 0.0
  %3605 = vmatpush1.xpose.msra.mxu0 0.0
  %3606 = vmatprep.subr.mxu0 0.0
  %3607 = vmatpush1.xpose.msra.mxu0 0.0
  %3608 = vmatprep.subr.mxu0 0.0
  %3609 = vmatpush1.xpose.msra.mxu0 0.0
  %3610 = vmatprep.subr.mxu0 0.0
  %3611 = vmatpush1.xpose.msra.mxu0 0.0
  %3612 = vmatprep.subr.mxu0 0.0
  %3613 = vmatpush1.xpose.msra.mxu0 0.0
  %3614 = vmatprep.subr.mxu0 0.0
  %3615 = vmatpush1.xpose.msra.mxu0 0.0
  %3616 = vmatprep.subr.mxu0 0.0
  %3617 = vmatpush1.xpose.msra.mxu0 0.0
  %3618 = vmatprep.subr.mxu0 0.0
  %3619 = vmatpush1.xpose.msra.mxu0 0.0
  %3620 = vmatprep.subr.mxu0 0.0
  %3621 = vmatpush1.xpose.msra.mxu0 0.0
  %3622 = vmatprep.subr.mxu0 0.0
  %3623 = vmatpush1.xpose.msra.mxu0 0.0
  %3624 = vmatprep.subr.mxu0 0.0
  %3625 = vmatpush1.xpose.msra.mxu0 0.0
  %3626 = vmatprep.subr.mxu0 0.0
  %3627 = vmatpush1.xpose.msra.mxu0 0.0
  %3628 = vmatprep.subr.mxu0 0.0
  %3629 = vmatpush1.xpose.msra.mxu0 0.0
  %3630 = vmatprep.subr.mxu0 0.0
  %3631 = vmatpush1.xpose.msra.mxu0 0.0
  %3632 = vmatprep.subr.mxu0 0.0
  %3633 = vmatpush1.xpose.msra.mxu0 0.0
  %3634 = vmatprep.subr.mxu0 0.0
  %3635 = vmatpush1.xpose.msra.mxu0 0.0
  %3636 = vmatprep.subr.mxu0 0.0
  %3637 = vmatpush1.xpose.msra.mxu0 0.0
  %3638 = vmatprep.subr.mxu0 0.0
  %3639 = vmatpush1.xpose.msra.mxu0 0.0
  %3640 = vmatprep.subr.mxu0 0.0
  %3641 = vmatpush1.xpose.msra.mxu0 0.0
  %3642 = vmatprep.subr.mxu0 0.0
  %3643 = vmatpush1.xpose.msra.mxu0 0.0
  %3644 = vmatprep.subr.mxu0 0.0
  %3645 = vmatpush1.xpose.msra.mxu0 0.0
  %3646 = vmatprep.subr.mxu0 0.0
  %3647 = vmatpush1.xpose.msra.mxu0 0.0
  %3648 = vmatprep.subr.mxu0 0.0
  %3649 = vmatpush1.xpose.msra.mxu0 0.0
  %3650 = vmatprep.subr.mxu0 0.0
  %3651 = vmatpush1.xpose.msra.mxu0 0.0
  %3652 = vmatprep.subr.mxu0 0.0
  %3653 = vmatpush1.xpose.msra.mxu0 0.0
  %3654 = vmatprep.mubr.f32.mxu0 0.0
  %3655 = vmatmul.mubr.f32.gmra.mrb[0].mxu0 %v3582
  %v3656 = vpop.f32.mrb[0].mxu0
  %v3657 = vadd.f32 0.0, %v3656
  %v3658 = vpop.f32.mrb[0].mxu0
  %3659 = vmatprep.mubr.f32.mxu0 0.0
  %3660 = vmatmul.mubr.f32.gmra.mrb[0].mxu0 %v3584
  %v3661 = vpop.f32.mrb[0].mxu0
  %v3662 = vadd.f32 0.0, %v3661
  %v3663 = vpop.f32.mrb[0].mxu0
  %3664 = vdwg.mxu0
  %3665 = vrot.lane.b32.xlu0 %v378, 64
  %v3666 = vpop.permute.xlu0 %3665
  %3667 = vrot.lane.b32.xlu0 %v379, 64
  %v3668 = vpop.permute.xlu0 %3667
  %3669 = vrot.lane.b32.xlu0 %v378, 112
  %v3670 = vpop.permute.xlu0 %3669
  %3671 = vrot.lane.b32.xlu0 %v379, 112
  %v3672 = vpop.permute.xlu0 %3671
  %v3673 = vsel %vm412, %v3666, 0
  %v3675 = vsel %vm412, %v3668, 0
  %v3677 = vsel %vm412, %v3670, 0
  %v3679 = vsel %vm412, %v3672, 0
  %3681 = vmatprep.subr.mxu0 0.0
  %3682 = vmatpush1.xpose.msra.mxu0 %v3677
  %3683 = vmatprep.subr.mxu0 0.0
  %3684 = vmatpush1.xpose.msra.mxu0 %v3679
  %3685 = vmatprep.subr.mxu0 0.0
  %3686 = vmatpush1.xpose.msra.mxu0 0.0
  %3687 = vmatprep.subr.mxu0 0.0
  %3688 = vmatpush1.xpose.msra.mxu0 0.0
  %3689 = vmatprep.subr.mxu0 0.0
  %3690 = vmatpush1.xpose.msra.mxu0 0.0
  %3691 = vmatprep.subr.mxu0 0.0
  %3692 = vmatpush1.xpose.msra.mxu0 0.0
  %3693 = vmatprep.subr.mxu0 0.0
  %3694 = vmatpush1.xpose.msra.mxu0 0.0
  %3695 = vmatprep.subr.mxu0 0.0
  %3696 = vmatpush1.xpose.msra.mxu0 0.0
  %3697 = vmatprep.subr.mxu0 0.0
  %3698 = vmatpush1.xpose.msra.mxu0 0.0
  %3699 = vmatprep.subr.mxu0 0.0
  %3700 = vmatpush1.xpose.msra.mxu0 0.0
  %3701 = vmatprep.subr.mxu0 0.0
  %3702 = vmatpush1.xpose.msra.mxu0 0.0
  %3703 = vmatprep.subr.mxu0 0.0
  %3704 = vmatpush1.xpose.msra.mxu0 0.0
  %3705 = vmatprep.subr.mxu0 0.0
  %3706 = vmatpush1.xpose.msra.mxu0 0.0
  %3707 = vmatprep.subr.mxu0 0.0
  %3708 = vmatpush1.xpose.msra.mxu0 0.0
  %3709 = vmatprep.subr.mxu0 0.0
  %3710 = vmatpush1.xpose.msra.mxu0 0.0
  %3711 = vmatprep.subr.mxu0 0.0
  %3712 = vmatpush1.xpose.msra.mxu0 0.0
  %3713 = vmatprep.subr.mxu0 0.0
  %3714 = vmatpush1.xpose.msra.mxu0 0.0
  %3715 = vmatprep.subr.mxu0 0.0
  %3716 = vmatpush1.xpose.msra.mxu0 0.0
  %3717 = vmatprep.subr.mxu0 0.0
  %3718 = vmatpush1.xpose.msra.mxu0 0.0
  %3719 = vmatprep.subr.mxu0 0.0
  %3720 = vmatpush1.xpose.msra.mxu0 0.0
  %3721 = vmatprep.subr.mxu0 0.0
  %3722 = vmatpush1.xpose.msra.mxu0 0.0
  %3723 = vmatprep.subr.mxu0 0.0
  %3724 = vmatpush1.xpose.msra.mxu0 0.0
  %3725 = vmatprep.subr.mxu0 0.0
  %3726 = vmatpush1.xpose.msra.mxu0 0.0
  %3727 = vmatprep.subr.mxu0 0.0
  %3728 = vmatpush1.xpose.msra.mxu0 0.0
  %3729 = vmatprep.subr.mxu0 0.0
  %3730 = vmatpush1.xpose.msra.mxu0 0.0
  %3731 = vmatprep.subr.mxu0 0.0
  %3732 = vmatpush1.xpose.msra.mxu0 0.0
  %3733 = vmatprep.subr.mxu0 0.0
  %3734 = vmatpush1.xpose.msra.mxu0 0.0
  %3735 = vmatprep.subr.mxu0 0.0
  %3736 = vmatpush1.xpose.msra.mxu0 0.0
  %3737 = vmatprep.subr.mxu0 0.0
  %3738 = vmatpush1.xpose.msra.mxu0 0.0
  %3739 = vmatprep.subr.mxu0 0.0
  %3740 = vmatpush1.xpose.msra.mxu0 0.0
  %3741 = vmatprep.subr.mxu0 0.0
  %3742 = vmatpush1.xpose.msra.mxu0 0.0
  %3743 = vmatprep.subr.mxu0 0.0
  %3744 = vmatpush1.xpose.msra.mxu0 0.0
  %3745 = vmatprep.mubr.f32.mxu0 0.0
  %3746 = vmatmul.mubr.f32.gmra.mrb[0].mxu0 %v3673
  %v3747 = vpop.f32.mrb[0].mxu0
  %v3748 = vadd.f32 0.0, %v3747
  %v3749 = vpop.f32.mrb[0].mxu0
  %3750 = vmatprep.mubr.f32.mxu0 0.0
  %3751 = vmatmul.mubr.f32.gmra.mrb[0].mxu0 %v3675
  %v3752 = vpop.f32.mrb[0].mxu0
  %v3753 = vadd.f32 0.0, %v3752
  %v3754 = vpop.f32.mrb[0].mxu0
  %3755 = vdwg.mxu0
  %3756 = vrot.lane.b32.xlu0 %v380, 64
  %v3757 = vpop.permute.xlu0 %3756
  %3758 = vrot.lane.b32.xlu0 %v381, 64
  %v3759 = vpop.permute.xlu0 %3758
  %3760 = vrot.lane.b32.xlu0 %v380, 112
  %v3761 = vpop.permute.xlu0 %3760
  %3762 = vrot.lane.b32.xlu0 %v381, 112
  %v3763 = vpop.permute.xlu0 %3762
  %v3764 = vsel %vm412, %v3757, 0
  %v3766 = vsel %vm412, %v3759, 0
  %v3768 = vsel %vm412, %v3761, 0
  %v3770 = vsel %vm412, %v3763, 0
  %3772 = vmatprep.subr.mxu0 0.0
  %3773 = vmatpush1.xpose.msra.mxu0 %v3768
  %3774 = vmatprep.subr.mxu0 0.0
  %3775 = vmatpush1.xpose.msra.mxu0 %v3770
  %3776 = vmatprep.subr.mxu0 0.0
  %3777 = vmatpush1.xpose.msra.mxu0 0.0
  %3778 = vmatprep.subr.mxu0 0.0
  %3779 = vmatpush1.xpose.msra.mxu0 0.0
  %3780 = vmatprep.subr.mxu0 0.0
  %3781 = vmatpush1.xpose.msra.mxu0 0.0
  %3782 = vmatprep.subr.mxu0 0.0
  %3783 = vmatpush1.xpose.msra.mxu0 0.0
  %3784 = vmatprep.subr.mxu0 0.0
  %3785 = vmatpush1.xpose.msra.mxu0 0.0
  %3786 = vmatprep.subr.mxu0 0.0
  %3787 = vmatpush1.xpose.msra.mxu0 0.0
  %3788 = vmatprep.subr.mxu0 0.0
  %3789 = vmatpush1.xpose.msra.mxu0 0.0
  %3790 = vmatprep.subr.mxu0 0.0
  %3791 = vmatpush1.xpose.msra.mxu0 0.0
  %3792 = vmatprep.subr.mxu0 0.0
  %3793 = vmatpush1.xpose.msra.mxu0 0.0
  %3794 = vmatprep.subr.mxu0 0.0
  %3795 = vmatpush1.xpose.msra.mxu0 0.0
  %3796 = vmatprep.subr.mxu0 0.0
  %3797 = vmatpush1.xpose.msra.mxu0 0.0
  %3798 = vmatprep.subr.mxu0 0.0
  %3799 = vmatpush1.xpose.msra.mxu0 0.0
  %3800 = vmatprep.subr.mxu0 0.0
  %3801 = vmatpush1.xpose.msra.mxu0 0.0
  %3802 = vmatprep.subr.mxu0 0.0
  %3803 = vmatpush1.xpose.msra.mxu0 0.0
  %3804 = vmatprep.subr.mxu0 0.0
  %3805 = vmatpush1.xpose.msra.mxu0 0.0
  %3806 = vmatprep.subr.mxu0 0.0
  %3807 = vmatpush1.xpose.msra.mxu0 0.0
  %3808 = vmatprep.subr.mxu0 0.0
  %3809 = vmatpush1.xpose.msra.mxu0 0.0
  %3810 = vmatprep.subr.mxu0 0.0
  %3811 = vmatpush1.xpose.msra.mxu0 0.0
  %3812 = vmatprep.subr.mxu0 0.0
  %3813 = vmatpush1.xpose.msra.mxu0 0.0
  %3814 = vmatprep.subr.mxu0 0.0
  %3815 = vmatpush1.xpose.msra.mxu0 0.0
  %3816 = vmatprep.subr.mxu0 0.0
  %3817 = vmatpush1.xpose.msra.mxu0 0.0
  %3818 = vmatprep.subr.mxu0 0.0
  %3819 = vmatpush1.xpose.msra.mxu0 0.0
  %3820 = vmatprep.subr.mxu0 0.0
  %3821 = vmatpush1.xpose.msra.mxu0 0.0
  %3822 = vmatprep.subr.mxu0 0.0
  %3823 = vmatpush1.xpose.msra.mxu0 0.0
  %3824 = vmatprep.subr.mxu0 0.0
  %3825 = vmatpush1.xpose.msra.mxu0 0.0
  %3826 = vmatprep.subr.mxu0 0.0
  %3827 = vmatpush1.xpose.msra.mxu0 0.0
  %3828 = vmatprep.subr.mxu0 0.0
  %3829 = vmatpush1.xpose.msra.mxu0 0.0
  %3830 = vmatprep.subr.mxu0 0.0
  %3831 = vmatpush1.xpose.msra.mxu0 0.0
  %3832 = vmatprep.subr.mxu0 0.0
  %3833 = vmatpush1.xpose.msra.mxu0 0.0
  %3834 = vmatprep.subr.mxu0 0.0
  %3835 = vmatpush1.xpose.msra.mxu0 0.0
  %3836 = vmatprep.mubr.f32.mxu0 0.0
  %3837 = vmatmul.mubr.f32.gmra.mrb[0].mxu0 %v3764
  %v3838 = vpop.f32.mrb[0].mxu0
  %v3839 = vadd.f32 0.0, %v3838
  %v3840 = vpop.f32.mrb[0].mxu0
  %3841 = vmatprep.mubr.f32.mxu0 0.0
  %3842 = vmatmul.mubr.f32.gmra.mrb[0].mxu0 %v3766
  %v3843 = vpop.f32.mrb[0].mxu0
  %v3844 = vadd.f32 0.0, %v3843
  %v3845 = vpop.f32.mrb[0].mxu0
  %3846 = vdwg.mxu0
  %3847 = vrot.lane.b32.xlu0 %v382, 64
  %v3848 = vpop.permute.xlu0 %3847
  %3849 = vrot.lane.b32.xlu0 %v383, 64
  %v3850 = vpop.permute.xlu0 %3849
  %3851 = vrot.lane.b32.xlu0 %v382, 112
  %v3852 = vpop.permute.xlu0 %3851
  %3853 = vrot.lane.b32.xlu0 %v383, 112
  %v3854 = vpop.permute.xlu0 %3853
  %v3855 = vsel %vm412, %v3848, 0
  %v3857 = vsel %vm412, %v3850, 0
  %v3859 = vsel %vm412, %v3852, 0
  %v3861 = vsel %vm412, %v3854, 0
  %3863 = vmatprep.subr.mxu0 0.0
  %3864 = vmatpush1.xpose.msra.mxu0 %v3859
  %3865 = vmatprep.subr.mxu0 0.0
  %3866 = vmatpush1.xpose.msra.mxu0 %v3861
  %3867 = vmatprep.subr.mxu0 0.0
  %3868 = vmatpush1.xpose.msra.mxu0 0.0
  %3869 = vmatprep.subr.mxu0 0.0
  %3870 = vmatpush1.xpose.msra.mxu0 0.0
  %3871 = vmatprep.subr.mxu0 0.0
  %3872 = vmatpush1.xpose.msra.mxu0 0.0
  %3873 = vmatprep.subr.mxu0 0.0
  %3874 = vmatpush1.xpose.msra.mxu0 0.0
  %3875 = vmatprep.subr.mxu0 0.0
  %3876 = vmatpush1.xpose.msra.mxu0 0.0
  %3877 = vmatprep.subr.mxu0 0.0
  %3878 = vmatpush1.xpose.msra.mxu0 0.0
  %3879 = vmatprep.subr.mxu0 0.0
  %3880 = vmatpush1.xpose.msra.mxu0 0.0
  %3881 = vmatprep.subr.mxu0 0.0
  %3882 = vmatpush1.xpose.msra.mxu0 0.0
  %3883 = vmatprep.subr.mxu0 0.0
  %3884 = vmatpush1.xpose.msra.mxu0 0.0
  %3885 = vmatprep.subr.mxu0 0.0
  %3886 = vmatpush1.xpose.msra.mxu0 0.0
  %3887 = vmatprep.subr.mxu0 0.0
  %3888 = vmatpush1.xpose.msra.mxu0 0.0
  %3889 = vmatprep.subr.mxu0 0.0
  %3890 = vmatpush1.xpose.msra.mxu0 0.0
  %3891 = vmatprep.subr.mxu0 0.0
  %3892 = vmatpush1.xpose.msra.mxu0 0.0
  %3893 = vmatprep.subr.mxu0 0.0
  %3894 = vmatpush1.xpose.msra.mxu0 0.0
  %3895 = vmatprep.subr.mxu0 0.0
  %3896 = vmatpush1.xpose.msra.mxu0 0.0
  %3897 = vmatprep.subr.mxu0 0.0
  %3898 = vmatpush1.xpose.msra.mxu0 0.0
  %3899 = vmatprep.subr.mxu0 0.0
  %3900 = vmatpush1.xpose.msra.mxu0 0.0
  %3901 = vmatprep.subr.mxu0 0.0
  %3902 = vmatpush1.xpose.msra.mxu0 0.0
  %3903 = vmatprep.subr.mxu0 0.0
  %3904 = vmatpush1.xpose.msra.mxu0 0.0
  %3905 = vmatprep.subr.mxu0 0.0
  %3906 = vmatpush1.xpose.msra.mxu0 0.0
  %3907 = vmatprep.subr.mxu0 0.0
  %3908 = vmatpush1.xpose.msra.mxu0 0.0
  %3909 = vmatprep.subr.mxu0 0.0
  %3910 = vmatpush1.xpose.msra.mxu0 0.0
  %3911 = vmatprep.subr.mxu0 0.0
  %3912 = vmatpush1.xpose.msra.mxu0 0.0
  %3913 = vmatprep.subr.mxu0 0.0
  %3914 = vmatpush1.xpose.msra.mxu0 0.0
  %3915 = vmatprep.subr.mxu0 0.0
  %3916 = vmatpush1.xpose.msra.mxu0 0.0
  %3917 = vmatprep.subr.mxu0 0.0
  %3918 = vmatpush1.xpose.msra.mxu0 0.0
  %3919 = vmatprep.subr.mxu0 0.0
  %3920 = vmatpush1.xpose.msra.mxu0 0.0
  %3921 = vmatprep.subr.mxu0 0.0
  %3922 = vmatpush1.xpose.msra.mxu0 0.0
  %3923 = vmatprep.subr.mxu0 0.0
  %3924 = vmatpush1.xpose.msra.mxu0 0.0
  %3925 = vmatprep.subr.mxu0 0.0
  %3926 = vmatpush1.xpose.msra.mxu0 0.0
  %3927 = vmatprep.mubr.f32.mxu0 0.0
  %3928 = vmatmul.mubr.f32.gmra.mrb[0].mxu0 %v3855
  %v3929 = vpop.f32.mrb[0].mxu0
  %v3930 = vadd.f32 0.0, %v3929
  %v3931 = vpop.f32.mrb[0].mxu0
  %3932 = vmatprep.mubr.f32.mxu0 0.0
  %3933 = vmatmul.mubr.f32.gmra.mrb[0].mxu0 %v3857
  %v3934 = vpop.f32.mrb[0].mxu0
  %v3935 = vadd.f32 0.0, %v3934
  %v3936 = vpop.f32.mrb[0].mxu0
  %3937 = vdwg.mxu0
  %3938 = vrot.lane.b32.xlu0 %v384, 64
  %v3939 = vpop.permute.xlu0 %3938
  %3940 = vrot.lane.b32.xlu0 %v385, 64
  %v3941 = vpop.permute.xlu0 %3940
  %3942 = vrot.lane.b32.xlu0 %v384, 112
  %v3943 = vpop.permute.xlu0 %3942
  %3944 = vrot.lane.b32.xlu0 %v385, 112
  %v3945 = vpop.permute.xlu0 %3944
  %v3946 = vsel %vm412, %v3939, 0
  %v3948 = vsel %vm412, %v3941, 0
  %v3950 = vsel %vm412, %v3943, 0
  %v3952 = vsel %vm412, %v3945, 0
  %3954 = vmatprep.subr.mxu0 0.0
  %3955 = vmatpush1.xpose.msra.mxu0 %v3950
  %3956 = vmatprep.subr.mxu0 0.0
  %3957 = vmatpush1.xpose.msra.mxu0 %v3952
  %3958 = vmatprep.subr.mxu0 0.0
  %3959 = vmatpush1.xpose.msra.mxu0 0.0
  %3960 = vmatprep.subr.mxu0 0.0
  %3961 = vmatpush1.xpose.msra.mxu0 0.0
  %3962 = vmatprep.subr.mxu0 0.0
  %3963 = vmatpush1.xpose.msra.mxu0 0.0
  %3964 = vmatprep.subr.mxu0 0.0
  %3965 = vmatpush1.xpose.msra.mxu0 0.0
  %3966 = vmatprep.subr.mxu0 0.0
  %3967 = vmatpush1.xpose.msra.mxu0 0.0
  %3968 = vmatprep.subr.mxu0 0.0
  %3969 = vmatpush1.xpose.msra.mxu0 0.0
  %3970 = vmatprep.subr.mxu0 0.0
  %3971 = vmatpush1.xpose.msra.mxu0 0.0
  %3972 = vmatprep.subr.mxu0 0.0
  %3973 = vmatpush1.xpose.msra.mxu0 0.0
  %3974 = vmatprep.subr.mxu0 0.0
  %3975 = vmatpush1.xpose.msra.mxu0 0.0
  %3976 = vmatprep.subr.mxu0 0.0
  %3977 = vmatpush1.xpose.msra.mxu0 0.0
  %3978 = vmatprep.subr.mxu0 0.0
  %3979 = vmatpush1.xpose.msra.mxu0 0.0
  %3980 = vmatprep.subr.mxu0 0.0
  %3981 = vmatpush1.xpose.msra.mxu0 0.0
  %3982 = vmatprep.subr.mxu0 0.0
  %3983 = vmatpush1.xpose.msra.mxu0 0.0
  %3984 = vmatprep.subr.mxu0 0.0
  %3985 = vmatpush1.xpose.msra.mxu0 0.0
  %3986 = vmatprep.subr.mxu0 0.0
  %3987 = vmatpush1.xpose.msra.mxu0 0.0
  %3988 = vmatprep.subr.mxu0 0.0
  %3989 = vmatpush1.xpose.msra.mxu0 0.0
  %3990 = vmatprep.subr.mxu0 0.0
  %3991 = vmatpush1.xpose.msra.mxu0 0.0
  %3992 = vmatprep.subr.mxu0 0.0
  %3993 = vmatpush1.xpose.msra.mxu0 0.0
  %3994 = vmatprep.subr.mxu0 0.0
  %3995 = vmatpush1.xpose.msra.mxu0 0.0
  %3996 = vmatprep.subr.mxu0 0.0
  %3997 = vmatpush1.xpose.msra.mxu0 0.0
  %3998 = vmatprep.subr.mxu0 0.0
  %3999 = vmatpush1.xpose.msra.mxu0 0.0
  %4000 = vmatprep.subr.mxu0 0.0
  %4001 = vmatpush1.xpose.msra.mxu0 0.0
  %4002 = vmatprep.subr.mxu0 0.0
  %4003 = vmatpush1.xpose.msra.mxu0 0.0
  %4004 = vmatprep.subr.mxu0 0.0
  %4005 = vmatpush1.xpose.msra.mxu0 0.0
  %4006 = vmatprep.subr.mxu0 0.0
  %4007 = vmatpush1.xpose.msra.mxu0 0.0
  %4008 = vmatprep.subr.mxu0 0.0
  %4009 = vmatpush1.xpose.msra.mxu0 0.0
  %4010 = vmatprep.subr.mxu0 0.0
  %4011 = vmatpush1.xpose.msra.mxu0 0.0
  %4012 = vmatprep.subr.mxu0 0.0
  %4013 = vmatpush1.xpose.msra.mxu0 0.0
  %4014 = vmatprep.subr.mxu0 0.0
  %4015 = vmatpush1.xpose.msra.mxu0 0.0
  %4016 = vmatprep.subr.mxu0 0.0
  %4017 = vmatpush1.xpose.msra.mxu0 0.0
  %4018 = vmatprep.mubr.f32.mxu0 0.0
  %4019 = vmatmul.mubr.f32.gmra.mrb[0].mxu0 %v3946
  %v4020 = vpop.f32.mrb[0].mxu0
  %v4021 = vadd.f32 0.0, %v4020
  %v4022 = vpop.f32.mrb[0].mxu0
  %4023 = vmatprep.mubr.f32.mxu0 0.0
  %4024 = vmatmul.mubr.f32.gmra.mrb[0].mxu0 %v3948
  %v4025 = vpop.f32.mrb[0].mxu0
  %v4026 = vadd.f32 0.0, %v4025
  %v4027 = vpop.f32.mrb[0].mxu0
  %4028 = vdwg.mxu0
  %4029 = vrot.lane.b32.xlu0 %v386, 64
  %v4030 = vpop.permute.xlu0 %4029
  %4031 = vrot.lane.b32.xlu0 %v387, 64
  %v4032 = vpop.permute.xlu0 %4031
  %4033 = vrot.lane.b32.xlu0 %v386, 112
  %v4034 = vpop.permute.xlu0 %4033
  %4035 = vrot.lane.b32.xlu0 %v387, 112
  %v4036 = vpop.permute.xlu0 %4035
  %v4037 = vsel %vm412, %v4030, 0
  %v4039 = vsel %vm412, %v4032, 0
  %v4041 = vsel %vm412, %v4034, 0
  %v4043 = vsel %vm412, %v4036, 0
  %4045 = vmatprep.subr.mxu0 0.0
  %4046 = vmatpush1.xpose.msra.mxu0 %v4041
  %4047 = vmatprep.subr.mxu0 0.0
  %4048 = vmatpush1.xpose.msra.mxu0 %v4043
  %4049 = vmatprep.subr.mxu0 0.0
  %4050 = vmatpush1.xpose.msra.mxu0 0.0
  %4051 = vmatprep.subr.mxu0 0.0
  %4052 = vmatpush1.xpose.msra.mxu0 0.0
  %4053 = vmatprep.subr.mxu0 0.0
  %4054 = vmatpush1.xpose.msra.mxu0 0.0
  %4055 = vmatprep.subr.mxu0 0.0
  %4056 = vmatpush1.xpose.msra.mxu0 0.0
  %4057 = vmatprep.subr.mxu0 0.0
  %4058 = vmatpush1.xpose.msra.mxu0 0.0
  %4059 = vmatprep.subr.mxu0 0.0
  %4060 = vmatpush1.xpose.msra.mxu0 0.0
  %4061 = vmatprep.subr.mxu0 0.0
  %4062 = vmatpush1.xpose.msra.mxu0 0.0
  %4063 = vmatprep.subr.mxu0 0.0
  %4064 = vmatpush1.xpose.msra.mxu0 0.0
  %4065 = vmatprep.subr.mxu0 0.0
  %4066 = vmatpush1.xpose.msra.mxu0 0.0
  %4067 = vmatprep.subr.mxu0 0.0
  %4068 = vmatpush1.xpose.msra.mxu0 0.0
  %4069 = vmatprep.subr.mxu0 0.0
  %4070 = vmatpush1.xpose.msra.mxu0 0.0
  %4071 = vmatprep.subr.mxu0 0.0
  %4072 = vmatpush1.xpose.msra.mxu0 0.0
  %4073 = vmatprep.subr.mxu0 0.0
  %4074 = vmatpush1.xpose.msra.mxu0 0.0
  %4075 = vmatprep.subr.mxu0 0.0
  %4076 = vmatpush1.xpose.msra.mxu0 0.0
  %4077 = vmatprep.subr.mxu0 0.0
  %4078 = vmatpush1.xpose.msra.mxu0 0.0
  %4079 = vmatprep.subr.mxu0 0.0
  %4080 = vmatpush1.xpose.msra.mxu0 0.0
  %4081 = vmatprep.subr.mxu0 0.0
  %4082 = vmatpush1.xpose.msra.mxu0 0.0
  %4083 = vmatprep.subr.mxu0 0.0
  %4084 = vmatpush1.xpose.msra.mxu0 0.0
  %4085 = vmatprep.subr.mxu0 0.0
  %4086 = vmatpush1.xpose.msra.mxu0 0.0
  %4087 = vmatprep.subr.mxu0 0.0
  %4088 = vmatpush1.xpose.msra.mxu0 0.0
  %4089 = vmatprep.subr.mxu0 0.0
  %4090 = vmatpush1.xpose.msra.mxu0 0.0
  %4091 = vmatprep.subr.mxu0 0.0
  %4092 = vmatpush1.xpose.msra.mxu0 0.0
  %4093 = vmatprep.subr.mxu0 0.0
  %4094 = vmatpush1.xpose.msra.mxu0 0.0
  %4095 = vmatprep.subr.mxu0 0.0
  %4096 = vmatpush1.xpose.msra.mxu0 0.0
  %4097 = vmatprep.subr.mxu0 0.0
  %4098 = vmatpush1.xpose.msra.mxu0 0.0
  %4099 = vmatprep.subr.mxu0 0.0
  %4100 = vmatpush1.xpose.msra.mxu0 0.0
  %4101 = vmatprep.subr.mxu0 0.0
  %4102 = vmatpush1.xpose.msra.mxu0 0.0
  %4103 = vmatprep.subr.mxu0 0.0
  %4104 = vmatpush1.xpose.msra.mxu0 0.0
  %4105 = vmatprep.subr.mxu0 0.0
  %4106 = vmatpush1.xpose.msra.mxu0 0.0
  %4107 = vmatprep.subr.mxu0 0.0
  %4108 = vmatpush1.xpose.msra.mxu0 0.0
  %4109 = vmatprep.mubr.f32.mxu0 0.0
  %4110 = vmatmul.mubr.f32.gmra.mrb[0].mxu0 %v4037
  %v4111 = vpop.f32.mrb[0].mxu0
  %v4112 = vadd.f32 0.0, %v4111
  %v4113 = vpop.f32.mrb[0].mxu0
  %4114 = vmatprep.mubr.f32.mxu0 0.0
  %4115 = vmatmul.mubr.f32.gmra.mrb[0].mxu0 %v4039
  %v4116 = vpop.f32.mrb[0].mxu0
  %v4117 = vadd.f32 0.0, %v4116
  %v4118 = vpop.f32.mrb[0].mxu0
  %4119 = vdwg.mxu0
  %4120 = vrot.lane.b32.xlu0 %v388, 64
  %v4121 = vpop.permute.xlu0 %4120
  %4122 = vrot.lane.b32.xlu0 %v389, 64
  %v4123 = vpop.permute.xlu0 %4122
  %4124 = vrot.lane.b32.xlu0 %v388, 112
  %v4125 = vpop.permute.xlu0 %4124
  %4126 = vrot.lane.b32.xlu0 %v389, 112
  %v4127 = vpop.permute.xlu0 %4126
  %v4128 = vsel %vm412, %v4121, 0
  %v4130 = vsel %vm412, %v4123, 0
  %v4132 = vsel %vm412, %v4125, 0
  %v4134 = vsel %vm412, %v4127, 0
  %4136 = vmatprep.subr.mxu0 0.0
  %4137 = vmatpush1.xpose.msra.mxu0 %v4132
  %4138 = vmatprep.subr.mxu0 0.0
  %4139 = vmatpush1.xpose.msra.mxu0 %v4134
  %4140 = vmatprep.subr.mxu0 0.0
  %4141 = vmatpush1.xpose.msra.mxu0 0.0
  %4142 = vmatprep.subr.mxu0 0.0
  %4143 = vmatpush1.xpose.msra.mxu0 0.0
  %4144 = vmatprep.subr.mxu0 0.0
  %4145 = vmatpush1.xpose.msra.mxu0 0.0
  %4146 = vmatprep.subr.mxu0 0.0
  %4147 = vmatpush1.xpose.msra.mxu0 0.0
  %4148 = vmatprep.subr.mxu0 0.0
  %4149 = vmatpush1.xpose.msra.mxu0 0.0
  %4150 = vmatprep.subr.mxu0 0.0
  %4151 = vmatpush1.xpose.msra.mxu0 0.0
  %4152 = vmatprep.subr.mxu0 0.0
  %4153 = vmatpush1.xpose.msra.mxu0 0.0
  %4154 = vmatprep.subr.mxu0 0.0
  %4155 = vmatpush1.xpose.msra.mxu0 0.0
  %4156 = vmatprep.subr.mxu0 0.0
  %4157 = vmatpush1.xpose.msra.mxu0 0.0
  %4158 = vmatprep.subr.mxu0 0.0
  %4159 = vmatpush1.xpose.msra.mxu0 0.0
  %4160 = vmatprep.subr.mxu0 0.0
  %4161 = vmatpush1.xpose.msra.mxu0 0.0
  %4162 = vmatprep.subr.mxu0 0.0
  %4163 = vmatpush1.xpose.msra.mxu0 0.0
  %4164 = vmatprep.subr.mxu0 0.0
  %4165 = vmatpush1.xpose.msra.mxu0 0.0
  %4166 = vmatprep.subr.mxu0 0.0
  %4167 = vmatpush1.xpose.msra.mxu0 0.0
  %4168 = vmatprep.subr.mxu0 0.0
  %4169 = vmatpush1.xpose.msra.mxu0 0.0
  %4170 = vmatprep.subr.mxu0 0.0
  %4171 = vmatpush1.xpose.msra.mxu0 0.0
  %4172 = vmatprep.subr.mxu0 0.0
  %4173 = vmatpush1.xpose.msra.mxu0 0.0
  %4174 = vmatprep.subr.mxu0 0.0
  %4175 = vmatpush1.xpose.msra.mxu0 0.0
  %4176 = vmatprep.subr.mxu0 0.0
  %4177 = vmatpush1.xpose.msra.mxu0 0.0
  %4178 = vmatprep.subr.mxu0 0.0
  %4179 = vmatpush1.xpose.msra.mxu0 0.0
  %4180 = vmatprep.subr.mxu0 0.0
  %4181 = vmatpush1.xpose.msra.mxu0 0.0
  %4182 = vmatprep.subr.mxu0 0.0
  %4183 = vmatpush1.xpose.msra.mxu0 0.0
  %4184 = vmatprep.subr.mxu0 0.0
  %4185 = vmatpush1.xpose.msra.mxu0 0.0
  %4186 = vmatprep.subr.mxu0 0.0
  %4187 = vmatpush1.xpose.msra.mxu0 0.0
  %4188 = vmatprep.subr.mxu0 0.0
  %4189 = vmatpush1.xpose.msra.mxu0 0.0
  %4190 = vmatprep.subr.mxu0 0.0
  %4191 = vmatpush1.xpose.msra.mxu0 0.0
  %4192 = vmatprep.subr.mxu0 0.0
  %4193 = vmatpush1.xpose.msra.mxu0 0.0
  %4194 = vmatprep.subr.mxu0 0.0
  %4195 = vmatpush1.xpose.msra.mxu0 0.0
  %4196 = vmatprep.subr.mxu0 0.0
  %4197 = vmatpush1.xpose.msra.mxu0 0.0
  %4198 = vmatprep.subr.mxu0 0.0
  %4199 = vmatpush1.xpose.msra.mxu0 0.0
  %4200 = vmatprep.mubr.f32.mxu0 0.0
  %4201 = vmatmul.mubr.f32.gmra.mrb[0].mxu0 %v4128
  %v4202 = vpop.f32.mrb[0].mxu0
  %v4203 = vadd.f32 0.0, %v4202
  %v4204 = vpop.f32.mrb[0].mxu0
  %4205 = vmatprep.mubr.f32.mxu0 0.0
  %4206 = vmatmul.mubr.f32.gmra.mrb[0].mxu0 %v4130
  %v4207 = vpop.f32.mrb[0].mxu0
  %v4208 = vadd.f32 0.0, %v4207
  %v4209 = vpop.f32.mrb[0].mxu0
  %4210 = vdwg.mxu0
  %4211 = vrot.lane.b32.xlu0 %v390, 64
  %v4212 = vpop.permute.xlu0 %4211
  %4213 = vrot.lane.b32.xlu0 %v391, 64
  %v4214 = vpop.permute.xlu0 %4213
  %4215 = vrot.lane.b32.xlu0 %v390, 112
  %v4216 = vpop.permute.xlu0 %4215
  %4217 = vrot.lane.b32.xlu0 %v391, 112
  %v4218 = vpop.permute.xlu0 %4217
  %v4219 = vsel %vm412, %v4212, 0
  %v4221 = vsel %vm412, %v4214, 0
  %v4223 = vsel %vm412, %v4216, 0
  %v4225 = vsel %vm412, %v4218, 0
  %4227 = vmatprep.subr.mxu0 0.0
  %4228 = vmatpush1.xpose.msra.mxu0 %v4223
  %4229 = vmatprep.subr.mxu0 0.0
  %4230 = vmatpush1.xpose.msra.mxu0 %v4225
  %4231 = vmatprep.subr.mxu0 0.0
  %4232 = vmatpush1.xpose.msra.mxu0 0.0
  %4233 = vmatprep.subr.mxu0 0.0
  %4234 = vmatpush1.xpose.msra.mxu0 0.0
  %4235 = vmatprep.subr.mxu0 0.0
  %4236 = vmatpush1.xpose.msra.mxu0 0.0
  %4237 = vmatprep.subr.mxu0 0.0
  %4238 = vmatpush1.xpose.msra.mxu0 0.0
  %4239 = vmatprep.subr.mxu0 0.0
  %4240 = vmatpush1.xpose.msra.mxu0 0.0
  %4241 = vmatprep.subr.mxu0 0.0
  %4242 = vmatpush1.xpose.msra.mxu0 0.0
  %4243 = vmatprep.subr.mxu0 0.0
  %4244 = vmatpush1.xpose.msra.mxu0 0.0
  %4245 = vmatprep.subr.mxu0 0.0
  %4246 = vmatpush1.xpose.msra.mxu0 0.0
  %4247 = vmatprep.subr.mxu0 0.0
  %4248 = vmatpush1.xpose.msra.mxu0 0.0
  %4249 = vmatprep.subr.mxu0 0.0
  %4250 = vmatpush1.xpose.msra.mxu0 0.0
  %4251 = vmatprep.subr.mxu0 0.0
  %4252 = vmatpush1.xpose.msra.mxu0 0.0
  %4253 = vmatprep.subr.mxu0 0.0
  %4254 = vmatpush1.xpose.msra.mxu0 0.0
  %4255 = vmatprep.subr.mxu0 0.0
  %4256 = vmatpush1.xpose.msra.mxu0 0.0
  %4257 = vmatprep.subr.mxu0 0.0
  %4258 = vmatpush1.xpose.msra.mxu0 0.0
  %4259 = vmatprep.subr.mxu0 0.0
  %4260 = vmatpush1.xpose.msra.mxu0 0.0
  %4261 = vmatprep.subr.mxu0 0.0
  %4262 = vmatpush1.xpose.msra.mxu0 0.0
  %4263 = vmatprep.subr.mxu0 0.0
  %4264 = vmatpush1.xpose.msra.mxu0 0.0
  %4265 = vmatprep.subr.mxu0 0.0
  %4266 = vmatpush1.xpose.msra.mxu0 0.0
  %4267 = vmatprep.subr.mxu0 0.0
  %4268 = vmatpush1.xpose.msra.mxu0 0.0
  %4269 = vmatprep.subr.mxu0 0.0
  %4270 = vmatpush1.xpose.msra.mxu0 0.0
  %4271 = vmatprep.subr.mxu0 0.0
  %4272 = vmatpush1.xpose.msra.mxu0 0.0
  %4273 = vmatprep.subr.mxu0 0.0
  %4274 = vmatpush1.xpose.msra.mxu0 0.0
  %4275 = vmatprep.subr.mxu0 0.0
  %4276 = vmatpush1.xpose.msra.mxu0 0.0
  %4277 = vmatprep.subr.mxu0 0.0
  %4278 = vmatpush1.xpose.msra.mxu0 0.0
  %4279 = vmatprep.subr.mxu0 0.0
  %4280 = vmatpush1.xpose.msra.mxu0 0.0
  %4281 = vmatprep.subr.mxu0 0.0
  %4282 = vmatpush1.xpose.msra.mxu0 0.0
  %4283 = vmatprep.subr.mxu0 0.0
  %4284 = vmatpush1.xpose.msra.mxu0 0.0
  %4285 = vmatprep.subr.mxu0 0.0
  %4286 = vmatpush1.xpose.msra.mxu0 0.0
  %4287 = vmatprep.subr.mxu0 0.0
  %4288 = vmatpush1.xpose.msra.mxu0 0.0
  %4289 = vmatprep.subr.mxu0 0.0
  %4290 = vmatpush1.xpose.msra.mxu0 0.0
  %4291 = vmatprep.mubr.f32.mxu0 0.0
  %4292 = vmatmul.mubr.f32.gmra.mrb[0].mxu0 %v4219
  %v4293 = vpop.f32.mrb[0].mxu0
  %v4294 = vadd.f32 0.0, %v4293
  %v4295 = vpop.f32.mrb[0].mxu0
  %4296 = vmatprep.mubr.f32.mxu0 0.0
  %4297 = vmatmul.mubr.f32.gmra.mrb[0].mxu0 %v4221
  %v4298 = vpop.f32.mrb[0].mxu0
  %v4299 = vadd.f32 0.0, %v4298
  %v4300 = vpop.f32.mrb[0].mxu0
  %4301 = vdwg.mxu0
  %4302 = vrot.lane.b32.xlu0 %v392, 64
  %v4303 = vpop.permute.xlu0 %4302
  %4304 = vrot.lane.b32.xlu0 %v393, 64
  %v4305 = vpop.permute.xlu0 %4304
  %4306 = vrot.lane.b32.xlu0 %v392, 112
  %v4307 = vpop.permute.xlu0 %4306
  %4308 = vrot.lane.b32.xlu0 %v393, 112
  %v4309 = vpop.permute.xlu0 %4308
  %v4310 = vsel %vm412, %v4303, 0
  %v4312 = vsel %vm412, %v4305, 0
  %v4314 = vsel %vm412, %v4307, 0
  %v4316 = vsel %vm412, %v4309, 0
  %4318 = vmatprep.subr.mxu0 0.0
  %4319 = vmatpush1.xpose.msra.mxu0 %v4314
  %4320 = vmatprep.subr.mxu0 0.0
  %4321 = vmatpush1.xpose.msra.mxu0 %v4316
  %4322 = vmatprep.subr.mxu0 0.0
  %4323 = vmatpush1.xpose.msra.mxu0 0.0
  %4324 = vmatprep.subr.mxu0 0.0
  %4325 = vmatpush1.xpose.msra.mxu0 0.0
  %4326 = vmatprep.subr.mxu0 0.0
  %4327 = vmatpush1.xpose.msra.mxu0 0.0
  %4328 = vmatprep.subr.mxu0 0.0
  %4329 = vmatpush1.xpose.msra.mxu0 0.0
  %4330 = vmatprep.subr.mxu0 0.0
  %4331 = vmatpush1.xpose.msra.mxu0 0.0
  %4332 = vmatprep.subr.mxu0 0.0
  %4333 = vmatpush1.xpose.msra.mxu0 0.0
  %4334 = vmatprep.subr.mxu0 0.0
  %4335 = vmatpush1.xpose.msra.mxu0 0.0
  %4336 = vmatprep.subr.mxu0 0.0
  %4337 = vmatpush1.xpose.msra.mxu0 0.0
  %4338 = vmatprep.subr.mxu0 0.0
  %4339 = vmatpush1.xpose.msra.mxu0 0.0
  %4340 = vmatprep.subr.mxu0 0.0
  %4341 = vmatpush1.xpose.msra.mxu0 0.0
  %4342 = vmatprep.subr.mxu0 0.0
  %4343 = vmatpush1.xpose.msra.mxu0 0.0
  %4344 = vmatprep.subr.mxu0 0.0
  %4345 = vmatpush1.xpose.msra.mxu0 0.0
  %4346 = vmatprep.subr.mxu0 0.0
  %4347 = vmatpush1.xpose.msra.mxu0 0.0
  %4348 = vmatprep.subr.mxu0 0.0
  %4349 = vmatpush1.xpose.msra.mxu0 0.0
  %4350 = vmatprep.subr.mxu0 0.0
  %4351 = vmatpush1.xpose.msra.mxu0 0.0
  %4352 = vmatprep.subr.mxu0 0.0
  %4353 = vmatpush1.xpose.msra.mxu0 0.0
  %4354 = vmatprep.subr.mxu0 0.0
  %4355 = vmatpush1.xpose.msra.mxu0 0.0
  %4356 = vmatprep.subr.mxu0 0.0
  %4357 = vmatpush1.xpose.msra.mxu0 0.0
  %4358 = vmatprep.subr.mxu0 0.0
  %4359 = vmatpush1.xpose.msra.mxu0 0.0
  %4360 = vmatprep.subr.mxu0 0.0
  %4361 = vmatpush1.xpose.msra.mxu0 0.0
  %4362 = vmatprep.subr.mxu0 0.0
  %4363 = vmatpush1.xpose.msra.mxu0 0.0
  %4364 = vmatprep.subr.mxu0 0.0
  %4365 = vmatpush1.xpose.msra.mxu0 0.0
  %4366 = vmatprep.subr.mxu0 0.0
  %4367 = vmatpush1.xpose.msra.mxu0 0.0
  %4368 = vmatprep.subr.mxu0 0.0
  %4369 = vmatpush1.xpose.msra.mxu0 0.0
  %4370 = vmatprep.subr.mxu0 0.0
  %4371 = vmatpush1.xpose.msra.mxu0 0.0
  %4372 = vmatprep.subr.mxu0 0.0
  %4373 = vmatpush1.xpose.msra.mxu0 0.0
  %4374 = vmatprep.subr.mxu0 0.0
  %4375 = vmatpush1.xpose.msra.mxu0 0.0
  %4376 = vmatprep.subr.mxu0 0.0
  %4377 = vmatpush1.xpose.msra.mxu0 0.0
  %4378 = vmatprep.subr.mxu0 0.0
  %4379 = vmatpush1.xpose.msra.mxu0 0.0
  %4380 = vmatprep.subr.mxu0 0.0
  %4381 = vmatpush1.xpose.msra.mxu0 0.0
  %4382 = vmatprep.mubr.f32.mxu0 0.0
  %4383 = vmatmul.mubr.f32.gmra.mrb[0].mxu0 %v4310
  %v4384 = vpop.f32.mrb[0].mxu0
  %v4385 = vadd.f32 0.0, %v4384
  %v4386 = vpop.f32.mrb[0].mxu0
  %4387 = vmatprep.mubr.f32.mxu0 0.0
  %4388 = vmatmul.mubr.f32.gmra.mrb[0].mxu0 %v4312
  %v4389 = vpop.f32.mrb[0].mxu0
  %v4390 = vadd.f32 0.0, %v4389
  %v4391 = vpop.f32.mrb[0].mxu0
  %4392 = vdwg.mxu0
  %4393 = vrot.lane.b32.xlu0 %v394, 64
  %v4394 = vpop.permute.xlu0 %4393
  %4395 = vrot.lane.b32.xlu0 %v395, 64
  %v4396 = vpop.permute.xlu0 %4395
  %4397 = vrot.lane.b32.xlu0 %v394, 112
  %v4398 = vpop.permute.xlu0 %4397
  %4399 = vrot.lane.b32.xlu0 %v395, 112
  %v4400 = vpop.permute.xlu0 %4399
  %v4401 = vsel %vm412, %v4394, 0
  %v4403 = vsel %vm412, %v4396, 0
  %v4405 = vsel %vm412, %v4398, 0
  %v4407 = vsel %vm412, %v4400, 0
  %4409 = vmatprep.subr.mxu0 0.0
  %4410 = vmatpush1.xpose.msra.mxu0 %v4405
  %4411 = vmatprep.subr.mxu0 0.0
  %4412 = vmatpush1.xpose.msra.mxu0 %v4407
  %4413 = vmatprep.subr.mxu0 0.0
  %4414 = vmatpush1.xpose.msra.mxu0 0.0
  %4415 = vmatprep.subr.mxu0 0.0
  %4416 = vmatpush1.xpose.msra.mxu0 0.0
  %4417 = vmatprep.subr.mxu0 0.0
  %4418 = vmatpush1.xpose.msra.mxu0 0.0
  %4419 = vmatprep.subr.mxu0 0.0
  %4420 = vmatpush1.xpose.msra.mxu0 0.0
  %4421 = vmatprep.subr.mxu0 0.0
  %4422 = vmatpush1.xpose.msra.mxu0 0.0
  %4423 = vmatprep.subr.mxu0 0.0
  %4424 = vmatpush1.xpose.msra.mxu0 0.0
  %4425 = vmatprep.subr.mxu0 0.0
  %4426 = vmatpush1.xpose.msra.mxu0 0.0
  %4427 = vmatprep.subr.mxu0 0.0
  %4428 = vmatpush1.xpose.msra.mxu0 0.0
  %4429 = vmatprep.subr.mxu0 0.0
  %4430 = vmatpush1.xpose.msra.mxu0 0.0
  %4431 = vmatprep.subr.mxu0 0.0
  %4432 = vmatpush1.xpose.msra.mxu0 0.0
  %4433 = vmatprep.subr.mxu0 0.0
  %4434 = vmatpush1.xpose.msra.mxu0 0.0
  %4435 = vmatprep.subr.mxu0 0.0
  %4436 = vmatpush1.xpose.msra.mxu0 0.0
  %4437 = vmatprep.subr.mxu0 0.0
  %4438 = vmatpush1.xpose.msra.mxu0 0.0
  %4439 = vmatprep.subr.mxu0 0.0
  %4440 = vmatpush1.xpose.msra.mxu0 0.0
  %4441 = vmatprep.subr.mxu0 0.0
  %4442 = vmatpush1.xpose.msra.mxu0 0.0
  %4443 = vmatprep.subr.mxu0 0.0
  %4444 = vmatpush1.xpose.msra.mxu0 0.0
  %4445 = vmatprep.subr.mxu0 0.0
  %4446 = vmatpush1.xpose.msra.mxu0 0.0
  %4447 = vmatprep.subr.mxu0 0.0
  %4448 = vmatpush1.xpose.msra.mxu0 0.0
  %4449 = vmatprep.subr.mxu0 0.0
  %4450 = vmatpush1.xpose.msra.mxu0 0.0
  %4451 = vmatprep.subr.mxu0 0.0
  %4452 = vmatpush1.xpose.msra.mxu0 0.0
  %4453 = vmatprep.subr.mxu0 0.0
  %4454 = vmatpush1.xpose.msra.mxu0 0.0
  %4455 = vmatprep.subr.mxu0 0.0
  %4456 = vmatpush1.xpose.msra.mxu0 0.0
  %4457 = vmatprep.subr.mxu0 0.0
  %4458 = vmatpush1.xpose.msra.mxu0 0.0
  %4459 = vmatprep.subr.mxu0 0.0
  %4460 = vmatpush1.xpose.msra.mxu0 0.0
  %4461 = vmatprep.subr.mxu0 0.0
  %4462 = vmatpush1.xpose.msra.mxu0 0.0
  %4463 = vmatprep.subr.mxu0 0.0
  %4464 = vmatpush1.xpose.msra.mxu0 0.0
  %4465 = vmatprep.subr.mxu0 0.0
  %4466 = vmatpush1.xpose.msra.mxu0 0.0
  %4467 = vmatprep.subr.mxu0 0.0
  %4468 = vmatpush1.xpose.msra.mxu0 0.0
  %4469 = vmatprep.subr.mxu0 0.0
  %4470 = vmatpush1.xpose.msra.mxu0 0.0
  %4471 = vmatprep.subr.mxu0 0.0
  %4472 = vmatpush1.xpose.msra.mxu0 0.0
  %4473 = vmatprep.mubr.f32.mxu0 0.0
  %4474 = vmatmul.mubr.f32.gmra.mrb[0].mxu0 %v4401
  %v4475 = vpop.f32.mrb[0].mxu0
  %v4476 = vadd.f32 0.0, %v4475
  %v4477 = vpop.f32.mrb[0].mxu0
  %4478 = vmatprep.mubr.f32.mxu0 0.0
  %4479 = vmatmul.mubr.f32.gmra.mrb[0].mxu0 %v4403
  %v4480 = vpop.f32.mrb[0].mxu0
  %v4481 = vadd.f32 0.0, %v4480
  %v4482 = vpop.f32.mrb[0].mxu0
  %4483 = vdwg.mxu0
  %4484 = vrot.lane.b32.xlu0 %v396, 64
  %v4485 = vpop.permute.xlu0 %4484
  %4486 = vrot.lane.b32.xlu0 %v397, 64
  %v4487 = vpop.permute.xlu0 %4486
  %4488 = vrot.lane.b32.xlu0 %v396, 112
  %v4489 = vpop.permute.xlu0 %4488
  %4490 = vrot.lane.b32.xlu0 %v397, 112
  %v4491 = vpop.permute.xlu0 %4490
  %v4492 = vsel %vm412, %v4485, 0
  %v4494 = vsel %vm412, %v4487, 0
  %v4496 = vsel %vm412, %v4489, 0
  %v4498 = vsel %vm412, %v4491, 0
  %4500 = vmatprep.subr.mxu0 0.0
  %4501 = vmatpush1.xpose.msra.mxu0 %v4496
  %4502 = vmatprep.subr.mxu0 0.0
  %4503 = vmatpush1.xpose.msra.mxu0 %v4498
  %4504 = vmatprep.subr.mxu0 0.0
  %4505 = vmatpush1.xpose.msra.mxu0 0.0
  %4506 = vmatprep.subr.mxu0 0.0
  %4507 = vmatpush1.xpose.msra.mxu0 0.0
  %4508 = vmatprep.subr.mxu0 0.0
  %4509 = vmatpush1.xpose.msra.mxu0 0.0
  %4510 = vmatprep.subr.mxu0 0.0
  %4511 = vmatpush1.xpose.msra.mxu0 0.0
  %4512 = vmatprep.subr.mxu0 0.0
  %4513 = vmatpush1.xpose.msra.mxu0 0.0
  %4514 = vmatprep.subr.mxu0 0.0
  %4515 = vmatpush1.xpose.msra.mxu0 0.0
  %4516 = vmatprep.subr.mxu0 0.0
  %4517 = vmatpush1.xpose.msra.mxu0 0.0
  %4518 = vmatprep.subr.mxu0 0.0
  %4519 = vmatpush1.xpose.msra.mxu0 0.0
  %4520 = vmatprep.subr.mxu0 0.0
  %4521 = vmatpush1.xpose.msra.mxu0 0.0
  %4522 = vmatprep.subr.mxu0 0.0
  %4523 = vmatpush1.xpose.msra.mxu0 0.0
  %4524 = vmatprep.subr.mxu0 0.0
  %4525 = vmatpush1.xpose.msra.mxu0 0.0
  %4526 = vmatprep.subr.mxu0 0.0
  %4527 = vmatpush1.xpose.msra.mxu0 0.0
  %4528 = vmatprep.subr.mxu0 0.0
  %4529 = vmatpush1.xpose.msra.mxu0 0.0
  %4530 = vmatprep.subr.mxu0 0.0
  %4531 = vmatpush1.xpose.msra.mxu0 0.0
  %4532 = vmatprep.subr.mxu0 0.0
  %4533 = vmatpush1.xpose.msra.mxu0 0.0
  %4534 = vmatprep.subr.mxu0 0.0
  %4535 = vmatpush1.xpose.msra.mxu0 0.0
  %4536 = vmatprep.subr.mxu0 0.0
  %4537 = vmatpush1.xpose.msra.mxu0 0.0
  %4538 = vmatprep.subr.mxu0 0.0
  %4539 = vmatpush1.xpose.msra.mxu0 0.0
  %4540 = vmatprep.subr.mxu0 0.0
  %4541 = vmatpush1.xpose.msra.mxu0 0.0
  %4542 = vmatprep.subr.mxu0 0.0
  %4543 = vmatpush1.xpose.msra.mxu0 0.0
  %4544 = vmatprep.subr.mxu0 0.0
  %4545 = vmatpush1.xpose.msra.mxu0 0.0
  %4546 = vmatprep.subr.mxu0 0.0
  %4547 = vmatpush1.xpose.msra.mxu0 0.0
  %4548 = vmatprep.subr.mxu0 0.0
  %4549 = vmatpush1.xpose.msra.mxu0 0.0
  %4550 = vmatprep.subr.mxu0 0.0
  %4551 = vmatpush1.xpose.msra.mxu0 0.0
  %4552 = vmatprep.subr.mxu0 0.0
  %4553 = vmatpush1.xpose.msra.mxu0 0.0
  %4554 = vmatprep.subr.mxu0 0.0
  %4555 = vmatpush1.xpose.msra.mxu0 0.0
  %4556 = vmatprep.subr.mxu0 0.0
  %4557 = vmatpush1.xpose.msra.mxu0 0.0
  %4558 = vmatprep.subr.mxu0 0.0
  %4559 = vmatpush1.xpose.msra.mxu0 0.0
  %4560 = vmatprep.subr.mxu0 0.0
  %4561 = vmatpush1.xpose.msra.mxu0 0.0
  %4562 = vmatprep.subr.mxu0 0.0
  %4563 = vmatpush1.xpose.msra.mxu0 0.0
  %4564 = vmatprep.mubr.f32.mxu0 0.0
  %4565 = vmatmul.mubr.f32.gmra.mrb[0].mxu0 %v4492
  %v4566 = vpop.f32.mrb[0].mxu0
  %v4567 = vadd.f32 0.0, %v4566
  %v4568 = vpop.f32.mrb[0].mxu0
  %4569 = vmatprep.mubr.f32.mxu0 0.0
  %4570 = vmatmul.mubr.f32.gmra.mrb[0].mxu0 %v4494
  %v4571 = vpop.f32.mrb[0].mxu0
  %v4572 = vadd.f32 0.0, %v4571
  %v4573 = vpop.f32.mrb[0].mxu0
  %4574 = vdwg.mxu0
  %4575 = vrot.lane.b32.xlu0 %v398, 64
  %v4576 = vpop.permute.xlu0 %4575
  %4577 = vrot.lane.b32.xlu0 %v399, 64
  %v4578 = vpop.permute.xlu0 %4577
  %4579 = vrot.lane.b32.xlu0 %v398, 112
  %v4580 = vpop.permute.xlu0 %4579
  %4581 = vrot.lane.b32.xlu0 %v399, 112
  %v4582 = vpop.permute.xlu0 %4581
  %v4583 = vsel %vm412, %v4576, 0
  %v4585 = vsel %vm412, %v4578, 0
  %v4587 = vsel %vm412, %v4580, 0
  %v4589 = vsel %vm412, %v4582, 0
  %4591 = vmatprep.subr.mxu0 0.0
  %4592 = vmatpush1.xpose.msra.mxu0 %v4587
  %4593 = vmatprep.subr.mxu0 0.0
  %4594 = vmatpush1.xpose.msra.mxu0 %v4589
  %4595 = vmatprep.subr.mxu0 0.0
  %4596 = vmatpush1.xpose.msra.mxu0 0.0
  %4597 = vmatprep.subr.mxu0 0.0
  %4598 = vmatpush1.xpose.msra.mxu0 0.0
  %4599 = vmatprep.subr.mxu0 0.0
  %4600 = vmatpush1.xpose.msra.mxu0 0.0
  %4601 = vmatprep.subr.mxu0 0.0
  %4602 = vmatpush1.xpose.msra.mxu0 0.0
  %4603 = vmatprep.subr.mxu0 0.0
  %4604 = vmatpush1.xpose.msra.mxu0 0.0
  %4605 = vmatprep.subr.mxu0 0.0
  %4606 = vmatpush1.xpose.msra.mxu0 0.0
  %4607 = vmatprep.subr.mxu0 0.0
  %4608 = vmatpush1.xpose.msra.mxu0 0.0
  %4609 = vmatprep.subr.mxu0 0.0
  %4610 = vmatpush1.xpose.msra.mxu0 0.0
  %4611 = vmatprep.subr.mxu0 0.0
  %4612 = vmatpush1.xpose.msra.mxu0 0.0
  %4613 = vmatprep.subr.mxu0 0.0
  %4614 = vmatpush1.xpose.msra.mxu0 0.0
  %4615 = vmatprep.subr.mxu0 0.0
  %4616 = vmatpush1.xpose.msra.mxu0 0.0
  %4617 = vmatprep.subr.mxu0 0.0
  %4618 = vmatpush1.xpose.msra.mxu0 0.0
  %4619 = vmatprep.subr.mxu0 0.0
  %4620 = vmatpush1.xpose.msra.mxu0 0.0
  %4621 = vmatprep.subr.mxu0 0.0
  %4622 = vmatpush1.xpose.msra.mxu0 0.0
  %4623 = vmatprep.subr.mxu0 0.0
  %4624 = vmatpush1.xpose.msra.mxu0 0.0
  %4625 = vmatprep.subr.mxu0 0.0
  %4626 = vmatpush1.xpose.msra.mxu0 0.0
  %4627 = vmatprep.subr.mxu0 0.0
  %4628 = vmatpush1.xpose.msra.mxu0 0.0
  %4629 = vmatprep.subr.mxu0 0.0
  %4630 = vmatpush1.xpose.msra.mxu0 0.0
  %4631 = vmatprep.subr.mxu0 0.0
  %4632 = vmatpush1.xpose.msra.mxu0 0.0
  %4633 = vmatprep.subr.mxu0 0.0
  %4634 = vmatpush1.xpose.msra.mxu0 0.0
  %4635 = vmatprep.subr.mxu0 0.0
  %4636 = vmatpush1.xpose.msra.mxu0 0.0
  %4637 = vmatprep.subr.mxu0 0.0
  %4638 = vmatpush1.xpose.msra.mxu0 0.0
  %4639 = vmatprep.subr.mxu0 0.0
  %4640 = vmatpush1.xpose.msra.mxu0 0.0
  %4641 = vmatprep.subr.mxu0 0.0
  %4642 = vmatpush1.xpose.msra.mxu0 0.0
  %4643 = vmatprep.subr.mxu0 0.0
  %4644 = vmatpush1.xpose.msra.mxu0 0.0
  %4645 = vmatprep.subr.mxu0 0.0
  %4646 = vmatpush1.xpose.msra.mxu0 0.0
  %4647 = vmatprep.subr.mxu0 0.0
  %4648 = vmatpush1.xpose.msra.mxu0 0.0
  %4649 = vmatprep.subr.mxu0 0.0
  %4650 = vmatpush1.xpose.msra.mxu0 0.0
  %4651 = vmatprep.subr.mxu0 0.0
  %4652 = vmatpush1.xpose.msra.mxu0 0.0
  %4653 = vmatprep.subr.mxu0 0.0
  %4654 = vmatpush1.xpose.msra.mxu0 0.0
  %4655 = vmatprep.mubr.f32.mxu0 0.0
  %4656 = vmatmul.mubr.f32.gmra.mrb[0].mxu0 %v4583
  %v4657 = vpop.f32.mrb[0].mxu0
  %v4658 = vadd.f32 0.0, %v4657
  %v4659 = vpop.f32.mrb[0].mxu0
  %4660 = vmatprep.mubr.f32.mxu0 0.0
  %4661 = vmatmul.mubr.f32.gmra.mrb[0].mxu0 %v4585
  %v4662 = vpop.f32.mrb[0].mxu0
  %v4663 = vadd.f32 0.0, %v4662
  %v4664 = vpop.f32.mrb[0].mxu0
  %4665 = vdwg.mxu0
  %4666 = vrot.lane.b32.xlu0 %v400, 64
  %v4667 = vpop.permute.xlu0 %4666
  %4668 = vrot.lane.b32.xlu0 %v401, 64
  %v4669 = vpop.permute.xlu0 %4668
  %4670 = vrot.lane.b32.xlu0 %v400, 112
  %v4671 = vpop.permute.xlu0 %4670
  %4672 = vrot.lane.b32.xlu0 %v401, 112
  %v4673 = vpop.permute.xlu0 %4672
  %v4674 = vsel %vm412, %v4667, 0
  %v4676 = vsel %vm412, %v4669, 0
  %v4678 = vsel %vm412, %v4671, 0
  %v4680 = vsel %vm412, %v4673, 0
  %4682 = vmatprep.subr.mxu0 0.0
  %4683 = vmatpush1.xpose.msra.mxu0 %v4678
  %4684 = vmatprep.subr.mxu0 0.0
  %4685 = vmatpush1.xpose.msra.mxu0 %v4680
  %4686 = vmatprep.subr.mxu0 0.0
  %4687 = vmatpush1.xpose.msra.mxu0 0.0
  %4688 = vmatprep.subr.mxu0 0.0
  %4689 = vmatpush1.xpose.msra.mxu0 0.0
  %4690 = vmatprep.subr.mxu0 0.0
  %4691 = vmatpush1.xpose.msra.mxu0 0.0
  %4692 = vmatprep.subr.mxu0 0.0
  %4693 = vmatpush1.xpose.msra.mxu0 0.0
  %4694 = vmatprep.subr.mxu0 0.0
  %4695 = vmatpush1.xpose.msra.mxu0 0.0
  %4696 = vmatprep.subr.mxu0 0.0
  %4697 = vmatpush1.xpose.msra.mxu0 0.0
  %4698 = vmatprep.subr.mxu0 0.0
  %4699 = vmatpush1.xpose.msra.mxu0 0.0
  %4700 = vmatprep.subr.mxu0 0.0
  %4701 = vmatpush1.xpose.msra.mxu0 0.0
  %4702 = vmatprep.subr.mxu0 0.0
  %4703 = vmatpush1.xpose.msra.mxu0 0.0
  %4704 = vmatprep.subr.mxu0 0.0
  %4705 = vmatpush1.xpose.msra.mxu0 0.0
  %4706 = vmatprep.subr.mxu0 0.0
  %4707 = vmatpush1.xpose.msra.mxu0 0.0
  %4708 = vmatprep.subr.mxu0 0.0
  %4709 = vmatpush1.xpose.msra.mxu0 0.0
  %4710 = vmatprep.subr.mxu0 0.0
  %4711 = vmatpush1.xpose.msra.mxu0 0.0
  %4712 = vmatprep.subr.mxu0 0.0
  %4713 = vmatpush1.xpose.msra.mxu0 0.0
  %4714 = vmatprep.subr.mxu0 0.0
  %4715 = vmatpush1.xpose.msra.mxu0 0.0
  %4716 = vmatprep.subr.mxu0 0.0
  %4717 = vmatpush1.xpose.msra.mxu0 0.0
  %4718 = vmatprep.subr.mxu0 0.0
  %4719 = vmatpush1.xpose.msra.mxu0 0.0
  %4720 = vmatprep.subr.mxu0 0.0
  %4721 = vmatpush1.xpose.msra.mxu0 0.0
  %4722 = vmatprep.subr.mxu0 0.0
  %4723 = vmatpush1.xpose.msra.mxu0 0.0
  %4724 = vmatprep.subr.mxu0 0.0
  %4725 = vmatpush1.xpose.msra.mxu0 0.0
  %4726 = vmatprep.subr.mxu0 0.0
  %4727 = vmatpush1.xpose.msra.mxu0 0.0
  %4728 = vmatprep.subr.mxu0 0.0
  %4729 = vmatpush1.xpose.msra.mxu0 0.0
  %4730 = vmatprep.subr.mxu0 0.0
  %4731 = vmatpush1.xpose.msra.mxu0 0.0
  %4732 = vmatprep.subr.mxu0 0.0
  %4733 = vmatpush1.xpose.msra.mxu0 0.0
  %4734 = vmatprep.subr.mxu0 0.0
  %4735 = vmatpush1.xpose.msra.mxu0 0.0
  %4736 = vmatprep.subr.mxu0 0.0
  %4737 = vmatpush1.xpose.msra.mxu0 0.0
  %4738 = vmatprep.subr.mxu0 0.0
  %4739 = vmatpush1.xpose.msra.mxu0 0.0
  %4740 = vmatprep.subr.mxu0 0.0
  %4741 = vmatpush1.xpose.msra.mxu0 0.0
  %4742 = vmatprep.subr.mxu0 0.0
  %4743 = vmatpush1.xpose.msra.mxu0 0.0
  %4744 = vmatprep.subr.mxu0 0.0
  %4745 = vmatpush1.xpose.msra.mxu0 0.0
  %4746 = vmatprep.mubr.f32.mxu0 0.0
  %4747 = vmatmul.mubr.f32.gmra.mrb[0].mxu0 %v4674
  %v4748 = vpop.f32.mrb[0].mxu0
  %v4749 = vadd.f32 0.0, %v4748
  %v4750 = vpop.f32.mrb[0].mxu0
  %4751 = vmatprep.mubr.f32.mxu0 0.0
  %4752 = vmatmul.mubr.f32.gmra.mrb[0].mxu0 %v4676
  %v4753 = vpop.f32.mrb[0].mxu0
  %v4754 = vadd.f32 0.0, %v4753
  %v4755 = vpop.f32.mrb[0].mxu0
  %4756 = vdwg.mxu0
  %4757 = vrot.lane.b32.xlu0 %v402, 64
  %v4758 = vpop.permute.xlu0 %4757
  %4759 = vrot.lane.b32.xlu0 %v403, 64
  %v4760 = vpop.permute.xlu0 %4759
  %4761 = vrot.lane.b32.xlu0 %v402, 112
  %v4762 = vpop.permute.xlu0 %4761
  %4763 = vrot.lane.b32.xlu0 %v403, 112
  %v4764 = vpop.permute.xlu0 %4763
  %v4765 = vsel %vm412, %v4758, 0
  %v4767 = vsel %vm412, %v4760, 0
  %v4769 = vsel %vm412, %v4762, 0
  %v4771 = vsel %vm412, %v4764, 0
  %4773 = vmatprep.subr.mxu0 0.0
  %4774 = vmatpush1.xpose.msra.mxu0 %v4769
  %4775 = vmatprep.subr.mxu0 0.0
  %4776 = vmatpush1.xpose.msra.mxu0 %v4771
  %4777 = vmatprep.subr.mxu0 0.0
  %4778 = vmatpush1.xpose.msra.mxu0 0.0
  %4779 = vmatprep.subr.mxu0 0.0
  %4780 = vmatpush1.xpose.msra.mxu0 0.0
  %4781 = vmatprep.subr.mxu0 0.0
  %4782 = vmatpush1.xpose.msra.mxu0 0.0
  %4783 = vmatprep.subr.mxu0 0.0
  %4784 = vmatpush1.xpose.msra.mxu0 0.0
  %4785 = vmatprep.subr.mxu0 0.0
  %4786 = vmatpush1.xpose.msra.mxu0 0.0
  %4787 = vmatprep.subr.mxu0 0.0
  %4788 = vmatpush1.xpose.msra.mxu0 0.0
  %4789 = vmatprep.subr.mxu0 0.0
  %4790 = vmatpush1.xpose.msra.mxu0 0.0
  %4791 = vmatprep.subr.mxu0 0.0
  %4792 = vmatpush1.xpose.msra.mxu0 0.0
  %4793 = vmatprep.subr.mxu0 0.0
  %4794 = vmatpush1.xpose.msra.mxu0 0.0
  %4795 = vmatprep.subr.mxu0 0.0
  %4796 = vmatpush1.xpose.msra.mxu0 0.0
  %4797 = vmatprep.subr.mxu0 0.0
  %4798 = vmatpush1.xpose.msra.mxu0 0.0
  %4799 = vmatprep.subr.mxu0 0.0
  %4800 = vmatpush1.xpose.msra.mxu0 0.0
  %4801 = vmatprep.subr.mxu0 0.0
  %4802 = vmatpush1.xpose.msra.mxu0 0.0
  %4803 = vmatprep.subr.mxu0 0.0
  %4804 = vmatpush1.xpose.msra.mxu0 0.0
  %4805 = vmatprep.subr.mxu0 0.0
  %4806 = vmatpush1.xpose.msra.mxu0 0.0
  %4807 = vmatprep.subr.mxu0 0.0
  %4808 = vmatpush1.xpose.msra.mxu0 0.0
  %4809 = vmatprep.subr.mxu0 0.0
  %4810 = vmatpush1.xpose.msra.mxu0 0.0
  %4811 = vmatprep.subr.mxu0 0.0
  %4812 = vmatpush1.xpose.msra.mxu0 0.0
  %4813 = vmatprep.subr.mxu0 0.0
  %4814 = vmatpush1.xpose.msra.mxu0 0.0
  %4815 = vmatprep.subr.mxu0 0.0
  %4816 = vmatpush1.xpose.msra.mxu0 0.0
  %4817 = vmatprep.subr.mxu0 0.0
  %4818 = vmatpush1.xpose.msra.mxu0 0.0
  %4819 = vmatprep.subr.mxu0 0.0
  %4820 = vmatpush1.xpose.msra.mxu0 0.0
  %4821 = vmatprep.subr.mxu0 0.0
  %4822 = vmatpush1.xpose.msra.mxu0 0.0
  %4823 = vmatprep.subr.mxu0 0.0
  %4824 = vmatpush1.xpose.msra.mxu0 0.0
  %4825 = vmatprep.subr.mxu0 0.0
  %4826 = vmatpush1.xpose.msra.mxu0 0.0
  %4827 = vmatprep.subr.mxu0 0.0
  %4828 = vmatpush1.xpose.msra.mxu0 0.0
  %4829 = vmatprep.subr.mxu0 0.0
  %4830 = vmatpush1.xpose.msra.mxu0 0.0
  %4831 = vmatprep.subr.mxu0 0.0
  %4832 = vmatpush1.xpose.msra.mxu0 0.0
  %4833 = vmatprep.subr.mxu0 0.0
  %4834 = vmatpush1.xpose.msra.mxu0 0.0
  %4835 = vmatprep.subr.mxu0 0.0
  %4836 = vmatpush1.xpose.msra.mxu0 0.0
  %4837 = vmatprep.mubr.f32.mxu0 0.0
  %4838 = vmatmul.mubr.f32.gmra.mrb[0].mxu0 %v4765
  %v4839 = vpop.f32.mrb[0].mxu0
  %v4840 = vadd.f32 0.0, %v4839
  %v4841 = vpop.f32.mrb[0].mxu0
  %4842 = vmatprep.mubr.f32.mxu0 0.0
  %4843 = vmatmul.mubr.f32.gmra.mrb[0].mxu0 %v4767
  %v4844 = vpop.f32.mrb[0].mxu0
  %v4845 = vadd.f32 0.0, %v4844
  %v4846 = vpop.f32.mrb[0].mxu0
  %4847 = vdwg.mxu0
  %4848 = vrot.lane.b32.xlu0 %v404, 64
  %v4849 = vpop.permute.xlu0 %4848
  %4850 = vrot.lane.b32.xlu0 %v405, 64
  %v4851 = vpop.permute.xlu0 %4850
  %4852 = vrot.lane.b32.xlu0 %v404, 112
  %v4853 = vpop.permute.xlu0 %4852
  %4854 = vrot.lane.b32.xlu0 %v405, 112
  %v4855 = vpop.permute.xlu0 %4854
  %v4856 = vsel %vm412, %v4849, 0
  %v4858 = vsel %vm412, %v4851, 0
  %v4860 = vsel %vm412, %v4853, 0
  %v4862 = vsel %vm412, %v4855, 0
  %4864 = vmatprep.subr.mxu0 0.0
  %4865 = vmatpush1.xpose.msra.mxu0 %v4860
  %4866 = vmatprep.subr.mxu0 0.0
  %4867 = vmatpush1.xpose.msra.mxu0 %v4862
  %4868 = vmatprep.subr.mxu0 0.0
  %4869 = vmatpush1.xpose.msra.mxu0 0.0
  %4870 = vmatprep.subr.mxu0 0.0
  %4871 = vmatpush1.xpose.msra.mxu0 0.0
  %4872 = vmatprep.subr.mxu0 0.0
  %4873 = vmatpush1.xpose.msra.mxu0 0.0
  %4874 = vmatprep.subr.mxu0 0.0
  %4875 = vmatpush1.xpose.msra.mxu0 0.0
  %4876 = vmatprep.subr.mxu0 0.0
  %4877 = vmatpush1.xpose.msra.mxu0 0.0
  %4878 = vmatprep.subr.mxu0 0.0
  %4879 = vmatpush1.xpose.msra.mxu0 0.0
  %4880 = vmatprep.subr.mxu0 0.0
  %4881 = vmatpush1.xpose.msra.mxu0 0.0
  %4882 = vmatprep.subr.mxu0 0.0
  %4883 = vmatpush1.xpose.msra.mxu0 0.0
  %4884 = vmatprep.subr.mxu0 0.0
  %4885 = vmatpush1.xpose.msra.mxu0 0.0
  %4886 = vmatprep.subr.mxu0 0.0
  %4887 = vmatpush1.xpose.msra.mxu0 0.0
  %4888 = vmatprep.subr.mxu0 0.0
  %4889 = vmatpush1.xpose.msra.mxu0 0.0
  %4890 = vmatprep.subr.mxu0 0.0
  %4891 = vmatpush1.xpose.msra.mxu0 0.0
  %4892 = vmatprep.subr.mxu0 0.0
  %4893 = vmatpush1.xpose.msra.mxu0 0.0
  %4894 = vmatprep.subr.mxu0 0.0
  %4895 = vmatpush1.xpose.msra.mxu0 0.0
  %4896 = vmatprep.subr.mxu0 0.0
  %4897 = vmatpush1.xpose.msra.mxu0 0.0
  %4898 = vmatprep.subr.mxu0 0.0
  %4899 = vmatpush1.xpose.msra.mxu0 0.0
  %4900 = vmatprep.subr.mxu0 0.0
  %4901 = vmatpush1.xpose.msra.mxu0 0.0
  %4902 = vmatprep.subr.mxu0 0.0
  %4903 = vmatpush1.xpose.msra.mxu0 0.0
  %4904 = vmatprep.subr.mxu0 0.0
  %4905 = vmatpush1.xpose.msra.mxu0 0.0
  %4906 = vmatprep.subr.mxu0 0.0
  %4907 = vmatpush1.xpose.msra.mxu0 0.0
  %4908 = vmatprep.subr.mxu0 0.0
  %4909 = vmatpush1.xpose.msra.mxu0 0.0
  %4910 = vmatprep.subr.mxu0 0.0
  %4911 = vmatpush1.xpose.msra.mxu0 0.0
  %4912 = vmatprep.subr.mxu0 0.0
  %4913 = vmatpush1.xpose.msra.mxu0 0.0
  %4914 = vmatprep.subr.mxu0 0.0
  %4915 = vmatpush1.xpose.msra.mxu0 0.0
  %4916 = vmatprep.subr.mxu0 0.0
  %4917 = vmatpush1.xpose.msra.mxu0 0.0
  %4918 = vmatprep.subr.mxu0 0.0
  %4919 = vmatpush1.xpose.msra.mxu0 0.0
  %4920 = vmatprep.subr.mxu0 0.0
  %4921 = vmatpush1.xpose.msra.mxu0 0.0
  %4922 = vmatprep.subr.mxu0 0.0
  %4923 = vmatpush1.xpose.msra.mxu0 0.0
  %4924 = vmatprep.subr.mxu0 0.0
  %4925 = vmatpush1.xpose.msra.mxu0 0.0
  %4926 = vmatprep.subr.mxu0 0.0
  %4927 = vmatpush1.xpose.msra.mxu0 0.0
  %4928 = vmatprep.mubr.f32.mxu0 0.0
  %4929 = vmatmul.mubr.f32.gmra.mrb[0].mxu0 %v4856
  %v4930 = vpop.f32.mrb[0].mxu0
  %v4931 = vadd.f32 0.0, %v4930
  %v4932 = vpop.f32.mrb[0].mxu0
  %4933 = vmatprep.mubr.f32.mxu0 0.0
  %4934 = vmatmul.mubr.f32.gmra.mrb[0].mxu0 %v4858
  %v4935 = vpop.f32.mrb[0].mxu0
  %v4936 = vadd.f32 0.0, %v4935
  %v4937 = vpop.f32.mrb[0].mxu0
  %4938 = vdwg.mxu0
  %v4939 = vsel %vm412, %v3566, -inf
  %4940 = vmax.xlane.f32.xlu0 %v4939
  %v4941 = vpop.xlane.xlu0 %4940
  %v4942 = vsel %vm412, %v3571, -inf
  %4943 = vmax.xlane.f32.xlu0 %v4942
  %v4944 = vpop.xlane.xlu0 %4943
  %v4945 = vsel %vm412, %v3657, -inf
  %4946 = vmax.xlane.f32.xlu0 %v4945
  %v4947 = vpop.xlane.xlu0 %4946
  %v4948 = vsel %vm412, %v3662, -inf
  %4949 = vmax.xlane.f32.xlu0 %v4948
  %v4950 = vpop.xlane.xlu0 %4949
  %v4951 = vsel %vm412, %v3748, -inf
  %4952 = vmax.xlane.f32.xlu0 %v4951
  %v4953 = vpop.xlane.xlu0 %4952
  %v4954 = vsel %vm412, %v3753, -inf
  %4955 = vmax.xlane.f32.xlu0 %v4954
  %v4956 = vpop.xlane.xlu0 %4955
  %v4957 = vsel %vm412, %v3839, -inf
  %4958 = vmax.xlane.f32.xlu0 %v4957
  %v4959 = vpop.xlane.xlu0 %4958
  %v4960 = vsel %vm412, %v3844, -inf
  %4961 = vmax.xlane.f32.xlu0 %v4960
  %v4962 = vpop.xlane.xlu0 %4961
  %v4963 = vsel %vm412, %v3930, -inf
  %4964 = vmax.xlane.f32.xlu0 %v4963
  %v4965 = vpop.xlane.xlu0 %4964
  %v4966 = vsel %vm412, %v3935, -inf
  %4967 = vmax.xlane.f32.xlu0 %v4966
  %v4968 = vpop.xlane.xlu0 %4967
  %v4969 = vsel %vm412, %v4021, -inf
  %4970 = vmax.xlane.f32.xlu0 %v4969
  %v4971 = vpop.xlane.xlu0 %4970
  %v4972 = vsel %vm412, %v4026, -inf
  %4973 = vmax.xlane.f32.xlu0 %v4972
  %v4974 = vpop.xlane.xlu0 %4973
  %v4975 = vsel %vm412, %v4112, -inf
  %4976 = vmax.xlane.f32.xlu0 %v4975
  %v4977 = vpop.xlane.xlu0 %4976
  %v4978 = vsel %vm412, %v4117, -inf
  %4979 = vmax.xlane.f32.xlu0 %v4978
  %v4980 = vpop.xlane.xlu0 %4979
  %v4981 = vsel %vm412, %v4203, -inf
  %4982 = vmax.xlane.f32.xlu0 %v4981
  %v4983 = vpop.xlane.xlu0 %4982
  %v4984 = vsel %vm412, %v4208, -inf
  %4985 = vmax.xlane.f32.xlu0 %v4984
  %v4986 = vpop.xlane.xlu0 %4985
  %v4987 = vsel %vm412, %v4294, -inf
  %4988 = vmax.xlane.f32.xlu0 %v4987
  %v4989 = vpop.xlane.xlu0 %4988
  %v4990 = vsel %vm412, %v4299, -inf
  %4991 = vmax.xlane.f32.xlu0 %v4990
  %v4992 = vpop.xlane.xlu0 %4991
  %v4993 = vsel %vm412, %v4385, -inf
  %4994 = vmax.xlane.f32.xlu0 %v4993
  %v4995 = vpop.xlane.xlu0 %4994
  %v4996 = vsel %vm412, %v4390, -inf
  %4997 = vmax.xlane.f32.xlu0 %v4996
  %v4998 = vpop.xlane.xlu0 %4997
  %v4999 = vsel %vm412, %v4476, -inf
  %5000 = vmax.xlane.f32.xlu0 %v4999
  %v5001 = vpop.xlane.xlu0 %5000
  %v5002 = vsel %vm412, %v4481, -inf
  %5003 = vmax.xlane.f32.xlu0 %v5002
  %v5004 = vpop.xlane.xlu0 %5003
  %v5005 = vsel %vm412, %v4567, -inf
  %5006 = vmax.xlane.f32.xlu0 %v5005
  %v5007 = vpop.xlane.xlu0 %5006
  %v5008 = vsel %vm412, %v4572, -inf
  %5009 = vmax.xlane.f32.xlu0 %v5008
  %v5010 = vpop.xlane.xlu0 %5009
  %v5011 = vsel %vm412, %v4658, -inf
  %5012 = vmax.xlane.f32.xlu0 %v5011
  %v5013 = vpop.xlane.xlu0 %5012
  %v5014 = vsel %vm412, %v4663, -inf
  %5015 = vmax.xlane.f32.xlu0 %v5014
  %v5016 = vpop.xlane.xlu0 %5015
  %v5017 = vsel %vm412, %v4749, -inf
  %5018 = vmax.xlane.f32.xlu0 %v5017
  %v5019 = vpop.xlane.xlu0 %5018
  %v5020 = vsel %vm412, %v4754, -inf
  %5021 = vmax.xlane.f32.xlu0 %v5020
  %v5022 = vpop.xlane.xlu0 %5021
  %v5023 = vsel %vm412, %v4840, -inf
  %5024 = vmax.xlane.f32.xlu0 %v5023
  %v5025 = vpop.xlane.xlu0 %5024
  %v5026 = vsel %vm412, %v4845, -inf
  %5027 = vmax.xlane.f32.xlu0 %v5026
  %v5028 = vpop.xlane.xlu0 %5027
  %v5029 = vsel %vm412, %v4931, -inf
  %5030 = vmax.xlane.f32.xlu0 %v5029
  %v5031 = vpop.xlane.xlu0 %5030
  %v5032 = vsel %vm412, %v4936, -inf
  %5033 = vmax.xlane.f32.xlu0 %v5032
  %v5034 = vpop.xlane.xlu0 %5033
  %v5035 = vsub.f32 %v3566, %v4941
  %v5036 = vsub.f32 %v3571, %v4944
  %v5037 = vsub.f32 %v3657, %v4947
  %v5038 = vsub.f32 %v3662, %v4950
  %v5039 = vsub.f32 %v3748, %v4953
  %v5040 = vsub.f32 %v3753, %v4956
  %v5041 = vsub.f32 %v3839, %v4959
  %v5042 = vsub.f32 %v3844, %v4962
  %v5043 = vsub.f32 %v3930, %v4965
  %v5044 = vsub.f32 %v3935, %v4968
  %v5045 = vsub.f32 %v4021, %v4971
  %v5046 = vsub.f32 %v4026, %v4974
  %v5047 = vsub.f32 %v4112, %v4977
  %v5048 = vsub.f32 %v4117, %v4980
  %v5049 = vsub.f32 %v4203, %v4983
  %v5050 = vsub.f32 %v4208, %v4986
  %v5051 = vsub.f32 %v4294, %v4989
  %v5052 = vsub.f32 %v4299, %v4992
  %v5053 = vsub.f32 %v4385, %v4995
  %v5054 = vsub.f32 %v4390, %v4998
  %v5055 = vsub.f32 %v4476, %v5001
  %v5056 = vsub.f32 %v4481, %v5004
  %v5057 = vsub.f32 %v4567, %v5007
  %v5058 = vsub.f32 %v4572, %v5010
  %v5059 = vsub.f32 %v4658, %v5013
  %v5060 = vsub.f32 %v4663, %v5016
  %v5061 = vsub.f32 %v4749, %v5019
  %v5062 = vsub.f32 %v4754, %v5022
  %v5063 = vsub.f32 %v4840, %v5025
  %v5064 = vsub.f32 %v4845, %v5028
  %v5065 = vsub.f32 %v4931, %v5031
  %v5066 = vsub.f32 %v4936, %v5034
  %v5067 = vmul.f32 %v5035, 1.442695
  %v5068 = vpow.pop %v5067
  %v5069 = vmul.f32 %v5036, 1.442695
  %v5070 = vpow.pop %v5069
  %v5071 = vmul.f32 %v5037, 1.442695
  %v5072 = vpow.pop %v5071
  %v5073 = vmul.f32 %v5038, 1.442695
  %v5074 = vpow.pop %v5073
  %v5075 = vmul.f32 %v5039, 1.442695
  %v5076 = vpow.pop %v5075
  %v5077 = vmul.f32 %v5040, 1.442695
  %v5078 = vpow.pop %v5077
  %v5079 = vmul.f32 %v5041, 1.442695
  %v5080 = vpow.pop %v5079
  %v5081 = vmul.f32 %v5042, 1.442695
  %v5082 = vpow.pop %v5081
  %v5083 = vmul.f32 %v5043, 1.442695
  %v5084 = vpow.pop %v5083
  %v5085 = vmul.f32 %v5044, 1.442695
  %v5086 = vpow.pop %v5085
  %v5087 = vmul.f32 %v5045, 1.442695
  %v5088 = vpow.pop %v5087
  %v5089 = vmul.f32 %v5046, 1.442695
  %v5090 = vpow.pop %v5089
  %v5091 = vmul.f32 %v5047, 1.442695
  %v5092 = vpow.pop %v5091
  %v5093 = vmul.f32 %v5048, 1.442695
  %v5094 = vpow.pop %v5093
  %v5095 = vmul.f32 %v5049, 1.442695
  %v5096 = vpow.pop %v5095
  %v5097 = vmul.f32 %v5050, 1.442695
  %v5098 = vpow.pop %v5097
  %v5099 = vmul.f32 %v5051, 1.442695
  %v5100 = vpow.pop %v5099
  %v5101 = vmul.f32 %v5052, 1.442695
  %v5102 = vpow.pop %v5101
  %v5103 = vmul.f32 %v5053, 1.442695
  %v5104 = vpow.pop %v5103
  %v5105 = vmul.f32 %v5054, 1.442695
  %v5106 = vpow.pop %v5105
  %v5107 = vmul.f32 %v5055, 1.442695
  %v5108 = vpow.pop %v5107
  %v5109 = vmul.f32 %v5056, 1.442695
  %v5110 = vpow.pop %v5109
  %v5111 = vmul.f32 %v5057, 1.442695
  %v5112 = vpow.pop %v5111
  %v5113 = vmul.f32 %v5058, 1.442695
  %v5114 = vpow.pop %v5113
  %v5115 = vmul.f32 %v5059, 1.442695
  %v5116 = vpow.pop %v5115
  %v5117 = vmul.f32 %v5060, 1.442695
  %v5118 = vpow.pop %v5117
  %v5119 = vmul.f32 %v5061, 1.442695
  %v5120 = vpow.pop %v5119
  %v5121 = vmul.f32 %v5062, 1.442695
  %v5122 = vpow.pop %v5121
  %v5123 = vmul.f32 %v5063, 1.442695
  %v5124 = vpow.pop %v5123
  %v5125 = vmul.f32 %v5064, 1.442695
  %v5126 = vpow.pop %v5125
  %v5127 = vmul.f32 %v5065, 1.442695
  %v5128 = vpow.pop %v5127
  %v5129 = vmul.f32 %v5066, 1.442695
  %v5130 = vpow.pop %v5129
  %v5131 = vsel %vm412, %v5068, 0.0
  %5132 = vadd.xlane.f32.xlu0 %v5131
  %v5133 = vpop.xlane.xlu0 %5132
  %v5134 = vsel %vm412, %v5070, 0.0
  %5135 = vadd.xlane.f32.xlu0 %v5134
  %v5136 = vpop.xlane.xlu0 %5135
  %v5137 = vsel %vm412, %v5072, 0.0
  %5138 = vadd.xlane.f32.xlu0 %v5137
  %v5139 = vpop.xlane.xlu0 %5138
  %v5140 = vsel %vm412, %v5074, 0.0
  %5141 = vadd.xlane.f32.xlu0 %v5140
  %v5142 = vpop.xlane.xlu0 %5141
  %v5143 = vsel %vm412, %v5076, 0.0
  %5144 = vadd.xlane.f32.xlu0 %v5143
  %v5145 = vpop.xlane.xlu0 %5144
  %v5146 = vsel %vm412, %v5078, 0.0
  %5147 = vadd.xlane.f32.xlu0 %v5146
  %v5148 = vpop.xlane.xlu0 %5147
  %v5149 = vsel %vm412, %v5080, 0.0
  %5150 = vadd.xlane.f32.xlu0 %v5149
  %v5151 = vpop.xlane.xlu0 %5150
  %v5152 = vsel %vm412, %v5082, 0.0
  %5153 = vadd.xlane.f32.xlu0 %v5152
  %v5154 = vpop.xlane.xlu0 %5153
  %v5155 = vsel %vm412, %v5084, 0.0
  %5156 = vadd.xlane.f32.xlu0 %v5155
  %v5157 = vpop.xlane.xlu0 %5156
  %v5158 = vsel %vm412, %v5086, 0.0
  %5159 = vadd.xlane.f32.xlu0 %v5158
  %v5160 = vpop.xlane.xlu0 %5159
  %v5161 = vsel %vm412, %v5088, 0.0
  %5162 = vadd.xlane.f32.xlu0 %v5161
  %v5163 = vpop.xlane.xlu0 %5162
  %v5164 = vsel %vm412, %v5090, 0.0
  %5165 = vadd.xlane.f32.xlu0 %v5164
  %v5166 = vpop.xlane.xlu0 %5165
  %v5167 = vsel %vm412, %v5092, 0.0
  %5168 = vadd.xlane.f32.xlu0 %v5167
  %v5169 = vpop.xlane.xlu0 %5168
  %v5170 = vsel %vm412, %v5094, 0.0
  %5171 = vadd.xlane.f32.xlu0 %v5170
  %v5172 = vpop.xlane.xlu0 %5171
  %v5173 = vsel %vm412, %v5096, 0.0
  %5174 = vadd.xlane.f32.xlu0 %v5173
  %v5175 = vpop.xlane.xlu0 %5174
  %v5176 = vsel %vm412, %v5098, 0.0
  %5177 = vadd.xlane.f32.xlu0 %v5176
  %v5178 = vpop.xlane.xlu0 %5177
  %v5179 = vsel %vm412, %v5100, 0.0
  %5180 = vadd.xlane.f32.xlu0 %v5179
  %v5181 = vpop.xlane.xlu0 %5180
  %v5182 = vsel %vm412, %v5102, 0.0
  %5183 = vadd.xlane.f32.xlu0 %v5182
  %v5184 = vpop.xlane.xlu0 %5183
  %v5185 = vsel %vm412, %v5104, 0.0
  %5186 = vadd.xlane.f32.xlu0 %v5185
  %v5187 = vpop.xlane.xlu0 %5186
  %v5188 = vsel %vm412, %v5106, 0.0
  %5189 = vadd.xlane.f32.xlu0 %v5188
  %v5190 = vpop.xlane.xlu0 %5189
  %v5191 = vsel %vm412, %v5108, 0.0
  %5192 = vadd.xlane.f32.xlu0 %v5191
  %v5193 = vpop.xlane.xlu0 %5192
  %v5194 = vsel %vm412, %v5110, 0.0
  %5195 = vadd.xlane.f32.xlu0 %v5194
  %v5196 = vpop.xlane.xlu0 %5195
  %v5197 = vsel %vm412, %v5112, 0.0
  %5198 = vadd.xlane.f32.xlu0 %v5197
  %v5199 = vpop.xlane.xlu0 %5198
  %v5200 = vsel %vm412, %v5114, 0.0
  %5201 = vadd.xlane.f32.xlu0 %v5200
  %v5202 = vpop.xlane.xlu0 %5201
  %v5203 = vsel %vm412, %v5116, 0.0
  %5204 = vadd.xlane.f32.xlu0 %v5203
  %v5205 = vpop.xlane.xlu0 %5204
  %v5206 = vsel %vm412, %v5118, 0.0
  %5207 = vadd.xlane.f32.xlu0 %v5206
  %v5208 = vpop.xlane.xlu0 %5207
  %v5209 = vsel %vm412, %v5120, 0.0
  %5210 = vadd.xlane.f32.xlu0 %v5209
  %v5211 = vpop.xlane.xlu0 %5210
  %v5212 = vsel %vm412, %v5122, 0.0
  %5213 = vadd.xlane.f32.xlu0 %v5212
  %v5214 = vpop.xlane.xlu0 %5213
  %v5215 = vsel %vm412, %v5124, 0.0
  %5216 = vadd.xlane.f32.xlu0 %v5215
  %v5217 = vpop.xlane.xlu0 %5216
  %v5218 = vsel %vm412, %v5126, 0.0
  %5219 = vadd.xlane.f32.xlu0 %v5218
  %v5220 = vpop.xlane.xlu0 %5219
  %v5221 = vsel %vm412, %v5128, 0.0
  %5222 = vadd.xlane.f32.xlu0 %v5221
  %v5223 = vpop.xlane.xlu0 %5222
  %v5224 = vsel %vm412, %v5130, 0.0
  %5225 = vadd.xlane.f32.xlu0 %v5224
  %v5226 = vpop.xlane.xlu0 %5225
  %v5227 = vrcp.pop %v5133
  %v5228 = vrcp.pop %v5136
  %v5229 = vrcp.pop %v5139
  %v5230 = vrcp.pop %v5142
  %v5231 = vrcp.pop %v5145
  %v5232 = vrcp.pop %v5148
  %v5233 = vrcp.pop %v5151
  %v5234 = vrcp.pop %v5154
  %v5235 = vrcp.pop %v5157
  %v5236 = vrcp.pop %v5160
  %v5237 = vrcp.pop %v5163
  %v5238 = vrcp.pop %v5166
  %v5239 = vrcp.pop %v5169
  %v5240 = vrcp.pop %v5172
  %v5241 = vrcp.pop %v5175
  %v5242 = vrcp.pop %v5178
  %v5243 = vrcp.pop %v5181
  %v5244 = vrcp.pop %v5184
  %v5245 = vrcp.pop %v5187
  %v5246 = vrcp.pop %v5190
  %v5247 = vrcp.pop %v5193
  %v5248 = vrcp.pop %v5196
  %v5249 = vrcp.pop %v5199
  %v5250 = vrcp.pop %v5202
  %v5251 = vrcp.pop %v5205
  %v5252 = vrcp.pop %v5208
  %v5253 = vrcp.pop %v5211
  %v5254 = vrcp.pop %v5214
  %v5255 = vrcp.pop %v5217
  %v5256 = vrcp.pop %v5220
  %v5257 = vrcp.pop %v5223
  %v5258 = vrcp.pop %v5226
  %v5259 = vmul.f32 %v5068, %v5227
  %v5260 = vmul.f32 %v5070, %v5228
  %v5261 = vmul.f32 %v5072, %v5229
  %v5262 = vmul.f32 %v5074, %v5230
  %v5263 = vmul.f32 %v5076, %v5231
  %v5264 = vmul.f32 %v5078, %v5232
  %v5265 = vmul.f32 %v5080, %v5233
  %v5266 = vmul.f32 %v5082, %v5234
  %v5267 = vmul.f32 %v5084, %v5235
  %v5268 = vmul.f32 %v5086, %v5236
  %v5269 = vmul.f32 %v5088, %v5237
  %v5270 = vmul.f32 %v5090, %v5238
  %v5271 = vmul.f32 %v5092, %v5239
  %v5272 = vmul.f32 %v5094, %v5240
  %v5273 = vmul.f32 %v5096, %v5241
  %v5274 = vmul.f32 %v5098, %v5242
  %v5275 = vmul.f32 %v5100, %v5243
  %v5276 = vmul.f32 %v5102, %v5244
  %v5277 = vmul.f32 %v5104, %v5245
  %v5278 = vmul.f32 %v5106, %v5246
  %v5279 = vmul.f32 %v5108, %v5247
  %v5280 = vmul.f32 %v5110, %v5248
  %v5281 = vmul.f32 %v5112, %v5249
  %v5282 = vmul.f32 %v5114, %v5250
  %v5283 = vmul.f32 %v5116, %v5251
  %v5284 = vmul.f32 %v5118, %v5252
  %v5285 = vmul.f32 %v5120, %v5253
  %v5286 = vmul.f32 %v5122, %v5254
  %v5287 = vmul.f32 %v5124, %v5255
  %v5288 = vmul.f32 %v5126, %v5256
  %v5289 = vmul.f32 %v5128, %v5257
  %v5290 = vmul.f32 %v5130, %v5258
  %v5292 = vsel %vm412, %v5259, 0
  %v5295 = vsel %vm412, %v5260, 0
  %5297 = vmatprep.subr.mxu0 0.0
  %5298 = vmatpush1.msra.mxu0 %v14
  %5299 = vmatprep.subr.mxu0 0.0
  %5300 = vmatpush1.msra.mxu0 %v15
  %5301 = vmatprep.subr.mxu0 0.0
  %5302 = vmatpush1.msra.mxu0 0.0
  %5303 = vmatprep.subr.mxu0 0.0
  %5304 = vmatpush1.msra.mxu0 0.0
  %5305 = vmatprep.subr.mxu0 0.0
  %5306 = vmatpush1.msra.mxu0 0.0
  %5307 = vmatprep.subr.mxu0 0.0
  %5308 = vmatpush1.msra.mxu0 0.0
  %5309 = vmatprep.subr.mxu0 0.0
  %5310 = vmatpush1.msra.mxu0 0.0
  %5311 = vmatprep.subr.mxu0 0.0
  %5312 = vmatpush1.msra.mxu0 0.0
  %5313 = vmatprep.subr.mxu0 0.0
  %5314 = vmatpush1.msra.mxu0 0.0
  %5315 = vmatprep.subr.mxu0 0.0
  %5316 = vmatpush1.msra.mxu0 0.0
  %5317 = vmatprep.subr.mxu0 0.0
  %5318 = vmatpush1.msra.mxu0 0.0
  %5319 = vmatprep.subr.mxu0 0.0
  %5320 = vmatpush1.msra.mxu0 0.0
  %5321 = vmatprep.subr.mxu0 0.0
  %5322 = vmatpush1.msra.mxu0 0.0
  %5323 = vmatprep.subr.mxu0 0.0
  %5324 = vmatpush1.msra.mxu0 0.0
  %5325 = vmatprep.subr.mxu0 0.0
  %5326 = vmatpush1.msra.mxu0 0.0
  %5327 = vmatprep.subr.mxu0 0.0
  %5328 = vmatpush1.msra.mxu0 0.0
  %5329 = vmatprep.subr.mxu0 0.0
  %5330 = vmatpush1.msra.mxu0 0.0
  %5331 = vmatprep.subr.mxu0 0.0
  %5332 = vmatpush1.msra.mxu0 0.0
  %5333 = vmatprep.subr.mxu0 0.0
  %5334 = vmatpush1.msra.mxu0 0.0
  %5335 = vmatprep.subr.mxu0 0.0
  %5336 = vmatpush1.msra.mxu0 0.0
  %5337 = vmatprep.subr.mxu0 0.0
  %5338 = vmatpush1.msra.mxu0 0.0
  %5339 = vmatprep.subr.mxu0 0.0
  %5340 = vmatpush1.msra.mxu0 0.0
  %5341 = vmatprep.subr.mxu0 0.0
  %5342 = vmatpush1.msra.mxu0 0.0
  %5343 = vmatprep.subr.mxu0 0.0
  %5344 = vmatpush1.msra.mxu0 0.0
  %5345 = vmatprep.subr.mxu0 0.0
  %5346 = vmatpush1.msra.mxu0 0.0
  %5347 = vmatprep.subr.mxu0 0.0
  %5348 = vmatpush1.msra.mxu0 0.0
  %5349 = vmatprep.subr.mxu0 0.0
  %5350 = vmatpush1.msra.mxu0 0.0
  %5351 = vmatprep.subr.mxu0 0.0
  %5352 = vmatpush1.msra.mxu0 0.0
  %5353 = vmatprep.subr.mxu0 0.0
  %5354 = vmatpush1.msra.mxu0 0.0
  %5355 = vmatprep.subr.mxu0 0.0
  %5356 = vmatpush1.msra.mxu0 0.0
  %5357 = vmatprep.subr.mxu0 0.0
  %5358 = vmatpush1.msra.mxu0 0.0
  %5359 = vmatprep.subr.mxu0 0.0
  %5360 = vmatpush1.msra.mxu0 0.0
  %5361 = vmatprep.mubr.f32.mxu0 0.0
  %5362 = vmatmul.mubr.f32.gmra.mrb[0].mxu0 %v5292
  %v5363 = vpop.f32.mrb[0].mxu0
  %v5364 = vadd.f32 0.0, %v5363
  %v5365 = vpop.f32.mrb[0].mxu0
  %5366 = vmatprep.mubr.f32.mxu0 0.0
  %5367 = vmatmul.mubr.f32.gmra.mrb[0].mxu0 %v5295
  %v5368 = vpop.f32.mrb[0].mxu0
  %v5369 = vadd.f32 0.0, %v5368
  %v5370 = vpop.f32.mrb[0].mxu0
  %5371 = vdwg.mxu0
  %v5373 = vsel %vm412, %v5261, 0
  %v5376 = vsel %vm412, %v5262, 0
  %5378 = vmatprep.subr.mxu0 0.0
  %5379 = vmatpush1.msra.mxu0 %v16
  %5380 = vmatprep.subr.mxu0 0.0
  %5381 = vmatpush1.msra.mxu0 %v17
  %5382 = vmatprep.subr.mxu0 0.0
  %5383 = vmatpush1.msra.mxu0 0.0
  %5384 = vmatprep.subr.mxu0 0.0
  %5385 = vmatpush1.msra.mxu0 0.0
  %5386 = vmatprep.subr.mxu0 0.0
  %5387 = vmatpush1.msra.mxu0 0.0
  %5388 = vmatprep.subr.mxu0 0.0
  %5389 = vmatpush1.msra.mxu0 0.0
  %5390 = vmatprep.subr.mxu0 0.0
  %5391 = vmatpush1.msra.mxu0 0.0
  %5392 = vmatprep.subr.mxu0 0.0
  %5393 = vmatpush1.msra.mxu0 0.0
  %5394 = vmatprep.subr.mxu0 0.0
  %5395 = vmatpush1.msra.mxu0 0.0
  %5396 = vmatprep.subr.mxu0 0.0
  %5397 = vmatpush1.msra.mxu0 0.0
  %5398 = vmatprep.subr.mxu0 0.0
  %5399 = vmatpush1.msra.mxu0 0.0
  %5400 = vmatprep.subr.mxu0 0.0
  %5401 = vmatpush1.msra.mxu0 0.0
  %5402 = vmatprep.subr.mxu0 0.0
  %5403 = vmatpush1.msra.mxu0 0.0
  %5404 = vmatprep.subr.mxu0 0.0
  %5405 = vmatpush1.msra.mxu0 0.0
  %5406 = vmatprep.subr.mxu0 0.0
  %5407 = vmatpush1.msra.mxu0 0.0
  %5408 = vmatprep.subr.mxu0 0.0
  %5409 = vmatpush1.msra.mxu0 0.0
  %5410 = vmatprep.subr.mxu0 0.0
  %5411 = vmatpush1.msra.mxu0 0.0
  %5412 = vmatprep.subr.mxu0 0.0
  %5413 = vmatpush1.msra.mxu0 0.0
  %5414 = vmatprep.subr.mxu0 0.0
  %5415 = vmatpush1.msra.mxu0 0.0
  %5416 = vmatprep.subr.mxu0 0.0
  %5417 = vmatpush1.msra.mxu0 0.0
  %5418 = vmatprep.subr.mxu0 0.0
  %5419 = vmatpush1.msra.mxu0 0.0
  %5420 = vmatprep.subr.mxu0 0.0
  %5421 = vmatpush1.msra.mxu0 0.0
  %5422 = vmatprep.subr.mxu0 0.0
  %5423 = vmatpush1.msra.mxu0 0.0
  %5424 = vmatprep.subr.mxu0 0.0
  %5425 = vmatpush1.msra.mxu0 0.0
  %5426 = vmatprep.subr.mxu0 0.0
  %5427 = vmatpush1.msra.mxu0 0.0
  %5428 = vmatprep.subr.mxu0 0.0
  %5429 = vmatpush1.msra.mxu0 0.0
  %5430 = vmatprep.subr.mxu0 0.0
  %5431 = vmatpush1.msra.mxu0 0.0
  %5432 = vmatprep.subr.mxu0 0.0
  %5433 = vmatpush1.msra.mxu0 0.0
  %5434 = vmatprep.subr.mxu0 0.0
  %5435 = vmatpush1.msra.mxu0 0.0
  %5436 = vmatprep.subr.mxu0 0.0
  %5437 = vmatpush1.msra.mxu0 0.0
  %5438 = vmatprep.subr.mxu0 0.0
  %5439 = vmatpush1.msra.mxu0 0.0
  %5440 = vmatprep.subr.mxu0 0.0
  %5441 = vmatpush1.msra.mxu0 0.0
  %5442 = vmatprep.mubr.f32.mxu0 0.0
  %5443 = vmatmul.mubr.f32.gmra.mrb[0].mxu0 %v5373
  %v5444 = vpop.f32.mrb[0].mxu0
  %v5445 = vadd.f32 0.0, %v5444
  %v5446 = vpop.f32.mrb[0].mxu0
  %5447 = vmatprep.mubr.f32.mxu0 0.0
  %5448 = vmatmul.mubr.f32.gmra.mrb[0].mxu0 %v5376
  %v5449 = vpop.f32.mrb[0].mxu0
  %v5450 = vadd.f32 0.0, %v5449
  %v5451 = vpop.f32.mrb[0].mxu0
  %5452 = vdwg.mxu0
  %v5454 = vsel %vm412, %v5263, 0
  %v5457 = vsel %vm412, %v5264, 0
  %5459 = vmatprep.subr.mxu0 0.0
  %5460 = vmatpush1.msra.mxu0 %v18
  %5461 = vmatprep.subr.mxu0 0.0
  %5462 = vmatpush1.msra.mxu0 %v19
  %5463 = vmatprep.subr.mxu0 0.0
  %5464 = vmatpush1.msra.mxu0 0.0
  %5465 = vmatprep.subr.mxu0 0.0
  %5466 = vmatpush1.msra.mxu0 0.0
  %5467 = vmatprep.subr.mxu0 0.0
  %5468 = vmatpush1.msra.mxu0 0.0
  %5469 = vmatprep.subr.mxu0 0.0
  %5470 = vmatpush1.msra.mxu0 0.0
  %5471 = vmatprep.subr.mxu0 0.0
  %5472 = vmatpush1.msra.mxu0 0.0
  %5473 = vmatprep.subr.mxu0 0.0
  %5474 = vmatpush1.msra.mxu0 0.0
  %5475 = vmatprep.subr.mxu0 0.0
  %5476 = vmatpush1.msra.mxu0 0.0
  %5477 = vmatprep.subr.mxu0 0.0
  %5478 = vmatpush1.msra.mxu0 0.0
  %5479 = vmatprep.subr.mxu0 0.0
  %5480 = vmatpush1.msra.mxu0 0.0
  %5481 = vmatprep.subr.mxu0 0.0
  %5482 = vmatpush1.msra.mxu0 0.0
  %5483 = vmatprep.subr.mxu0 0.0
  %5484 = vmatpush1.msra.mxu0 0.0
  %5485 = vmatprep.subr.mxu0 0.0
  %5486 = vmatpush1.msra.mxu0 0.0
  %5487 = vmatprep.subr.mxu0 0.0
  %5488 = vmatpush1.msra.mxu0 0.0
  %5489 = vmatprep.subr.mxu0 0.0
  %5490 = vmatpush1.msra.mxu0 0.0
  %5491 = vmatprep.subr.mxu0 0.0
  %5492 = vmatpush1.msra.mxu0 0.0
  %5493 = vmatprep.subr.mxu0 0.0
  %5494 = vmatpush1.msra.mxu0 0.0
  %5495 = vmatprep.subr.mxu0 0.0
  %5496 = vmatpush1.msra.mxu0 0.0
  %5497 = vmatprep.subr.mxu0 0.0
  %5498 = vmatpush1.msra.mxu0 0.0
  %5499 = vmatprep.subr.mxu0 0.0
  %5500 = vmatpush1.msra.mxu0 0.0
  %5501 = vmatprep.subr.mxu0 0.0
  %5502 = vmatpush1.msra.mxu0 0.0
  %5503 = vmatprep.subr.mxu0 0.0
  %5504 = vmatpush1.msra.mxu0 0.0
  %5505 = vmatprep.subr.mxu0 0.0
  %5506 = vmatpush1.msra.mxu0 0.0
  %5507 = vmatprep.subr.mxu0 0.0
  %5508 = vmatpush1.msra.mxu0 0.0
  %5509 = vmatprep.subr.mxu0 0.0
  %5510 = vmatpush1.msra.mxu0 0.0
  %5511 = vmatprep.subr.mxu0 0.0
  %5512 = vmatpush1.msra.mxu0 0.0
  %5513 = vmatprep.subr.mxu0 0.0
  %5514 = vmatpush1.msra.mxu0 0.0
  %5515 = vmatprep.subr.mxu0 0.0
  %5516 = vmatpush1.msra.mxu0 0.0
  %5517 = vmatprep.subr.mxu0 0.0
  %5518 = vmatpush1.msra.mxu0 0.0
  %5519 = vmatprep.subr.mxu0 0.0
  %5520 = vmatpush1.msra.mxu0 0.0
  %5521 = vmatprep.subr.mxu0 0.0
  %5522 = vmatpush1.msra.mxu0 0.0
  %5523 = vmatprep.mubr.f32.mxu0 0.0
  %5524 = vmatmul.mubr.f32.gmra.mrb[0].mxu0 %v5454
  %v5525 = vpop.f32.mrb[0].mxu0
  %v5526 = vadd.f32 0.0, %v5525
  %v5527 = vpop.f32.mrb[0].mxu0
  %5528 = vmatprep.mubr.f32.mxu0 0.0
  %5529 = vmatmul.mubr.f32.gmra.mrb[0].mxu0 %v5457
  %v5530 = vpop.f32.mrb[0].mxu0
  %v5531 = vadd.f32 0.0, %v5530
  %v5532 = vpop.f32.mrb[0].mxu0
  %5533 = vdwg.mxu0
  %v5535 = vsel %vm412, %v5265, 0
  %v5538 = vsel %vm412, %v5266, 0
  %5540 = vmatprep.subr.mxu0 0.0
  %5541 = vmatpush1.msra.mxu0 %v20
  %5542 = vmatprep.subr.mxu0 0.0
  %5543 = vmatpush1.msra.mxu0 %v21
  %5544 = vmatprep.subr.mxu0 0.0
  %5545 = vmatpush1.msra.mxu0 0.0
  %5546 = vmatprep.subr.mxu0 0.0
  %5547 = vmatpush1.msra.mxu0 0.0
  %5548 = vmatprep.subr.mxu0 0.0
  %5549 = vmatpush1.msra.mxu0 0.0
  %5550 = vmatprep.subr.mxu0 0.0
  %5551 = vmatpush1.msra.mxu0 0.0
  %5552 = vmatprep.subr.mxu0 0.0
  %5553 = vmatpush1.msra.mxu0 0.0
  %5554 = vmatprep.subr.mxu0 0.0
  %5555 = vmatpush1.msra.mxu0 0.0
  %5556 = vmatprep.subr.mxu0 0.0
  %5557 = vmatpush1.msra.mxu0 0.0
  %5558 = vmatprep.subr.mxu0 0.0
  %5559 = vmatpush1.msra.mxu0 0.0
  %5560 = vmatprep.subr.mxu0 0.0
  %5561 = vmatpush1.msra.mxu0 0.0
  %5562 = vmatprep.subr.mxu0 0.0
  %5563 = vmatpush1.msra.mxu0 0.0
  %5564 = vmatprep.subr.mxu0 0.0
  %5565 = vmatpush1.msra.mxu0 0.0
  %5566 = vmatprep.subr.mxu0 0.0
  %5567 = vmatpush1.msra.mxu0 0.0
  %5568 = vmatprep.subr.mxu0 0.0
  %5569 = vmatpush1.msra.mxu0 0.0
  %5570 = vmatprep.subr.mxu0 0.0
  %5571 = vmatpush1.msra.mxu0 0.0
  %5572 = vmatprep.subr.mxu0 0.0
  %5573 = vmatpush1.msra.mxu0 0.0
  %5574 = vmatprep.subr.mxu0 0.0
  %5575 = vmatpush1.msra.mxu0 0.0
  %5576 = vmatprep.subr.mxu0 0.0
  %5577 = vmatpush1.msra.mxu0 0.0
  %5578 = vmatprep.subr.mxu0 0.0
  %5579 = vmatpush1.msra.mxu0 0.0
  %5580 = vmatprep.subr.mxu0 0.0
  %5581 = vmatpush1.msra.mxu0 0.0
  %5582 = vmatprep.subr.mxu0 0.0
  %5583 = vmatpush1.msra.mxu0 0.0
  %5584 = vmatprep.subr.mxu0 0.0
  %5585 = vmatpush1.msra.mxu0 0.0
  %5586 = vmatprep.subr.mxu0 0.0
  %5587 = vmatpush1.msra.mxu0 0.0
  %5588 = vmatprep.subr.mxu0 0.0
  %5589 = vmatpush1.msra.mxu0 0.0
  %5590 = vmatprep.subr.mxu0 0.0
  %5591 = vmatpush1.msra.mxu0 0.0
  %5592 = vmatprep.subr.mxu0 0.0
  %5593 = vmatpush1.msra.mxu0 0.0
  %5594 = vmatprep.subr.mxu0 0.0
  %5595 = vmatpush1.msra.mxu0 0.0
  %5596 = vmatprep.subr.mxu0 0.0
  %5597 = vmatpush1.msra.mxu0 0.0
  %5598 = vmatprep.subr.mxu0 0.0
  %5599 = vmatpush1.msra.mxu0 0.0
  %5600 = vmatprep.subr.mxu0 0.0
  %5601 = vmatpush1.msra.mxu0 0.0
  %5602 = vmatprep.subr.mxu0 0.0
  %5603 = vmatpush1.msra.mxu0 0.0
  %5604 = vmatprep.mubr.f32.mxu0 0.0
  %5605 = vmatmul.mubr.f32.gmra.mrb[0].mxu0 %v5535
  %v5606 = vpop.f32.mrb[0].mxu0
  %v5607 = vadd.f32 0.0, %v5606
  %v5608 = vpop.f32.mrb[0].mxu0
  %5609 = vmatprep.mubr.f32.mxu0 0.0
  %5610 = vmatmul.mubr.f32.gmra.mrb[0].mxu0 %v5538
  %v5611 = vpop.f32.mrb[0].mxu0
  %v5612 = vadd.f32 0.0, %v5611
  %v5613 = vpop.f32.mrb[0].mxu0
  %5614 = vdwg.mxu0
  %v5616 = vsel %vm412, %v5267, 0
  %v5619 = vsel %vm412, %v5268, 0
  %5621 = vmatprep.subr.mxu0 0.0
  %5622 = vmatpush1.msra.mxu0 %v22
  %5623 = vmatprep.subr.mxu0 0.0
  %5624 = vmatpush1.msra.mxu0 %v23
  %5625 = vmatprep.subr.mxu0 0.0
  %5626 = vmatpush1.msra.mxu0 0.0
  %5627 = vmatprep.subr.mxu0 0.0
  %5628 = vmatpush1.msra.mxu0 0.0
  %5629 = vmatprep.subr.mxu0 0.0
  %5630 = vmatpush1.msra.mxu0 0.0
  %5631 = vmatprep.subr.mxu0 0.0
  %5632 = vmatpush1.msra.mxu0 0.0
  %5633 = vmatprep.subr.mxu0 0.0
  %5634 = vmatpush1.msra.mxu0 0.0
  %5635 = vmatprep.subr.mxu0 0.0
  %5636 = vmatpush1.msra.mxu0 0.0
  %5637 = vmatprep.subr.mxu0 0.0
  %5638 = vmatpush1.msra.mxu0 0.0
  %5639 = vmatprep.subr.mxu0 0.0
  %5640 = vmatpush1.msra.mxu0 0.0
  %5641 = vmatprep.subr.mxu0 0.0
  %5642 = vmatpush1.msra.mxu0 0.0
  %5643 = vmatprep.subr.mxu0 0.0
  %5644 = vmatpush1.msra.mxu0 0.0
  %5645 = vmatprep.subr.mxu0 0.0
  %5646 = vmatpush1.msra.mxu0 0.0
  %5647 = vmatprep.subr.mxu0 0.0
  %5648 = vmatpush1.msra.mxu0 0.0
  %5649 = vmatprep.subr.mxu0 0.0
  %5650 = vmatpush1.msra.mxu0 0.0
  %5651 = vmatprep.subr.mxu0 0.0
  %5652 = vmatpush1.msra.mxu0 0.0
  %5653 = vmatprep.subr.mxu0 0.0
  %5654 = vmatpush1.msra.mxu0 0.0
  %5655 = vmatprep.subr.mxu0 0.0
  %5656 = vmatpush1.msra.mxu0 0.0
  %5657 = vmatprep.subr.mxu0 0.0
  %5658 = vmatpush1.msra.mxu0 0.0
  %5659 = vmatprep.subr.mxu0 0.0
  %5660 = vmatpush1.msra.mxu0 0.0
  %5661 = vmatprep.subr.mxu0 0.0
  %5662 = vmatpush1.msra.mxu0 0.0
  %5663 = vmatprep.subr.mxu0 0.0
  %5664 = vmatpush1.msra.mxu0 0.0
  %5665 = vmatprep.subr.mxu0 0.0
  %5666 = vmatpush1.msra.mxu0 0.0
  %5667 = vmatprep.subr.mxu0 0.0
  %5668 = vmatpush1.msra.mxu0 0.0
  %5669 = vmatprep.subr.mxu0 0.0
  %5670 = vmatpush1.msra.mxu0 0.0
  %5671 = vmatprep.subr.mxu0 0.0
  %5672 = vmatpush1.msra.mxu0 0.0
  %5673 = vmatprep.subr.mxu0 0.0
  %5674 = vmatpush1.msra.mxu0 0.0
  %5675 = vmatprep.subr.mxu0 0.0
  %5676 = vmatpush1.msra.mxu0 0.0
  %5677 = vmatprep.subr.mxu0 0.0
  %5678 = vmatpush1.msra.mxu0 0.0
  %5679 = vmatprep.subr.mxu0 0.0
  %5680 = vmatpush1.msra.mxu0 0.0
  %5681 = vmatprep.subr.mxu0 0.0
  %5682 = vmatpush1.msra.mxu0 0.0
  %5683 = vmatprep.subr.mxu0 0.0
  %5684 = vmatpush1.msra.mxu0 0.0
  %5685 = vmatprep.mubr.f32.mxu0 0.0
  %5686 = vmatmul.mubr.f32.gmra.mrb[0].mxu0 %v5616
  %v5687 = vpop.f32.mrb[0].mxu0
  %v5688 = vadd.f32 0.0, %v5687
  %v5689 = vpop.f32.mrb[0].mxu0
  %5690 = vmatprep.mubr.f32.mxu0 0.0
  %5691 = vmatmul.mubr.f32.gmra.mrb[0].mxu0 %v5619
  %v5692 = vpop.f32.mrb[0].mxu0
  %v5693 = vadd.f32 0.0, %v5692
  %v5694 = vpop.f32.mrb[0].mxu0
  %5695 = vdwg.mxu0
  %v5697 = vsel %vm412, %v5269, 0
  %v5700 = vsel %vm412, %v5270, 0
  %5702 = vmatprep.subr.mxu0 0.0
  %5703 = vmatpush1.msra.mxu0 %v24
  %5704 = vmatprep.subr.mxu0 0.0
  %5705 = vmatpush1.msra.mxu0 %v25
  %5706 = vmatprep.subr.mxu0 0.0
  %5707 = vmatpush1.msra.mxu0 0.0
  %5708 = vmatprep.subr.mxu0 0.0
  %5709 = vmatpush1.msra.mxu0 0.0
  %5710 = vmatprep.subr.mxu0 0.0
  %5711 = vmatpush1.msra.mxu0 0.0
  %5712 = vmatprep.subr.mxu0 0.0
  %5713 = vmatpush1.msra.mxu0 0.0
  %5714 = vmatprep.subr.mxu0 0.0
  %5715 = vmatpush1.msra.mxu0 0.0
  %5716 = vmatprep.subr.mxu0 0.0
  %5717 = vmatpush1.msra.mxu0 0.0
  %5718 = vmatprep.subr.mxu0 0.0
  %5719 = vmatpush1.msra.mxu0 0.0
  %5720 = vmatprep.subr.mxu0 0.0
  %5721 = vmatpush1.msra.mxu0 0.0
  %5722 = vmatprep.subr.mxu0 0.0
  %5723 = vmatpush1.msra.mxu0 0.0
  %5724 = vmatprep.subr.mxu0 0.0
  %5725 = vmatpush1.msra.mxu0 0.0
  %5726 = vmatprep.subr.mxu0 0.0
  %5727 = vmatpush1.msra.mxu0 0.0
  %5728 = vmatprep.subr.mxu0 0.0
  %5729 = vmatpush1.msra.mxu0 0.0
  %5730 = vmatprep.subr.mxu0 0.0
  %5731 = vmatpush1.msra.mxu0 0.0
  %5732 = vmatprep.subr.mxu0 0.0
  %5733 = vmatpush1.msra.mxu0 0.0
  %5734 = vmatprep.subr.mxu0 0.0
  %5735 = vmatpush1.msra.mxu0 0.0
  %5736 = vmatprep.subr.mxu0 0.0
  %5737 = vmatpush1.msra.mxu0 0.0
  %5738 = vmatprep.subr.mxu0 0.0
  %5739 = vmatpush1.msra.mxu0 0.0
  %5740 = vmatprep.subr.mxu0 0.0
  %5741 = vmatpush1.msra.mxu0 0.0
  %5742 = vmatprep.subr.mxu0 0.0
  %5743 = vmatpush1.msra.mxu0 0.0
  %5744 = vmatprep.subr.mxu0 0.0
  %5745 = vmatpush1.msra.mxu0 0.0
  %5746 = vmatprep.subr.mxu0 0.0
  %5747 = vmatpush1.msra.mxu0 0.0
  %5748 = vmatprep.subr.mxu0 0.0
  %5749 = vmatpush1.msra.mxu0 0.0
  %5750 = vmatprep.subr.mxu0 0.0
  %5751 = vmatpush1.msra.mxu0 0.0
  %5752 = vmatprep.subr.mxu0 0.0
  %5753 = vmatpush1.msra.mxu0 0.0
  %5754 = vmatprep.subr.mxu0 0.0
  %5755 = vmatpush1.msra.mxu0 0.0
  %5756 = vmatprep.subr.mxu0 0.0
  %5757 = vmatpush1.msra.mxu0 0.0
  %5758 = vmatprep.subr.mxu0 0.0
  %5759 = vmatpush1.msra.mxu0 0.0
  %5760 = vmatprep.subr.mxu0 0.0
  %5761 = vmatpush1.msra.mxu0 0.0
  %5762 = vmatprep.subr.mxu0 0.0
  %5763 = vmatpush1.msra.mxu0 0.0
  %5764 = vmatprep.subr.mxu0 0.0
  %5765 = vmatpush1.msra.mxu0 0.0
  %5766 = vmatprep.mubr.f32.mxu0 0.0
  %5767 = vmatmul.mubr.f32.gmra.mrb[0].mxu0 %v5697
  %v5768 = vpop.f32.mrb[0].mxu0
  %v5769 = vadd.f32 0.0, %v5768
  %v5770 = vpop.f32.mrb[0].mxu0
  %5771 = vmatprep.mubr.f32.mxu0 0.0
  %5772 = vmatmul.mubr.f32.gmra.mrb[0].mxu0 %v5700
  %v5773 = vpop.f32.mrb[0].mxu0
  %v5774 = vadd.f32 0.0, %v5773
  %v5775 = vpop.f32.mrb[0].mxu0
  %5776 = vdwg.mxu0
  %v5778 = vsel %vm412, %v5271, 0
  %v5781 = vsel %vm412, %v5272, 0
  %5783 = vmatprep.subr.mxu0 0.0
  %5784 = vmatpush1.msra.mxu0 %v26
  %5785 = vmatprep.subr.mxu0 0.0
  %5786 = vmatpush1.msra.mxu0 %v27
  %5787 = vmatprep.subr.mxu0 0.0
  %5788 = vmatpush1.msra.mxu0 0.0
  %5789 = vmatprep.subr.mxu0 0.0
  %5790 = vmatpush1.msra.mxu0 0.0
  %5791 = vmatprep.subr.mxu0 0.0
  %5792 = vmatpush1.msra.mxu0 0.0
  %5793 = vmatprep.subr.mxu0 0.0
  %5794 = vmatpush1.msra.mxu0 0.0
  %5795 = vmatprep.subr.mxu0 0.0
  %5796 = vmatpush1.msra.mxu0 0.0
  %5797 = vmatprep.subr.mxu0 0.0
  %5798 = vmatpush1.msra.mxu0 0.0
  %5799 = vmatprep.subr.mxu0 0.0
  %5800 = vmatpush1.msra.mxu0 0.0
  %5801 = vmatprep.subr.mxu0 0.0
  %5802 = vmatpush1.msra.mxu0 0.0
  %5803 = vmatprep.subr.mxu0 0.0
  %5804 = vmatpush1.msra.mxu0 0.0
  %5805 = vmatprep.subr.mxu0 0.0
  %5806 = vmatpush1.msra.mxu0 0.0
  %5807 = vmatprep.subr.mxu0 0.0
  %5808 = vmatpush1.msra.mxu0 0.0
  %5809 = vmatprep.subr.mxu0 0.0
  %5810 = vmatpush1.msra.mxu0 0.0
  %5811 = vmatprep.subr.mxu0 0.0
  %5812 = vmatpush1.msra.mxu0 0.0
  %5813 = vmatprep.subr.mxu0 0.0
  %5814 = vmatpush1.msra.mxu0 0.0
  %5815 = vmatprep.subr.mxu0 0.0
  %5816 = vmatpush1.msra.mxu0 0.0
  %5817 = vmatprep.subr.mxu0 0.0
  %5818 = vmatpush1.msra.mxu0 0.0
  %5819 = vmatprep.subr.mxu0 0.0
  %5820 = vmatpush1.msra.mxu0 0.0
  %5821 = vmatprep.subr.mxu0 0.0
  %5822 = vmatpush1.msra.mxu0 0.0
  %5823 = vmatprep.subr.mxu0 0.0
  %5824 = vmatpush1.msra.mxu0 0.0
  %5825 = vmatprep.subr.mxu0 0.0
  %5826 = vmatpush1.msra.mxu0 0.0
  %5827 = vmatprep.subr.mxu0 0.0
  %5828 = vmatpush1.msra.mxu0 0.0
  %5829 = vmatprep.subr.mxu0 0.0
  %5830 = vmatpush1.msra.mxu0 0.0
  %5831 = vmatprep.subr.mxu0 0.0
  %5832 = vmatpush1.msra.mxu0 0.0
  %5833 = vmatprep.subr.mxu0 0.0
  %5834 = vmatpush1.msra.mxu0 0.0
  %5835 = vmatprep.subr.mxu0 0.0
  %5836 = vmatpush1.msra.mxu0 0.0
  %5837 = vmatprep.subr.mxu0 0.0
  %5838 = vmatpush1.msra.mxu0 0.0
  %5839 = vmatprep.subr.mxu0 0.0
  %5840 = vmatpush1.msra.mxu0 0.0
  %5841 = vmatprep.subr.mxu0 0.0
  %5842 = vmatpush1.msra.mxu0 0.0
  %5843 = vmatprep.subr.mxu0 0.0
  %5844 = vmatpush1.msra.mxu0 0.0
  %5845 = vmatprep.subr.mxu0 0.0
  %5846 = vmatpush1.msra.mxu0 0.0
  %5847 = vmatprep.mubr.f32.mxu0 0.0
  %5848 = vmatmul.mubr.f32.gmra.mrb[0].mxu0 %v5778
  %v5849 = vpop.f32.mrb[0].mxu0
  %v5850 = vadd.f32 0.0, %v5849
  %v5851 = vpop.f32.mrb[0].mxu0
  %5852 = vmatprep.mubr.f32.mxu0 0.0
  %5853 = vmatmul.mubr.f32.gmra.mrb[0].mxu0 %v5781
  %v5854 = vpop.f32.mrb[0].mxu0
  %v5855 = vadd.f32 0.0, %v5854
  %v5856 = vpop.f32.mrb[0].mxu0
  %5857 = vdwg.mxu0
  %v5859 = vsel %vm412, %v5273, 0
  %v5862 = vsel %vm412, %v5274, 0
  %5864 = vmatprep.subr.mxu0 0.0
  %5865 = vmatpush1.msra.mxu0 %v28
  %5866 = vmatprep.subr.mxu0 0.0
  %5867 = vmatpush1.msra.mxu0 %v29
  %5868 = vmatprep.subr.mxu0 0.0
  %5869 = vmatpush1.msra.mxu0 0.0
  %5870 = vmatprep.subr.mxu0 0.0
  %5871 = vmatpush1.msra.mxu0 0.0
  %5872 = vmatprep.subr.mxu0 0.0
  %5873 = vmatpush1.msra.mxu0 0.0
  %5874 = vmatprep.subr.mxu0 0.0
  %5875 = vmatpush1.msra.mxu0 0.0
  %5876 = vmatprep.subr.mxu0 0.0
  %5877 = vmatpush1.msra.mxu0 0.0
  %5878 = vmatprep.subr.mxu0 0.0
  %5879 = vmatpush1.msra.mxu0 0.0
  %5880 = vmatprep.subr.mxu0 0.0
  %5881 = vmatpush1.msra.mxu0 0.0
  %5882 = vmatprep.subr.mxu0 0.0
  %5883 = vmatpush1.msra.mxu0 0.0
  %5884 = vmatprep.subr.mxu0 0.0
  %5885 = vmatpush1.msra.mxu0 0.0
  %5886 = vmatprep.subr.mxu0 0.0
  %5887 = vmatpush1.msra.mxu0 0.0
  %5888 = vmatprep.subr.mxu0 0.0
  %5889 = vmatpush1.msra.mxu0 0.0
  %5890 = vmatprep.subr.mxu0 0.0
  %5891 = vmatpush1.msra.mxu0 0.0
  %5892 = vmatprep.subr.mxu0 0.0
  %5893 = vmatpush1.msra.mxu0 0.0
  %5894 = vmatprep.subr.mxu0 0.0
  %5895 = vmatpush1.msra.mxu0 0.0
  %5896 = vmatprep.subr.mxu0 0.0
  %5897 = vmatpush1.msra.mxu0 0.0
  %5898 = vmatprep.subr.mxu0 0.0
  %5899 = vmatpush1.msra.mxu0 0.0
  %5900 = vmatprep.subr.mxu0 0.0
  %5901 = vmatpush1.msra.mxu0 0.0
  %5902 = vmatprep.subr.mxu0 0.0
  %5903 = vmatpush1.msra.mxu0 0.0
  %5904 = vmatprep.subr.mxu0 0.0
  %5905 = vmatpush1.msra.mxu0 0.0
  %5906 = vmatprep.subr.mxu0 0.0
  %5907 = vmatpush1.msra.mxu0 0.0
  %5908 = vmatprep.subr.mxu0 0.0
  %5909 = vmatpush1.msra.mxu0 0.0
  %5910 = vmatprep.subr.mxu0 0.0
  %5911 = vmatpush1.msra.mxu0 0.0
  %5912 = vmatprep.subr.mxu0 0.0
  %5913 = vmatpush1.msra.mxu0 0.0
  %5914 = vmatprep.subr.mxu0 0.0
  %5915 = vmatpush1.msra.mxu0 0.0
  %5916 = vmatprep.subr.mxu0 0.0
  %5917 = vmatpush1.msra.mxu0 0.0
  %5918 = vmatprep.subr.mxu0 0.0
  %5919 = vmatpush1.msra.mxu0 0.0
  %5920 = vmatprep.subr.mxu0 0.0
  %5921 = vmatpush1.msra.mxu0 0.0
  %5922 = vmatprep.subr.mxu0 0.0
  %5923 = vmatpush1.msra.mxu0 0.0
  %5924 = vmatprep.subr.mxu0 0.0
  %5925 = vmatpush1.msra.mxu0 0.0
  %5926 = vmatprep.subr.mxu0 0.0
  %5927 = vmatpush1.msra.mxu0 0.0
  %5928 = vmatprep.mubr.f32.mxu0 0.0
  %5929 = vmatmul.mubr.f32.gmra.mrb[0].mxu0 %v5859
  %v5930 = vpop.f32.mrb[0].mxu0
  %v5931 = vadd.f32 0.0, %v5930
  %v5932 = vpop.f32.mrb[0].mxu0
  %5933 = vmatprep.mubr.f32.mxu0 0.0
  %5934 = vmatmul.mubr.f32.gmra.mrb[0].mxu0 %v5862
  %v5935 = vpop.f32.mrb[0].mxu0
  %v5936 = vadd.f32 0.0, %v5935
  %v5937 = vpop.f32.mrb[0].mxu0
  %5938 = vdwg.mxu0
  %v5940 = vsel %vm412, %v5275, 0
  %v5943 = vsel %vm412, %v5276, 0
  %5945 = vmatprep.subr.mxu0 0.0
  %5946 = vmatpush1.msra.mxu0 %v30
  %5947 = vmatprep.subr.mxu0 0.0
  %5948 = vmatpush1.msra.mxu0 %v31
  %5949 = vmatprep.subr.mxu0 0.0
  %5950 = vmatpush1.msra.mxu0 0.0
  %5951 = vmatprep.subr.mxu0 0.0
  %5952 = vmatpush1.msra.mxu0 0.0
  %5953 = vmatprep.subr.mxu0 0.0
  %5954 = vmatpush1.msra.mxu0 0.0
  %5955 = vmatprep.subr.mxu0 0.0
  %5956 = vmatpush1.msra.mxu0 0.0
  %5957 = vmatprep.subr.mxu0 0.0
  %5958 = vmatpush1.msra.mxu0 0.0
  %5959 = vmatprep.subr.mxu0 0.0
  %5960 = vmatpush1.msra.mxu0 0.0
  %5961 = vmatprep.subr.mxu0 0.0
  %5962 = vmatpush1.msra.mxu0 0.0
  %5963 = vmatprep.subr.mxu0 0.0
  %5964 = vmatpush1.msra.mxu0 0.0
  %5965 = vmatprep.subr.mxu0 0.0
  %5966 = vmatpush1.msra.mxu0 0.0
  %5967 = vmatprep.subr.mxu0 0.0
  %5968 = vmatpush1.msra.mxu0 0.0
  %5969 = vmatprep.subr.mxu0 0.0
  %5970 = vmatpush1.msra.mxu0 0.0
  %5971 = vmatprep.subr.mxu0 0.0
  %5972 = vmatpush1.msra.mxu0 0.0
  %5973 = vmatprep.subr.mxu0 0.0
  %5974 = vmatpush1.msra.mxu0 0.0
  %5975 = vmatprep.subr.mxu0 0.0
  %5976 = vmatpush1.msra.mxu0 0.0
  %5977 = vmatprep.subr.mxu0 0.0
  %5978 = vmatpush1.msra.mxu0 0.0
  %5979 = vmatprep.subr.mxu0 0.0
  %5980 = vmatpush1.msra.mxu0 0.0
  %5981 = vmatprep.subr.mxu0 0.0
  %5982 = vmatpush1.msra.mxu0 0.0
  %5983 = vmatprep.subr.mxu0 0.0
  %5984 = vmatpush1.msra.mxu0 0.0
  %5985 = vmatprep.subr.mxu0 0.0
  %5986 = vmatpush1.msra.mxu0 0.0
  %5987 = vmatprep.subr.mxu0 0.0
  %5988 = vmatpush1.msra.mxu0 0.0
  %5989 = vmatprep.subr.mxu0 0.0
  %5990 = vmatpush1.msra.mxu0 0.0
  %5991 = vmatprep.subr.mxu0 0.0
  %5992 = vmatpush1.msra.mxu0 0.0
  %5993 = vmatprep.subr.mxu0 0.0
  %5994 = vmatpush1.msra.mxu0 0.0
  %5995 = vmatprep.subr.mxu0 0.0
  %5996 = vmatpush1.msra.mxu0 0.0
  %5997 = vmatprep.subr.mxu0 0.0
  %5998 = vmatpush1.msra.mxu0 0.0
  %5999 = vmatprep.subr.mxu0 0.0
  %6000 = vmatpush1.msra.mxu0 0.0
  %6001 = vmatprep.subr.mxu0 0.0
  %6002 = vmatpush1.msra.mxu0 0.0
  %6003 = vmatprep.subr.mxu0 0.0
  %6004 = vmatpush1.msra.mxu0 0.0
  %6005 = vmatprep.subr.mxu0 0.0
  %6006 = vmatpush1.msra.mxu0 0.0
  %6007 = vmatprep.subr.mxu0 0.0
  %6008 = vmatpush1.msra.mxu0 0.0
  %6009 = vmatprep.mubr.f32.mxu0 0.0
  %6010 = vmatmul.mubr.f32.gmra.mrb[0].mxu0 %v5940
  %v6011 = vpop.f32.mrb[0].mxu0
  %v6012 = vadd.f32 0.0, %v6011
  %v6013 = vpop.f32.mrb[0].mxu0
  %6014 = vmatprep.mubr.f32.mxu0 0.0
  %6015 = vmatmul.mubr.f32.gmra.mrb[0].mxu0 %v5943
  %v6016 = vpop.f32.mrb[0].mxu0
  %v6017 = vadd.f32 0.0, %v6016
  %v6018 = vpop.f32.mrb[0].mxu0
  %6019 = vdwg.mxu0
  %v6021 = vsel %vm412, %v5277, 0
  %v6024 = vsel %vm412, %v5278, 0
  %6026 = vmatprep.subr.mxu0 0.0
  %6027 = vmatpush1.msra.mxu0 %v32
  %6028 = vmatprep.subr.mxu0 0.0
  %6029 = vmatpush1.msra.mxu0 %v33
  %6030 = vmatprep.subr.mxu0 0.0
  %6031 = vmatpush1.msra.mxu0 0.0
  %6032 = vmatprep.subr.mxu0 0.0
  %6033 = vmatpush1.msra.mxu0 0.0
  %6034 = vmatprep.subr.mxu0 0.0
  %6035 = vmatpush1.msra.mxu0 0.0
  %6036 = vmatprep.subr.mxu0 0.0
  %6037 = vmatpush1.msra.mxu0 0.0
  %6038 = vmatprep.subr.mxu0 0.0
  %6039 = vmatpush1.msra.mxu0 0.0
  %6040 = vmatprep.subr.mxu0 0.0
  %6041 = vmatpush1.msra.mxu0 0.0
  %6042 = vmatprep.subr.mxu0 0.0
  %6043 = vmatpush1.msra.mxu0 0.0
  %6044 = vmatprep.subr.mxu0 0.0
  %6045 = vmatpush1.msra.mxu0 0.0
  %6046 = vmatprep.subr.mxu0 0.0
  %6047 = vmatpush1.msra.mxu0 0.0
  %6048 = vmatprep.subr.mxu0 0.0
  %6049 = vmatpush1.msra.mxu0 0.0
  %6050 = vmatprep.subr.mxu0 0.0
  %6051 = vmatpush1.msra.mxu0 0.0
  %6052 = vmatprep.subr.mxu0 0.0
  %6053 = vmatpush1.msra.mxu0 0.0
  %6054 = vmatprep.subr.mxu0 0.0
  %6055 = vmatpush1.msra.mxu0 0.0
  %6056 = vmatprep.subr.mxu0 0.0
  %6057 = vmatpush1.msra.mxu0 0.0
  %6058 = vmatprep.subr.mxu0 0.0
  %6059 = vmatpush1.msra.mxu0 0.0
  %6060 = vmatprep.subr.mxu0 0.0
  %6061 = vmatpush1.msra.mxu0 0.0
  %6062 = vmatprep.subr.mxu0 0.0
  %6063 = vmatpush1.msra.mxu0 0.0
  %6064 = vmatprep.subr.mxu0 0.0
  %6065 = vmatpush1.msra.mxu0 0.0
  %6066 = vmatprep.subr.mxu0 0.0
  %6067 = vmatpush1.msra.mxu0 0.0
  %6068 = vmatprep.subr.mxu0 0.0
  %6069 = vmatpush1.msra.mxu0 0.0
  %6070 = vmatprep.subr.mxu0 0.0
  %6071 = vmatpush1.msra.mxu0 0.0
  %6072 = vmatprep.subr.mxu0 0.0
  %6073 = vmatpush1.msra.mxu0 0.0
  %6074 = vmatprep.subr.mxu0 0.0
  %6075 = vmatpush1.msra.mxu0 0.0
  %6076 = vmatprep.subr.mxu0 0.0
  %6077 = vmatpush1.msra.mxu0 0.0
  %6078 = vmatprep.subr.mxu0 0.0
  %6079 = vmatpush1.msra.mxu0 0.0
  %6080 = vmatprep.subr.mxu0 0.0
  %6081 = vmatpush1.msra.mxu0 0.0
  %6082 = vmatprep.subr.mxu0 0.0
  %6083 = vmatpush1.msra.mxu0 0.0
  %6084 = vmatprep.subr.mxu0 0.0
  %6085 = vmatpush1.msra.mxu0 0.0
  %6086 = vmatprep.subr.mxu0 0.0
  %6087 = vmatpush1.msra.mxu0 0.0
  %6088 = vmatprep.subr.mxu0 0.0
  %6089 = vmatpush1.msra.mxu0 0.0
  %6090 = vmatprep.mubr.f32.mxu0 0.0
  %6091 = vmatmul.mubr.f32.gmra.mrb[0].mxu0 %v6021
  %v6092 = vpop.f32.mrb[0].mxu0
  %v6093 = vadd.f32 0.0, %v6092
  %v6094 = vpop.f32.mrb[0].mxu0
  %6095 = vmatprep.mubr.f32.mxu0 0.0
  %6096 = vmatmul.mubr.f32.gmra.mrb[0].mxu0 %v6024
  %v6097 = vpop.f32.mrb[0].mxu0
  %v6098 = vadd.f32 0.0, %v6097
  %v6099 = vpop.f32.mrb[0].mxu0
  %6100 = vdwg.mxu0
  %v6102 = vsel %vm412, %v5279, 0
  %v6105 = vsel %vm412, %v5280, 0
  %6107 = vmatprep.subr.mxu0 0.0
  %6108 = vmatpush1.msra.mxu0 %v34
  %6109 = vmatprep.subr.mxu0 0.0
  %6110 = vmatpush1.msra.mxu0 %v35
  %6111 = vmatprep.subr.mxu0 0.0
  %6112 = vmatpush1.msra.mxu0 0.0
  %6113 = vmatprep.subr.mxu0 0.0
  %6114 = vmatpush1.msra.mxu0 0.0
  %6115 = vmatprep.subr.mxu0 0.0
  %6116 = vmatpush1.msra.mxu0 0.0
  %6117 = vmatprep.subr.mxu0 0.0
  %6118 = vmatpush1.msra.mxu0 0.0
  %6119 = vmatprep.subr.mxu0 0.0
  %6120 = vmatpush1.msra.mxu0 0.0
  %6121 = vmatprep.subr.mxu0 0.0
  %6122 = vmatpush1.msra.mxu0 0.0
  %6123 = vmatprep.subr.mxu0 0.0
  %6124 = vmatpush1.msra.mxu0 0.0
  %6125 = vmatprep.subr.mxu0 0.0
  %6126 = vmatpush1.msra.mxu0 0.0
  %6127 = vmatprep.subr.mxu0 0.0
  %6128 = vmatpush1.msra.mxu0 0.0
  %6129 = vmatprep.subr.mxu0 0.0
  %6130 = vmatpush1.msra.mxu0 0.0
  %6131 = vmatprep.subr.mxu0 0.0
  %6132 = vmatpush1.msra.mxu0 0.0
  %6133 = vmatprep.subr.mxu0 0.0
  %6134 = vmatpush1.msra.mxu0 0.0
  %6135 = vmatprep.subr.mxu0 0.0
  %6136 = vmatpush1.msra.mxu0 0.0
  %6137 = vmatprep.subr.mxu0 0.0
  %6138 = vmatpush1.msra.mxu0 0.0
  %6139 = vmatprep.subr.mxu0 0.0
  %6140 = vmatpush1.msra.mxu0 0.0
  %6141 = vmatprep.subr.mxu0 0.0
  %6142 = vmatpush1.msra.mxu0 0.0
  %6143 = vmatprep.subr.mxu0 0.0
  %6144 = vmatpush1.msra.mxu0 0.0
  %6145 = vmatprep.subr.mxu0 0.0
  %6146 = vmatpush1.msra.mxu0 0.0
  %6147 = vmatprep.subr.mxu0 0.0
  %6148 = vmatpush1.msra.mxu0 0.0
  %6149 = vmatprep.subr.mxu0 0.0
  %6150 = vmatpush1.msra.mxu0 0.0
  %6151 = vmatprep.subr.mxu0 0.0
  %6152 = vmatpush1.msra.mxu0 0.0
  %6153 = vmatprep.subr.mxu0 0.0
  %6154 = vmatpush1.msra.mxu0 0.0
  %6155 = vmatprep.subr.mxu0 0.0
  %6156 = vmatpush1.msra.mxu0 0.0
  %6157 = vmatprep.subr.mxu0 0.0
  %6158 = vmatpush1.msra.mxu0 0.0
  %6159 = vmatprep.subr.mxu0 0.0
  %6160 = vmatpush1.msra.mxu0 0.0
  %6161 = vmatprep.subr.mxu0 0.0
  %6162 = vmatpush1.msra.mxu0 0.0
  %6163 = vmatprep.subr.mxu0 0.0
  %6164 = vmatpush1.msra.mxu0 0.0
  %6165 = vmatprep.subr.mxu0 0.0
  %6166 = vmatpush1.msra.mxu0 0.0
  %6167 = vmatprep.subr.mxu0 0.0
  %6168 = vmatpush1.msra.mxu0 0.0
  %6169 = vmatprep.subr.mxu0 0.0
  %6170 = vmatpush1.msra.mxu0 0.0
  %6171 = vmatprep.mubr.f32.mxu0 0.0
  %6172 = vmatmul.mubr.f32.gmra.mrb[0].mxu0 %v6102
  %v6173 = vpop.f32.mrb[0].mxu0
  %v6174 = vadd.f32 0.0, %v6173
  %v6175 = vpop.f32.mrb[0].mxu0
  %6176 = vmatprep.mubr.f32.mxu0 0.0
  %6177 = vmatmul.mubr.f32.gmra.mrb[0].mxu0 %v6105
  %v6178 = vpop.f32.mrb[0].mxu0
  %v6179 = vadd.f32 0.0, %v6178
  %v6180 = vpop.f32.mrb[0].mxu0
  %6181 = vdwg.mxu0
  %v6183 = vsel %vm412, %v5281, 0
  %v6186 = vsel %vm412, %v5282, 0
  %6188 = vmatprep.subr.mxu0 0.0
  %6189 = vmatpush1.msra.mxu0 %v36
  %6190 = vmatprep.subr.mxu0 0.0
  %6191 = vmatpush1.msra.mxu0 %v37
  %6192 = vmatprep.subr.mxu0 0.0
  %6193 = vmatpush1.msra.mxu0 0.0
  %6194 = vmatprep.subr.mxu0 0.0
  %6195 = vmatpush1.msra.mxu0 0.0
  %6196 = vmatprep.subr.mxu0 0.0
  %6197 = vmatpush1.msra.mxu0 0.0
  %6198 = vmatprep.subr.mxu0 0.0
  %6199 = vmatpush1.msra.mxu0 0.0
  %6200 = vmatprep.subr.mxu0 0.0
  %6201 = vmatpush1.msra.mxu0 0.0
  %6202 = vmatprep.subr.mxu0 0.0
  %6203 = vmatpush1.msra.mxu0 0.0
  %6204 = vmatprep.subr.mxu0 0.0
  %6205 = vmatpush1.msra.mxu0 0.0
  %6206 = vmatprep.subr.mxu0 0.0
  %6207 = vmatpush1.msra.mxu0 0.0
  %6208 = vmatprep.subr.mxu0 0.0
  %6209 = vmatpush1.msra.mxu0 0.0
  %6210 = vmatprep.subr.mxu0 0.0
  %6211 = vmatpush1.msra.mxu0 0.0
  %6212 = vmatprep.subr.mxu0 0.0
  %6213 = vmatpush1.msra.mxu0 0.0
  %6214 = vmatprep.subr.mxu0 0.0
  %6215 = vmatpush1.msra.mxu0 0.0
  %6216 = vmatprep.subr.mxu0 0.0
  %6217 = vmatpush1.msra.mxu0 0.0
  %6218 = vmatprep.subr.mxu0 0.0
  %6219 = vmatpush1.msra.mxu0 0.0
  %6220 = vmatprep.subr.mxu0 0.0
  %6221 = vmatpush1.msra.mxu0 0.0
  %6222 = vmatprep.subr.mxu0 0.0
  %6223 = vmatpush1.msra.mxu0 0.0
  %6224 = vmatprep.subr.mxu0 0.0
  %6225 = vmatpush1.msra.mxu0 0.0
  %6226 = vmatprep.subr.mxu0 0.0
  %6227 = vmatpush1.msra.mxu0 0.0
  %6228 = vmatprep.subr.mxu0 0.0
  %6229 = vmatpush1.msra.mxu0 0.0
  %6230 = vmatprep.subr.mxu0 0.0
  %6231 = vmatpush1.msra.mxu0 0.0
  %6232 = vmatprep.subr.mxu0 0.0
  %6233 = vmatpush1.msra.mxu0 0.0
  %6234 = vmatprep.subr.mxu0 0.0
  %6235 = vmatpush1.msra.mxu0 0.0
  %6236 = vmatprep.subr.mxu0 0.0
  %6237 = vmatpush1.msra.mxu0 0.0
  %6238 = vmatprep.subr.mxu0 0.0
  %6239 = vmatpush1.msra.mxu0 0.0
  %6240 = vmatprep.subr.mxu0 0.0
  %6241 = vmatpush1.msra.mxu0 0.0
  %6242 = vmatprep.subr.mxu0 0.0
  %6243 = vmatpush1.msra.mxu0 0.0
  %6244 = vmatprep.subr.mxu0 0.0
  %6245 = vmatpush1.msra.mxu0 0.0
  %6246 = vmatprep.subr.mxu0 0.0
  %6247 = vmatpush1.msra.mxu0 0.0
  %6248 = vmatprep.subr.mxu0 0.0
  %6249 = vmatpush1.msra.mxu0 0.0
  %6250 = vmatprep.subr.mxu0 0.0
  %6251 = vmatpush1.msra.mxu0 0.0
  %6252 = vmatprep.mubr.f32.mxu0 0.0
  %6253 = vmatmul.mubr.f32.gmra.mrb[0].mxu0 %v6183
  %v6254 = vpop.f32.mrb[0].mxu0
  %v6255 = vadd.f32 0.0, %v6254
  %v6256 = vpop.f32.mrb[0].mxu0
  %6257 = vmatprep.mubr.f32.mxu0 0.0
  %6258 = vmatmul.mubr.f32.gmra.mrb[0].mxu0 %v6186
  %v6259 = vpop.f32.mrb[0].mxu0
  %v6260 = vadd.f32 0.0, %v6259
  %v6261 = vpop.f32.mrb[0].mxu0
  %6262 = vdwg.mxu0
  %v6264 = vsel %vm412, %v5283, 0
  %v6267 = vsel %vm412, %v5284, 0
  %6269 = vmatprep.subr.mxu0 0.0
  %6270 = vmatpush1.msra.mxu0 %v38
  %6271 = vmatprep.subr.mxu0 0.0
  %6272 = vmatpush1.msra.mxu0 %v39
  %6273 = vmatprep.subr.mxu0 0.0
  %6274 = vmatpush1.msra.mxu0 0.0
  %6275 = vmatprep.subr.mxu0 0.0
  %6276 = vmatpush1.msra.mxu0 0.0
  %6277 = vmatprep.subr.mxu0 0.0
  %6278 = vmatpush1.msra.mxu0 0.0
  %6279 = vmatprep.subr.mxu0 0.0
  %6280 = vmatpush1.msra.mxu0 0.0
  %6281 = vmatprep.subr.mxu0 0.0
  %6282 = vmatpush1.msra.mxu0 0.0
  %6283 = vmatprep.subr.mxu0 0.0
  %6284 = vmatpush1.msra.mxu0 0.0
  %6285 = vmatprep.subr.mxu0 0.0
  %6286 = vmatpush1.msra.mxu0 0.0
  %6287 = vmatprep.subr.mxu0 0.0
  %6288 = vmatpush1.msra.mxu0 0.0
  %6289 = vmatprep.subr.mxu0 0.0
  %6290 = vmatpush1.msra.mxu0 0.0
  %6291 = vmatprep.subr.mxu0 0.0
  %6292 = vmatpush1.msra.mxu0 0.0
  %6293 = vmatprep.subr.mxu0 0.0
  %6294 = vmatpush1.msra.mxu0 0.0
  %6295 = vmatprep.subr.mxu0 0.0
  %6296 = vmatpush1.msra.mxu0 0.0
  %6297 = vmatprep.subr.mxu0 0.0
  %6298 = vmatpush1.msra.mxu0 0.0
  %6299 = vmatprep.subr.mxu0 0.0
  %6300 = vmatpush1.msra.mxu0 0.0
  %6301 = vmatprep.subr.mxu0 0.0
  %6302 = vmatpush1.msra.mxu0 0.0
  %6303 = vmatprep.subr.mxu0 0.0
  %6304 = vmatpush1.msra.mxu0 0.0
  %6305 = vmatprep.subr.mxu0 0.0
  %6306 = vmatpush1.msra.mxu0 0.0
  %6307 = vmatprep.subr.mxu0 0.0
  %6308 = vmatpush1.msra.mxu0 0.0
  %6309 = vmatprep.subr.mxu0 0.0
  %6310 = vmatpush1.msra.mxu0 0.0
  %6311 = vmatprep.subr.mxu0 0.0
  %6312 = vmatpush1.msra.mxu0 0.0
  %6313 = vmatprep.subr.mxu0 0.0
  %6314 = vmatpush1.msra.mxu0 0.0
  %6315 = vmatprep.subr.mxu0 0.0
  %6316 = vmatpush1.msra.mxu0 0.0
  %6317 = vmatprep.subr.mxu0 0.0
  %6318 = vmatpush1.msra.mxu0 0.0
  %6319 = vmatprep.subr.mxu0 0.0
  %6320 = vmatpush1.msra.mxu0 0.0
  %6321 = vmatprep.subr.mxu0 0.0
  %6322 = vmatpush1.msra.mxu0 0.0
  %6323 = vmatprep.subr.mxu0 0.0
  %6324 = vmatpush1.msra.mxu0 0.0
  %6325 = vmatprep.subr.mxu0 0.0
  %6326 = vmatpush1.msra.mxu0 0.0
  %6327 = vmatprep.subr.mxu0 0.0
  %6328 = vmatpush1.msra.mxu0 0.0
  %6329 = vmatprep.subr.mxu0 0.0
  %6330 = vmatpush1.msra.mxu0 0.0
  %6331 = vmatprep.subr.mxu0 0.0
  %6332 = vmatpush1.msra.mxu0 0.0
  %6333 = vmatprep.mubr.f32.mxu0 0.0
  %6334 = vmatmul.mubr.f32.gmra.mrb[0].mxu0 %v6264
  %v6335 = vpop.f32.mrb[0].mxu0
  %v6336 = vadd.f32 0.0, %v6335
  %v6337 = vpop.f32.mrb[0].mxu0
  %6338 = vmatprep.mubr.f32.mxu0 0.0
  %6339 = vmatmul.mubr.f32.gmra.mrb[0].mxu0 %v6267
  %v6340 = vpop.f32.mrb[0].mxu0
  %v6341 = vadd.f32 0.0, %v6340
  %v6342 = vpop.f32.mrb[0].mxu0
  %6343 = vdwg.mxu0
  %v6345 = vsel %vm412, %v5285, 0
  %v6348 = vsel %vm412, %v5286, 0
  %6350 = vmatprep.subr.mxu0 0.0
  %6351 = vmatpush1.msra.mxu0 %v40
  %6352 = vmatprep.subr.mxu0 0.0
  %6353 = vmatpush1.msra.mxu0 %v41
  %6354 = vmatprep.subr.mxu0 0.0
  %6355 = vmatpush1.msra.mxu0 0.0
  %6356 = vmatprep.subr.mxu0 0.0
  %6357 = vmatpush1.msra.mxu0 0.0
  %6358 = vmatprep.subr.mxu0 0.0
  %6359 = vmatpush1.msra.mxu0 0.0
  %6360 = vmatprep.subr.mxu0 0.0
  %6361 = vmatpush1.msra.mxu0 0.0
  %6362 = vmatprep.subr.mxu0 0.0
  %6363 = vmatpush1.msra.mxu0 0.0
  %6364 = vmatprep.subr.mxu0 0.0
  %6365 = vmatpush1.msra.mxu0 0.0
  %6366 = vmatprep.subr.mxu0 0.0
  %6367 = vmatpush1.msra.mxu0 0.0
  %6368 = vmatprep.subr.mxu0 0.0
  %6369 = vmatpush1.msra.mxu0 0.0
  %6370 = vmatprep.subr.mxu0 0.0
  %6371 = vmatpush1.msra.mxu0 0.0
  %6372 = vmatprep.subr.mxu0 0.0
  %6373 = vmatpush1.msra.mxu0 0.0
  %6374 = vmatprep.subr.mxu0 0.0
  %6375 = vmatpush1.msra.mxu0 0.0
  %6376 = vmatprep.subr.mxu0 0.0
  %6377 = vmatpush1.msra.mxu0 0.0
  %6378 = vmatprep.subr.mxu0 0.0
  %6379 = vmatpush1.msra.mxu0 0.0
  %6380 = vmatprep.subr.mxu0 0.0
  %6381 = vmatpush1.msra.mxu0 0.0
  %6382 = vmatprep.subr.mxu0 0.0
  %6383 = vmatpush1.msra.mxu0 0.0
  %6384 = vmatprep.subr.mxu0 0.0
  %6385 = vmatpush1.msra.mxu0 0.0
  %6386 = vmatprep.subr.mxu0 0.0
  %6387 = vmatpush1.msra.mxu0 0.0
  %6388 = vmatprep.subr.mxu0 0.0
  %6389 = vmatpush1.msra.mxu0 0.0
  %6390 = vmatprep.subr.mxu0 0.0
  %6391 = vmatpush1.msra.mxu0 0.0
  %6392 = vmatprep.subr.mxu0 0.0
  %6393 = vmatpush1.msra.mxu0 0.0
  %6394 = vmatprep.subr.mxu0 0.0
  %6395 = vmatpush1.msra.mxu0 0.0
  %6396 = vmatprep.subr.mxu0 0.0
  %6397 = vmatpush1.msra.mxu0 0.0
  %6398 = vmatprep.subr.mxu0 0.0
  %6399 = vmatpush1.msra.mxu0 0.0
  %6400 = vmatprep.subr.mxu0 0.0
  %6401 = vmatpush1.msra.mxu0 0.0
  %6402 = vmatprep.subr.mxu0 0.0
  %6403 = vmatpush1.msra.mxu0 0.0
  %6404 = vmatprep.subr.mxu0 0.0
  %6405 = vmatpush1.msra.mxu0 0.0
  %6406 = vmatprep.subr.mxu0 0.0
  %6407 = vmatpush1.msra.mxu0 0.0
  %6408 = vmatprep.subr.mxu0 0.0
  %6409 = vmatpush1.msra.mxu0 0.0
  %6410 = vmatprep.subr.mxu0 0.0
  %6411 = vmatpush1.msra.mxu0 0.0
  %6412 = vmatprep.subr.mxu0 0.0
  %6413 = vmatpush1.msra.mxu0 0.0
  %6414 = vmatprep.mubr.f32.mxu0 0.0
  %6415 = vmatmul.mubr.f32.gmra.mrb[0].mxu0 %v6345
  %v6416 = vpop.f32.mrb[0].mxu0
  %v6417 = vadd.f32 0.0, %v6416
  %v6418 = vpop.f32.mrb[0].mxu0
  %6419 = vmatprep.mubr.f32.mxu0 0.0
  %6420 = vmatmul.mubr.f32.gmra.mrb[0].mxu0 %v6348
  %v6421 = vpop.f32.mrb[0].mxu0
  %v6422 = vadd.f32 0.0, %v6421
  %v6423 = vpop.f32.mrb[0].mxu0
  %6424 = vdwg.mxu0
  %v6426 = vsel %vm412, %v5287, 0
  %v6429 = vsel %vm412, %v5288, 0
  %6431 = vmatprep.subr.mxu0 0.0
  %6432 = vmatpush1.msra.mxu0 %v42
  %6433 = vmatprep.subr.mxu0 0.0
  %6434 = vmatpush1.msra.mxu0 %v43
  %6435 = vmatprep.subr.mxu0 0.0
  %6436 = vmatpush1.msra.mxu0 0.0
  %6437 = vmatprep.subr.mxu0 0.0
  %6438 = vmatpush1.msra.mxu0 0.0
  %6439 = vmatprep.subr.mxu0 0.0
  %6440 = vmatpush1.msra.mxu0 0.0
  %6441 = vmatprep.subr.mxu0 0.0
  %6442 = vmatpush1.msra.mxu0 0.0
  %6443 = vmatprep.subr.mxu0 0.0
  %6444 = vmatpush1.msra.mxu0 0.0
  %6445 = vmatprep.subr.mxu0 0.0
  %6446 = vmatpush1.msra.mxu0 0.0
  %6447 = vmatprep.subr.mxu0 0.0
  %6448 = vmatpush1.msra.mxu0 0.0
  %6449 = vmatprep.subr.mxu0 0.0
  %6450 = vmatpush1.msra.mxu0 0.0
  %6451 = vmatprep.subr.mxu0 0.0
  %6452 = vmatpush1.msra.mxu0 0.0
  %6453 = vmatprep.subr.mxu0 0.0
  %6454 = vmatpush1.msra.mxu0 0.0
  %6455 = vmatprep.subr.mxu0 0.0
  %6456 = vmatpush1.msra.mxu0 0.0
  %6457 = vmatprep.subr.mxu0 0.0
  %6458 = vmatpush1.msra.mxu0 0.0
  %6459 = vmatprep.subr.mxu0 0.0
  %6460 = vmatpush1.msra.mxu0 0.0
  %6461 = vmatprep.subr.mxu0 0.0
  %6462 = vmatpush1.msra.mxu0 0.0
  %6463 = vmatprep.subr.mxu0 0.0
  %6464 = vmatpush1.msra.mxu0 0.0
  %6465 = vmatprep.subr.mxu0 0.0
  %6466 = vmatpush1.msra.mxu0 0.0
  %6467 = vmatprep.subr.mxu0 0.0
  %6468 = vmatpush1.msra.mxu0 0.0
  %6469 = vmatprep.subr.mxu0 0.0
  %6470 = vmatpush1.msra.mxu0 0.0
  %6471 = vmatprep.subr.mxu0 0.0
  %6472 = vmatpush1.msra.mxu0 0.0
  %6473 = vmatprep.subr.mxu0 0.0
  %6474 = vmatpush1.msra.mxu0 0.0
  %6475 = vmatprep.subr.mxu0 0.0
  %6476 = vmatpush1.msra.mxu0 0.0
  %6477 = vmatprep.subr.mxu0 0.0
  %6478 = vmatpush1.msra.mxu0 0.0
  %6479 = vmatprep.subr.mxu0 0.0
  %6480 = vmatpush1.msra.mxu0 0.0
  %6481 = vmatprep.subr.mxu0 0.0
  %6482 = vmatpush1.msra.mxu0 0.0
  %6483 = vmatprep.subr.mxu0 0.0
  %6484 = vmatpush1.msra.mxu0 0.0
  %6485 = vmatprep.subr.mxu0 0.0
  %6486 = vmatpush1.msra.mxu0 0.0
  %6487 = vmatprep.subr.mxu0 0.0
  %6488 = vmatpush1.msra.mxu0 0.0
  %6489 = vmatprep.subr.mxu0 0.0
  %6490 = vmatpush1.msra.mxu0 0.0
  %6491 = vmatprep.subr.mxu0 0.0
  %6492 = vmatpush1.msra.mxu0 0.0
  %6493 = vmatprep.subr.mxu0 0.0
  %6494 = vmatpush1.msra.mxu0 0.0
  %6495 = vmatprep.mubr.f32.mxu0 0.0
  %6496 = vmatmul.mubr.f32.gmra.mrb[0].mxu0 %v6426
  %v6497 = vpop.f32.mrb[0].mxu0
  %v6498 = vadd.f32 0.0, %v6497
  %v6499 = vpop.f32.mrb[0].mxu0
  %6500 = vmatprep.mubr.f32.mxu0 0.0
  %6501 = vmatmul.mubr.f32.gmra.mrb[0].mxu0 %v6429
  %v6502 = vpop.f32.mrb[0].mxu0
  %v6503 = vadd.f32 0.0, %v6502
  %v6504 = vpop.f32.mrb[0].mxu0
  %6505 = vdwg.mxu0
  %v6507 = vsel %vm412, %v5289, 0
  %v6510 = vsel %vm412, %v5290, 0
  %6512 = vmatprep.subr.mxu0 0.0
  %6513 = vmatpush1.msra.mxu0 %v44
  %6514 = vmatprep.subr.mxu0 0.0
  %6515 = vmatpush1.msra.mxu0 %v45
  %6516 = vmatprep.subr.mxu0 0.0
  %6517 = vmatpush1.msra.mxu0 0.0
  %6518 = vmatprep.subr.mxu0 0.0
  %6519 = vmatpush1.msra.mxu0 0.0
  %6520 = vmatprep.subr.mxu0 0.0
  %6521 = vmatpush1.msra.mxu0 0.0
  %6522 = vmatprep.subr.mxu0 0.0
  %6523 = vmatpush1.msra.mxu0 0.0
  %6524 = vmatprep.subr.mxu0 0.0
  %6525 = vmatpush1.msra.mxu0 0.0
  %6526 = vmatprep.subr.mxu0 0.0
  %6527 = vmatpush1.msra.mxu0 0.0
  %6528 = vmatprep.subr.mxu0 0.0
  %6529 = vmatpush1.msra.mxu0 0.0
  %6530 = vmatprep.subr.mxu0 0.0
  %6531 = vmatpush1.msra.mxu0 0.0
  %6532 = vmatprep.subr.mxu0 0.0
  %6533 = vmatpush1.msra.mxu0 0.0
  %6534 = vmatprep.subr.mxu0 0.0
  %6535 = vmatpush1.msra.mxu0 0.0
  %6536 = vmatprep.subr.mxu0 0.0
  %6537 = vmatpush1.msra.mxu0 0.0
  %6538 = vmatprep.subr.mxu0 0.0
  %6539 = vmatpush1.msra.mxu0 0.0
  %6540 = vmatprep.subr.mxu0 0.0
  %6541 = vmatpush1.msra.mxu0 0.0
  %6542 = vmatprep.subr.mxu0 0.0
  %6543 = vmatpush1.msra.mxu0 0.0
  %6544 = vmatprep.subr.mxu0 0.0
  %6545 = vmatpush1.msra.mxu0 0.0
  %6546 = vmatprep.subr.mxu0 0.0
  %6547 = vmatpush1.msra.mxu0 0.0
  %6548 = vmatprep.subr.mxu0 0.0
  %6549 = vmatpush1.msra.mxu0 0.0
  %6550 = vmatprep.subr.mxu0 0.0
  %6551 = vmatpush1.msra.mxu0 0.0
  %6552 = vmatprep.subr.mxu0 0.0
  %6553 = vmatpush1.msra.mxu0 0.0
  %6554 = vmatprep.subr.mxu0 0.0
  %6555 = vmatpush1.msra.mxu0 0.0
  %6556 = vmatprep.subr.mxu0 0.0
  %6557 = vmatpush1.msra.mxu0 0.0
  %6558 = vmatprep.subr.mxu0 0.0
  %6559 = vmatpush1.msra.mxu0 0.0
  %6560 = vmatprep.subr.mxu0 0.0
  %6561 = vmatpush1.msra.mxu0 0.0
  %6562 = vmatprep.subr.mxu0 0.0
  %6563 = vmatpush1.msra.mxu0 0.0
  %6564 = vmatprep.subr.mxu0 0.0
  %6565 = vmatpush1.msra.mxu0 0.0
  %6566 = vmatprep.subr.mxu0 0.0
  %6567 = vmatpush1.msra.mxu0 0.0
  %6568 = vmatprep.subr.mxu0 0.0
  %6569 = vmatpush1.msra.mxu0 0.0
  %6570 = vmatprep.subr.mxu0 0.0
  %6571 = vmatpush1.msra.mxu0 0.0
  %6572 = vmatprep.subr.mxu0 0.0
  %6573 = vmatpush1.msra.mxu0 0.0
  %6574 = vmatprep.subr.mxu0 0.0
  %6575 = vmatpush1.msra.mxu0 0.0
  %6576 = vmatprep.mubr.f32.mxu0 0.0
  %6577 = vmatmul.mubr.f32.gmra.mrb[0].mxu0 %v6507
  %v6578 = vpop.f32.mrb[0].mxu0
  %v6579 = vadd.f32 0.0, %v6578
  %v6580 = vpop.f32.mrb[0].mxu0
  %6581 = vmatprep.mubr.f32.mxu0 0.0
  %6582 = vmatmul.mubr.f32.gmra.mrb[0].mxu0 %v6510
  %v6583 = vpop.f32.mrb[0].mxu0
  %v6584 = vadd.f32 0.0, %v6583
  %v6585 = vpop.f32.mrb[0].mxu0
  %6586 = vdwg.mxu0
  %v6587 = vld [vmem:[%s2 + $0x20] sm:$0xff]
  %v6588 = vld [vmem:[%s2 + $0x28] sm:$0xff]
  %v6589 = vld [vmem:[%s2 + $0x30] sm:$0xff]
  %v6590 = vld [vmem:[%s2 + $0x38] sm:$0xff]
  %v6592 = vsel %vm52, %v5364, 0
  %v6595 = vsel %vm52, %v5369, 0
  %v6598 = vsel %vm52, %v5445, 0
  %v6601 = vsel %vm52, %v5450, 0
  %v6604 = vsel %vm52, %v5526, 0
  %v6607 = vsel %vm52, %v5531, 0
  %v6610 = vsel %vm52, %v5607, 0
  %v6613 = vsel %vm52, %v5612, 0
  %v6616 = vsel %vm52, %v5688, 0
  %v6619 = vsel %vm52, %v5693, 0
  %v6622 = vsel %vm52, %v5769, 0
  %v6625 = vsel %vm52, %v5774, 0
  %v6628 = vsel %vm52, %v5850, 0
  %v6631 = vsel %vm52, %v5855, 0
  %v6634 = vsel %vm52, %v5931, 0
  %v6637 = vsel %vm52, %v5936, 0
  %v6640 = vsel %vm52, %v6012, 0
  %v6643 = vsel %vm52, %v6017, 0
  %v6646 = vsel %vm52, %v6093, 0
  %v6649 = vsel %vm52, %v6098, 0
  %v6652 = vsel %vm52, %v6174, 0
  %v6655 = vsel %vm52, %v6179, 0
  %v6658 = vsel %vm52, %v6255, 0
  %v6661 = vsel %vm52, %v6260, 0
  %v6664 = vsel %vm52, %v6336, 0
  %v6667 = vsel %vm52, %v6341, 0
  %v6670 = vsel %vm52, %v6417, 0
  %v6673 = vsel %vm52, %v6422, 0
  %v6676 = vsel %vm52, %v6498, 0
  %v6679 = vsel %vm52, %v6503, 0
  %v6682 = vsel %vm52, %v6579, 0
  %v6685 = vsel %vm52, %v6584, 0
  %6687 = vmatprep.subr.mxu0 0.0
  %6688 = vmatpush1.msra.mxu0 %v6587
  %6689 = vmatprep.subr.mxu0 0.0
  %6690 = vmatpush1.msra.mxu0 %v6588
  %6691 = vmatprep.subr.mxu0 0.0
  %6692 = vmatpush1.msra.mxu0 %v6589
  %6693 = vmatprep.subr.mxu0 0.0
  %6694 = vmatpush1.msra.mxu0 %v6590
  %6695 = vmatprep.subr.mxu0 0.0
  %6696 = vmatpush1.msra.mxu0 0.0
  %6697 = vmatprep.subr.mxu0 0.0
  %6698 = vmatpush1.msra.mxu0 0.0
  %6699 = vmatprep.subr.mxu0 0.0
  %6700 = vmatpush1.msra.mxu0 0.0
  %6701 = vmatprep.subr.mxu0 0.0
  %6702 = vmatpush1.msra.mxu0 0.0
  %6703 = vmatprep.subr.mxu0 0.0
  %6704 = vmatpush1.msra.mxu0 0.0
  %6705 = vmatprep.subr.mxu0 0.0
  %6706 = vmatpush1.msra.mxu0 0.0
  %6707 = vmatprep.subr.mxu0 0.0
  %6708 = vmatpush1.msra.mxu0 0.0
  %6709 = vmatprep.subr.mxu0 0.0
  %6710 = vmatpush1.msra.mxu0 0.0
  %6711 = vmatprep.subr.mxu0 0.0
  %6712 = vmatpush1.msra.mxu0 0.0
  %6713 = vmatprep.subr.mxu0 0.0
  %6714 = vmatpush1.msra.mxu0 0.0
  %6715 = vmatprep.subr.mxu0 0.0
  %6716 = vmatpush1.msra.mxu0 0.0
  %6717 = vmatprep.subr.mxu0 0.0
  %6718 = vmatpush1.msra.mxu0 0.0
  %6719 = vmatprep.subr.mxu0 0.0
  %6720 = vmatpush1.msra.mxu0 0.0
  %6721 = vmatprep.subr.mxu0 0.0
  %6722 = vmatpush1.msra.mxu0 0.0
  %6723 = vmatprep.subr.mxu0 0.0
  %6724 = vmatpush1.msra.mxu0 0.0
  %6725 = vmatprep.subr.mxu0 0.0
  %6726 = vmatpush1.msra.mxu0 0.0
  %6727 = vmatprep.subr.mxu0 0.0
  %6728 = vmatpush1.msra.mxu0 0.0
  %6729 = vmatprep.subr.mxu0 0.0
  %6730 = vmatpush1.msra.mxu0 0.0
  %6731 = vmatprep.subr.mxu0 0.0
  %6732 = vmatpush1.msra.mxu0 0.0
  %6733 = vmatprep.subr.mxu0 0.0
  %6734 = vmatpush1.msra.mxu0 0.0
  %6735 = vmatprep.subr.mxu0 0.0
  %6736 = vmatpush1.msra.mxu0 0.0
  %6737 = vmatprep.subr.mxu0 0.0
  %6738 = vmatpush1.msra.mxu0 0.0
  %6739 = vmatprep.subr.mxu0 0.0
  %6740 = vmatpush1.msra.mxu0 0.0
  %6741 = vmatprep.subr.mxu0 0.0
  %6742 = vmatpush1.msra.mxu0 0.0
  %6743 = vmatprep.subr.mxu0 0.0
  %6744 = vmatpush1.msra.mxu0 0.0
  %6745 = vmatprep.subr.mxu0 0.0
  %6746 = vmatpush1.msra.mxu0 0.0
  %6747 = vmatprep.subr.mxu0 0.0
  %6748 = vmatpush1.msra.mxu0 0.0
  %6749 = vmatprep.subr.mxu0 0.0
  %6750 = vmatpush1.msra.mxu0 0.0
  %6751 = vmatprep.mubr.f32.mxu0 0.0
  %6752 = vmatmul.mubr.f32.gmra.mrb[0].mxu0 %v6592
  %v6753 = vpop.f32.mrb[0].mxu0
  %v6754 = vadd.f32 0.0, %v6753
  %v6755 = vpop.f32.mrb[0].mxu0
  %6756 = vmatprep.mubr.f32.mxu0 0.0
  %6757 = vmatmul.mubr.f32.gmra.mrb[0].mxu0 %v6595
  %v6758 = vpop.f32.mrb[0].mxu0
  %v6759 = vadd.f32 0.0, %v6758
  %v6760 = vpop.f32.mrb[0].mxu0
  %6761 = vmatprep.mubr.f32.mxu0 0.0
  %6762 = vmatmul.mubr.f32.gmra.mrb[0].mxu0 %v6598
  %v6763 = vpop.f32.mrb[0].mxu0
  %v6764 = vadd.f32 0.0, %v6763
  %v6765 = vpop.f32.mrb[0].mxu0
  %6766 = vmatprep.mubr.f32.mxu0 0.0
  %6767 = vmatmul.mubr.f32.gmra.mrb[0].mxu0 %v6601
  %v6768 = vpop.f32.mrb[0].mxu0
  %v6769 = vadd.f32 0.0, %v6768
  %v6770 = vpop.f32.mrb[0].mxu0
  %6771 = vmatprep.mubr.f32.mxu0 0.0
  %6772 = vmatmul.mubr.f32.gmra.mrb[0].mxu0 %v6604
  %v6773 = vpop.f32.mrb[0].mxu0
  %v6774 = vadd.f32 0.0, %v6773
  %v6775 = vpop.f32.mrb[0].mxu0
  %6776 = vmatprep.mubr.f32.mxu0 0.0
  %6777 = vmatmul.mubr.f32.gmra.mrb[0].mxu0 %v6607
  %v6778 = vpop.f32.mrb[0].mxu0
  %v6779 = vadd.f32 0.0, %v6778
  %v6780 = vpop.f32.mrb[0].mxu0
  %6781 = vmatprep.mubr.f32.mxu0 0.0
  %6782 = vmatmul.mubr.f32.gmra.mrb[0].mxu0 %v6610
  %v6783 = vpop.f32.mrb[0].mxu0
  %v6784 = vadd.f32 0.0, %v6783
  %v6785 = vpop.f32.mrb[0].mxu0
  %6786 = vmatprep.mubr.f32.mxu0 0.0
  %6787 = vmatmul.mubr.f32.gmra.mrb[0].mxu0 %v6613
  %v6788 = vpop.f32.mrb[0].mxu0
  %v6789 = vadd.f32 0.0, %v6788
  %v6790 = vpop.f32.mrb[0].mxu0
  %6791 = vmatprep.mubr.f32.mxu0 0.0
  %6792 = vmatmul.mubr.f32.gmra.mrb[0].mxu0 %v6616
  %v6793 = vpop.f32.mrb[0].mxu0
  %v6794 = vadd.f32 0.0, %v6793
  %v6795 = vpop.f32.mrb[0].mxu0
  %6796 = vmatprep.mubr.f32.mxu0 0.0
  %6797 = vmatmul.mubr.f32.gmra.mrb[0].mxu0 %v6619
  %v6798 = vpop.f32.mrb[0].mxu0
  %v6799 = vadd.f32 0.0, %v6798
  %v6800 = vpop.f32.mrb[0].mxu0
  %6801 = vmatprep.mubr.f32.mxu0 0.0
  %6802 = vmatmul.mubr.f32.gmra.mrb[0].mxu0 %v6622
  %v6803 = vpop.f32.mrb[0].mxu0
  %v6804 = vadd.f32 0.0, %v6803
  %v6805 = vpop.f32.mrb[0].mxu0
  %6806 = vmatprep.mubr.f32.mxu0 0.0
  %6807 = vmatmul.mubr.f32.gmra.mrb[0].mxu0 %v6625
  %v6808 = vpop.f32.mrb[0].mxu0
  %v6809 = vadd.f32 0.0, %v6808
  %v6810 = vpop.f32.mrb[0].mxu0
  %6811 = vmatprep.mubr.f32.mxu0 0.0
  %6812 = vmatmul.mubr.f32.gmra.mrb[0].mxu0 %v6628
  %v6813 = vpop.f32.mrb[0].mxu0
  %v6814 = vadd.f32 0.0, %v6813
  %v6815 = vpop.f32.mrb[0].mxu0
  %6816 = vmatprep.mubr.f32.mxu0 0.0
  %6817 = vmatmul.mubr.f32.gmra.mrb[0].mxu0 %v6631
  %v6818 = vpop.f32.mrb[0].mxu0
  %v6819 = vadd.f32 0.0, %v6818
  %v6820 = vpop.f32.mrb[0].mxu0
  %6821 = vmatprep.mubr.f32.mxu0 0.0
  %6822 = vmatmul.mubr.f32.gmra.mrb[0].mxu0 %v6634
  %v6823 = vpop.f32.mrb[0].mxu0
  %v6824 = vadd.f32 0.0, %v6823
  %v6825 = vpop.f32.mrb[0].mxu0
  %6826 = vmatprep.mubr.f32.mxu0 0.0
  %6827 = vmatmul.mubr.f32.gmra.mrb[0].mxu0 %v6637
  %v6828 = vpop.f32.mrb[0].mxu0
  %v6829 = vadd.f32 0.0, %v6828
  %v6830 = vpop.f32.mrb[0].mxu0
  %6831 = vmatprep.mubr.f32.mxu0 0.0
  %6832 = vmatmul.mubr.f32.gmra.mrb[0].mxu0 %v6640
  %v6833 = vpop.f32.mrb[0].mxu0
  %v6834 = vadd.f32 0.0, %v6833
  %v6835 = vpop.f32.mrb[0].mxu0
  %6836 = vmatprep.mubr.f32.mxu0 0.0
  %6837 = vmatmul.mubr.f32.gmra.mrb[0].mxu0 %v6643
  %v6838 = vpop.f32.mrb[0].mxu0
  %v6839 = vadd.f32 0.0, %v6838
  %v6840 = vpop.f32.mrb[0].mxu0
  %6841 = vmatprep.mubr.f32.mxu0 0.0
  %6842 = vmatmul.mubr.f32.gmra.mrb[0].mxu0 %v6646
  %v6843 = vpop.f32.mrb[0].mxu0
  %v6844 = vadd.f32 0.0, %v6843
  %v6845 = vpop.f32.mrb[0].mxu0
  %6846 = vmatprep.mubr.f32.mxu0 0.0
  %6847 = vmatmul.mubr.f32.gmra.mrb[0].mxu0 %v6649
  %v6848 = vpop.f32.mrb[0].mxu0
  %v6849 = vadd.f32 0.0, %v6848
  %v6850 = vpop.f32.mrb[0].mxu0
  %6851 = vmatprep.mubr.f32.mxu0 0.0
  %6852 = vmatmul.mubr.f32.gmra.mrb[0].mxu0 %v6652
  %v6853 = vpop.f32.mrb[0].mxu0
  %v6854 = vadd.f32 0.0, %v6853
  %v6855 = vpop.f32.mrb[0].mxu0
  %6856 = vmatprep.mubr.f32.mxu0 0.0
  %6857 = vmatmul.mubr.f32.gmra.mrb[0].mxu0 %v6655
  %v6858 = vpop.f32.mrb[0].mxu0
  %v6859 = vadd.f32 0.0, %v6858
  %v6860 = vpop.f32.mrb[0].mxu0
  %6861 = vmatprep.mubr.f32.mxu0 0.0
  %6862 = vmatmul.mubr.f32.gmra.mrb[0].mxu0 %v6658
  %v6863 = vpop.f32.mrb[0].mxu0
  %v6864 = vadd.f32 0.0, %v6863
  %v6865 = vpop.f32.mrb[0].mxu0
  %6866 = vmatprep.mubr.f32.mxu0 0.0
  %6867 = vmatmul.mubr.f32.gmra.mrb[0].mxu0 %v6661
  %v6868 = vpop.f32.mrb[0].mxu0
  %v6869 = vadd.f32 0.0, %v6868
  %v6870 = vpop.f32.mrb[0].mxu0
  %6871 = vmatprep.mubr.f32.mxu0 0.0
  %6872 = vmatmul.mubr.f32.gmra.mrb[0].mxu0 %v6664
  %v6873 = vpop.f32.mrb[0].mxu0
  %v6874 = vadd.f32 0.0, %v6873
  %v6875 = vpop.f32.mrb[0].mxu0
  %6876 = vmatprep.mubr.f32.mxu0 0.0
  %6877 = vmatmul.mubr.f32.gmra.mrb[0].mxu0 %v6667
  %v6878 = vpop.f32.mrb[0].mxu0
  %v6879 = vadd.f32 0.0, %v6878
  %v6880 = vpop.f32.mrb[0].mxu0
  %6881 = vmatprep.mubr.f32.mxu0 0.0
  %6882 = vmatmul.mubr.f32.gmra.mrb[0].mxu0 %v6670
  %v6883 = vpop.f32.mrb[0].mxu0
  %v6884 = vadd.f32 0.0, %v6883
  %v6885 = vpop.f32.mrb[0].mxu0
  %6886 = vmatprep.mubr.f32.mxu0 0.0
  %6887 = vmatmul.mubr.f32.gmra.mrb[0].mxu0 %v6673
  %v6888 = vpop.f32.mrb[0].mxu0
  %v6889 = vadd.f32 0.0, %v6888
  %v6890 = vpop.f32.mrb[0].mxu0
  %6891 = vmatprep.mubr.f32.mxu0 0.0
  %6892 = vmatmul.mubr.f32.gmra.mrb[0].mxu0 %v6676
  %v6893 = vpop.f32.mrb[0].mxu0
  %v6894 = vadd.f32 0.0, %v6893
  %v6895 = vpop.f32.mrb[0].mxu0
  %6896 = vmatprep.mubr.f32.mxu0 0.0
  %6897 = vmatmul.mubr.f32.gmra.mrb[0].mxu0 %v6679
  %v6898 = vpop.f32.mrb[0].mxu0
  %v6899 = vadd.f32 0.0, %v6898
  %v6900 = vpop.f32.mrb[0].mxu0
  %6901 = vmatprep.mubr.f32.mxu0 0.0
  %6902 = vmatmul.mubr.f32.gmra.mrb[0].mxu0 %v6682
  %v6903 = vpop.f32.mrb[0].mxu0
  %v6904 = vadd.f32 0.0, %v6903
  %v6905 = vpop.f32.mrb[0].mxu0
  %6906 = vmatprep.mubr.f32.mxu0 0.0
  %6907 = vmatmul.mubr.f32.gmra.mrb[0].mxu0 %v6685
  %v6908 = vpop.f32.mrb[0].mxu0
  %v6909 = vadd.f32 0.0, %v6908
  %v6910 = vpop.f32.mrb[0].mxu0
  %6911 = vdwg.mxu0
  %v6913 = vsel %vm52, %v2256, 0
  %v6916 = vsel %vm52, %v2261, 0
  %v6919 = vsel %vm52, %v2337, 0
  %v6922 = vsel %vm52, %v2342, 0
  %v6925 = vsel %vm52, %v2418, 0
  %v6928 = vsel %vm52, %v2423, 0
  %v6931 = vsel %vm52, %v2499, 0
  %v6934 = vsel %vm52, %v2504, 0
  %v6937 = vsel %vm52, %v2580, 0
  %v6940 = vsel %vm52, %v2585, 0
  %v6943 = vsel %vm52, %v2661, 0
  %v6946 = vsel %vm52, %v2666, 0
  %v6949 = vsel %vm52, %v2742, 0
  %v6952 = vsel %vm52, %v2747, 0
  %v6955 = vsel %vm52, %v2823, 0
  %v6958 = vsel %vm52, %v2828, 0
  %v6961 = vsel %vm52, %v2904, 0
  %v6964 = vsel %vm52, %v2909, 0
  %v6967 = vsel %vm52, %v2985, 0
  %v6970 = vsel %vm52, %v2990, 0
  %v6973 = vsel %vm52, %v3066, 0
  %v6976 = vsel %vm52, %v3071, 0
  %v6979 = vsel %vm52, %v3147, 0
  %v6982 = vsel %vm52, %v3152, 0
  %v6985 = vsel %vm52, %v3228, 0
  %v6988 = vsel %vm52, %v3233, 0
  %v6991 = vsel %vm52, %v3309, 0
  %v6994 = vsel %vm52, %v3314, 0
  %v6997 = vsel %vm52, %v3390, 0
  %v7000 = vsel %vm52, %v3395, 0
  %v7003 = vsel %vm52, %v3471, 0
  %v7006 = vsel %vm52, %v3476, 0
  %7008 = vmatprep.subr.mxu0 0.0
  %7009 = vmatpush1.msra.mxu0 %v3479
  %7010 = vmatprep.subr.mxu0 0.0
  %7011 = vmatpush1.msra.mxu0 %v3480
  %7012 = vmatprep.subr.mxu0 0.0
  %7013 = vmatpush1.msra.mxu0 %v3481
  %7014 = vmatprep.subr.mxu0 0.0
  %7015 = vmatpush1.msra.mxu0 %v3482
  %7016 = vmatprep.subr.mxu0 0.0
  %7017 = vmatpush1.msra.mxu0 0.0
  %7018 = vmatprep.subr.mxu0 0.0
  %7019 = vmatpush1.msra.mxu0 0.0
  %7020 = vmatprep.subr.mxu0 0.0
  %7021 = vmatpush1.msra.mxu0 0.0
  %7022 = vmatprep.subr.mxu0 0.0
  %7023 = vmatpush1.msra.mxu0 0.0
  %7024 = vmatprep.subr.mxu0 0.0
  %7025 = vmatpush1.msra.mxu0 0.0
  %7026 = vmatprep.subr.mxu0 0.0
  %7027 = vmatpush1.msra.mxu0 0.0
  %7028 = vmatprep.subr.mxu0 0.0
  %7029 = vmatpush1.msra.mxu0 0.0
  %7030 = vmatprep.subr.mxu0 0.0
  %7031 = vmatpush1.msra.mxu0 0.0
  %7032 = vmatprep.subr.mxu0 0.0
  %7033 = vmatpush1.msra.mxu0 0.0
  %7034 = vmatprep.subr.mxu0 0.0
  %7035 = vmatpush1.msra.mxu0 0.0
  %7036 = vmatprep.subr.mxu0 0.0
  %7037 = vmatpush1.msra.mxu0 0.0
  %7038 = vmatprep.subr.mxu0 0.0
  %7039 = vmatpush1.msra.mxu0 0.0
  %7040 = vmatprep.subr.mxu0 0.0
  %7041 = vmatpush1.msra.mxu0 0.0
  %7042 = vmatprep.subr.mxu0 0.0
  %7043 = vmatpush1.msra.mxu0 0.0
  %7044 = vmatprep.subr.mxu0 0.0
  %7045 = vmatpush1.msra.mxu0 0.0
  %7046 = vmatprep.subr.mxu0 0.0
  %7047 = vmatpush1.msra.mxu0 0.0
  %7048 = vmatprep.subr.mxu0 0.0
  %7049 = vmatpush1.msra.mxu0 0.0
  %7050 = vmatprep.subr.mxu0 0.0
  %7051 = vmatpush1.msra.mxu0 0.0
  %7052 = vmatprep.subr.mxu0 0.0
  %7053 = vmatpush1.msra.mxu0 0.0
  %7054 = vmatprep.subr.mxu0 0.0
  %7055 = vmatpush1.msra.mxu0 0.0
  %7056 = vmatprep.subr.mxu0 0.0
  %7057 = vmatpush1.msra.mxu0 0.0
  %7058 = vmatprep.subr.mxu0 0.0
  %7059 = vmatpush1.msra.mxu0 0.0
  %7060 = vmatprep.subr.mxu0 0.0
  %7061 = vmatpush1.msra.mxu0 0.0
  %7062 = vmatprep.subr.mxu0 0.0
  %7063 = vmatpush1.msra.mxu0 0.0
  %7064 = vmatprep.subr.mxu0 0.0
  %7065 = vmatpush1.msra.mxu0 0.0
  %7066 = vmatprep.subr.mxu0 0.0
  %7067 = vmatpush1.msra.mxu0 0.0
  %7068 = vmatprep.subr.mxu0 0.0
  %7069 = vmatpush1.msra.mxu0 0.0
  %7070 = vmatprep.subr.mxu0 0.0
  %7071 = vmatpush1.msra.mxu0 0.0
  %7072 = vmatprep.mubr.f32.mxu0 0.0
  %7073 = vmatmul.mubr.f32.gmra.mrb[0].mxu0 %v6913
  %v7074 = vpop.f32.mrb[0].mxu0
  %v7075 = vadd.f32 %v6754, %v7074
  %v7076 = vpop.f32.mrb[0].mxu0
  %7077 = vmatprep.mubr.f32.mxu0 0.0
  %7078 = vmatmul.mubr.f32.gmra.mrb[0].mxu0 %v6916
  %v7079 = vpop.f32.mrb[0].mxu0
  %v7080 = vadd.f32 %v6759, %v7079
  %v7081 = vpop.f32.mrb[0].mxu0
  %7082 = vmatprep.mubr.f32.mxu0 0.0
  %7083 = vmatmul.mubr.f32.gmra.mrb[0].mxu0 %v6919
  %v7084 = vpop.f32.mrb[0].mxu0
  %v7085 = vadd.f32 %v6764, %v7084
  %v7086 = vpop.f32.mrb[0].mxu0
  %7087 = vmatprep.mubr.f32.mxu0 0.0
  %7088 = vmatmul.mubr.f32.gmra.mrb[0].mxu0 %v6922
  %v7089 = vpop.f32.mrb[0].mxu0
  %v7090 = vadd.f32 %v6769, %v7089
  %v7091 = vpop.f32.mrb[0].mxu0
  %7092 = vmatprep.mubr.f32.mxu0 0.0
  %7093 = vmatmul.mubr.f32.gmra.mrb[0].mxu0 %v6925
  %v7094 = vpop.f32.mrb[0].mxu0
  %v7095 = vadd.f32 %v6774, %v7094
  %v7096 = vpop.f32.mrb[0].mxu0
  %7097 = vmatprep.mubr.f32.mxu0 0.0
  %7098 = vmatmul.mubr.f32.gmra.mrb[0].mxu0 %v6928
  %v7099 = vpop.f32.mrb[0].mxu0
  %v7100 = vadd.f32 %v6779, %v7099
  %v7101 = vpop.f32.mrb[0].mxu0
  %7102 = vmatprep.mubr.f32.mxu0 0.0
  %7103 = vmatmul.mubr.f32.gmra.mrb[0].mxu0 %v6931
  %v7104 = vpop.f32.mrb[0].mxu0
  %v7105 = vadd.f32 %v6784, %v7104
  %v7106 = vpop.f32.mrb[0].mxu0
  %7107 = vmatprep.mubr.f32.mxu0 0.0
  %7108 = vmatmul.mubr.f32.gmra.mrb[0].mxu0 %v6934
  %v7109 = vpop.f32.mrb[0].mxu0
  %v7110 = vadd.f32 %v6789, %v7109
  %v7111 = vpop.f32.mrb[0].mxu0
  %7112 = vmatprep.mubr.f32.mxu0 0.0
  %7113 = vmatmul.mubr.f32.gmra.mrb[0].mxu0 %v6937
  %v7114 = vpop.f32.mrb[0].mxu0
  %v7115 = vadd.f32 %v6794, %v7114
  %v7116 = vpop.f32.mrb[0].mxu0
  %7117 = vmatprep.mubr.f32.mxu0 0.0
  %7118 = vmatmul.mubr.f32.gmra.mrb[0].mxu0 %v6940
  %v7119 = vpop.f32.mrb[0].mxu0
  %v7120 = vadd.f32 %v6799, %v7119
  %v7121 = vpop.f32.mrb[0].mxu0
  %7122 = vmatprep.mubr.f32.mxu0 0.0
  %7123 = vmatmul.mubr.f32.gmra.mrb[0].mxu0 %v6943
  %v7124 = vpop.f32.mrb[0].mxu0
  %v7125 = vadd.f32 %v6804, %v7124
  %v7126 = vpop.f32.mrb[0].mxu0
  %7127 = vmatprep.mubr.f32.mxu0 0.0
  %7128 = vmatmul.mubr.f32.gmra.mrb[0].mxu0 %v6946
  %v7129 = vpop.f32.mrb[0].mxu0
  %v7130 = vadd.f32 %v6809, %v7129
  %v7131 = vpop.f32.mrb[0].mxu0
  %7132 = vmatprep.mubr.f32.mxu0 0.0
  %7133 = vmatmul.mubr.f32.gmra.mrb[0].mxu0 %v6949
  %v7134 = vpop.f32.mrb[0].mxu0
  %v7135 = vadd.f32 %v6814, %v7134
  %v7136 = vpop.f32.mrb[0].mxu0
  %7137 = vmatprep.mubr.f32.mxu0 0.0
  %7138 = vmatmul.mubr.f32.gmra.mrb[0].mxu0 %v6952
  %v7139 = vpop.f32.mrb[0].mxu0
  %v7140 = vadd.f32 %v6819, %v7139
  %v7141 = vpop.f32.mrb[0].mxu0
  %7142 = vmatprep.mubr.f32.mxu0 0.0
  %7143 = vmatmul.mubr.f32.gmra.mrb[0].mxu0 %v6955
  %v7144 = vpop.f32.mrb[0].mxu0
  %v7145 = vadd.f32 %v6824, %v7144
  %v7146 = vpop.f32.mrb[0].mxu0
  %7147 = vmatprep.mubr.f32.mxu0 0.0
  %7148 = vmatmul.mubr.f32.gmra.mrb[0].mxu0 %v6958
  %v7149 = vpop.f32.mrb[0].mxu0
  %v7150 = vadd.f32 %v6829, %v7149
  %v7151 = vpop.f32.mrb[0].mxu0
  %7152 = vmatprep.mubr.f32.mxu0 0.0
  %7153 = vmatmul.mubr.f32.gmra.mrb[0].mxu0 %v6961
  %v7154 = vpop.f32.mrb[0].mxu0
  %v7155 = vadd.f32 %v6834, %v7154
  %v7156 = vpop.f32.mrb[0].mxu0
  %7157 = vmatprep.mubr.f32.mxu0 0.0
  %7158 = vmatmul.mubr.f32.gmra.mrb[0].mxu0 %v6964
  %v7159 = vpop.f32.mrb[0].mxu0
  %v7160 = vadd.f32 %v6839, %v7159
  %v7161 = vpop.f32.mrb[0].mxu0
  %7162 = vmatprep.mubr.f32.mxu0 0.0
  %7163 = vmatmul.mubr.f32.gmra.mrb[0].mxu0 %v6967
  %v7164 = vpop.f32.mrb[0].mxu0
  %v7165 = vadd.f32 %v6844, %v7164
  %v7166 = vpop.f32.mrb[0].mxu0
  %7167 = vmatprep.mubr.f32.mxu0 0.0
  %7168 = vmatmul.mubr.f32.gmra.mrb[0].mxu0 %v6970
  %v7169 = vpop.f32.mrb[0].mxu0
  %v7170 = vadd.f32 %v6849, %v7169
  %v7171 = vpop.f32.mrb[0].mxu0
  %7172 = vmatprep.mubr.f32.mxu0 0.0
  %7173 = vmatmul.mubr.f32.gmra.mrb[0].mxu0 %v6973
  %v7174 = vpop.f32.mrb[0].mxu0
  %v7175 = vadd.f32 %v6854, %v7174
  %v7176 = vpop.f32.mrb[0].mxu0
  %7177 = vmatprep.mubr.f32.mxu0 0.0
  %7178 = vmatmul.mubr.f32.gmra.mrb[0].mxu0 %v6976
  %v7179 = vpop.f32.mrb[0].mxu0
  %v7180 = vadd.f32 %v6859, %v7179
  %v7181 = vpop.f32.mrb[0].mxu0
  %7182 = vmatprep.mubr.f32.mxu0 0.0
  %7183 = vmatmul.mubr.f32.gmra.mrb[0].mxu0 %v6979
  %v7184 = vpop.f32.mrb[0].mxu0
  %v7185 = vadd.f32 %v6864, %v7184
  %v7186 = vpop.f32.mrb[0].mxu0
  %7187 = vmatprep.mubr.f32.mxu0 0.0
  %7188 = vmatmul.mubr.f32.gmra.mrb[0].mxu0 %v6982
  %v7189 = vpop.f32.mrb[0].mxu0
  %v7190 = vadd.f32 %v6869, %v7189
  %v7191 = vpop.f32.mrb[0].mxu0
  %7192 = vmatprep.mubr.f32.mxu0 0.0
  %7193 = vmatmul.mubr.f32.gmra.mrb[0].mxu0 %v6985
  %v7194 = vpop.f32.mrb[0].mxu0
  %v7195 = vadd.f32 %v6874, %v7194
  %v7196 = vpop.f32.mrb[0].mxu0
  %7197 = vmatprep.mubr.f32.mxu0 0.0
  %7198 = vmatmul.mubr.f32.gmra.mrb[0].mxu0 %v6988
  %v7199 = vpop.f32.mrb[0].mxu0
  %v7200 = vadd.f32 %v6879, %v7199
  %v7201 = vpop.f32.mrb[0].mxu0
  %7202 = vmatprep.mubr.f32.mxu0 0.0
  %7203 = vmatmul.mubr.f32.gmra.mrb[0].mxu0 %v6991
  %v7204 = vpop.f32.mrb[0].mxu0
  %v7205 = vadd.f32 %v6884, %v7204
  %v7206 = vpop.f32.mrb[0].mxu0
  %7207 = vmatprep.mubr.f32.mxu0 0.0
  %7208 = vmatmul.mubr.f32.gmra.mrb[0].mxu0 %v6994
  %v7209 = vpop.f32.mrb[0].mxu0
  %v7210 = vadd.f32 %v6889, %v7209
  %v7211 = vpop.f32.mrb[0].mxu0
  %7212 = vmatprep.mubr.f32.mxu0 0.0
  %7213 = vmatmul.mubr.f32.gmra.mrb[0].mxu0 %v6997
  %v7214 = vpop.f32.mrb[0].mxu0
  %v7215 = vadd.f32 %v6894, %v7214
  %v7216 = vpop.f32.mrb[0].mxu0
  %7217 = vmatprep.mubr.f32.mxu0 0.0
  %7218 = vmatmul.mubr.f32.gmra.mrb[0].mxu0 %v7000
  %v7219 = vpop.f32.mrb[0].mxu0
  %v7220 = vadd.f32 %v6899, %v7219
  %v7221 = vpop.f32.mrb[0].mxu0
  %7222 = vmatprep.mubr.f32.mxu0 0.0
  %7223 = vmatmul.mubr.f32.gmra.mrb[0].mxu0 %v7003
  %v7224 = vpop.f32.mrb[0].mxu0
  %v7225 = vadd.f32 %v6904, %v7224
  %v7226 = vpop.f32.mrb[0].mxu0
  %7227 = vmatprep.mubr.f32.mxu0 0.0
  %7228 = vmatmul.mubr.f32.gmra.mrb[0].mxu0 %v7006
  %v7229 = vpop.f32.mrb[0].mxu0
  %v7230 = vadd.f32 %v6909, %v7229
  %v7231 = vpop.f32.mrb[0].mxu0
  %7232 = vdwg.mxu0
  %7233 = vrot.lane.b32.xlu0 %v374, 48
  %v7234 = vpop.permute.xlu0 %7233
  %7235 = vrot.lane.b32.xlu0 %v375, 48
  %v7236 = vpop.permute.xlu0 %7235
  %7237 = vrot.lane.b32.xlu0 %v374, 96
  %v7238 = vpop.permute.xlu0 %7237
  %7239 = vrot.lane.b32.xlu0 %v375, 96
  %v7240 = vpop.permute.xlu0 %7239
  %v7241 = vsel %vm412, %v7234, 0
  %v7243 = vsel %vm412, %v7236, 0
  %v7245 = vsel %vm412, %v7238, 0
  %v7247 = vsel %vm412, %v7240, 0
  %7249 = vmatprep.subr.mxu0 0.0
  %7250 = vmatpush1.xpose.msra.mxu0 %v7245
  %7251 = vmatprep.subr.mxu0 0.0
  %7252 = vmatpush1.xpose.msra.mxu0 %v7247
  %7253 = vmatprep.subr.mxu0 0.0
  %7254 = vmatpush1.xpose.msra.mxu0 0.0
  %7255 = vmatprep.subr.mxu0 0.0
  %7256 = vmatpush1.xpose.msra.mxu0 0.0
  %7257 = vmatprep.subr.mxu0 0.0
  %7258 = vmatpush1.xpose.msra.mxu0 0.0
  %7259 = vmatprep.subr.mxu0 0.0
  %7260 = vmatpush1.xpose.msra.mxu0 0.0
  %7261 = vmatprep.subr.mxu0 0.0
  %7262 = vmatpush1.xpose.msra.mxu0 0.0
  %7263 = vmatprep.subr.mxu0 0.0
  %7264 = vmatpush1.xpose.msra.mxu0 0.0
  %7265 = vmatprep.subr.mxu0 0.0
  %7266 = vmatpush1.xpose.msra.mxu0 0.0
  %7267 = vmatprep.subr.mxu0 0.0
  %7268 = vmatpush1.xpose.msra.mxu0 0.0
  %7269 = vmatprep.subr.mxu0 0.0
  %7270 = vmatpush1.xpose.msra.mxu0 0.0
  %7271 = vmatprep.subr.mxu0 0.0
  %7272 = vmatpush1.xpose.msra.mxu0 0.0
  %7273 = vmatprep.subr.mxu0 0.0
  %7274 = vmatpush1.xpose.msra.mxu0 0.0
  %7275 = vmatprep.subr.mxu0 0.0
  %7276 = vmatpush1.xpose.msra.mxu0 0.0
  %7277 = vmatprep.subr.mxu0 0.0
  %7278 = vmatpush1.xpose.msra.mxu0 0.0
  %7279 = vmatprep.subr.mxu0 0.0
  %7280 = vmatpush1.xpose.msra.mxu0 0.0
  %7281 = vmatprep.subr.mxu0 0.0
  %7282 = vmatpush1.xpose.msra.mxu0 0.0
  %7283 = vmatprep.subr.mxu0 0.0
  %7284 = vmatpush1.xpose.msra.mxu0 0.0
  %7285 = vmatprep.subr.mxu0 0.0
  %7286 = vmatpush1.xpose.msra.mxu0 0.0
  %7287 = vmatprep.subr.mxu0 0.0
  %7288 = vmatpush1.xpose.msra.mxu0 0.0
  %7289 = vmatprep.subr.mxu0 0.0
  %7290 = vmatpush1.xpose.msra.mxu0 0.0
  %7291 = vmatprep.subr.mxu0 0.0
  %7292 = vmatpush1.xpose.msra.mxu0 0.0
  %7293 = vmatprep.subr.mxu0 0.0
  %7294 = vmatpush1.xpose.msra.mxu0 0.0
  %7295 = vmatprep.subr.mxu0 0.0
  %7296 = vmatpush1.xpose.msra.mxu0 0.0
  %7297 = vmatprep.subr.mxu0 0.0
  %7298 = vmatpush1.xpose.msra.mxu0 0.0
  %7299 = vmatprep.subr.mxu0 0.0
  %7300 = vmatpush1.xpose.msra.mxu0 0.0
  %7301 = vmatprep.subr.mxu0 0.0
  %7302 = vmatpush1.xpose.msra.mxu0 0.0
  %7303 = vmatprep.subr.mxu0 0.0
  %7304 = vmatpush1.xpose.msra.mxu0 0.0
  %7305 = vmatprep.subr.mxu0 0.0
  %7306 = vmatpush1.xpose.msra.mxu0 0.0
  %7307 = vmatprep.subr.mxu0 0.0
  %7308 = vmatpush1.xpose.msra.mxu0 0.0
  %7309 = vmatprep.subr.mxu0 0.0
  %7310 = vmatpush1.xpose.msra.mxu0 0.0
  %7311 = vmatprep.subr.mxu0 0.0
  %7312 = vmatpush1.xpose.msra.mxu0 0.0
  %7313 = vmatprep.mubr.f32.mxu0 0.0
  %7314 = vmatmul.mubr.f32.gmra.mrb[0].mxu0 %v7241
  %v7315 = vpop.f32.mrb[0].mxu0
  %v7316 = vadd.f32 0.0, %v7315
  %v7317 = vpop.f32.mrb[0].mxu0
  %7318 = vmatprep.mubr.f32.mxu0 0.0
  %7319 = vmatmul.mubr.f32.gmra.mrb[0].mxu0 %v7243
  %v7320 = vpop.f32.mrb[0].mxu0
  %v7321 = vadd.f32 0.0, %v7320
  %v7322 = vpop.f32.mrb[0].mxu0
  %7323 = vdwg.mxu0
  %7324 = vrot.lane.b32.xlu0 %v376, 48
  %v7325 = vpop.permute.xlu0 %7324
  %7326 = vrot.lane.b32.xlu0 %v377, 48
  %v7327 = vpop.permute.xlu0 %7326
  %7328 = vrot.lane.b32.xlu0 %v376, 96
  %v7329 = vpop.permute.xlu0 %7328
  %7330 = vrot.lane.b32.xlu0 %v377, 96
  %v7331 = vpop.permute.xlu0 %7330
  %v7332 = vsel %vm412, %v7325, 0
  %v7334 = vsel %vm412, %v7327, 0
  %v7336 = vsel %vm412, %v7329, 0
  %v7338 = vsel %vm412, %v7331, 0
  %7340 = vmatprep.subr.mxu0 0.0
  %7341 = vmatpush1.xpose.msra.mxu0 %v7336
  %7342 = vmatprep.subr.mxu0 0.0
  %7343 = vmatpush1.xpose.msra.mxu0 %v7338
  %7344 = vmatprep.subr.mxu0 0.0
  %7345 = vmatpush1.xpose.msra.mxu0 0.0
  %7346 = vmatprep.subr.mxu0 0.0
  %7347 = vmatpush1.xpose.msra.mxu0 0.0
  %7348 = vmatprep.subr.mxu0 0.0
  %7349 = vmatpush1.xpose.msra.mxu0 0.0
  %7350 = vmatprep.subr.mxu0 0.0
  %7351 = vmatpush1.xpose.msra.mxu0 0.0
  %7352 = vmatprep.subr.mxu0 0.0
  %7353 = vmatpush1.xpose.msra.mxu0 0.0
  %7354 = vmatprep.subr.mxu0 0.0
  %7355 = vmatpush1.xpose.msra.mxu0 0.0
  %7356 = vmatprep.subr.mxu0 0.0
  %7357 = vmatpush1.xpose.msra.mxu0 0.0
  %7358 = vmatprep.subr.mxu0 0.0
  %7359 = vmatpush1.xpose.msra.mxu0 0.0
  %7360 = vmatprep.subr.mxu0 0.0
  %7361 = vmatpush1.xpose.msra.mxu0 0.0
  %7362 = vmatprep.subr.mxu0 0.0
  %7363 = vmatpush1.xpose.msra.mxu0 0.0
  %7364 = vmatprep.subr.mxu0 0.0
  %7365 = vmatpush1.xpose.msra.mxu0 0.0
  %7366 = vmatprep.subr.mxu0 0.0
  %7367 = vmatpush1.xpose.msra.mxu0 0.0
  %7368 = vmatprep.subr.mxu0 0.0
  %7369 = vmatpush1.xpose.msra.mxu0 0.0
  %7370 = vmatprep.subr.mxu0 0.0
  %7371 = vmatpush1.xpose.msra.mxu0 0.0
  %7372 = vmatprep.subr.mxu0 0.0
  %7373 = vmatpush1.xpose.msra.mxu0 0.0
  %7374 = vmatprep.subr.mxu0 0.0
  %7375 = vmatpush1.xpose.msra.mxu0 0.0
  %7376 = vmatprep.subr.mxu0 0.0
  %7377 = vmatpush1.xpose.msra.mxu0 0.0
  %7378 = vmatprep.subr.mxu0 0.0
  %7379 = vmatpush1.xpose.msra.mxu0 0.0
  %7380 = vmatprep.subr.mxu0 0.0
  %7381 = vmatpush1.xpose.msra.mxu0 0.0
  %7382 = vmatprep.subr.mxu0 0.0
  %7383 = vmatpush1.xpose.msra.mxu0 0.0
  %7384 = vmatprep.subr.mxu0 0.0
  %7385 = vmatpush1.xpose.msra.mxu0 0.0
  %7386 = vmatprep.subr.mxu0 0.0
  %7387 = vmatpush1.xpose.msra.mxu0 0.0
  %7388 = vmatprep.subr.mxu0 0.0
  %7389 = vmatpush1.xpose.msra.mxu0 0.0
  %7390 = vmatprep.subr.mxu0 0.0
  %7391 = vmatpush1.xpose.msra.mxu0 0.0
  %7392 = vmatprep.subr.mxu0 0.0
  %7393 = vmatpush1.xpose.msra.mxu0 0.0
  %7394 = vmatprep.subr.mxu0 0.0
  %7395 = vmatpush1.xpose.msra.mxu0 0.0
  %7396 = vmatprep.subr.mxu0 0.0
  %7397 = vmatpush1.xpose.msra.mxu0 0.0
  %7398 = vmatprep.subr.mxu0 0.0
  %7399 = vmatpush1.xpose.msra.mxu0 0.0
  %7400 = vmatprep.subr.mxu0 0.0
  %7401 = vmatpush1.xpose.msra.mxu0 0.0
  %7402 = vmatprep.subr.mxu0 0.0
  %7403 = vmatpush1.xpose.msra.mxu0 0.0
  %7404 = vmatprep.mubr.f32.mxu0 0.0
  %7405 = vmatmul.mubr.f32.gmra.mrb[0].mxu0 %v7332
  %v7406 = vpop.f32.mrb[0].mxu0
  %v7407 = vadd.f32 0.0, %v7406
  %v7408 = vpop.f32.mrb[0].mxu0
  %7409 = vmatprep.mubr.f32.mxu0 0.0
  %7410 = vmatmul.mubr.f32.gmra.mrb[0].mxu0 %v7334
  %v7411 = vpop.f32.mrb[0].mxu0
  %v7412 = vadd.f32 0.0, %v7411
  %v7413 = vpop.f32.mrb[0].mxu0
  %7414 = vdwg.mxu0
  %7415 = vrot.lane.b32.xlu0 %v378, 48
  %v7416 = vpop.permute.xlu0 %7415
  %7417 = vrot.lane.b32.xlu0 %v379, 48
  %v7418 = vpop.permute.xlu0 %7417
  %7419 = vrot.lane.b32.xlu0 %v378, 96
  %v7420 = vpop.permute.xlu0 %7419
  %7421 = vrot.lane.b32.xlu0 %v379, 96
  %v7422 = vpop.permute.xlu0 %7421
  %v7423 = vsel %vm412, %v7416, 0
  %v7425 = vsel %vm412, %v7418, 0
  %v7427 = vsel %vm412, %v7420, 0
  %v7429 = vsel %vm412, %v7422, 0
  %7431 = vmatprep.subr.mxu0 0.0
  %7432 = vmatpush1.xpose.msra.mxu0 %v7427
  %7433 = vmatprep.subr.mxu0 0.0
  %7434 = vmatpush1.xpose.msra.mxu0 %v7429
  %7435 = vmatprep.subr.mxu0 0.0
  %7436 = vmatpush1.xpose.msra.mxu0 0.0
  %7437 = vmatprep.subr.mxu0 0.0
  %7438 = vmatpush1.xpose.msra.mxu0 0.0
  %7439 = vmatprep.subr.mxu0 0.0
  %7440 = vmatpush1.xpose.msra.mxu0 0.0
  %7441 = vmatprep.subr.mxu0 0.0
  %7442 = vmatpush1.xpose.msra.mxu0 0.0
  %7443 = vmatprep.subr.mxu0 0.0
  %7444 = vmatpush1.xpose.msra.mxu0 0.0
  %7445 = vmatprep.subr.mxu0 0.0
  %7446 = vmatpush1.xpose.msra.mxu0 0.0
  %7447 = vmatprep.subr.mxu0 0.0
  %7448 = vmatpush1.xpose.msra.mxu0 0.0
  %7449 = vmatprep.subr.mxu0 0.0
  %7450 = vmatpush1.xpose.msra.mxu0 0.0
  %7451 = vmatprep.subr.mxu0 0.0
  %7452 = vmatpush1.xpose.msra.mxu0 0.0
  %7453 = vmatprep.subr.mxu0 0.0
  %7454 = vmatpush1.xpose.msra.mxu0 0.0
  %7455 = vmatprep.subr.mxu0 0.0
  %7456 = vmatpush1.xpose.msra.mxu0 0.0
  %7457 = vmatprep.subr.mxu0 0.0
  %7458 = vmatpush1.xpose.msra.mxu0 0.0
  %7459 = vmatprep.subr.mxu0 0.0
  %7460 = vmatpush1.xpose.msra.mxu0 0.0
  %7461 = vmatprep.subr.mxu0 0.0
  %7462 = vmatpush1.xpose.msra.mxu0 0.0
  %7463 = vmatprep.subr.mxu0 0.0
  %7464 = vmatpush1.xpose.msra.mxu0 0.0
  %7465 = vmatprep.subr.mxu0 0.0
  %7466 = vmatpush1.xpose.msra.mxu0 0.0
  %7467 = vmatprep.subr.mxu0 0.0
  %7468 = vmatpush1.xpose.msra.mxu0 0.0
  %7469 = vmatprep.subr.mxu0 0.0
  %7470 = vmatpush1.xpose.msra.mxu0 0.0
  %7471 = vmatprep.subr.mxu0 0.0
  %7472 = vmatpush1.xpose.msra.mxu0 0.0
  %7473 = vmatprep.subr.mxu0 0.0
  %7474 = vmatpush1.xpose.msra.mxu0 0.0
  %7475 = vmatprep.subr.mxu0 0.0
  %7476 = vmatpush1.xpose.msra.mxu0 0.0
  %7477 = vmatprep.subr.mxu0 0.0
  %7478 = vmatpush1.xpose.msra.mxu0 0.0
  %7479 = vmatprep.subr.mxu0 0.0
  %7480 = vmatpush1.xpose.msra.mxu0 0.0
  %7481 = vmatprep.subr.mxu0 0.0
  %7482 = vmatpush1.xpose.msra.mxu0 0.0
  %7483 = vmatprep.subr.mxu0 0.0
  %7484 = vmatpush1.xpose.msra.mxu0 0.0
  %7485 = vmatprep.subr.mxu0 0.0
  %7486 = vmatpush1.xpose.msra.mxu0 0.0
  %7487 = vmatprep.subr.mxu0 0.0
  %7488 = vmatpush1.xpose.msra.mxu0 0.0
  %7489 = vmatprep.subr.mxu0 0.0
  %7490 = vmatpush1.xpose.msra.mxu0 0.0
  %7491 = vmatprep.subr.mxu0 0.0
  %7492 = vmatpush1.xpose.msra.mxu0 0.0
  %7493 = vmatprep.subr.mxu0 0.0
  %7494 = vmatpush1.xpose.msra.mxu0 0.0
  %7495 = vmatprep.mubr.f32.mxu0 0.0
  %7496 = vmatmul.mubr.f32.gmra.mrb[0].mxu0 %v7423
  %v7497 = vpop.f32.mrb[0].mxu0
  %v7498 = vadd.f32 0.0, %v7497
  %v7499 = vpop.f32.mrb[0].mxu0
  %7500 = vmatprep.mubr.f32.mxu0 0.0
  %7501 = vmatmul.mubr.f32.gmra.mrb[0].mxu0 %v7425
  %v7502 = vpop.f32.mrb[0].mxu0
  %v7503 = vadd.f32 0.0, %v7502
  %v7504 = vpop.f32.mrb[0].mxu0
  %7505 = vdwg.mxu0
  %7506 = vrot.lane.b32.xlu0 %v380, 48
  %v7507 = vpop.permute.xlu0 %7506
  %7508 = vrot.lane.b32.xlu0 %v381, 48
  %v7509 = vpop.permute.xlu0 %7508
  %7510 = vrot.lane.b32.xlu0 %v380, 96
  %v7511 = vpop.permute.xlu0 %7510
  %7512 = vrot.lane.b32.xlu0 %v381, 96
  %v7513 = vpop.permute.xlu0 %7512
  %v7514 = vsel %vm412, %v7507, 0
  %v7516 = vsel %vm412, %v7509, 0
  %v7518 = vsel %vm412, %v7511, 0
  %v7520 = vsel %vm412, %v7513, 0
  %7522 = vmatprep.subr.mxu0 0.0
  %7523 = vmatpush1.xpose.msra.mxu0 %v7518
  %7524 = vmatprep.subr.mxu0 0.0
  %7525 = vmatpush1.xpose.msra.mxu0 %v7520
  %7526 = vmatprep.subr.mxu0 0.0
  %7527 = vmatpush1.xpose.msra.mxu0 0.0
  %7528 = vmatprep.subr.mxu0 0.0
  %7529 = vmatpush1.xpose.msra.mxu0 0.0
  %7530 = vmatprep.subr.mxu0 0.0
  %7531 = vmatpush1.xpose.msra.mxu0 0.0
  %7532 = vmatprep.subr.mxu0 0.0
  %7533 = vmatpush1.xpose.msra.mxu0 0.0
  %7534 = vmatprep.subr.mxu0 0.0
  %7535 = vmatpush1.xpose.msra.mxu0 0.0
  %7536 = vmatprep.subr.mxu0 0.0
  %7537 = vmatpush1.xpose.msra.mxu0 0.0
  %7538 = vmatprep.subr.mxu0 0.0
  %7539 = vmatpush1.xpose.msra.mxu0 0.0
  %7540 = vmatprep.subr.mxu0 0.0
  %7541 = vmatpush1.xpose.msra.mxu0 0.0
  %7542 = vmatprep.subr.mxu0 0.0
  %7543 = vmatpush1.xpose.msra.mxu0 0.0
  %7544 = vmatprep.subr.mxu0 0.0
  %7545 = vmatpush1.xpose.msra.mxu0 0.0
  %7546 = vmatprep.subr.mxu0 0.0
  %7547 = vmatpush1.xpose.msra.mxu0 0.0
  %7548 = vmatprep.subr.mxu0 0.0
  %7549 = vmatpush1.xpose.msra.mxu0 0.0
  %7550 = vmatprep.subr.mxu0 0.0
  %7551 = vmatpush1.xpose.msra.mxu0 0.0
  %7552 = vmatprep.subr.mxu0 0.0
  %7553 = vmatpush1.xpose.msra.mxu0 0.0
  %7554 = vmatprep.subr.mxu0 0.0
  %7555 = vmatpush1.xpose.msra.mxu0 0.0
  %7556 = vmatprep.subr.mxu0 0.0
  %7557 = vmatpush1.xpose.msra.mxu0 0.0
  %7558 = vmatprep.subr.mxu0 0.0
  %7559 = vmatpush1.xpose.msra.mxu0 0.0
  %7560 = vmatprep.subr.mxu0 0.0
  %7561 = vmatpush1.xpose.msra.mxu0 0.0
  %7562 = vmatprep.subr.mxu0 0.0
  %7563 = vmatpush1.xpose.msra.mxu0 0.0
  %7564 = vmatprep.subr.mxu0 0.0
  %7565 = vmatpush1.xpose.msra.mxu0 0.0
  %7566 = vmatprep.subr.mxu0 0.0
  %7567 = vmatpush1.xpose.msra.mxu0 0.0
  %7568 = vmatprep.subr.mxu0 0.0
  %7569 = vmatpush1.xpose.msra.mxu0 0.0
  %7570 = vmatprep.subr.mxu0 0.0
  %7571 = vmatpush1.xpose.msra.mxu0 0.0
  %7572 = vmatprep.subr.mxu0 0.0
  %7573 = vmatpush1.xpose.msra.mxu0 0.0
  %7574 = vmatprep.subr.mxu0 0.0
  %7575 = vmatpush1.xpose.msra.mxu0 0.0
  %7576 = vmatprep.subr.mxu0 0.0
  %7577 = vmatpush1.xpose.msra.mxu0 0.0
  %7578 = vmatprep.subr.mxu0 0.0
  %7579 = vmatpush1.xpose.msra.mxu0 0.0
  %7580 = vmatprep.subr.mxu0 0.0
  %7581 = vmatpush1.xpose.msra.mxu0 0.0
  %7582 = vmatprep.subr.mxu0 0.0
  %7583 = vmatpush1.xpose.msra.mxu0 0.0
  %7584 = vmatprep.subr.mxu0 0.0
  %7585 = vmatpush1.xpose.msra.mxu0 0.0
  %7586 = vmatprep.mubr.f32.mxu0 0.0
  %7587 = vmatmul.mubr.f32.gmra.mrb[0].mxu0 %v7514
  %v7588 = vpop.f32.mrb[0].mxu0
  %v7589 = vadd.f32 0.0, %v7588
  %v7590 = vpop.f32.mrb[0].mxu0
  %7591 = vmatprep.mubr.f32.mxu0 0.0
  %7592 = vmatmul.mubr.f32.gmra.mrb[0].mxu0 %v7516
  %v7593 = vpop.f32.mrb[0].mxu0
  %v7594 = vadd.f32 0.0, %v7593
  %v7595 = vpop.f32.mrb[0].mxu0
  %7596 = vdwg.mxu0
  %7597 = vrot.lane.b32.xlu0 %v382, 48
  %v7598 = vpop.permute.xlu0 %7597
  %7599 = vrot.lane.b32.xlu0 %v383, 48
  %v7600 = vpop.permute.xlu0 %7599
  %7601 = vrot.lane.b32.xlu0 %v382, 96
  %v7602 = vpop.permute.xlu0 %7601
  %7603 = vrot.lane.b32.xlu0 %v383, 96
  %v7604 = vpop.permute.xlu0 %7603
  %v7605 = vsel %vm412, %v7598, 0
  %v7607 = vsel %vm412, %v7600, 0
  %v7609 = vsel %vm412, %v7602, 0
  %v7611 = vsel %vm412, %v7604, 0
  %7613 = vmatprep.subr.mxu0 0.0
  %7614 = vmatpush1.xpose.msra.mxu0 %v7609
  %7615 = vmatprep.subr.mxu0 0.0
  %7616 = vmatpush1.xpose.msra.mxu0 %v7611
  %7617 = vmatprep.subr.mxu0 0.0
  %7618 = vmatpush1.xpose.msra.mxu0 0.0
  %7619 = vmatprep.subr.mxu0 0.0
  %7620 = vmatpush1.xpose.msra.mxu0 0.0
  %7621 = vmatprep.subr.mxu0 0.0
  %7622 = vmatpush1.xpose.msra.mxu0 0.0
  %7623 = vmatprep.subr.mxu0 0.0
  %7624 = vmatpush1.xpose.msra.mxu0 0.0
  %7625 = vmatprep.subr.mxu0 0.0
  %7626 = vmatpush1.xpose.msra.mxu0 0.0
  %7627 = vmatprep.subr.mxu0 0.0
  %7628 = vmatpush1.xpose.msra.mxu0 0.0
  %7629 = vmatprep.subr.mxu0 0.0
  %7630 = vmatpush1.xpose.msra.mxu0 0.0
  %7631 = vmatprep.subr.mxu0 0.0
  %7632 = vmatpush1.xpose.msra.mxu0 0.0
  %7633 = vmatprep.subr.mxu0 0.0
  %7634 = vmatpush1.xpose.msra.mxu0 0.0
  %7635 = vmatprep.subr.mxu0 0.0
  %7636 = vmatpush1.xpose.msra.mxu0 0.0
  %7637 = vmatprep.subr.mxu0 0.0
  %7638 = vmatpush1.xpose.msra.mxu0 0.0
  %7639 = vmatprep.subr.mxu0 0.0
  %7640 = vmatpush1.xpose.msra.mxu0 0.0
  %7641 = vmatprep.subr.mxu0 0.0
  %7642 = vmatpush1.xpose.msra.mxu0 0.0
  %7643 = vmatprep.subr.mxu0 0.0
  %7644 = vmatpush1.xpose.msra.mxu0 0.0
  %7645 = vmatprep.subr.mxu0 0.0
  %7646 = vmatpush1.xpose.msra.mxu0 0.0
  %7647 = vmatprep.subr.mxu0 0.0
  %7648 = vmatpush1.xpose.msra.mxu0 0.0
  %7649 = vmatprep.subr.mxu0 0.0
  %7650 = vmatpush1.xpose.msra.mxu0 0.0
  %7651 = vmatprep.subr.mxu0 0.0
  %7652 = vmatpush1.xpose.msra.mxu0 0.0
  %7653 = vmatprep.subr.mxu0 0.0
  %7654 = vmatpush1.xpose.msra.mxu0 0.0
  %7655 = vmatprep.subr.mxu0 0.0
  %7656 = vmatpush1.xpose.msra.mxu0 0.0
  %7657 = vmatprep.subr.mxu0 0.0
  %7658 = vmatpush1.xpose.msra.mxu0 0.0
  %7659 = vmatprep.subr.mxu0 0.0
  %7660 = vmatpush1.xpose.msra.mxu0 0.0
  %7661 = vmatprep.subr.mxu0 0.0
  %7662 = vmatpush1.xpose.msra.mxu0 0.0
  %7663 = vmatprep.subr.mxu0 0.0
  %7664 = vmatpush1.xpose.msra.mxu0 0.0
  %7665 = vmatprep.subr.mxu0 0.0
  %7666 = vmatpush1.xpose.msra.mxu0 0.0
  %7667 = vmatprep.subr.mxu0 0.0
  %7668 = vmatpush1.xpose.msra.mxu0 0.0
  %7669 = vmatprep.subr.mxu0 0.0
  %7670 = vmatpush1.xpose.msra.mxu0 0.0
  %7671 = vmatprep.subr.mxu0 0.0
  %7672 = vmatpush1.xpose.msra.mxu0 0.0
  %7673 = vmatprep.subr.mxu0 0.0
  %7674 = vmatpush1.xpose.msra.mxu0 0.0
  %7675 = vmatprep.subr.mxu0 0.0
  %7676 = vmatpush1.xpose.msra.mxu0 0.0
  %7677 = vmatprep.mubr.f32.mxu0 0.0
  %7678 = vmatmul.mubr.f32.gmra.mrb[0].mxu0 %v7605
  %v7679 = vpop.f32.mrb[0].mxu0
  %v7680 = vadd.f32 0.0, %v7679
  %v7681 = vpop.f32.mrb[0].mxu0
  %7682 = vmatprep.mubr.f32.mxu0 0.0
  %7683 = vmatmul.mubr.f32.gmra.mrb[0].mxu0 %v7607
  %v7684 = vpop.f32.mrb[0].mxu0
  %v7685 = vadd.f32 0.0, %v7684
  %v7686 = vpop.f32.mrb[0].mxu0
  %7687 = vdwg.mxu0
  %7688 = vrot.lane.b32.xlu0 %v384, 48
  %v7689 = vpop.permute.xlu0 %7688
  %7690 = vrot.lane.b32.xlu0 %v385, 48
  %v7691 = vpop.permute.xlu0 %7690
  %7692 = vrot.lane.b32.xlu0 %v384, 96
  %v7693 = vpop.permute.xlu0 %7692
  %7694 = vrot.lane.b32.xlu0 %v385, 96
  %v7695 = vpop.permute.xlu0 %7694
  %v7696 = vsel %vm412, %v7689, 0
  %v7698 = vsel %vm412, %v7691, 0
  %v7700 = vsel %vm412, %v7693, 0
  %v7702 = vsel %vm412, %v7695, 0
  %7704 = vmatprep.subr.mxu0 0.0
  %7705 = vmatpush1.xpose.msra.mxu0 %v7700
  %7706 = vmatprep.subr.mxu0 0.0
  %7707 = vmatpush1.xpose.msra.mxu0 %v7702
  %7708 = vmatprep.subr.mxu0 0.0
  %7709 = vmatpush1.xpose.msra.mxu0 0.0
  %7710 = vmatprep.subr.mxu0 0.0
  %7711 = vmatpush1.xpose.msra.mxu0 0.0
  %7712 = vmatprep.subr.mxu0 0.0
  %7713 = vmatpush1.xpose.msra.mxu0 0.0
  %7714 = vmatprep.subr.mxu0 0.0
  %7715 = vmatpush1.xpose.msra.mxu0 0.0
  %7716 = vmatprep.subr.mxu0 0.0
  %7717 = vmatpush1.xpose.msra.mxu0 0.0
  %7718 = vmatprep.subr.mxu0 0.0
  %7719 = vmatpush1.xpose.msra.mxu0 0.0
  %7720 = vmatprep.subr.mxu0 0.0
  %7721 = vmatpush1.xpose.msra.mxu0 0.0
  %7722 = vmatprep.subr.mxu0 0.0
  %7723 = vmatpush1.xpose.msra.mxu0 0.0
  %7724 = vmatprep.subr.mxu0 0.0
  %7725 = vmatpush1.xpose.msra.mxu0 0.0
  %7726 = vmatprep.subr.mxu0 0.0
  %7727 = vmatpush1.xpose.msra.mxu0 0.0
  %7728 = vmatprep.subr.mxu0 0.0
  %7729 = vmatpush1.xpose.msra.mxu0 0.0
  %7730 = vmatprep.subr.mxu0 0.0
  %7731 = vmatpush1.xpose.msra.mxu0 0.0
  %7732 = vmatprep.subr.mxu0 0.0
  %7733 = vmatpush1.xpose.msra.mxu0 0.0
  %7734 = vmatprep.subr.mxu0 0.0
  %7735 = vmatpush1.xpose.msra.mxu0 0.0
  %7736 = vmatprep.subr.mxu0 0.0
  %7737 = vmatpush1.xpose.msra.mxu0 0.0
  %7738 = vmatprep.subr.mxu0 0.0
  %7739 = vmatpush1.xpose.msra.mxu0 0.0
  %7740 = vmatprep.subr.mxu0 0.0
  %7741 = vmatpush1.xpose.msra.mxu0 0.0
  %7742 = vmatprep.subr.mxu0 0.0
  %7743 = vmatpush1.xpose.msra.mxu0 0.0
  %7744 = vmatprep.subr.mxu0 0.0
  %7745 = vmatpush1.xpose.msra.mxu0 0.0
  %7746 = vmatprep.subr.mxu0 0.0
  %7747 = vmatpush1.xpose.msra.mxu0 0.0
  %7748 = vmatprep.subr.mxu0 0.0
  %7749 = vmatpush1.xpose.msra.mxu0 0.0
  %7750 = vmatprep.subr.mxu0 0.0
  %7751 = vmatpush1.xpose.msra.mxu0 0.0
  %7752 = vmatprep.subr.mxu0 0.0
  %7753 = vmatpush1.xpose.msra.mxu0 0.0
  %7754 = vmatprep.subr.mxu0 0.0
  %7755 = vmatpush1.xpose.msra.mxu0 0.0
  %7756 = vmatprep.subr.mxu0 0.0
  %7757 = vmatpush1.xpose.msra.mxu0 0.0
  %7758 = vmatprep.subr.mxu0 0.0
  %7759 = vmatpush1.xpose.msra.mxu0 0.0
  %7760 = vmatprep.subr.mxu0 0.0
  %7761 = vmatpush1.xpose.msra.mxu0 0.0
  %7762 = vmatprep.subr.mxu0 0.0
  %7763 = vmatpush1.xpose.msra.mxu0 0.0
  %7764 = vmatprep.subr.mxu0 0.0
  %7765 = vmatpush1.xpose.msra.mxu0 0.0
  %7766 = vmatprep.subr.mxu0 0.0
  %7767 = vmatpush1.xpose.msra.mxu0 0.0
  %7768 = vmatprep.mubr.f32.mxu0 0.0
  %7769 = vmatmul.mubr.f32.gmra.mrb[0].mxu0 %v7696
  %v7770 = vpop.f32.mrb[0].mxu0
  %v7771 = vadd.f32 0.0, %v7770
  %v7772 = vpop.f32.mrb[0].mxu0
  %7773 = vmatprep.mubr.f32.mxu0 0.0
  %7774 = vmatmul.mubr.f32.gmra.mrb[0].mxu0 %v7698
  %v7775 = vpop.f32.mrb[0].mxu0
  %v7776 = vadd.f32 0.0, %v7775
  %v7777 = vpop.f32.mrb[0].mxu0
  %7778 = vdwg.mxu0
  %7779 = vrot.lane.b32.xlu0 %v386, 48
  %v7780 = vpop.permute.xlu0 %7779
  %7781 = vrot.lane.b32.xlu0 %v387, 48
  %v7782 = vpop.permute.xlu0 %7781
  %7783 = vrot.lane.b32.xlu0 %v386, 96
  %v7784 = vpop.permute.xlu0 %7783
  %7785 = vrot.lane.b32.xlu0 %v387, 96
  %v7786 = vpop.permute.xlu0 %7785
  %v7787 = vsel %vm412, %v7780, 0
  %v7789 = vsel %vm412, %v7782, 0
  %v7791 = vsel %vm412, %v7784, 0
  %v7793 = vsel %vm412, %v7786, 0
  %7795 = vmatprep.subr.mxu0 0.0
  %7796 = vmatpush1.xpose.msra.mxu0 %v7791
  %7797 = vmatprep.subr.mxu0 0.0
  %7798 = vmatpush1.xpose.msra.mxu0 %v7793
  %7799 = vmatprep.subr.mxu0 0.0
  %7800 = vmatpush1.xpose.msra.mxu0 0.0
  %7801 = vmatprep.subr.mxu0 0.0
  %7802 = vmatpush1.xpose.msra.mxu0 0.0
  %7803 = vmatprep.subr.mxu0 0.0
  %7804 = vmatpush1.xpose.msra.mxu0 0.0
  %7805 = vmatprep.subr.mxu0 0.0
  %7806 = vmatpush1.xpose.msra.mxu0 0.0
  %7807 = vmatprep.subr.mxu0 0.0
  %7808 = vmatpush1.xpose.msra.mxu0 0.0
  %7809 = vmatprep.subr.mxu0 0.0
  %7810 = vmatpush1.xpose.msra.mxu0 0.0
  %7811 = vmatprep.subr.mxu0 0.0
  %7812 = vmatpush1.xpose.msra.mxu0 0.0
  %7813 = vmatprep.subr.mxu0 0.0
  %7814 = vmatpush1.xpose.msra.mxu0 0.0
  %7815 = vmatprep.subr.mxu0 0.0
  %7816 = vmatpush1.xpose.msra.mxu0 0.0
  %7817 = vmatprep.subr.mxu0 0.0
  %7818 = vmatpush1.xpose.msra.mxu0 0.0
  %7819 = vmatprep.subr.mxu0 0.0
  %7820 = vmatpush1.xpose.msra.mxu0 0.0
  %7821 = vmatprep.subr.mxu0 0.0
  %7822 = vmatpush1.xpose.msra.mxu0 0.0
  %7823 = vmatprep.subr.mxu0 0.0
  %7824 = vmatpush1.xpose.msra.mxu0 0.0
  %7825 = vmatprep.subr.mxu0 0.0
  %7826 = vmatpush1.xpose.msra.mxu0 0.0
  %7827 = vmatprep.subr.mxu0 0.0
  %7828 = vmatpush1.xpose.msra.mxu0 0.0
  %7829 = vmatprep.subr.mxu0 0.0
  %7830 = vmatpush1.xpose.msra.mxu0 0.0
  %7831 = vmatprep.subr.mxu0 0.0
  %7832 = vmatpush1.xpose.msra.mxu0 0.0
  %7833 = vmatprep.subr.mxu0 0.0
  %7834 = vmatpush1.xpose.msra.mxu0 0.0
  %7835 = vmatprep.subr.mxu0 0.0
  %7836 = vmatpush1.xpose.msra.mxu0 0.0
  %7837 = vmatprep.subr.mxu0 0.0
  %7838 = vmatpush1.xpose.msra.mxu0 0.0
  %7839 = vmatprep.subr.mxu0 0.0
  %7840 = vmatpush1.xpose.msra.mxu0 0.0
  %7841 = vmatprep.subr.mxu0 0.0
  %7842 = vmatpush1.xpose.msra.mxu0 0.0
  %7843 = vmatprep.subr.mxu0 0.0
  %7844 = vmatpush1.xpose.msra.mxu0 0.0
  %7845 = vmatprep.subr.mxu0 0.0
  %7846 = vmatpush1.xpose.msra.mxu0 0.0
  %7847 = vmatprep.subr.mxu0 0.0
  %7848 = vmatpush1.xpose.msra.mxu0 0.0
  %7849 = vmatprep.subr.mxu0 0.0
  %7850 = vmatpush1.xpose.msra.mxu0 0.0
  %7851 = vmatprep.subr.mxu0 0.0
  %7852 = vmatpush1.xpose.msra.mxu0 0.0
  %7853 = vmatprep.subr.mxu0 0.0
  %7854 = vmatpush1.xpose.msra.mxu0 0.0
  %7855 = vmatprep.subr.mxu0 0.0
  %7856 = vmatpush1.xpose.msra.mxu0 0.0
  %7857 = vmatprep.subr.mxu0 0.0
  %7858 = vmatpush1.xpose.msra.mxu0 0.0
  %7859 = vmatprep.mubr.f32.mxu0 0.0
  %7860 = vmatmul.mubr.f32.gmra.mrb[0].mxu0 %v7787
  %v7861 = vpop.f32.mrb[0].mxu0
  %v7862 = vadd.f32 0.0, %v7861
  %v7863 = vpop.f32.mrb[0].mxu0
  %7864 = vmatprep.mubr.f32.mxu0 0.0
  %7865 = vmatmul.mubr.f32.gmra.mrb[0].mxu0 %v7789
  %v7866 = vpop.f32.mrb[0].mxu0
  %v7867 = vadd.f32 0.0, %v7866
  %v7868 = vpop.f32.mrb[0].mxu0
  %7869 = vdwg.mxu0
  %7870 = vrot.lane.b32.xlu0 %v388, 48
  %v7871 = vpop.permute.xlu0 %7870
  %7872 = vrot.lane.b32.xlu0 %v389, 48
  %v7873 = vpop.permute.xlu0 %7872
  %7874 = vrot.lane.b32.xlu0 %v388, 96
  %v7875 = vpop.permute.xlu0 %7874
  %7876 = vrot.lane.b32.xlu0 %v389, 96
  %v7877 = vpop.permute.xlu0 %7876
  %v7878 = vsel %vm412, %v7871, 0
  %v7880 = vsel %vm412, %v7873, 0
  %v7882 = vsel %vm412, %v7875, 0
  %v7884 = vsel %vm412, %v7877, 0
  %7886 = vmatprep.subr.mxu0 0.0
  %7887 = vmatpush1.xpose.msra.mxu0 %v7882
  %7888 = vmatprep.subr.mxu0 0.0
  %7889 = vmatpush1.xpose.msra.mxu0 %v7884
  %7890 = vmatprep.subr.mxu0 0.0
  %7891 = vmatpush1.xpose.msra.mxu0 0.0
  %7892 = vmatprep.subr.mxu0 0.0
  %7893 = vmatpush1.xpose.msra.mxu0 0.0
  %7894 = vmatprep.subr.mxu0 0.0
  %7895 = vmatpush1.xpose.msra.mxu0 0.0
  %7896 = vmatprep.subr.mxu0 0.0
  %7897 = vmatpush1.xpose.msra.mxu0 0.0
  %7898 = vmatprep.subr.mxu0 0.0
  %7899 = vmatpush1.xpose.msra.mxu0 0.0
  %7900 = vmatprep.subr.mxu0 0.0
  %7901 = vmatpush1.xpose.msra.mxu0 0.0
  %7902 = vmatprep.subr.mxu0 0.0
  %7903 = vmatpush1.xpose.msra.mxu0 0.0
  %7904 = vmatprep.subr.mxu0 0.0
  %7905 = vmatpush1.xpose.msra.mxu0 0.0
  %7906 = vmatprep.subr.mxu0 0.0
  %7907 = vmatpush1.xpose.msra.mxu0 0.0
  %7908 = vmatprep.subr.mxu0 0.0
  %7909 = vmatpush1.xpose.msra.mxu0 0.0
  %7910 = vmatprep.subr.mxu0 0.0
  %7911 = vmatpush1.xpose.msra.mxu0 0.0
  %7912 = vmatprep.subr.mxu0 0.0
  %7913 = vmatpush1.xpose.msra.mxu0 0.0
  %7914 = vmatprep.subr.mxu0 0.0
  %7915 = vmatpush1.xpose.msra.mxu0 0.0
  %7916 = vmatprep.subr.mxu0 0.0
  %7917 = vmatpush1.xpose.msra.mxu0 0.0
  %7918 = vmatprep.subr.mxu0 0.0
  %7919 = vmatpush1.xpose.msra.mxu0 0.0
  %7920 = vmatprep.subr.mxu0 0.0
  %7921 = vmatpush1.xpose.msra.mxu0 0.0
  %7922 = vmatprep.subr.mxu0 0.0
  %7923 = vmatpush1.xpose.msra.mxu0 0.0
  %7924 = vmatprep.subr.mxu0 0.0
  %7925 = vmatpush1.xpose.msra.mxu0 0.0
  %7926 = vmatprep.subr.mxu0 0.0
  %7927 = vmatpush1.xpose.msra.mxu0 0.0
  %7928 = vmatprep.subr.mxu0 0.0
  %7929 = vmatpush1.xpose.msra.mxu0 0.0
  %7930 = vmatprep.subr.mxu0 0.0
  %7931 = vmatpush1.xpose.msra.mxu0 0.0
  %7932 = vmatprep.subr.mxu0 0.0
  %7933 = vmatpush1.xpose.msra.mxu0 0.0
  %7934 = vmatprep.subr.mxu0 0.0
  %7935 = vmatpush1.xpose.msra.mxu0 0.0
  %7936 = vmatprep.subr.mxu0 0.0
  %7937 = vmatpush1.xpose.msra.mxu0 0.0
  %7938 = vmatprep.subr.mxu0 0.0
  %7939 = vmatpush1.xpose.msra.mxu0 0.0
  %7940 = vmatprep.subr.mxu0 0.0
  %7941 = vmatpush1.xpose.msra.mxu0 0.0
  %7942 = vmatprep.subr.mxu0 0.0
  %7943 = vmatpush1.xpose.msra.mxu0 0.0
  %7944 = vmatprep.subr.mxu0 0.0
  %7945 = vmatpush1.xpose.msra.mxu0 0.0
  %7946 = vmatprep.subr.mxu0 0.0
  %7947 = vmatpush1.xpose.msra.mxu0 0.0
  %7948 = vmatprep.subr.mxu0 0.0
  %7949 = vmatpush1.xpose.msra.mxu0 0.0
  %7950 = vmatprep.mubr.f32.mxu0 0.0
  %7951 = vmatmul.mubr.f32.gmra.mrb[0].mxu0 %v7878
  %v7952 = vpop.f32.mrb[0].mxu0
  %v7953 = vadd.f32 0.0, %v7952
  %v7954 = vpop.f32.mrb[0].mxu0
  %7955 = vmatprep.mubr.f32.mxu0 0.0
  %7956 = vmatmul.mubr.f32.gmra.mrb[0].mxu0 %v7880
  %v7957 = vpop.f32.mrb[0].mxu0
  %v7958 = vadd.f32 0.0, %v7957
  %v7959 = vpop.f32.mrb[0].mxu0
  %7960 = vdwg.mxu0
  %7961 = vrot.lane.b32.xlu0 %v390, 48
  %v7962 = vpop.permute.xlu0 %7961
  %7963 = vrot.lane.b32.xlu0 %v391, 48
  %v7964 = vpop.permute.xlu0 %7963
  %7965 = vrot.lane.b32.xlu0 %v390, 96
  %v7966 = vpop.permute.xlu0 %7965
  %7967 = vrot.lane.b32.xlu0 %v391, 96
  %v7968 = vpop.permute.xlu0 %7967
  %v7969 = vsel %vm412, %v7962, 0
  %v7971 = vsel %vm412, %v7964, 0
  %v7973 = vsel %vm412, %v7966, 0
  %v7975 = vsel %vm412, %v7968, 0
  %7977 = vmatprep.subr.mxu0 0.0
  %7978 = vmatpush1.xpose.msra.mxu0 %v7973
  %7979 = vmatprep.subr.mxu0 0.0
  %7980 = vmatpush1.xpose.msra.mxu0 %v7975
  %7981 = vmatprep.subr.mxu0 0.0
  %7982 = vmatpush1.xpose.msra.mxu0 0.0
  %7983 = vmatprep.subr.mxu0 0.0
  %7984 = vmatpush1.xpose.msra.mxu0 0.0
  %7985 = vmatprep.subr.mxu0 0.0
  %7986 = vmatpush1.xpose.msra.mxu0 0.0
  %7987 = vmatprep.subr.mxu0 0.0
  %7988 = vmatpush1.xpose.msra.mxu0 0.0
  %7989 = vmatprep.subr.mxu0 0.0
  %7990 = vmatpush1.xpose.msra.mxu0 0.0
  %7991 = vmatprep.subr.mxu0 0.0
  %7992 = vmatpush1.xpose.msra.mxu0 0.0
  %7993 = vmatprep.subr.mxu0 0.0
  %7994 = vmatpush1.xpose.msra.mxu0 0.0
  %7995 = vmatprep.subr.mxu0 0.0
  %7996 = vmatpush1.xpose.msra.mxu0 0.0
  %7997 = vmatprep.subr.mxu0 0.0
  %7998 = vmatpush1.xpose.msra.mxu0 0.0
  %7999 = vmatprep.subr.mxu0 0.0
  %8000 = vmatpush1.xpose.msra.mxu0 0.0
  %8001 = vmatprep.subr.mxu0 0.0
  %8002 = vmatpush1.xpose.msra.mxu0 0.0
  %8003 = vmatprep.subr.mxu0 0.0
  %8004 = vmatpush1.xpose.msra.mxu0 0.0
  %8005 = vmatprep.subr.mxu0 0.0
  %8006 = vmatpush1.xpose.msra.mxu0 0.0
  %8007 = vmatprep.subr.mxu0 0.0
  %8008 = vmatpush1.xpose.msra.mxu0 0.0
  %8009 = vmatprep.subr.mxu0 0.0
  %8010 = vmatpush1.xpose.msra.mxu0 0.0
  %8011 = vmatprep.subr.mxu0 0.0
  %8012 = vmatpush1.xpose.msra.mxu0 0.0
  %8013 = vmatprep.subr.mxu0 0.0
  %8014 = vmatpush1.xpose.msra.mxu0 0.0
  %8015 = vmatprep.subr.mxu0 0.0
  %8016 = vmatpush1.xpose.msra.mxu0 0.0
  %8017 = vmatprep.subr.mxu0 0.0
  %8018 = vmatpush1.xpose.msra.mxu0 0.0
  %8019 = vmatprep.subr.mxu0 0.0
  %8020 = vmatpush1.xpose.msra.mxu0 0.0
  %8021 = vmatprep.subr.mxu0 0.0
  %8022 = vmatpush1.xpose.msra.mxu0 0.0
  %8023 = vmatprep.subr.mxu0 0.0
  %8024 = vmatpush1.xpose.msra.mxu0 0.0
  %8025 = vmatprep.subr.mxu0 0.0
  %8026 = vmatpush1.xpose.msra.mxu0 0.0
  %8027 = vmatprep.subr.mxu0 0.0
  %8028 = vmatpush1.xpose.msra.mxu0 0.0
  %8029 = vmatprep.subr.mxu0 0.0
  %8030 = vmatpush1.xpose.msra.mxu0 0.0
  %8031 = vmatprep.subr.mxu0 0.0
  %8032 = vmatpush1.xpose.msra.mxu0 0.0
  %8033 = vmatprep.subr.mxu0 0.0
  %8034 = vmatpush1.xpose.msra.mxu0 0.0
  %8035 = vmatprep.subr.mxu0 0.0
  %8036 = vmatpush1.xpose.msra.mxu0 0.0
  %8037 = vmatprep.subr.mxu0 0.0
  %8038 = vmatpush1.xpose.msra.mxu0 0.0
  %8039 = vmatprep.subr.mxu0 0.0
  %8040 = vmatpush1.xpose.msra.mxu0 0.0
  %8041 = vmatprep.mubr.f32.mxu0 0.0
  %8042 = vmatmul.mubr.f32.gmra.mrb[0].mxu0 %v7969
  %v8043 = vpop.f32.mrb[0].mxu0
  %v8044 = vadd.f32 0.0, %v8043
  %v8045 = vpop.f32.mrb[0].mxu0
  %8046 = vmatprep.mubr.f32.mxu0 0.0
  %8047 = vmatmul.mubr.f32.gmra.mrb[0].mxu0 %v7971
  %v8048 = vpop.f32.mrb[0].mxu0
  %v8049 = vadd.f32 0.0, %v8048
  %v8050 = vpop.f32.mrb[0].mxu0
  %8051 = vdwg.mxu0
  %8052 = vrot.lane.b32.xlu0 %v392, 48
  %v8053 = vpop.permute.xlu0 %8052
  %8054 = vrot.lane.b32.xlu0 %v393, 48
  %v8055 = vpop.permute.xlu0 %8054
  %8056 = vrot.lane.b32.xlu0 %v392, 96
  %v8057 = vpop.permute.xlu0 %8056
  %8058 = vrot.lane.b32.xlu0 %v393, 96
  %v8059 = vpop.permute.xlu0 %8058
  %v8060 = vsel %vm412, %v8053, 0
  %v8062 = vsel %vm412, %v8055, 0
  %v8064 = vsel %vm412, %v8057, 0
  %v8066 = vsel %vm412, %v8059, 0
  %8068 = vmatprep.subr.mxu0 0.0
  %8069 = vmatpush1.xpose.msra.mxu0 %v8064
  %8070 = vmatprep.subr.mxu0 0.0
  %8071 = vmatpush1.xpose.msra.mxu0 %v8066
  %8072 = vmatprep.subr.mxu0 0.0
  %8073 = vmatpush1.xpose.msra.mxu0 0.0
  %8074 = vmatprep.subr.mxu0 0.0
  %8075 = vmatpush1.xpose.msra.mxu0 0.0
  %8076 = vmatprep.subr.mxu0 0.0
  %8077 = vmatpush1.xpose.msra.mxu0 0.0
  %8078 = vmatprep.subr.mxu0 0.0
  %8079 = vmatpush1.xpose.msra.mxu0 0.0
  %8080 = vmatprep.subr.mxu0 0.0
  %8081 = vmatpush1.xpose.msra.mxu0 0.0
  %8082 = vmatprep.subr.mxu0 0.0
  %8083 = vmatpush1.xpose.msra.mxu0 0.0
  %8084 = vmatprep.subr.mxu0 0.0
  %8085 = vmatpush1.xpose.msra.mxu0 0.0
  %8086 = vmatprep.subr.mxu0 0.0
  %8087 = vmatpush1.xpose.msra.mxu0 0.0
  %8088 = vmatprep.subr.mxu0 0.0
  %8089 = vmatpush1.xpose.msra.mxu0 0.0
  %8090 = vmatprep.subr.mxu0 0.0
  %8091 = vmatpush1.xpose.msra.mxu0 0.0
  %8092 = vmatprep.subr.mxu0 0.0
  %8093 = vmatpush1.xpose.msra.mxu0 0.0
  %8094 = vmatprep.subr.mxu0 0.0
  %8095 = vmatpush1.xpose.msra.mxu0 0.0
  %8096 = vmatprep.subr.mxu0 0.0
  %8097 = vmatpush1.xpose.msra.mxu0 0.0
  %8098 = vmatprep.subr.mxu0 0.0
  %8099 = vmatpush1.xpose.msra.mxu0 0.0
  %8100 = vmatprep.subr.mxu0 0.0
  %8101 = vmatpush1.xpose.msra.mxu0 0.0
  %8102 = vmatprep.subr.mxu0 0.0
  %8103 = vmatpush1.xpose.msra.mxu0 0.0
  %8104 = vmatprep.subr.mxu0 0.0
  %8105 = vmatpush1.xpose.msra.mxu0 0.0
  %8106 = vmatprep.subr.mxu0 0.0
  %8107 = vmatpush1.xpose.msra.mxu0 0.0
  %8108 = vmatprep.subr.mxu0 0.0
  %8109 = vmatpush1.xpose.msra.mxu0 0.0
  %8110 = vmatprep.subr.mxu0 0.0
  %8111 = vmatpush1.xpose.msra.mxu0 0.0
  %8112 = vmatprep.subr.mxu0 0.0
  %8113 = vmatpush1.xpose.msra.mxu0 0.0
  %8114 = vmatprep.subr.mxu0 0.0
  %8115 = vmatpush1.xpose.msra.mxu0 0.0
  %8116 = vmatprep.subr.mxu0 0.0
  %8117 = vmatpush1.xpose.msra.mxu0 0.0
  %8118 = vmatprep.subr.mxu0 0.0
  %8119 = vmatpush1.xpose.msra.mxu0 0.0
  %8120 = vmatprep.subr.mxu0 0.0
  %8121 = vmatpush1.xpose.msra.mxu0 0.0
  %8122 = vmatprep.subr.mxu0 0.0
  %8123 = vmatpush1.xpose.msra.mxu0 0.0
  %8124 = vmatprep.subr.mxu0 0.0
  %8125 = vmatpush1.xpose.msra.mxu0 0.0
  %8126 = vmatprep.subr.mxu0 0.0
  %8127 = vmatpush1.xpose.msra.mxu0 0.0
  %8128 = vmatprep.subr.mxu0 0.0
  %8129 = vmatpush1.xpose.msra.mxu0 0.0
  %8130 = vmatprep.subr.mxu0 0.0
  %8131 = vmatpush1.xpose.msra.mxu0 0.0
  %8132 = vmatprep.mubr.f32.mxu0 0.0
  %8133 = vmatmul.mubr.f32.gmra.mrb[0].mxu0 %v8060
  %v8134 = vpop.f32.mrb[0].mxu0
  %v8135 = vadd.f32 0.0, %v8134
  %v8136 = vpop.f32.mrb[0].mxu0
  %8137 = vmatprep.mubr.f32.mxu0 0.0
  %8138 = vmatmul.mubr.f32.gmra.mrb[0].mxu0 %v8062
  %v8139 = vpop.f32.mrb[0].mxu0
  %v8140 = vadd.f32 0.0, %v8139
  %v8141 = vpop.f32.mrb[0].mxu0
  %8142 = vdwg.mxu0
  %8143 = vrot.lane.b32.xlu0 %v394, 48
  %v8144 = vpop.permute.xlu0 %8143
  %8145 = vrot.lane.b32.xlu0 %v395, 48
  %v8146 = vpop.permute.xlu0 %8145
  %8147 = vrot.lane.b32.xlu0 %v394, 96
  %v8148 = vpop.permute.xlu0 %8147
  %8149 = vrot.lane.b32.xlu0 %v395, 96
  %v8150 = vpop.permute.xlu0 %8149
  %v8151 = vsel %vm412, %v8144, 0
  %v8153 = vsel %vm412, %v8146, 0
  %v8155 = vsel %vm412, %v8148, 0
  %v8157 = vsel %vm412, %v8150, 0
  %8159 = vmatprep.subr.mxu0 0.0
  %8160 = vmatpush1.xpose.msra.mxu0 %v8155
  %8161 = vmatprep.subr.mxu0 0.0
  %8162 = vmatpush1.xpose.msra.mxu0 %v8157
  %8163 = vmatprep.subr.mxu0 0.0
  %8164 = vmatpush1.xpose.msra.mxu0 0.0
  %8165 = vmatprep.subr.mxu0 0.0
  %8166 = vmatpush1.xpose.msra.mxu0 0.0
  %8167 = vmatprep.subr.mxu0 0.0
  %8168 = vmatpush1.xpose.msra.mxu0 0.0
  %8169 = vmatprep.subr.mxu0 0.0
  %8170 = vmatpush1.xpose.msra.mxu0 0.0
  %8171 = vmatprep.subr.mxu0 0.0
  %8172 = vmatpush1.xpose.msra.mxu0 0.0
  %8173 = vmatprep.subr.mxu0 0.0
  %8174 = vmatpush1.xpose.msra.mxu0 0.0
  %8175 = vmatprep.subr.mxu0 0.0
  %8176 = vmatpush1.xpose.msra.mxu0 0.0
  %8177 = vmatprep.subr.mxu0 0.0
  %8178 = vmatpush1.xpose.msra.mxu0 0.0
  %8179 = vmatprep.subr.mxu0 0.0
  %8180 = vmatpush1.xpose.msra.mxu0 0.0
  %8181 = vmatprep.subr.mxu0 0.0
  %8182 = vmatpush1.xpose.msra.mxu0 0.0
  %8183 = vmatprep.subr.mxu0 0.0
  %8184 = vmatpush1.xpose.msra.mxu0 0.0
  %8185 = vmatprep.subr.mxu0 0.0
  %8186 = vmatpush1.xpose.msra.mxu0 0.0
  %8187 = vmatprep.subr.mxu0 0.0
  %8188 = vmatpush1.xpose.msra.mxu0 0.0
  %8189 = vmatprep.subr.mxu0 0.0
  %8190 = vmatpush1.xpose.msra.mxu0 0.0
  %8191 = vmatprep.subr.mxu0 0.0
  %8192 = vmatpush1.xpose.msra.mxu0 0.0
  %8193 = vmatprep.subr.mxu0 0.0
  %8194 = vmatpush1.xpose.msra.mxu0 0.0
  %8195 = vmatprep.subr.mxu0 0.0
  %8196 = vmatpush1.xpose.msra.mxu0 0.0
  %8197 = vmatprep.subr.mxu0 0.0
  %8198 = vmatpush1.xpose.msra.mxu0 0.0
  %8199 = vmatprep.subr.mxu0 0.0
  %8200 = vmatpush1.xpose.msra.mxu0 0.0
  %8201 = vmatprep.subr.mxu0 0.0
  %8202 = vmatpush1.xpose.msra.mxu0 0.0
  %8203 = vmatprep.subr.mxu0 0.0
  %8204 = vmatpush1.xpose.msra.mxu0 0.0
  %8205 = vmatprep.subr.mxu0 0.0
  %8206 = vmatpush1.xpose.msra.mxu0 0.0
  %8207 = vmatprep.subr.mxu0 0.0
  %8208 = vmatpush1.xpose.msra.mxu0 0.0
  %8209 = vmatprep.subr.mxu0 0.0
  %8210 = vmatpush1.xpose.msra.mxu0 0.0
  %8211 = vmatprep.subr.mxu0 0.0
  %8212 = vmatpush1.xpose.msra.mxu0 0.0
  %8213 = vmatprep.subr.mxu0 0.0
  %8214 = vmatpush1.xpose.msra.mxu0 0.0
  %8215 = vmatprep.subr.mxu0 0.0
  %8216 = vmatpush1.xpose.msra.mxu0 0.0
  %8217 = vmatprep.subr.mxu0 0.0
  %8218 = vmatpush1.xpose.msra.mxu0 0.0
  %8219 = vmatprep.subr.mxu0 0.0
  %8220 = vmatpush1.xpose.msra.mxu0 0.0
  %8221 = vmatprep.subr.mxu0 0.0
  %8222 = vmatpush1.xpose.msra.mxu0 0.0
  %8223 = vmatprep.mubr.f32.mxu0 0.0
  %8224 = vmatmul.mubr.f32.gmra.mrb[0].mxu0 %v8151
  %v8225 = vpop.f32.mrb[0].mxu0
  %v8226 = vadd.f32 0.0, %v8225
  %v8227 = vpop.f32.mrb[0].mxu0
  %8228 = vmatprep.mubr.f32.mxu0 0.0
  %8229 = vmatmul.mubr.f32.gmra.mrb[0].mxu0 %v8153
  %v8230 = vpop.f32.mrb[0].mxu0
  %v8231 = vadd.f32 0.0, %v8230
  %v8232 = vpop.f32.mrb[0].mxu0
  %8233 = vdwg.mxu0
  %8234 = vrot.lane.b32.xlu0 %v396, 48
  %v8235 = vpop.permute.xlu0 %8234
  %8236 = vrot.lane.b32.xlu0 %v397, 48
  %v8237 = vpop.permute.xlu0 %8236
  %8238 = vrot.lane.b32.xlu0 %v396, 96
  %v8239 = vpop.permute.xlu0 %8238
  %8240 = vrot.lane.b32.xlu0 %v397, 96
  %v8241 = vpop.permute.xlu0 %8240
  %v8242 = vsel %vm412, %v8235, 0
  %v8244 = vsel %vm412, %v8237, 0
  %v8246 = vsel %vm412, %v8239, 0
  %v8248 = vsel %vm412, %v8241, 0
  %8250 = vmatprep.subr.mxu0 0.0
  %8251 = vmatpush1.xpose.msra.mxu0 %v8246
  %8252 = vmatprep.subr.mxu0 0.0
  %8253 = vmatpush1.xpose.msra.mxu0 %v8248
  %8254 = vmatprep.subr.mxu0 0.0
  %8255 = vmatpush1.xpose.msra.mxu0 0.0
  %8256 = vmatprep.subr.mxu0 0.0
  %8257 = vmatpush1.xpose.msra.mxu0 0.0
  %8258 = vmatprep.subr.mxu0 0.0
  %8259 = vmatpush1.xpose.msra.mxu0 0.0
  %8260 = vmatprep.subr.mxu0 0.0
  %8261 = vmatpush1.xpose.msra.mxu0 0.0
  %8262 = vmatprep.subr.mxu0 0.0
  %8263 = vmatpush1.xpose.msra.mxu0 0.0
  %8264 = vmatprep.subr.mxu0 0.0
  %8265 = vmatpush1.xpose.msra.mxu0 0.0
  %8266 = vmatprep.subr.mxu0 0.0
  %8267 = vmatpush1.xpose.msra.mxu0 0.0
  %8268 = vmatprep.subr.mxu0 0.0
  %8269 = vmatpush1.xpose.msra.mxu0 0.0
  %8270 = vmatprep.subr.mxu0 0.0
  %8271 = vmatpush1.xpose.msra.mxu0 0.0
  %8272 = vmatprep.subr.mxu0 0.0
  %8273 = vmatpush1.xpose.msra.mxu0 0.0
  %8274 = vmatprep.subr.mxu0 0.0
  %8275 = vmatpush1.xpose.msra.mxu0 0.0
  %8276 = vmatprep.subr.mxu0 0.0
  %8277 = vmatpush1.xpose.msra.mxu0 0.0
  %8278 = vmatprep.subr.mxu0 0.0
  %8279 = vmatpush1.xpose.msra.mxu0 0.0
  %8280 = vmatprep.subr.mxu0 0.0
  %8281 = vmatpush1.xpose.msra.mxu0 0.0
  %8282 = vmatprep.subr.mxu0 0.0
  %8283 = vmatpush1.xpose.msra.mxu0 0.0
  %8284 = vmatprep.subr.mxu0 0.0
  %8285 = vmatpush1.xpose.msra.mxu0 0.0
  %8286 = vmatprep.subr.mxu0 0.0
  %8287 = vmatpush1.xpose.msra.mxu0 0.0
  %8288 = vmatprep.subr.mxu0 0.0
  %8289 = vmatpush1.xpose.msra.mxu0 0.0
  %8290 = vmatprep.subr.mxu0 0.0
  %8291 = vmatpush1.xpose.msra.mxu0 0.0
  %8292 = vmatprep.subr.mxu0 0.0
  %8293 = vmatpush1.xpose.msra.mxu0 0.0
  %8294 = vmatprep.subr.mxu0 0.0
  %8295 = vmatpush1.xpose.msra.mxu0 0.0
  %8296 = vmatprep.subr.mxu0 0.0
  %8297 = vmatpush1.xpose.msra.mxu0 0.0
  %8298 = vmatprep.subr.mxu0 0.0
  %8299 = vmatpush1.xpose.msra.mxu0 0.0
  %8300 = vmatprep.subr.mxu0 0.0
  %8301 = vmatpush1.xpose.msra.mxu0 0.0
  %8302 = vmatprep.subr.mxu0 0.0
  %8303 = vmatpush1.xpose.msra.mxu0 0.0
  %8304 = vmatprep.subr.mxu0 0.0
  %8305 = vmatpush1.xpose.msra.mxu0 0.0
  %8306 = vmatprep.subr.mxu0 0.0
  %8307 = vmatpush1.xpose.msra.mxu0 0.0
  %8308 = vmatprep.subr.mxu0 0.0
  %8309 = vmatpush1.xpose.msra.mxu0 0.0
  %8310 = vmatprep.subr.mxu0 0.0
  %8311 = vmatpush1.xpose.msra.mxu0 0.0
  %8312 = vmatprep.subr.mxu0 0.0
  %8313 = vmatpush1.xpose.msra.mxu0 0.0
  %8314 = vmatprep.mubr.f32.mxu0 0.0
  %8315 = vmatmul.mubr.f32.gmra.mrb[0].mxu0 %v8242
  %v8316 = vpop.f32.mrb[0].mxu0
  %v8317 = vadd.f32 0.0, %v8316
  %v8318 = vpop.f32.mrb[0].mxu0
  %8319 = vmatprep.mubr.f32.mxu0 0.0
  %8320 = vmatmul.mubr.f32.gmra.mrb[0].mxu0 %v8244
  %v8321 = vpop.f32.mrb[0].mxu0
  %v8322 = vadd.f32 0.0, %v8321
  %v8323 = vpop.f32.mrb[0].mxu0
  %8324 = vdwg.mxu0
  %8325 = vrot.lane.b32.xlu0 %v398, 48
  %v8326 = vpop.permute.xlu0 %8325
  %8327 = vrot.lane.b32.xlu0 %v399, 48
  %v8328 = vpop.permute.xlu0 %8327
  %8329 = vrot.lane.b32.xlu0 %v398, 96
  %v8330 = vpop.permute.xlu0 %8329
  %8331 = vrot.lane.b32.xlu0 %v399, 96
  %v8332 = vpop.permute.xlu0 %8331
  %v8333 = vsel %vm412, %v8326, 0
  %v8335 = vsel %vm412, %v8328, 0
  %v8337 = vsel %vm412, %v8330, 0
  %v8339 = vsel %vm412, %v8332, 0
  %8341 = vmatprep.subr.mxu0 0.0
  %8342 = vmatpush1.xpose.msra.mxu0 %v8337
  %8343 = vmatprep.subr.mxu0 0.0
  %8344 = vmatpush1.xpose.msra.mxu0 %v8339
  %8345 = vmatprep.subr.mxu0 0.0
  %8346 = vmatpush1.xpose.msra.mxu0 0.0
  %8347 = vmatprep.subr.mxu0 0.0
  %8348 = vmatpush1.xpose.msra.mxu0 0.0
  %8349 = vmatprep.subr.mxu0 0.0
  %8350 = vmatpush1.xpose.msra.mxu0 0.0
  %8351 = vmatprep.subr.mxu0 0.0
  %8352 = vmatpush1.xpose.msra.mxu0 0.0
  %8353 = vmatprep.subr.mxu0 0.0
  %8354 = vmatpush1.xpose.msra.mxu0 0.0
  %8355 = vmatprep.subr.mxu0 0.0
  %8356 = vmatpush1.xpose.msra.mxu0 0.0
  %8357 = vmatprep.subr.mxu0 0.0
  %8358 = vmatpush1.xpose.msra.mxu0 0.0
  %8359 = vmatprep.subr.mxu0 0.0
  %8360 = vmatpush1.xpose.msra.mxu0 0.0
  %8361 = vmatprep.subr.mxu0 0.0
  %8362 = vmatpush1.xpose.msra.mxu0 0.0
  %8363 = vmatprep.subr.mxu0 0.0
  %8364 = vmatpush1.xpose.msra.mxu0 0.0
  %8365 = vmatprep.subr.mxu0 0.0
  %8366 = vmatpush1.xpose.msra.mxu0 0.0
  %8367 = vmatprep.subr.mxu0 0.0
  %8368 = vmatpush1.xpose.msra.mxu0 0.0
  %8369 = vmatprep.subr.mxu0 0.0
  %8370 = vmatpush1.xpose.msra.mxu0 0.0
  %8371 = vmatprep.subr.mxu0 0.0
  %8372 = vmatpush1.xpose.msra.mxu0 0.0
  %8373 = vmatprep.subr.mxu0 0.0
  %8374 = vmatpush1.xpose.msra.mxu0 0.0
  %8375 = vmatprep.subr.mxu0 0.0
  %8376 = vmatpush1.xpose.msra.mxu0 0.0
  %8377 = vmatprep.subr.mxu0 0.0
  %8378 = vmatpush1.xpose.msra.mxu0 0.0
  %8379 = vmatprep.subr.mxu0 0.0
  %8380 = vmatpush1.xpose.msra.mxu0 0.0
  %8381 = vmatprep.subr.mxu0 0.0
  %8382 = vmatpush1.xpose.msra.mxu0 0.0
  %8383 = vmatprep.subr.mxu0 0.0
  %8384 = vmatpush1.xpose.msra.mxu0 0.0
  %8385 = vmatprep.subr.mxu0 0.0
  %8386 = vmatpush1.xpose.msra.mxu0 0.0
  %8387 = vmatprep.subr.mxu0 0.0
  %8388 = vmatpush1.xpose.msra.mxu0 0.0
  %8389 = vmatprep.subr.mxu0 0.0
  %8390 = vmatpush1.xpose.msra.mxu0 0.0
  %8391 = vmatprep.subr.mxu0 0.0
  %8392 = vmatpush1.xpose.msra.mxu0 0.0
  %8393 = vmatprep.subr.mxu0 0.0
  %8394 = vmatpush1.xpose.msra.mxu0 0.0
  %8395 = vmatprep.subr.mxu0 0.0
  %8396 = vmatpush1.xpose.msra.mxu0 0.0
  %8397 = vmatprep.subr.mxu0 0.0
  %8398 = vmatpush1.xpose.msra.mxu0 0.0
  %8399 = vmatprep.subr.mxu0 0.0
  %8400 = vmatpush1.xpose.msra.mxu0 0.0
  %8401 = vmatprep.subr.mxu0 0.0
  %8402 = vmatpush1.xpose.msra.mxu0 0.0
  %8403 = vmatprep.subr.mxu0 0.0
  %8404 = vmatpush1.xpose.msra.mxu0 0.0
  %8405 = vmatprep.mubr.f32.mxu0 0.0
  %8406 = vmatmul.mubr.f32.gmra.mrb[0].mxu0 %v8333
  %v8407 = vpop.f32.mrb[0].mxu0
  %v8408 = vadd.f32 0.0, %v8407
  %v8409 = vpop.f32.mrb[0].mxu0
  %8410 = vmatprep.mubr.f32.mxu0 0.0
  %8411 = vmatmul.mubr.f32.gmra.mrb[0].mxu0 %v8335
  %v8412 = vpop.f32.mrb[0].mxu0
  %v8413 = vadd.f32 0.0, %v8412
  %v8414 = vpop.f32.mrb[0].mxu0
  %8415 = vdwg.mxu0
  %8416 = vrot.lane.b32.xlu0 %v400, 48
  %v8417 = vpop.permute.xlu0 %8416
  %8418 = vrot.lane.b32.xlu0 %v401, 48
  %v8419 = vpop.permute.xlu0 %8418
  %8420 = vrot.lane.b32.xlu0 %v400, 96
  %v8421 = vpop.permute.xlu0 %8420
  %8422 = vrot.lane.b32.xlu0 %v401, 96
  %v8423 = vpop.permute.xlu0 %8422
  %v8424 = vsel %vm412, %v8417, 0
  %v8426 = vsel %vm412, %v8419, 0
  %v8428 = vsel %vm412, %v8421, 0
  %v8430 = vsel %vm412, %v8423, 0
  %8432 = vmatprep.subr.mxu0 0.0
  %8433 = vmatpush1.xpose.msra.mxu0 %v8428
  %8434 = vmatprep.subr.mxu0 0.0
  %8435 = vmatpush1.xpose.msra.mxu0 %v8430
  %8436 = vmatprep.subr.mxu0 0.0
  %8437 = vmatpush1.xpose.msra.mxu0 0.0
  %8438 = vmatprep.subr.mxu0 0.0
  %8439 = vmatpush1.xpose.msra.mxu0 0.0
  %8440 = vmatprep.subr.mxu0 0.0
  %8441 = vmatpush1.xpose.msra.mxu0 0.0
  %8442 = vmatprep.subr.mxu0 0.0
  %8443 = vmatpush1.xpose.msra.mxu0 0.0
  %8444 = vmatprep.subr.mxu0 0.0
  %8445 = vmatpush1.xpose.msra.mxu0 0.0
  %8446 = vmatprep.subr.mxu0 0.0
  %8447 = vmatpush1.xpose.msra.mxu0 0.0
  %8448 = vmatprep.subr.mxu0 0.0
  %8449 = vmatpush1.xpose.msra.mxu0 0.0
  %8450 = vmatprep.subr.mxu0 0.0
  %8451 = vmatpush1.xpose.msra.mxu0 0.0
  %8452 = vmatprep.subr.mxu0 0.0
  %8453 = vmatpush1.xpose.msra.mxu0 0.0
  %8454 = vmatprep.subr.mxu0 0.0
  %8455 = vmatpush1.xpose.msra.mxu0 0.0
  %8456 = vmatprep.subr.mxu0 0.0
  %8457 = vmatpush1.xpose.msra.mxu0 0.0
  %8458 = vmatprep.subr.mxu0 0.0
  %8459 = vmatpush1.xpose.msra.mxu0 0.0
  %8460 = vmatprep.subr.mxu0 0.0
  %8461 = vmatpush1.xpose.msra.mxu0 0.0
  %8462 = vmatprep.subr.mxu0 0.0
  %8463 = vmatpush1.xpose.msra.mxu0 0.0
  %8464 = vmatprep.subr.mxu0 0.0
  %8465 = vmatpush1.xpose.msra.mxu0 0.0
  %8466 = vmatprep.subr.mxu0 0.0
  %8467 = vmatpush1.xpose.msra.mxu0 0.0
  %8468 = vmatprep.subr.mxu0 0.0
  %8469 = vmatpush1.xpose.msra.mxu0 0.0
  %8470 = vmatprep.subr.mxu0 0.0
  %8471 = vmatpush1.xpose.msra.mxu0 0.0
  %8472 = vmatprep.subr.mxu0 0.0
  %8473 = vmatpush1.xpose.msra.mxu0 0.0
  %8474 = vmatprep.subr.mxu0 0.0
  %8475 = vmatpush1.xpose.msra.mxu0 0.0
  %8476 = vmatprep.subr.mxu0 0.0
  %8477 = vmatpush1.xpose.msra.mxu0 0.0
  %8478 = vmatprep.subr.mxu0 0.0
  %8479 = vmatpush1.xpose.msra.mxu0 0.0
  %8480 = vmatprep.subr.mxu0 0.0
  %8481 = vmatpush1.xpose.msra.mxu0 0.0
  %8482 = vmatprep.subr.mxu0 0.0
  %8483 = vmatpush1.xpose.msra.mxu0 0.0
  %8484 = vmatprep.subr.mxu0 0.0
  %8485 = vmatpush1.xpose.msra.mxu0 0.0
  %8486 = vmatprep.subr.mxu0 0.0
  %8487 = vmatpush1.xpose.msra.mxu0 0.0
  %8488 = vmatprep.subr.mxu0 0.0
  %8489 = vmatpush1.xpose.msra.mxu0 0.0
  %8490 = vmatprep.subr.mxu0 0.0
  %8491 = vmatpush1.xpose.msra.mxu0 0.0
  %8492 = vmatprep.subr.mxu0 0.0
  %8493 = vmatpush1.xpose.msra.mxu0 0.0
  %8494 = vmatprep.subr.mxu0 0.0
  %8495 = vmatpush1.xpose.msra.mxu0 0.0
  %8496 = vmatprep.mubr.f32.mxu0 0.0
  %8497 = vmatmul.mubr.f32.gmra.mrb[0].mxu0 %v8424
  %v8498 = vpop.f32.mrb[0].mxu0
  %v8499 = vadd.f32 0.0, %v8498
  %v8500 = vpop.f32.mrb[0].mxu0
  %8501 = vmatprep.mubr.f32.mxu0 0.0
  %8502 = vmatmul.mubr.f32.gmra.mrb[0].mxu0 %v8426
  %v8503 = vpop.f32.mrb[0].mxu0
  %v8504 = vadd.f32 0.0, %v8503
  %v8505 = vpop.f32.mrb[0].mxu0
  %8506 = vdwg.mxu0
  %8507 = vrot.lane.b32.xlu0 %v402, 48
  %v8508 = vpop.permute.xlu0 %8507
  %8509 = vrot.lane.b32.xlu0 %v403, 48
  %v8510 = vpop.permute.xlu0 %8509
  %8511 = vrot.lane.b32.xlu0 %v402, 96
  %v8512 = vpop.permute.xlu0 %8511
  %8513 = vrot.lane.b32.xlu0 %v403, 96
  %v8514 = vpop.permute.xlu0 %8513
  %v8515 = vsel %vm412, %v8508, 0
  %v8517 = vsel %vm412, %v8510, 0
  %v8519 = vsel %vm412, %v8512, 0
  %v8521 = vsel %vm412, %v8514, 0
  %8523 = vmatprep.subr.mxu0 0.0
  %8524 = vmatpush1.xpose.msra.mxu0 %v8519
  %8525 = vmatprep.subr.mxu0 0.0
  %8526 = vmatpush1.xpose.msra.mxu0 %v8521
  %8527 = vmatprep.subr.mxu0 0.0
  %8528 = vmatpush1.xpose.msra.mxu0 0.0
  %8529 = vmatprep.subr.mxu0 0.0
  %8530 = vmatpush1.xpose.msra.mxu0 0.0
  %8531 = vmatprep.subr.mxu0 0.0
  %8532 = vmatpush1.xpose.msra.mxu0 0.0
  %8533 = vmatprep.subr.mxu0 0.0
  %8534 = vmatpush1.xpose.msra.mxu0 0.0
  %8535 = vmatprep.subr.mxu0 0.0
  %8536 = vmatpush1.xpose.msra.mxu0 0.0
  %8537 = vmatprep.subr.mxu0 0.0
  %8538 = vmatpush1.xpose.msra.mxu0 0.0
  %8539 = vmatprep.subr.mxu0 0.0
  %8540 = vmatpush1.xpose.msra.mxu0 0.0
  %8541 = vmatprep.subr.mxu0 0.0
  %8542 = vmatpush1.xpose.msra.mxu0 0.0
  %8543 = vmatprep.subr.mxu0 0.0
  %8544 = vmatpush1.xpose.msra.mxu0 0.0
  %8545 = vmatprep.subr.mxu0 0.0
  %8546 = vmatpush1.xpose.msra.mxu0 0.0
  %8547 = vmatprep.subr.mxu0 0.0
  %8548 = vmatpush1.xpose.msra.mxu0 0.0
  %8549 = vmatprep.subr.mxu0 0.0
  %8550 = vmatpush1.xpose.msra.mxu0 0.0
  %8551 = vmatprep.subr.mxu0 0.0
  %8552 = vmatpush1.xpose.msra.mxu0 0.0
  %8553 = vmatprep.subr.mxu0 0.0
  %8554 = vmatpush1.xpose.msra.mxu0 0.0
  %8555 = vmatprep.subr.mxu0 0.0
  %8556 = vmatpush1.xpose.msra.mxu0 0.0
  %8557 = vmatprep.subr.mxu0 0.0
  %8558 = vmatpush1.xpose.msra.mxu0 0.0
  %8559 = vmatprep.subr.mxu0 0.0
  %8560 = vmatpush1.xpose.msra.mxu0 0.0
  %8561 = vmatprep.subr.mxu0 0.0
  %8562 = vmatpush1.xpose.msra.mxu0 0.0
  %8563 = vmatprep.subr.mxu0 0.0
  %8564 = vmatpush1.xpose.msra.mxu0 0.0
  %8565 = vmatprep.subr.mxu0 0.0
  %8566 = vmatpush1.xpose.msra.mxu0 0.0
  %8567 = vmatprep.subr.mxu0 0.0
  %8568 = vmatpush1.xpose.msra.mxu0 0.0
  %8569 = vmatprep.subr.mxu0 0.0
  %8570 = vmatpush1.xpose.msra.mxu0 0.0
  %8571 = vmatprep.subr.mxu0 0.0
  %8572 = vmatpush1.xpose.msra.mxu0 0.0
  %8573 = vmatprep.subr.mxu0 0.0
  %8574 = vmatpush1.xpose.msra.mxu0 0.0
  %8575 = vmatprep.subr.mxu0 0.0
  %8576 = vmatpush1.xpose.msra.mxu0 0.0
  %8577 = vmatprep.subr.mxu0 0.0
  %8578 = vmatpush1.xpose.msra.mxu0 0.0
  %8579 = vmatprep.subr.mxu0 0.0
  %8580 = vmatpush1.xpose.msra.mxu0 0.0
  %8581 = vmatprep.subr.mxu0 0.0
  %8582 = vmatpush1.xpose.msra.mxu0 0.0
  %8583 = vmatprep.subr.mxu0 0.0
  %8584 = vmatpush1.xpose.msra.mxu0 0.0
  %8585 = vmatprep.subr.mxu0 0.0
  %8586 = vmatpush1.xpose.msra.mxu0 0.0
  %8587 = vmatprep.mubr.f32.mxu0 0.0
  %8588 = vmatmul.mubr.f32.gmra.mrb[0].mxu0 %v8515
  %v8589 = vpop.f32.mrb[0].mxu0
  %v8590 = vadd.f32 0.0, %v8589
  %v8591 = vpop.f32.mrb[0].mxu0
  %8592 = vmatprep.mubr.f32.mxu0 0.0
  %8593 = vmatmul.mubr.f32.gmra.mrb[0].mxu0 %v8517
  %v8594 = vpop.f32.mrb[0].mxu0
  %v8595 = vadd.f32 0.0, %v8594
  %v8596 = vpop.f32.mrb[0].mxu0
  %8597 = vdwg.mxu0
  %8598 = vrot.lane.b32.xlu0 %v404, 48
  %v8599 = vpop.permute.xlu0 %8598
  %8600 = vrot.lane.b32.xlu0 %v405, 48
  %v8601 = vpop.permute.xlu0 %8600
  %8602 = vrot.lane.b32.xlu0 %v404, 96
  %v8603 = vpop.permute.xlu0 %8602
  %8604 = vrot.lane.b32.xlu0 %v405, 96
  %v8605 = vpop.permute.xlu0 %8604
  %v8606 = vsel %vm412, %v8599, 0
  %v8608 = vsel %vm412, %v8601, 0
  %v8610 = vsel %vm412, %v8603, 0
  %v8612 = vsel %vm412, %v8605, 0
  %8614 = vmatprep.subr.mxu0 0.0
  %8615 = vmatpush1.xpose.msra.mxu0 %v8610
  %8616 = vmatprep.subr.mxu0 0.0
  %8617 = vmatpush1.xpose.msra.mxu0 %v8612
  %8618 = vmatprep.subr.mxu0 0.0
  %8619 = vmatpush1.xpose.msra.mxu0 0.0
  %8620 = vmatprep.subr.mxu0 0.0
  %8621 = vmatpush1.xpose.msra.mxu0 0.0
  %8622 = vmatprep.subr.mxu0 0.0
  %8623 = vmatpush1.xpose.msra.mxu0 0.0
  %8624 = vmatprep.subr.mxu0 0.0
  %8625 = vmatpush1.xpose.msra.mxu0 0.0
  %8626 = vmatprep.subr.mxu0 0.0
  %8627 = vmatpush1.xpose.msra.mxu0 0.0
  %8628 = vmatprep.subr.mxu0 0.0
  %8629 = vmatpush1.xpose.msra.mxu0 0.0
  %8630 = vmatprep.subr.mxu0 0.0
  %8631 = vmatpush1.xpose.msra.mxu0 0.0
  %8632 = vmatprep.subr.mxu0 0.0
  %8633 = vmatpush1.xpose.msra.mxu0 0.0
  %8634 = vmatprep.subr.mxu0 0.0
  %8635 = vmatpush1.xpose.msra.mxu0 0.0
  %8636 = vmatprep.subr.mxu0 0.0
  %8637 = vmatpush1.xpose.msra.mxu0 0.0
  %8638 = vmatprep.subr.mxu0 0.0
  %8639 = vmatpush1.xpose.msra.mxu0 0.0
  %8640 = vmatprep.subr.mxu0 0.0
  %8641 = vmatpush1.xpose.msra.mxu0 0.0
  %8642 = vmatprep.subr.mxu0 0.0
  %8643 = vmatpush1.xpose.msra.mxu0 0.0
  %8644 = vmatprep.subr.mxu0 0.0
  %8645 = vmatpush1.xpose.msra.mxu0 0.0
  %8646 = vmatprep.subr.mxu0 0.0
  %8647 = vmatpush1.xpose.msra.mxu0 0.0
  %8648 = vmatprep.subr.mxu0 0.0
  %8649 = vmatpush1.xpose.msra.mxu0 0.0
  %8650 = vmatprep.subr.mxu0 0.0
  %8651 = vmatpush1.xpose.msra.mxu0 0.0
  %8652 = vmatprep.subr.mxu0 0.0
  %8653 = vmatpush1.xpose.msra.mxu0 0.0
  %8654 = vmatprep.subr.mxu0 0.0
  %8655 = vmatpush1.xpose.msra.mxu0 0.0
  %8656 = vmatprep.subr.mxu0 0.0
  %8657 = vmatpush1.xpose.msra.mxu0 0.0
  %8658 = vmatprep.subr.mxu0 0.0
  %8659 = vmatpush1.xpose.msra.mxu0 0.0
  %8660 = vmatprep.subr.mxu0 0.0
  %8661 = vmatpush1.xpose.msra.mxu0 0.0
  %8662 = vmatprep.subr.mxu0 0.0
  %8663 = vmatpush1.xpose.msra.mxu0 0.0
  %8664 = vmatprep.subr.mxu0 0.0
  %8665 = vmatpush1.xpose.msra.mxu0 0.0
  %8666 = vmatprep.subr.mxu0 0.0
  %8667 = vmatpush1.xpose.msra.mxu0 0.0
  %8668 = vmatprep.subr.mxu0 0.0
  %8669 = vmatpush1.xpose.msra.mxu0 0.0
  %8670 = vmatprep.subr.mxu0 0.0
  %8671 = vmatpush1.xpose.msra.mxu0 0.0
  %8672 = vmatprep.subr.mxu0 0.0
  %8673 = vmatpush1.xpose.msra.mxu0 0.0
  %8674 = vmatprep.subr.mxu0 0.0
  %8675 = vmatpush1.xpose.msra.mxu0 0.0
  %8676 = vmatprep.subr.mxu0 0.0
  %8677 = vmatpush1.xpose.msra.mxu0 0.0
  %8678 = vmatprep.mubr.f32.mxu0 0.0
  %8679 = vmatmul.mubr.f32.gmra.mrb[0].mxu0 %v8606
  %v8680 = vpop.f32.mrb[0].mxu0
  %v8681 = vadd.f32 0.0, %v8680
  %v8682 = vpop.f32.mrb[0].mxu0
  %8683 = vmatprep.mubr.f32.mxu0 0.0
  %8684 = vmatmul.mubr.f32.gmra.mrb[0].mxu0 %v8608
  %v8685 = vpop.f32.mrb[0].mxu0
  %v8686 = vadd.f32 0.0, %v8685
  %v8687 = vpop.f32.mrb[0].mxu0
  %8688 = vdwg.mxu0
  %v8689 = vsel %vm412, %v7316, -inf
  %8690 = vmax.xlane.f32.xlu0 %v8689
  %v8691 = vpop.xlane.xlu0 %8690
  %v8692 = vsel %vm412, %v7321, -inf
  %8693 = vmax.xlane.f32.xlu0 %v8692
  %v8694 = vpop.xlane.xlu0 %8693
  %v8695 = vsel %vm412, %v7407, -inf
  %8696 = vmax.xlane.f32.xlu0 %v8695
  %v8697 = vpop.xlane.xlu0 %8696
  %v8698 = vsel %vm412, %v7412, -inf
  %8699 = vmax.xlane.f32.xlu0 %v8698
  %v8700 = vpop.xlane.xlu0 %8699
  %v8701 = vsel %vm412, %v7498, -inf
  %8702 = vmax.xlane.f32.xlu0 %v8701
  %v8703 = vpop.xlane.xlu0 %8702
  %v8704 = vsel %vm412, %v7503, -inf
  %8705 = vmax.xlane.f32.xlu0 %v8704
  %v8706 = vpop.xlane.xlu0 %8705
  %v8707 = vsel %vm412, %v7589, -inf
  %8708 = vmax.xlane.f32.xlu0 %v8707
  %v8709 = vpop.xlane.xlu0 %8708
  %v8710 = vsel %vm412, %v7594, -inf
  %8711 = vmax.xlane.f32.xlu0 %v8710
  %v8712 = vpop.xlane.xlu0 %8711
  %v8713 = vsel %vm412, %v7680, -inf
  %8714 = vmax.xlane.f32.xlu0 %v8713
  %v8715 = vpop.xlane.xlu0 %8714
  %v8716 = vsel %vm412, %v7685, -inf
  %8717 = vmax.xlane.f32.xlu0 %v8716
  %v8718 = vpop.xlane.xlu0 %8717
  %v8719 = vsel %vm412, %v7771, -inf
  %8720 = vmax.xlane.f32.xlu0 %v8719
  %v8721 = vpop.xlane.xlu0 %8720
  %v8722 = vsel %vm412, %v7776, -inf
  %8723 = vmax.xlane.f32.xlu0 %v8722
  %v8724 = vpop.xlane.xlu0 %8723
  %v8725 = vsel %vm412, %v7862, -inf
  %8726 = vmax.xlane.f32.xlu0 %v8725
  %v8727 = vpop.xlane.xlu0 %8726
  %v8728 = vsel %vm412, %v7867, -inf
  %8729 = vmax.xlane.f32.xlu0 %v8728
  %v8730 = vpop.xlane.xlu0 %8729
  %v8731 = vsel %vm412, %v7953, -inf
  %8732 = vmax.xlane.f32.xlu0 %v8731
  %v8733 = vpop.xlane.xlu0 %8732
  %v8734 = vsel %vm412, %v7958, -inf
  %8735 = vmax.xlane.f32.xlu0 %v8734
  %v8736 = vpop.xlane.xlu0 %8735
  %v8737 = vsel %vm412, %v8044, -inf
  %8738 = vmax.xlane.f32.xlu0 %v8737
  %v8739 = vpop.xlane.xlu0 %8738
  %v8740 = vsel %vm412, %v8049, -inf
  %8741 = vmax.xlane.f32.xlu0 %v8740
  %v8742 = vpop.xlane.xlu0 %8741
  %v8743 = vsel %vm412, %v8135, -inf
  %8744 = vmax.xlane.f32.xlu0 %v8743
  %v8745 = vpop.xlane.xlu0 %8744
  %v8746 = vsel %vm412, %v8140, -inf
  %8747 = vmax.xlane.f32.xlu0 %v8746
  %v8748 = vpop.xlane.xlu0 %8747
  %v8749 = vsel %vm412, %v8226, -inf
  %8750 = vmax.xlane.f32.xlu0 %v8749
  %v8751 = vpop.xlane.xlu0 %8750
  %v8752 = vsel %vm412, %v8231, -inf
  %8753 = vmax.xlane.f32.xlu0 %v8752
  %v8754 = vpop.xlane.xlu0 %8753
  %v8755 = vsel %vm412, %v8317, -inf
  %8756 = vmax.xlane.f32.xlu0 %v8755
  %v8757 = vpop.xlane.xlu0 %8756
  %v8758 = vsel %vm412, %v8322, -inf
  %8759 = vmax.xlane.f32.xlu0 %v8758
  %v8760 = vpop.xlane.xlu0 %8759
  %v8761 = vsel %vm412, %v8408, -inf
  %8762 = vmax.xlane.f32.xlu0 %v8761
  %v8763 = vpop.xlane.xlu0 %8762
  %v8764 = vsel %vm412, %v8413, -inf
  %8765 = vmax.xlane.f32.xlu0 %v8764
  %v8766 = vpop.xlane.xlu0 %8765
  %v8767 = vsel %vm412, %v8499, -inf
  %8768 = vmax.xlane.f32.xlu0 %v8767
  %v8769 = vpop.xlane.xlu0 %8768
  %v8770 = vsel %vm412, %v8504, -inf
  %8771 = vmax.xlane.f32.xlu0 %v8770
  %v8772 = vpop.xlane.xlu0 %8771
  %v8773 = vsel %vm412, %v8590, -inf
  %8774 = vmax.xlane.f32.xlu0 %v8773
  %v8775 = vpop.xlane.xlu0 %8774
  %v8776 = vsel %vm412, %v8595, -inf
  %8777 = vmax.xlane.f32.xlu0 %v8776
  %v8778 = vpop.xlane.xlu0 %8777
  %v8779 = vsel %vm412, %v8681, -inf
  %8780 = vmax.xlane.f32.xlu0 %v8779
  %v8781 = vpop.xlane.xlu0 %8780
  %v8782 = vsel %vm412, %v8686, -inf
  %8783 = vmax.xlane.f32.xlu0 %v8782
  %v8784 = vpop.xlane.xlu0 %8783
  %v8785 = vsub.f32 %v7316, %v8691
  %v8786 = vsub.f32 %v7321, %v8694
  %v8787 = vsub.f32 %v7407, %v8697
  %v8788 = vsub.f32 %v7412, %v8700
  %v8789 = vsub.f32 %v7498, %v8703
  %v8790 = vsub.f32 %v7503, %v8706
  %v8791 = vsub.f32 %v7589, %v8709
  %v8792 = vsub.f32 %v7594, %v8712
  %v8793 = vsub.f32 %v7680, %v8715
  %v8794 = vsub.f32 %v7685, %v8718
  %v8795 = vsub.f32 %v7771, %v8721
  %v8796 = vsub.f32 %v7776, %v8724
  %v8797 = vsub.f32 %v7862, %v8727
  %v8798 = vsub.f32 %v7867, %v8730
  %v8799 = vsub.f32 %v7953, %v8733
  %v8800 = vsub.f32 %v7958, %v8736
  %v8801 = vsub.f32 %v8044, %v8739
  %v8802 = vsub.f32 %v8049, %v8742
  %v8803 = vsub.f32 %v8135, %v8745
  %v8804 = vsub.f32 %v8140, %v8748
  %v8805 = vsub.f32 %v8226, %v8751
  %v8806 = vsub.f32 %v8231, %v8754
  %v8807 = vsub.f32 %v8317, %v8757
  %v8808 = vsub.f32 %v8322, %v8760
  %v8809 = vsub.f32 %v8408, %v8763
  %v8810 = vsub.f32 %v8413, %v8766
  %v8811 = vsub.f32 %v8499, %v8769
  %v8812 = vsub.f32 %v8504, %v8772
  %v8813 = vsub.f32 %v8590, %v8775
  %v8814 = vsub.f32 %v8595, %v8778
  %v8815 = vsub.f32 %v8681, %v8781
  %v8816 = vsub.f32 %v8686, %v8784
  %v8817 = vmul.f32 %v8785, 1.442695
  %v8818 = vpow.pop %v8817
  %v8819 = vmul.f32 %v8786, 1.442695
  %v8820 = vpow.pop %v8819
  %v8821 = vmul.f32 %v8787, 1.442695
  %v8822 = vpow.pop %v8821
  %v8823 = vmul.f32 %v8788, 1.442695
  %v8824 = vpow.pop %v8823
  %v8825 = vmul.f32 %v8789, 1.442695
  %v8826 = vpow.pop %v8825
  %v8827 = vmul.f32 %v8790, 1.442695
  %v8828 = vpow.pop %v8827
  %v8829 = vmul.f32 %v8791, 1.442695
  %v8830 = vpow.pop %v8829
  %v8831 = vmul.f32 %v8792, 1.442695
  %v8832 = vpow.pop %v8831
  %v8833 = vmul.f32 %v8793, 1.442695
  %v8834 = vpow.pop %v8833
  %v8835 = vmul.f32 %v8794, 1.442695
  %v8836 = vpow.pop %v8835
  %v8837 = vmul.f32 %v8795, 1.442695
  %v8838 = vpow.pop %v8837
  %v8839 = vmul.f32 %v8796, 1.442695
  %v8840 = vpow.pop %v8839
  %v8841 = vmul.f32 %v8797, 1.442695
  %v8842 = vpow.pop %v8841
  %v8843 = vmul.f32 %v8798, 1.442695
  %v8844 = vpow.pop %v8843
  %v8845 = vmul.f32 %v8799, 1.442695
  %v8846 = vpow.pop %v8845
  %v8847 = vmul.f32 %v8800, 1.442695
  %v8848 = vpow.pop %v8847
  %v8849 = vmul.f32 %v8801, 1.442695
  %v8850 = vpow.pop %v8849
  %v8851 = vmul.f32 %v8802, 1.442695
  %v8852 = vpow.pop %v8851
  %v8853 = vmul.f32 %v8803, 1.442695
  %v8854 = vpow.pop %v8853
  %v8855 = vmul.f32 %v8804, 1.442695
  %v8856 = vpow.pop %v8855
  %v8857 = vmul.f32 %v8805, 1.442695
  %v8858 = vpow.pop %v8857
  %v8859 = vmul.f32 %v8806, 1.442695
  %v8860 = vpow.pop %v8859
  %v8861 = vmul.f32 %v8807, 1.442695
  %v8862 = vpow.pop %v8861
  %v8863 = vmul.f32 %v8808, 1.442695
  %v8864 = vpow.pop %v8863
  %v8865 = vmul.f32 %v8809, 1.442695
  %v8866 = vpow.pop %v8865
  %v8867 = vmul.f32 %v8810, 1.442695
  %v8868 = vpow.pop %v8867
  %v8869 = vmul.f32 %v8811, 1.442695
  %v8870 = vpow.pop %v8869
  %v8871 = vmul.f32 %v8812, 1.442695
  %v8872 = vpow.pop %v8871
  %v8873 = vmul.f32 %v8813, 1.442695
  %v8874 = vpow.pop %v8873
  %v8875 = vmul.f32 %v8814, 1.442695
  %v8876 = vpow.pop %v8875
  %v8877 = vmul.f32 %v8815, 1.442695
  %v8878 = vpow.pop %v8877
  %v8879 = vmul.f32 %v8816, 1.442695
  %v8880 = vpow.pop %v8879
  %v8881 = vsel %vm412, %v8818, 0.0
  %8882 = vadd.xlane.f32.xlu0 %v8881
  %v8883 = vpop.xlane.xlu0 %8882
  %v8884 = vsel %vm412, %v8820, 0.0
  %8885 = vadd.xlane.f32.xlu0 %v8884
  %v8886 = vpop.xlane.xlu0 %8885
  %v8887 = vsel %vm412, %v8822, 0.0
  %8888 = vadd.xlane.f32.xlu0 %v8887
  %v8889 = vpop.xlane.xlu0 %8888
  %v8890 = vsel %vm412, %v8824, 0.0
  %8891 = vadd.xlane.f32.xlu0 %v8890
  %v8892 = vpop.xlane.xlu0 %8891
  %v8893 = vsel %vm412, %v8826, 0.0
  %8894 = vadd.xlane.f32.xlu0 %v8893
  %v8895 = vpop.xlane.xlu0 %8894
  %v8896 = vsel %vm412, %v8828, 0.0
  %8897 = vadd.xlane.f32.xlu0 %v8896
  %v8898 = vpop.xlane.xlu0 %8897
  %v8899 = vsel %vm412, %v8830, 0.0
  %8900 = vadd.xlane.f32.xlu0 %v8899
  %v8901 = vpop.xlane.xlu0 %8900
  %v8902 = vsel %vm412, %v8832, 0.0
  %8903 = vadd.xlane.f32.xlu0 %v8902
  %v8904 = vpop.xlane.xlu0 %8903
  %v8905 = vsel %vm412, %v8834, 0.0
  %8906 = vadd.xlane.f32.xlu0 %v8905
  %v8907 = vpop.xlane.xlu0 %8906
  %v8908 = vsel %vm412, %v8836, 0.0
  %8909 = vadd.xlane.f32.xlu0 %v8908
  %v8910 = vpop.xlane.xlu0 %8909
  %v8911 = vsel %vm412, %v8838, 0.0
  %8912 = vadd.xlane.f32.xlu0 %v8911
  %v8913 = vpop.xlane.xlu0 %8912
  %v8914 = vsel %vm412, %v8840, 0.0
  %8915 = vadd.xlane.f32.xlu0 %v8914
  %v8916 = vpop.xlane.xlu0 %8915
  %v8917 = vsel %vm412, %v8842, 0.0
  %8918 = vadd.xlane.f32.xlu0 %v8917
  %v8919 = vpop.xlane.xlu0 %8918
  %v8920 = vsel %vm412, %v8844, 0.0
  %8921 = vadd.xlane.f32.xlu0 %v8920
  %v8922 = vpop.xlane.xlu0 %8921
  %v8923 = vsel %vm412, %v8846, 0.0
  %8924 = vadd.xlane.f32.xlu0 %v8923
  %v8925 = vpop.xlane.xlu0 %8924
  %v8926 = vsel %vm412, %v8848, 0.0
  %8927 = vadd.xlane.f32.xlu0 %v8926
  %v8928 = vpop.xlane.xlu0 %8927
  %v8929 = vsel %vm412, %v8850, 0.0
  %8930 = vadd.xlane.f32.xlu0 %v8929
  %v8931 = vpop.xlane.xlu0 %8930
  %v8932 = vsel %vm412, %v8852, 0.0
  %8933 = vadd.xlane.f32.xlu0 %v8932
  %v8934 = vpop.xlane.xlu0 %8933
  %v8935 = vsel %vm412, %v8854, 0.0
  %8936 = vadd.xlane.f32.xlu0 %v8935
  %v8937 = vpop.xlane.xlu0 %8936
  %v8938 = vsel %vm412, %v8856, 0.0
  %8939 = vadd.xlane.f32.xlu0 %v8938
  %v8940 = vpop.xlane.xlu0 %8939
  %v8941 = vsel %vm412, %v8858, 0.0
  %8942 = vadd.xlane.f32.xlu0 %v8941
  %v8943 = vpop.xlane.xlu0 %8942
  %v8944 = vsel %vm412, %v8860, 0.0
  %8945 = vadd.xlane.f32.xlu0 %v8944
  %v8946 = vpop.xlane.xlu0 %8945
  %v8947 = vsel %vm412, %v8862, 0.0
  %8948 = vadd.xlane.f32.xlu0 %v8947
  %v8949 = vpop.xlane.xlu0 %8948
  %v8950 = vsel %vm412, %v8864, 0.0
  %8951 = vadd.xlane.f32.xlu0 %v8950
  %v8952 = vpop.xlane.xlu0 %8951
  %v8953 = vsel %vm412, %v8866, 0.0
  %8954 = vadd.xlane.f32.xlu0 %v8953
  %v8955 = vpop.xlane.xlu0 %8954
  %v8956 = vsel %vm412, %v8868, 0.0
  %8957 = vadd.xlane.f32.xlu0 %v8956
  %v8958 = vpop.xlane.xlu0 %8957
  %v8959 = vsel %vm412, %v8870, 0.0
  %8960 = vadd.xlane.f32.xlu0 %v8959
  %v8961 = vpop.xlane.xlu0 %8960
  %v8962 = vsel %vm412, %v8872, 0.0
  %8963 = vadd.xlane.f32.xlu0 %v8962
  %v8964 = vpop.xlane.xlu0 %8963
  %v8965 = vsel %vm412, %v8874, 0.0
  %8966 = vadd.xlane.f32.xlu0 %v8965
  %v8967 = vpop.xlane.xlu0 %8966
  %v8968 = vsel %vm412, %v8876, 0.0
  %8969 = vadd.xlane.f32.xlu0 %v8968
  %v8970 = vpop.xlane.xlu0 %8969
  %v8971 = vsel %vm412, %v8878, 0.0
  %8972 = vadd.xlane.f32.xlu0 %v8971
  %v8973 = vpop.xlane.xlu0 %8972
  %v8974 = vsel %vm412, %v8880, 0.0
  %8975 = vadd.xlane.f32.xlu0 %v8974
  %v8976 = vpop.xlane.xlu0 %8975
  %v8977 = vrcp.pop %v8883
  %v8978 = vrcp.pop %v8886
  %v8979 = vrcp.pop %v8889
  %v8980 = vrcp.pop %v8892
  %v8981 = vrcp.pop %v8895
  %v8982 = vrcp.pop %v8898
  %v8983 = vrcp.pop %v8901
  %v8984 = vrcp.pop %v8904
  %v8985 = vrcp.pop %v8907
  %v8986 = vrcp.pop %v8910
  %v8987 = vrcp.pop %v8913
  %v8988 = vrcp.pop %v8916
  %v8989 = vrcp.pop %v8919
  %v8990 = vrcp.pop %v8922
  %v8991 = vrcp.pop %v8925
  %v8992 = vrcp.pop %v8928
  %v8993 = vrcp.pop %v8931
  %v8994 = vrcp.pop %v8934
  %v8995 = vrcp.pop %v8937
  %v8996 = vrcp.pop %v8940
  %v8997 = vrcp.pop %v8943
  %v8998 = vrcp.pop %v8946
  %v8999 = vrcp.pop %v8949
  %v9000 = vrcp.pop %v8952
  %v9001 = vrcp.pop %v8955
  %v9002 = vrcp.pop %v8958
  %v9003 = vrcp.pop %v8961
  %v9004 = vrcp.pop %v8964
  %v9005 = vrcp.pop %v8967
  %v9006 = vrcp.pop %v8970
  %v9007 = vrcp.pop %v8973
  %v9008 = vrcp.pop %v8976
  %v9009 = vmul.f32 %v8818, %v8977
  %v9010 = vmul.f32 %v8820, %v8978
  %v9011 = vmul.f32 %v8822, %v8979
  %v9012 = vmul.f32 %v8824, %v8980
  %v9013 = vmul.f32 %v8826, %v8981
  %v9014 = vmul.f32 %v8828, %v8982
  %v9015 = vmul.f32 %v8830, %v8983
  %v9016 = vmul.f32 %v8832, %v8984
  %v9017 = vmul.f32 %v8834, %v8985
  %v9018 = vmul.f32 %v8836, %v8986
  %v9019 = vmul.f32 %v8838, %v8987
  %v9020 = vmul.f32 %v8840, %v8988
  %v9021 = vmul.f32 %v8842, %v8989
  %v9022 = vmul.f32 %v8844, %v8990
  %v9023 = vmul.f32 %v8846, %v8991
  %v9024 = vmul.f32 %v8848, %v8992
  %v9025 = vmul.f32 %v8850, %v8993
  %v9026 = vmul.f32 %v8852, %v8994
  %v9027 = vmul.f32 %v8854, %v8995
  %v9028 = vmul.f32 %v8856, %v8996
  %v9029 = vmul.f32 %v8858, %v8997
  %v9030 = vmul.f32 %v8860, %v8998
  %v9031 = vmul.f32 %v8862, %v8999
  %v9032 = vmul.f32 %v8864, %v9000
  %v9033 = vmul.f32 %v8866, %v9001
  %v9034 = vmul.f32 %v8868, %v9002
  %v9035 = vmul.f32 %v8870, %v9003
  %v9036 = vmul.f32 %v8872, %v9004
  %v9037 = vmul.f32 %v8874, %v9005
  %v9038 = vmul.f32 %v8876, %v9006
  %v9039 = vmul.f32 %v8878, %v9007
  %v9040 = vmul.f32 %v8880, %v9008
  %v9042 = vsel %vm412, %v9009, 0
  %v9045 = vsel %vm412, %v9010, 0
  %9047 = vmatprep.subr.mxu0 0.0
  %9048 = vmatpush1.msra.mxu0 %v14
  %9049 = vmatprep.subr.mxu0 0.0
  %9050 = vmatpush1.msra.mxu0 %v15
  %9051 = vmatprep.subr.mxu0 0.0
  %9052 = vmatpush1.msra.mxu0 0.0
  %9053 = vmatprep.subr.mxu0 0.0
  %9054 = vmatpush1.msra.mxu0 0.0
  %9055 = vmatprep.subr.mxu0 0.0
  %9056 = vmatpush1.msra.mxu0 0.0
  %9057 = vmatprep.subr.mxu0 0.0
  %9058 = vmatpush1.msra.mxu0 0.0
  %9059 = vmatprep.subr.mxu0 0.0
  %9060 = vmatpush1.msra.mxu0 0.0
  %9061 = vmatprep.subr.mxu0 0.0
  %9062 = vmatpush1.msra.mxu0 0.0
  %9063 = vmatprep.subr.mxu0 0.0
  %9064 = vmatpush1.msra.mxu0 0.0
  %9065 = vmatprep.subr.mxu0 0.0
  %9066 = vmatpush1.msra.mxu0 0.0
  %9067 = vmatprep.subr.mxu0 0.0
  %9068 = vmatpush1.msra.mxu0 0.0
  %9069 = vmatprep.subr.mxu0 0.0
  %9070 = vmatpush1.msra.mxu0 0.0
  %9071 = vmatprep.subr.mxu0 0.0
  %9072 = vmatpush1.msra.mxu0 0.0
  %9073 = vmatprep.subr.mxu0 0.0
  %9074 = vmatpush1.msra.mxu0 0.0
  %9075 = vmatprep.subr.mxu0 0.0
  %9076 = vmatpush1.msra.mxu0 0.0
  %9077 = vmatprep.subr.mxu0 0.0
  %9078 = vmatpush1.msra.mxu0 0.0
  %9079 = vmatprep.subr.mxu0 0.0
  %9080 = vmatpush1.msra.mxu0 0.0
  %9081 = vmatprep.subr.mxu0 0.0
  %9082 = vmatpush1.msra.mxu0 0.0
  %9083 = vmatprep.subr.mxu0 0.0
  %9084 = vmatpush1.msra.mxu0 0.0
  %9085 = vmatprep.subr.mxu0 0.0
  %9086 = vmatpush1.msra.mxu0 0.0
  %9087 = vmatprep.subr.mxu0 0.0
  %9088 = vmatpush1.msra.mxu0 0.0
  %9089 = vmatprep.subr.mxu0 0.0
  %9090 = vmatpush1.msra.mxu0 0.0
  %9091 = vmatprep.subr.mxu0 0.0
  %9092 = vmatpush1.msra.mxu0 0.0
  %9093 = vmatprep.subr.mxu0 0.0
  %9094 = vmatpush1.msra.mxu0 0.0
  %9095 = vmatprep.subr.mxu0 0.0
  %9096 = vmatpush1.msra.mxu0 0.0
  %9097 = vmatprep.subr.mxu0 0.0
  %9098 = vmatpush1.msra.mxu0 0.0
  %9099 = vmatprep.subr.mxu0 0.0
  %9100 = vmatpush1.msra.mxu0 0.0
  %9101 = vmatprep.subr.mxu0 0.0
  %9102 = vmatpush1.msra.mxu0 0.0
  %9103 = vmatprep.subr.mxu0 0.0
  %9104 = vmatpush1.msra.mxu0 0.0
  %9105 = vmatprep.subr.mxu0 0.0
  %9106 = vmatpush1.msra.mxu0 0.0
  %9107 = vmatprep.subr.mxu0 0.0
  %9108 = vmatpush1.msra.mxu0 0.0
  %9109 = vmatprep.subr.mxu0 0.0
  %9110 = vmatpush1.msra.mxu0 0.0
  %9111 = vmatprep.mubr.f32.mxu0 0.0
  %9112 = vmatmul.mubr.f32.gmra.mrb[0].mxu0 %v9042
  %v9113 = vpop.f32.mrb[0].mxu0
  %v9114 = vadd.f32 0.0, %v9113
  %v9115 = vpop.f32.mrb[0].mxu0
  %9116 = vmatprep.mubr.f32.mxu0 0.0
  %9117 = vmatmul.mubr.f32.gmra.mrb[0].mxu0 %v9045
  %v9118 = vpop.f32.mrb[0].mxu0
  %v9119 = vadd.f32 0.0, %v9118
  %v9120 = vpop.f32.mrb[0].mxu0
  %9121 = vdwg.mxu0
  %v9123 = vsel %vm412, %v9011, 0
  %v9126 = vsel %vm412, %v9012, 0
  %9128 = vmatprep.subr.mxu0 0.0
  %9129 = vmatpush1.msra.mxu0 %v16
  %9130 = vmatprep.subr.mxu0 0.0
  %9131 = vmatpush1.msra.mxu0 %v17
  %9132 = vmatprep.subr.mxu0 0.0
  %9133 = vmatpush1.msra.mxu0 0.0
  %9134 = vmatprep.subr.mxu0 0.0
  %9135 = vmatpush1.msra.mxu0 0.0
  %9136 = vmatprep.subr.mxu0 0.0
  %9137 = vmatpush1.msra.mxu0 0.0
  %9138 = vmatprep.subr.mxu0 0.0
  %9139 = vmatpush1.msra.mxu0 0.0
  %9140 = vmatprep.subr.mxu0 0.0
  %9141 = vmatpush1.msra.mxu0 0.0
  %9142 = vmatprep.subr.mxu0 0.0
  %9143 = vmatpush1.msra.mxu0 0.0
  %9144 = vmatprep.subr.mxu0 0.0
  %9145 = vmatpush1.msra.mxu0 0.0
  %9146 = vmatprep.subr.mxu0 0.0
  %9147 = vmatpush1.msra.mxu0 0.0
  %9148 = vmatprep.subr.mxu0 0.0
  %9149 = vmatpush1.msra.mxu0 0.0
  %9150 = vmatprep.subr.mxu0 0.0
  %9151 = vmatpush1.msra.mxu0 0.0
  %9152 = vmatprep.subr.mxu0 0.0
  %9153 = vmatpush1.msra.mxu0 0.0
  %9154 = vmatprep.subr.mxu0 0.0
  %9155 = vmatpush1.msra.mxu0 0.0
  %9156 = vmatprep.subr.mxu0 0.0
  %9157 = vmatpush1.msra.mxu0 0.0
  %9158 = vmatprep.subr.mxu0 0.0
  %9159 = vmatpush1.msra.mxu0 0.0
  %9160 = vmatprep.subr.mxu0 0.0
  %9161 = vmatpush1.msra.mxu0 0.0
  %9162 = vmatprep.subr.mxu0 0.0
  %9163 = vmatpush1.msra.mxu0 0.0
  %9164 = vmatprep.subr.mxu0 0.0
  %9165 = vmatpush1.msra.mxu0 0.0
  %9166 = vmatprep.subr.mxu0 0.0
  %9167 = vmatpush1.msra.mxu0 0.0
  %9168 = vmatprep.subr.mxu0 0.0
  %9169 = vmatpush1.msra.mxu0 0.0
  %9170 = vmatprep.subr.mxu0 0.0
  %9171 = vmatpush1.msra.mxu0 0.0
  %9172 = vmatprep.subr.mxu0 0.0
  %9173 = vmatpush1.msra.mxu0 0.0
  %9174 = vmatprep.subr.mxu0 0.0
  %9175 = vmatpush1.msra.mxu0 0.0
  %9176 = vmatprep.subr.mxu0 0.0
  %9177 = vmatpush1.msra.mxu0 0.0
  %9178 = vmatprep.subr.mxu0 0.0
  %9179 = vmatpush1.msra.mxu0 0.0
  %9180 = vmatprep.subr.mxu0 0.0
  %9181 = vmatpush1.msra.mxu0 0.0
  %9182 = vmatprep.subr.mxu0 0.0
  %9183 = vmatpush1.msra.mxu0 0.0
  %9184 = vmatprep.subr.mxu0 0.0
  %9185 = vmatpush1.msra.mxu0 0.0
  %9186 = vmatprep.subr.mxu0 0.0
  %9187 = vmatpush1.msra.mxu0 0.0
  %9188 = vmatprep.subr.mxu0 0.0
  %9189 = vmatpush1.msra.mxu0 0.0
  %9190 = vmatprep.subr.mxu0 0.0
  %9191 = vmatpush1.msra.mxu0 0.0
  %9192 = vmatprep.mubr.f32.mxu0 0.0
  %9193 = vmatmul.mubr.f32.gmra.mrb[0].mxu0 %v9123
  %v9194 = vpop.f32.mrb[0].mxu0
  %v9195 = vadd.f32 0.0, %v9194
  %v9196 = vpop.f32.mrb[0].mxu0
  %9197 = vmatprep.mubr.f32.mxu0 0.0
  %9198 = vmatmul.mubr.f32.gmra.mrb[0].mxu0 %v9126
  %v9199 = vpop.f32.mrb[0].mxu0
  %v9200 = vadd.f32 0.0, %v9199
  %v9201 = vpop.f32.mrb[0].mxu0
  %9202 = vdwg.mxu0
  %v9204 = vsel %vm412, %v9013, 0
  %v9207 = vsel %vm412, %v9014, 0
  %9209 = vmatprep.subr.mxu0 0.0
  %9210 = vmatpush1.msra.mxu0 %v18
  %9211 = vmatprep.subr.mxu0 0.0
  %9212 = vmatpush1.msra.mxu0 %v19
  %9213 = vmatprep.subr.mxu0 0.0
  %9214 = vmatpush1.msra.mxu0 0.0
  %9215 = vmatprep.subr.mxu0 0.0
  %9216 = vmatpush1.msra.mxu0 0.0
  %9217 = vmatprep.subr.mxu0 0.0
  %9218 = vmatpush1.msra.mxu0 0.0
  %9219 = vmatprep.subr.mxu0 0.0
  %9220 = vmatpush1.msra.mxu0 0.0
  %9221 = vmatprep.subr.mxu0 0.0
  %9222 = vmatpush1.msra.mxu0 0.0
  %9223 = vmatprep.subr.mxu0 0.0
  %9224 = vmatpush1.msra.mxu0 0.0
  %9225 = vmatprep.subr.mxu0 0.0
  %9226 = vmatpush1.msra.mxu0 0.0
  %9227 = vmatprep.subr.mxu0 0.0
  %9228 = vmatpush1.msra.mxu0 0.0
  %9229 = vmatprep.subr.mxu0 0.0
  %9230 = vmatpush1.msra.mxu0 0.0
  %9231 = vmatprep.subr.mxu0 0.0
  %9232 = vmatpush1.msra.mxu0 0.0
  %9233 = vmatprep.subr.mxu0 0.0
  %9234 = vmatpush1.msra.mxu0 0.0
  %9235 = vmatprep.subr.mxu0 0.0
  %9236 = vmatpush1.msra.mxu0 0.0
  %9237 = vmatprep.subr.mxu0 0.0
  %9238 = vmatpush1.msra.mxu0 0.0
  %9239 = vmatprep.subr.mxu0 0.0
  %9240 = vmatpush1.msra.mxu0 0.0
  %9241 = vmatprep.subr.mxu0 0.0
  %9242 = vmatpush1.msra.mxu0 0.0
  %9243 = vmatprep.subr.mxu0 0.0
  %9244 = vmatpush1.msra.mxu0 0.0
  %9245 = vmatprep.subr.mxu0 0.0
  %9246 = vmatpush1.msra.mxu0 0.0
  %9247 = vmatprep.subr.mxu0 0.0
  %9248 = vmatpush1.msra.mxu0 0.0
  %9249 = vmatprep.subr.mxu0 0.0
  %9250 = vmatpush1.msra.mxu0 0.0
  %9251 = vmatprep.subr.mxu0 0.0
  %9252 = vmatpush1.msra.mxu0 0.0
  %9253 = vmatprep.subr.mxu0 0.0
  %9254 = vmatpush1.msra.mxu0 0.0
  %9255 = vmatprep.subr.mxu0 0.0
  %9256 = vmatpush1.msra.mxu0 0.0
  %9257 = vmatprep.subr.mxu0 0.0
  %9258 = vmatpush1.msra.mxu0 0.0
  %9259 = vmatprep.subr.mxu0 0.0
  %9260 = vmatpush1.msra.mxu0 0.0
  %9261 = vmatprep.subr.mxu0 0.0
  %9262 = vmatpush1.msra.mxu0 0.0
  %9263 = vmatprep.subr.mxu0 0.0
  %9264 = vmatpush1.msra.mxu0 0.0
  %9265 = vmatprep.subr.mxu0 0.0
  %9266 = vmatpush1.msra.mxu0 0.0
  %9267 = vmatprep.subr.mxu0 0.0
  %9268 = vmatpush1.msra.mxu0 0.0
  %9269 = vmatprep.subr.mxu0 0.0
  %9270 = vmatpush1.msra.mxu0 0.0
  %9271 = vmatprep.subr.mxu0 0.0
  %9272 = vmatpush1.msra.mxu0 0.0
  %9273 = vmatprep.mubr.f32.mxu0 0.0
  %9274 = vmatmul.mubr.f32.gmra.mrb[0].mxu0 %v9204
  %v9275 = vpop.f32.mrb[0].mxu0
  %v9276 = vadd.f32 0.0, %v9275
  %v9277 = vpop.f32.mrb[0].mxu0
  %9278 = vmatprep.mubr.f32.mxu0 0.0
  %9279 = vmatmul.mubr.f32.gmra.mrb[0].mxu0 %v9207
  %v9280 = vpop.f32.mrb[0].mxu0
  %v9281 = vadd.f32 0.0, %v9280
  %v9282 = vpop.f32.mrb[0].mxu0
  %9283 = vdwg.mxu0
  %v9285 = vsel %vm412, %v9015, 0
  %v9288 = vsel %vm412, %v9016, 0
  %9290 = vmatprep.subr.mxu0 0.0
  %9291 = vmatpush1.msra.mxu0 %v20
  %9292 = vmatprep.subr.mxu0 0.0
  %9293 = vmatpush1.msra.mxu0 %v21
  %9294 = vmatprep.subr.mxu0 0.0
  %9295 = vmatpush1.msra.mxu0 0.0
  %9296 = vmatprep.subr.mxu0 0.0
  %9297 = vmatpush1.msra.mxu0 0.0
  %9298 = vmatprep.subr.mxu0 0.0
  %9299 = vmatpush1.msra.mxu0 0.0
  %9300 = vmatprep.subr.mxu0 0.0
  %9301 = vmatpush1.msra.mxu0 0.0
  %9302 = vmatprep.subr.mxu0 0.0
  %9303 = vmatpush1.msra.mxu0 0.0
  %9304 = vmatprep.subr.mxu0 0.0
  %9305 = vmatpush1.msra.mxu0 0.0
  %9306 = vmatprep.subr.mxu0 0.0
  %9307 = vmatpush1.msra.mxu0 0.0
  %9308 = vmatprep.subr.mxu0 0.0
  %9309 = vmatpush1.msra.mxu0 0.0
  %9310 = vmatprep.subr.mxu0 0.0
  %9311 = vmatpush1.msra.mxu0 0.0
  %9312 = vmatprep.subr.mxu0 0.0
  %9313 = vmatpush1.msra.mxu0 0.0
  %9314 = vmatprep.subr.mxu0 0.0
  %9315 = vmatpush1.msra.mxu0 0.0
  %9316 = vmatprep.subr.mxu0 0.0
  %9317 = vmatpush1.msra.mxu0 0.0
  %9318 = vmatprep.subr.mxu0 0.0
  %9319 = vmatpush1.msra.mxu0 0.0
  %9320 = vmatprep.subr.mxu0 0.0
  %9321 = vmatpush1.msra.mxu0 0.0
  %9322 = vmatprep.subr.mxu0 0.0
  %9323 = vmatpush1.msra.mxu0 0.0
  %9324 = vmatprep.subr.mxu0 0.0
  %9325 = vmatpush1.msra.mxu0 0.0
  %9326 = vmatprep.subr.mxu0 0.0
  %9327 = vmatpush1.msra.mxu0 0.0
  %9328 = vmatprep.subr.mxu0 0.0
  %9329 = vmatpush1.msra.mxu0 0.0
  %9330 = vmatprep.subr.mxu0 0.0
  %9331 = vmatpush1.msra.mxu0 0.0
  %9332 = vmatprep.subr.mxu0 0.0
  %9333 = vmatpush1.msra.mxu0 0.0
  %9334 = vmatprep.subr.mxu0 0.0
  %9335 = vmatpush1.msra.mxu0 0.0
  %9336 = vmatprep.subr.mxu0 0.0
  %9337 = vmatpush1.msra.mxu0 0.0
  %9338 = vmatprep.subr.mxu0 0.0
  %9339 = vmatpush1.msra.mxu0 0.0
  %9340 = vmatprep.subr.mxu0 0.0
  %9341 = vmatpush1.msra.mxu0 0.0
  %9342 = vmatprep.subr.mxu0 0.0
  %9343 = vmatpush1.msra.mxu0 0.0
  %9344 = vmatprep.subr.mxu0 0.0
  %9345 = vmatpush1.msra.mxu0 0.0
  %9346 = vmatprep.subr.mxu0 0.0
  %9347 = vmatpush1.msra.mxu0 0.0
  %9348 = vmatprep.subr.mxu0 0.0
  %9349 = vmatpush1.msra.mxu0 0.0
  %9350 = vmatprep.subr.mxu0 0.0
  %9351 = vmatpush1.msra.mxu0 0.0
  %9352 = vmatprep.subr.mxu0 0.0
  %9353 = vmatpush1.msra.mxu0 0.0
  %9354 = vmatprep.mubr.f32.mxu0 0.0
  %9355 = vmatmul.mubr.f32.gmra.mrb[0].mxu0 %v9285
  %v9356 = vpop.f32.mrb[0].mxu0
  %v9357 = vadd.f32 0.0, %v9356
  %v9358 = vpop.f32.mrb[0].mxu0
  %9359 = vmatprep.mubr.f32.mxu0 0.0
  %9360 = vmatmul.mubr.f32.gmra.mrb[0].mxu0 %v9288
  %v9361 = vpop.f32.mrb[0].mxu0
  %v9362 = vadd.f32 0.0, %v9361
  %v9363 = vpop.f32.mrb[0].mxu0
  %9364 = vdwg.mxu0
  %v9366 = vsel %vm412, %v9017, 0
  %v9369 = vsel %vm412, %v9018, 0
  %9371 = vmatprep.subr.mxu0 0.0
  %9372 = vmatpush1.msra.mxu0 %v22
  %9373 = vmatprep.subr.mxu0 0.0
  %9374 = vmatpush1.msra.mxu0 %v23
  %9375 = vmatprep.subr.mxu0 0.0
  %9376 = vmatpush1.msra.mxu0 0.0
  %9377 = vmatprep.subr.mxu0 0.0
  %9378 = vmatpush1.msra.mxu0 0.0
  %9379 = vmatprep.subr.mxu0 0.0
  %9380 = vmatpush1.msra.mxu0 0.0
  %9381 = vmatprep.subr.mxu0 0.0
  %9382 = vmatpush1.msra.mxu0 0.0
  %9383 = vmatprep.subr.mxu0 0.0
  %9384 = vmatpush1.msra.mxu0 0.0
  %9385 = vmatprep.subr.mxu0 0.0
  %9386 = vmatpush1.msra.mxu0 0.0
  %9387 = vmatprep.subr.mxu0 0.0
  %9388 = vmatpush1.msra.mxu0 0.0
  %9389 = vmatprep.subr.mxu0 0.0
  %9390 = vmatpush1.msra.mxu0 0.0
  %9391 = vmatprep.subr.mxu0 0.0
  %9392 = vmatpush1.msra.mxu0 0.0
  %9393 = vmatprep.subr.mxu0 0.0
  %9394 = vmatpush1.msra.mxu0 0.0
  %9395 = vmatprep.subr.mxu0 0.0
  %9396 = vmatpush1.msra.mxu0 0.0
  %9397 = vmatprep.subr.mxu0 0.0
  %9398 = vmatpush1.msra.mxu0 0.0
  %9399 = vmatprep.subr.mxu0 0.0
  %9400 = vmatpush1.msra.mxu0 0.0
  %9401 = vmatprep.subr.mxu0 0.0
  %9402 = vmatpush1.msra.mxu0 0.0
  %9403 = vmatprep.subr.mxu0 0.0
  %9404 = vmatpush1.msra.mxu0 0.0
  %9405 = vmatprep.subr.mxu0 0.0
  %9406 = vmatpush1.msra.mxu0 0.0
  %9407 = vmatprep.subr.mxu0 0.0
  %9408 = vmatpush1.msra.mxu0 0.0
  %9409 = vmatprep.subr.mxu0 0.0
  %9410 = vmatpush1.msra.mxu0 0.0
  %9411 = vmatprep.subr.mxu0 0.0
  %9412 = vmatpush1.msra.mxu0 0.0
  %9413 = vmatprep.subr.mxu0 0.0
  %9414 = vmatpush1.msra.mxu0 0.0
  %9415 = vmatprep.subr.mxu0 0.0
  %9416 = vmatpush1.msra.mxu0 0.0
  %9417 = vmatprep.subr.mxu0 0.0
  %9418 = vmatpush1.msra.mxu0 0.0
  %9419 = vmatprep.subr.mxu0 0.0
  %9420 = vmatpush1.msra.mxu0 0.0
  %9421 = vmatprep.subr.mxu0 0.0
  %9422 = vmatpush1.msra.mxu0 0.0
  %9423 = vmatprep.subr.mxu0 0.0
  %9424 = vmatpush1.msra.mxu0 0.0
  %9425 = vmatprep.subr.mxu0 0.0
  %9426 = vmatpush1.msra.mxu0 0.0
  %9427 = vmatprep.subr.mxu0 0.0
  %9428 = vmatpush1.msra.mxu0 0.0
  %9429 = vmatprep.subr.mxu0 0.0
  %9430 = vmatpush1.msra.mxu0 0.0
  %9431 = vmatprep.subr.mxu0 0.0
  %9432 = vmatpush1.msra.mxu0 0.0
  %9433 = vmatprep.subr.mxu0 0.0
  %9434 = vmatpush1.msra.mxu0 0.0
  %9435 = vmatprep.mubr.f32.mxu0 0.0
  %9436 = vmatmul.mubr.f32.gmra.mrb[0].mxu0 %v9366
  %v9437 = vpop.f32.mrb[0].mxu0
  %v9438 = vadd.f32 0.0, %v9437
  %v9439 = vpop.f32.mrb[0].mxu0
  %9440 = vmatprep.mubr.f32.mxu0 0.0
  %9441 = vmatmul.mubr.f32.gmra.mrb[0].mxu0 %v9369
  %v9442 = vpop.f32.mrb[0].mxu0
  %v9443 = vadd.f32 0.0, %v9442
  %v9444 = vpop.f32.mrb[0].mxu0
  %9445 = vdwg.mxu0
  %v9447 = vsel %vm412, %v9019, 0
  %v9450 = vsel %vm412, %v9020, 0
  %9452 = vmatprep.subr.mxu0 0.0
  %9453 = vmatpush1.msra.mxu0 %v24
  %9454 = vmatprep.subr.mxu0 0.0
  %9455 = vmatpush1.msra.mxu0 %v25
  %9456 = vmatprep.subr.mxu0 0.0
  %9457 = vmatpush1.msra.mxu0 0.0
  %9458 = vmatprep.subr.mxu0 0.0
  %9459 = vmatpush1.msra.mxu0 0.0
  %9460 = vmatprep.subr.mxu0 0.0
  %9461 = vmatpush1.msra.mxu0 0.0
  %9462 = vmatprep.subr.mxu0 0.0
  %9463 = vmatpush1.msra.mxu0 0.0
  %9464 = vmatprep.subr.mxu0 0.0
  %9465 = vmatpush1.msra.mxu0 0.0
  %9466 = vmatprep.subr.mxu0 0.0
  %9467 = vmatpush1.msra.mxu0 0.0
  %9468 = vmatprep.subr.mxu0 0.0
  %9469 = vmatpush1.msra.mxu0 0.0
  %9470 = vmatprep.subr.mxu0 0.0
  %9471 = vmatpush1.msra.mxu0 0.0
  %9472 = vmatprep.subr.mxu0 0.0
  %9473 = vmatpush1.msra.mxu0 0.0
  %9474 = vmatprep.subr.mxu0 0.0
  %9475 = vmatpush1.msra.mxu0 0.0
  %9476 = vmatprep.subr.mxu0 0.0
  %9477 = vmatpush1.msra.mxu0 0.0
  %9478 = vmatprep.subr.mxu0 0.0
  %9479 = vmatpush1.msra.mxu0 0.0
  %9480 = vmatprep.subr.mxu0 0.0
  %9481 = vmatpush1.msra.mxu0 0.0
  %9482 = vmatprep.subr.mxu0 0.0
  %9483 = vmatpush1.msra.mxu0 0.0
  %9484 = vmatprep.subr.mxu0 0.0
  %9485 = vmatpush1.msra.mxu0 0.0
  %9486 = vmatprep.subr.mxu0 0.0
  %9487 = vmatpush1.msra.mxu0 0.0
  %9488 = vmatprep.subr.mxu0 0.0
  %9489 = vmatpush1.msra.mxu0 0.0
  %9490 = vmatprep.subr.mxu0 0.0
  %9491 = vmatpush1.msra.mxu0 0.0
  %9492 = vmatprep.subr.mxu0 0.0
  %9493 = vmatpush1.msra.mxu0 0.0
  %9494 = vmatprep.subr.mxu0 0.0
  %9495 = vmatpush1.msra.mxu0 0.0
  %9496 = vmatprep.subr.mxu0 0.0
  %9497 = vmatpush1.msra.mxu0 0.0
  %9498 = vmatprep.subr.mxu0 0.0
  %9499 = vmatpush1.msra.mxu0 0.0
  %9500 = vmatprep.subr.mxu0 0.0
  %9501 = vmatpush1.msra.mxu0 0.0
  %9502 = vmatprep.subr.mxu0 0.0
  %9503 = vmatpush1.msra.mxu0 0.0
  %9504 = vmatprep.subr.mxu0 0.0
  %9505 = vmatpush1.msra.mxu0 0.0
  %9506 = vmatprep.subr.mxu0 0.0
  %9507 = vmatpush1.msra.mxu0 0.0
  %9508 = vmatprep.subr.mxu0 0.0
  %9509 = vmatpush1.msra.mxu0 0.0
  %9510 = vmatprep.subr.mxu0 0.0
  %9511 = vmatpush1.msra.mxu0 0.0
  %9512 = vmatprep.subr.mxu0 0.0
  %9513 = vmatpush1.msra.mxu0 0.0
  %9514 = vmatprep.subr.mxu0 0.0
  %9515 = vmatpush1.msra.mxu0 0.0
  %9516 = vmatprep.mubr.f32.mxu0 0.0
  %9517 = vmatmul.mubr.f32.gmra.mrb[0].mxu0 %v9447
  %v9518 = vpop.f32.mrb[0].mxu0
  %v9519 = vadd.f32 0.0, %v9518
  %v9520 = vpop.f32.mrb[0].mxu0
  %9521 = vmatprep.mubr.f32.mxu0 0.0
  %9522 = vmatmul.mubr.f32.gmra.mrb[0].mxu0 %v9450
  %v9523 = vpop.f32.mrb[0].mxu0
  %v9524 = vadd.f32 0.0, %v9523
  %v9525 = vpop.f32.mrb[0].mxu0
  %9526 = vdwg.mxu0
  %v9528 = vsel %vm412, %v9021, 0
  %v9531 = vsel %vm412, %v9022, 0
  %9533 = vmatprep.subr.mxu0 0.0
  %9534 = vmatpush1.msra.mxu0 %v26
  %9535 = vmatprep.subr.mxu0 0.0
  %9536 = vmatpush1.msra.mxu0 %v27
  %9537 = vmatprep.subr.mxu0 0.0
  %9538 = vmatpush1.msra.mxu0 0.0
  %9539 = vmatprep.subr.mxu0 0.0
  %9540 = vmatpush1.msra.mxu0 0.0
  %9541 = vmatprep.subr.mxu0 0.0
  %9542 = vmatpush1.msra.mxu0 0.0
  %9543 = vmatprep.subr.mxu0 0.0
  %9544 = vmatpush1.msra.mxu0 0.0
  %9545 = vmatprep.subr.mxu0 0.0
  %9546 = vmatpush1.msra.mxu0 0.0
  %9547 = vmatprep.subr.mxu0 0.0
  %9548 = vmatpush1.msra.mxu0 0.0
  %9549 = vmatprep.subr.mxu0 0.0
  %9550 = vmatpush1.msra.mxu0 0.0
  %9551 = vmatprep.subr.mxu0 0.0
  %9552 = vmatpush1.msra.mxu0 0.0
  %9553 = vmatprep.subr.mxu0 0.0
  %9554 = vmatpush1.msra.mxu0 0.0
  %9555 = vmatprep.subr.mxu0 0.0
  %9556 = vmatpush1.msra.mxu0 0.0
  %9557 = vmatprep.subr.mxu0 0.0
  %9558 = vmatpush1.msra.mxu0 0.0
  %9559 = vmatprep.subr.mxu0 0.0
  %9560 = vmatpush1.msra.mxu0 0.0
  %9561 = vmatprep.subr.mxu0 0.0
  %9562 = vmatpush1.msra.mxu0 0.0
  %9563 = vmatprep.subr.mxu0 0.0
  %9564 = vmatpush1.msra.mxu0 0.0
  %9565 = vmatprep.subr.mxu0 0.0
  %9566 = vmatpush1.msra.mxu0 0.0
  %9567 = vmatprep.subr.mxu0 0.0
  %9568 = vmatpush1.msra.mxu0 0.0
  %9569 = vmatprep.subr.mxu0 0.0
  %9570 = vmatpush1.msra.mxu0 0.0
  %9571 = vmatprep.subr.mxu0 0.0
  %9572 = vmatpush1.msra.mxu0 0.0
  %9573 = vmatprep.subr.mxu0 0.0
  %9574 = vmatpush1.msra.mxu0 0.0
  %9575 = vmatprep.subr.mxu0 0.0
  %9576 = vmatpush1.msra.mxu0 0.0
  %9577 = vmatprep.subr.mxu0 0.0
  %9578 = vmatpush1.msra.mxu0 0.0
  %9579 = vmatprep.subr.mxu0 0.0
  %9580 = vmatpush1.msra.mxu0 0.0
  %9581 = vmatprep.subr.mxu0 0.0
  %9582 = vmatpush1.msra.mxu0 0.0
  %9583 = vmatprep.subr.mxu0 0.0
  %9584 = vmatpush1.msra.mxu0 0.0
  %9585 = vmatprep.subr.mxu0 0.0
  %9586 = vmatpush1.msra.mxu0 0.0
  %9587 = vmatprep.subr.mxu0 0.0
  %9588 = vmatpush1.msra.mxu0 0.0
  %9589 = vmatprep.subr.mxu0 0.0
  %9590 = vmatpush1.msra.mxu0 0.0
  %9591 = vmatprep.subr.mxu0 0.0
  %9592 = vmatpush1.msra.mxu0 0.0
  %9593 = vmatprep.subr.mxu0 0.0
  %9594 = vmatpush1.msra.mxu0 0.0
  %9595 = vmatprep.subr.mxu0 0.0
  %9596 = vmatpush1.msra.mxu0 0.0
  %9597 = vmatprep.mubr.f32.mxu0 0.0
  %9598 = vmatmul.mubr.f32.gmra.mrb[0].mxu0 %v9528
  %v9599 = vpop.f32.mrb[0].mxu0
  %v9600 = vadd.f32 0.0, %v9599
  %v9601 = vpop.f32.mrb[0].mxu0
  %9602 = vmatprep.mubr.f32.mxu0 0.0
  %9603 = vmatmul.mubr.f32.gmra.mrb[0].mxu0 %v9531
  %v9604 = vpop.f32.mrb[0].mxu0
  %v9605 = vadd.f32 0.0, %v9604
  %v9606 = vpop.f32.mrb[0].mxu0
  %9607 = vdwg.mxu0
  %v9609 = vsel %vm412, %v9023, 0
  %v9612 = vsel %vm412, %v9024, 0
  %9614 = vmatprep.subr.mxu0 0.0
  %9615 = vmatpush1.msra.mxu0 %v28
  %9616 = vmatprep.subr.mxu0 0.0
  %9617 = vmatpush1.msra.mxu0 %v29
  %9618 = vmatprep.subr.mxu0 0.0
  %9619 = vmatpush1.msra.mxu0 0.0
  %9620 = vmatprep.subr.mxu0 0.0
  %9621 = vmatpush1.msra.mxu0 0.0
  %9622 = vmatprep.subr.mxu0 0.0
  %9623 = vmatpush1.msra.mxu0 0.0
  %9624 = vmatprep.subr.mxu0 0.0
  %9625 = vmatpush1.msra.mxu0 0.0
  %9626 = vmatprep.subr.mxu0 0.0
  %9627 = vmatpush1.msra.mxu0 0.0
  %9628 = vmatprep.subr.mxu0 0.0
  %9629 = vmatpush1.msra.mxu0 0.0
  %9630 = vmatprep.subr.mxu0 0.0
  %9631 = vmatpush1.msra.mxu0 0.0
  %9632 = vmatprep.subr.mxu0 0.0
  %9633 = vmatpush1.msra.mxu0 0.0
  %9634 = vmatprep.subr.mxu0 0.0
  %9635 = vmatpush1.msra.mxu0 0.0
  %9636 = vmatprep.subr.mxu0 0.0
  %9637 = vmatpush1.msra.mxu0 0.0
  %9638 = vmatprep.subr.mxu0 0.0
  %9639 = vmatpush1.msra.mxu0 0.0
  %9640 = vmatprep.subr.mxu0 0.0
  %9641 = vmatpush1.msra.mxu0 0.0
  %9642 = vmatprep.subr.mxu0 0.0
  %9643 = vmatpush1.msra.mxu0 0.0
  %9644 = vmatprep.subr.mxu0 0.0
  %9645 = vmatpush1.msra.mxu0 0.0
  %9646 = vmatprep.subr.mxu0 0.0
  %9647 = vmatpush1.msra.mxu0 0.0
  %9648 = vmatprep.subr.mxu0 0.0
  %9649 = vmatpush1.msra.mxu0 0.0
  %9650 = vmatprep.subr.mxu0 0.0
  %9651 = vmatpush1.msra.mxu0 0.0
  %9652 = vmatprep.subr.mxu0 0.0
  %9653 = vmatpush1.msra.mxu0 0.0
  %9654 = vmatprep.subr.mxu0 0.0
  %9655 = vmatpush1.msra.mxu0 0.0
  %9656 = vmatprep.subr.mxu0 0.0
  %9657 = vmatpush1.msra.mxu0 0.0
  %9658 = vmatprep.subr.mxu0 0.0
  %9659 = vmatpush1.msra.mxu0 0.0
  %9660 = vmatprep.subr.mxu0 0.0
  %9661 = vmatpush1.msra.mxu0 0.0
  %9662 = vmatprep.subr.mxu0 0.0
  %9663 = vmatpush1.msra.mxu0 0.0
  %9664 = vmatprep.subr.mxu0 0.0
  %9665 = vmatpush1.msra.mxu0 0.0
  %9666 = vmatprep.subr.mxu0 0.0
  %9667 = vmatpush1.msra.mxu0 0.0
  %9668 = vmatprep.subr.mxu0 0.0
  %9669 = vmatpush1.msra.mxu0 0.0
  %9670 = vmatprep.subr.mxu0 0.0
  %9671 = vmatpush1.msra.mxu0 0.0
  %9672 = vmatprep.subr.mxu0 0.0
  %9673 = vmatpush1.msra.mxu0 0.0
  %9674 = vmatprep.subr.mxu0 0.0
  %9675 = vmatpush1.msra.mxu0 0.0
  %9676 = vmatprep.subr.mxu0 0.0
  %9677 = vmatpush1.msra.mxu0 0.0
  %9678 = vmatprep.mubr.f32.mxu0 0.0
  %9679 = vmatmul.mubr.f32.gmra.mrb[0].mxu0 %v9609
  %v9680 = vpop.f32.mrb[0].mxu0
  %v9681 = vadd.f32 0.0, %v9680
  %v9682 = vpop.f32.mrb[0].mxu0
  %9683 = vmatprep.mubr.f32.mxu0 0.0
  %9684 = vmatmul.mubr.f32.gmra.mrb[0].mxu0 %v9612
  %v9685 = vpop.f32.mrb[0].mxu0
  %v9686 = vadd.f32 0.0, %v9685
  %v9687 = vpop.f32.mrb[0].mxu0
  %9688 = vdwg.mxu0
  %v9690 = vsel %vm412, %v9025, 0
  %v9693 = vsel %vm412, %v9026, 0
  %9695 = vmatprep.subr.mxu0 0.0
  %9696 = vmatpush1.msra.mxu0 %v30
  %9697 = vmatprep.subr.mxu0 0.0
  %9698 = vmatpush1.msra.mxu0 %v31
  %9699 = vmatprep.subr.mxu0 0.0
  %9700 = vmatpush1.msra.mxu0 0.0
  %9701 = vmatprep.subr.mxu0 0.0
  %9702 = vmatpush1.msra.mxu0 0.0
  %9703 = vmatprep.subr.mxu0 0.0
  %9704 = vmatpush1.msra.mxu0 0.0
  %9705 = vmatprep.subr.mxu0 0.0
  %9706 = vmatpush1.msra.mxu0 0.0
  %9707 = vmatprep.subr.mxu0 0.0
  %9708 = vmatpush1.msra.mxu0 0.0
  %9709 = vmatprep.subr.mxu0 0.0
  %9710 = vmatpush1.msra.mxu0 0.0
  %9711 = vmatprep.subr.mxu0 0.0
  %9712 = vmatpush1.msra.mxu0 0.0
  %9713 = vmatprep.subr.mxu0 0.0
  %9714 = vmatpush1.msra.mxu0 0.0
  %9715 = vmatprep.subr.mxu0 0.0
  %9716 = vmatpush1.msra.mxu0 0.0
  %9717 = vmatprep.subr.mxu0 0.0
  %9718 = vmatpush1.msra.mxu0 0.0
  %9719 = vmatprep.subr.mxu0 0.0
  %9720 = vmatpush1.msra.mxu0 0.0
  %9721 = vmatprep.subr.mxu0 0.0
  %9722 = vmatpush1.msra.mxu0 0.0
  %9723 = vmatprep.subr.mxu0 0.0
  %9724 = vmatpush1.msra.mxu0 0.0
  %9725 = vmatprep.subr.mxu0 0.0
  %9726 = vmatpush1.msra.mxu0 0.0
  %9727 = vmatprep.subr.mxu0 0.0
  %9728 = vmatpush1.msra.mxu0 0.0
  %9729 = vmatprep.subr.mxu0 0.0
  %9730 = vmatpush1.msra.mxu0 0.0
  %9731 = vmatprep.subr.mxu0 0.0
  %9732 = vmatpush1.msra.mxu0 0.0
  %9733 = vmatprep.subr.mxu0 0.0
  %9734 = vmatpush1.msra.mxu0 0.0
  %9735 = vmatprep.subr.mxu0 0.0
  %9736 = vmatpush1.msra.mxu0 0.0
  %9737 = vmatprep.subr.mxu0 0.0
  %9738 = vmatpush1.msra.mxu0 0.0
  %9739 = vmatprep.subr.mxu0 0.0
  %9740 = vmatpush1.msra.mxu0 0.0
  %9741 = vmatprep.subr.mxu0 0.0
  %9742 = vmatpush1.msra.mxu0 0.0
  %9743 = vmatprep.subr.mxu0 0.0
  %9744 = vmatpush1.msra.mxu0 0.0
  %9745 = vmatprep.subr.mxu0 0.0
  %9746 = vmatpush1.msra.mxu0 0.0
  %9747 = vmatprep.subr.mxu0 0.0
  %9748 = vmatpush1.msra.mxu0 0.0
  %9749 = vmatprep.subr.mxu0 0.0
  %9750 = vmatpush1.msra.mxu0 0.0
  %9751 = vmatprep.subr.mxu0 0.0
  %9752 = vmatpush1.msra.mxu0 0.0
  %9753 = vmatprep.subr.mxu0 0.0
  %9754 = vmatpush1.msra.mxu0 0.0
  %9755 = vmatprep.subr.mxu0 0.0
  %9756 = vmatpush1.msra.mxu0 0.0
  %9757 = vmatprep.subr.mxu0 0.0
  %9758 = vmatpush1.msra.mxu0 0.0
  %9759 = vmatprep.mubr.f32.mxu0 0.0
  %9760 = vmatmul.mubr.f32.gmra.mrb[0].mxu0 %v9690
  %v9761 = vpop.f32.mrb[0].mxu0
  %v9762 = vadd.f32 0.0, %v9761
  %v9763 = vpop.f32.mrb[0].mxu0
  %9764 = vmatprep.mubr.f32.mxu0 0.0
  %9765 = vmatmul.mubr.f32.gmra.mrb[0].mxu0 %v9693
  %v9766 = vpop.f32.mrb[0].mxu0
  %v9767 = vadd.f32 0.0, %v9766
  %v9768 = vpop.f32.mrb[0].mxu0
  %9769 = vdwg.mxu0
  %v9771 = vsel %vm412, %v9027, 0
  %v9774 = vsel %vm412, %v9028, 0
  %9776 = vmatprep.subr.mxu0 0.0
  %9777 = vmatpush1.msra.mxu0 %v32
  %9778 = vmatprep.subr.mxu0 0.0
  %9779 = vmatpush1.msra.mxu0 %v33
  %9780 = vmatprep.subr.mxu0 0.0
  %9781 = vmatpush1.msra.mxu0 0.0
  %9782 = vmatprep.subr.mxu0 0.0
  %9783 = vmatpush1.msra.mxu0 0.0
  %9784 = vmatprep.subr.mxu0 0.0
  %9785 = vmatpush1.msra.mxu0 0.0
  %9786 = vmatprep.subr.mxu0 0.0
  %9787 = vmatpush1.msra.mxu0 0.0
  %9788 = vmatprep.subr.mxu0 0.0
  %9789 = vmatpush1.msra.mxu0 0.0
  %9790 = vmatprep.subr.mxu0 0.0
  %9791 = vmatpush1.msra.mxu0 0.0
  %9792 = vmatprep.subr.mxu0 0.0
  %9793 = vmatpush1.msra.mxu0 0.0
  %9794 = vmatprep.subr.mxu0 0.0
  %9795 = vmatpush1.msra.mxu0 0.0
  %9796 = vmatprep.subr.mxu0 0.0
  %9797 = vmatpush1.msra.mxu0 0.0
  %9798 = vmatprep.subr.mxu0 0.0
  %9799 = vmatpush1.msra.mxu0 0.0
  %9800 = vmatprep.subr.mxu0 0.0
  %9801 = vmatpush1.msra.mxu0 0.0
  %9802 = vmatprep.subr.mxu0 0.0
  %9803 = vmatpush1.msra.mxu0 0.0
  %9804 = vmatprep.subr.mxu0 0.0
  %9805 = vmatpush1.msra.mxu0 0.0
  %9806 = vmatprep.subr.mxu0 0.0
  %9807 = vmatpush1.msra.mxu0 0.0
  %9808 = vmatprep.subr.mxu0 0.0
  %9809 = vmatpush1.msra.mxu0 0.0
  %9810 = vmatprep.subr.mxu0 0.0
  %9811 = vmatpush1.msra.mxu0 0.0
  %9812 = vmatprep.subr.mxu0 0.0
  %9813 = vmatpush1.msra.mxu0 0.0
  %9814 = vmatprep.subr.mxu0 0.0
  %9815 = vmatpush1.msra.mxu0 0.0
  %9816 = vmatprep.subr.mxu0 0.0
  %9817 = vmatpush1.msra.mxu0 0.0
  %9818 = vmatprep.subr.mxu0 0.0
  %9819 = vmatpush1.msra.mxu0 0.0
  %9820 = vmatprep.subr.mxu0 0.0
  %9821 = vmatpush1.msra.mxu0 0.0
  %9822 = vmatprep.subr.mxu0 0.0
  %9823 = vmatpush1.msra.mxu0 0.0
  %9824 = vmatprep.subr.mxu0 0.0
  %9825 = vmatpush1.msra.mxu0 0.0
  %9826 = vmatprep.subr.mxu0 0.0
  %9827 = vmatpush1.msra.mxu0 0.0
  %9828 = vmatprep.subr.mxu0 0.0
  %9829 = vmatpush1.msra.mxu0 0.0
  %9830 = vmatprep.subr.mxu0 0.0
  %9831 = vmatpush1.msra.mxu0 0.0
  %9832 = vmatprep.subr.mxu0 0.0
  %9833 = vmatpush1.msra.mxu0 0.0
  %9834 = vmatprep.subr.mxu0 0.0
  %9835 = vmatpush1.msra.mxu0 0.0
  %9836 = vmatprep.subr.mxu0 0.0
  %9837 = vmatpush1.msra.mxu0 0.0
  %9838 = vmatprep.subr.mxu0 0.0
  %9839 = vmatpush1.msra.mxu0 0.0
  %9840 = vmatprep.mubr.f32.mxu0 0.0
  %9841 = vmatmul.mubr.f32.gmra.mrb[0].mxu0 %v9771
  %v9842 = vpop.f32.mrb[0].mxu0
  %v9843 = vadd.f32 0.0, %v9842
  %v9844 = vpop.f32.mrb[0].mxu0
  %9845 = vmatprep.mubr.f32.mxu0 0.0
  %9846 = vmatmul.mubr.f32.gmra.mrb[0].mxu0 %v9774
  %v9847 = vpop.f32.mrb[0].mxu0
  %v9848 = vadd.f32 0.0, %v9847
  %v9849 = vpop.f32.mrb[0].mxu0
  %9850 = vdwg.mxu0
  %v9852 = vsel %vm412, %v9029, 0
  %v9855 = vsel %vm412, %v9030, 0
  %9857 = vmatprep.subr.mxu0 0.0
  %9858 = vmatpush1.msra.mxu0 %v34
  %9859 = vmatprep.subr.mxu0 0.0
  %9860 = vmatpush1.msra.mxu0 %v35
  %9861 = vmatprep.subr.mxu0 0.0
  %9862 = vmatpush1.msra.mxu0 0.0
  %9863 = vmatprep.subr.mxu0 0.0
  %9864 = vmatpush1.msra.mxu0 0.0
  %9865 = vmatprep.subr.mxu0 0.0
  %9866 = vmatpush1.msra.mxu0 0.0
  %9867 = vmatprep.subr.mxu0 0.0
  %9868 = vmatpush1.msra.mxu0 0.0
  %9869 = vmatprep.subr.mxu0 0.0
  %9870 = vmatpush1.msra.mxu0 0.0
  %9871 = vmatprep.subr.mxu0 0.0
  %9872 = vmatpush1.msra.mxu0 0.0
  %9873 = vmatprep.subr.mxu0 0.0
  %9874 = vmatpush1.msra.mxu0 0.0
  %9875 = vmatprep.subr.mxu0 0.0
  %9876 = vmatpush1.msra.mxu0 0.0
  %9877 = vmatprep.subr.mxu0 0.0
  %9878 = vmatpush1.msra.mxu0 0.0
  %9879 = vmatprep.subr.mxu0 0.0
  %9880 = vmatpush1.msra.mxu0 0.0
  %9881 = vmatprep.subr.mxu0 0.0
  %9882 = vmatpush1.msra.mxu0 0.0
  %9883 = vmatprep.subr.mxu0 0.0
  %9884 = vmatpush1.msra.mxu0 0.0
  %9885 = vmatprep.subr.mxu0 0.0
  %9886 = vmatpush1.msra.mxu0 0.0
  %9887 = vmatprep.subr.mxu0 0.0
  %9888 = vmatpush1.msra.mxu0 0.0
  %9889 = vmatprep.subr.mxu0 0.0
  %9890 = vmatpush1.msra.mxu0 0.0
  %9891 = vmatprep.subr.mxu0 0.0
  %9892 = vmatpush1.msra.mxu0 0.0
  %9893 = vmatprep.subr.mxu0 0.0
  %9894 = vmatpush1.msra.mxu0 0.0
  %9895 = vmatprep.subr.mxu0 0.0
  %9896 = vmatpush1.msra.mxu0 0.0
  %9897 = vmatprep.subr.mxu0 0.0
  %9898 = vmatpush1.msra.mxu0 0.0
  %9899 = vmatprep.subr.mxu0 0.0
  %9900 = vmatpush1.msra.mxu0 0.0
  %9901 = vmatprep.subr.mxu0 0.0
  %9902 = vmatpush1.msra.mxu0 0.0
  %9903 = vmatprep.subr.mxu0 0.0
  %9904 = vmatpush1.msra.mxu0 0.0
  %9905 = vmatprep.subr.mxu0 0.0
  %9906 = vmatpush1.msra.mxu0 0.0
  %9907 = vmatprep.subr.mxu0 0.0
  %9908 = vmatpush1.msra.mxu0 0.0
  %9909 = vmatprep.subr.mxu0 0.0
  %9910 = vmatpush1.msra.mxu0 0.0
  %9911 = vmatprep.subr.mxu0 0.0
  %9912 = vmatpush1.msra.mxu0 0.0
  %9913 = vmatprep.subr.mxu0 0.0
  %9914 = vmatpush1.msra.mxu0 0.0
  %9915 = vmatprep.subr.mxu0 0.0
  %9916 = vmatpush1.msra.mxu0 0.0
  %9917 = vmatprep.subr.mxu0 0.0
  %9918 = vmatpush1.msra.mxu0 0.0
  %9919 = vmatprep.subr.mxu0 0.0
  %9920 = vmatpush1.msra.mxu0 0.0
  %9921 = vmatprep.mubr.f32.mxu0 0.0
  %9922 = vmatmul.mubr.f32.gmra.mrb[0].mxu0 %v9852
  %v9923 = vpop.f32.mrb[0].mxu0
  %v9924 = vadd.f32 0.0, %v9923
  %v9925 = vpop.f32.mrb[0].mxu0
  %9926 = vmatprep.mubr.f32.mxu0 0.0
  %9927 = vmatmul.mubr.f32.gmra.mrb[0].mxu0 %v9855
  %v9928 = vpop.f32.mrb[0].mxu0
  %v9929 = vadd.f32 0.0, %v9928
  %v9930 = vpop.f32.mrb[0].mxu0
  %9931 = vdwg.mxu0
  %v9933 = vsel %vm412, %v9031, 0
  %v9936 = vsel %vm412, %v9032, 0
  %9938 = vmatprep.subr.mxu0 0.0
  %9939 = vmatpush1.msra.mxu0 %v36
  %9940 = vmatprep.subr.mxu0 0.0
  %9941 = vmatpush1.msra.mxu0 %v37
  %9942 = vmatprep.subr.mxu0 0.0
  %9943 = vmatpush1.msra.mxu0 0.0
  %9944 = vmatprep.subr.mxu0 0.0
  %9945 = vmatpush1.msra.mxu0 0.0
  %9946 = vmatprep.subr.mxu0 0.0
  %9947 = vmatpush1.msra.mxu0 0.0
  %9948 = vmatprep.subr.mxu0 0.0
  %9949 = vmatpush1.msra.mxu0 0.0
  %9950 = vmatprep.subr.mxu0 0.0
  %9951 = vmatpush1.msra.mxu0 0.0
  %9952 = vmatprep.subr.mxu0 0.0
  %9953 = vmatpush1.msra.mxu0 0.0
  %9954 = vmatprep.subr.mxu0 0.0
  %9955 = vmatpush1.msra.mxu0 0.0
  %9956 = vmatprep.subr.mxu0 0.0
  %9957 = vmatpush1.msra.mxu0 0.0
  %9958 = vmatprep.subr.mxu0 0.0
  %9959 = vmatpush1.msra.mxu0 0.0
  %9960 = vmatprep.subr.mxu0 0.0
  %9961 = vmatpush1.msra.mxu0 0.0
  %9962 = vmatprep.subr.mxu0 0.0
  %9963 = vmatpush1.msra.mxu0 0.0
  %9964 = vmatprep.subr.mxu0 0.0
  %9965 = vmatpush1.msra.mxu0 0.0
  %9966 = vmatprep.subr.mxu0 0.0
  %9967 = vmatpush1.msra.mxu0 0.0
  %9968 = vmatprep.subr.mxu0 0.0
  %9969 = vmatpush1.msra.mxu0 0.0
  %9970 = vmatprep.subr.mxu0 0.0
  %9971 = vmatpush1.msra.mxu0 0.0
  %9972 = vmatprep.subr.mxu0 0.0
  %9973 = vmatpush1.msra.mxu0 0.0
  %9974 = vmatprep.subr.mxu0 0.0
  %9975 = vmatpush1.msra.mxu0 0.0
  %9976 = vmatprep.subr.mxu0 0.0
  %9977 = vmatpush1.msra.mxu0 0.0
  %9978 = vmatprep.subr.mxu0 0.0
  %9979 = vmatpush1.msra.mxu0 0.0
  %9980 = vmatprep.subr.mxu0 0.0
  %9981 = vmatpush1.msra.mxu0 0.0
  %9982 = vmatprep.subr.mxu0 0.0
  %9983 = vmatpush1.msra.mxu0 0.0
  %9984 = vmatprep.subr.mxu0 0.0
  %9985 = vmatpush1.msra.mxu0 0.0
  %9986 = vmatprep.subr.mxu0 0.0
  %9987 = vmatpush1.msra.mxu0 0.0
  %9988 = vmatprep.subr.mxu0 0.0
  %9989 = vmatpush1.msra.mxu0 0.0
  %9990 = vmatprep.subr.mxu0 0.0
  %9991 = vmatpush1.msra.mxu0 0.0
  %9992 = vmatprep.subr.mxu0 0.0
  %9993 = vmatpush1.msra.mxu0 0.0
  %9994 = vmatprep.subr.mxu0 0.0
  %9995 = vmatpush1.msra.mxu0 0.0
  %9996 = vmatprep.subr.mxu0 0.0
  %9997 = vmatpush1.msra.mxu0 0.0
  %9998 = vmatprep.subr.mxu0 0.0
  %9999 = vmatpush1.msra.mxu0 0.0
  %10000 = vmatprep.subr.mxu0 0.0
  %10001 = vmatpush1.msra.mxu0 0.0
  %10002 = vmatprep.mubr.f32.mxu0 0.0
  %10003 = vmatmul.mubr.f32.gmra.mrb[0].mxu0 %v9933
  %v10004 = vpop.f32.mrb[0].mxu0
  %v10005 = vadd.f32 0.0, %v10004
  %v10006 = vpop.f32.mrb[0].mxu0
  %10007 = vmatprep.mubr.f32.mxu0 0.0
  %10008 = vmatmul.mubr.f32.gmra.mrb[0].mxu0 %v9936
  %v10009 = vpop.f32.mrb[0].mxu0
  %v10010 = vadd.f32 0.0, %v10009
  %v10011 = vpop.f32.mrb[0].mxu0
  %10012 = vdwg.mxu0
  %v10014 = vsel %vm412, %v9033, 0
  %v10017 = vsel %vm412, %v9034, 0
  %10019 = vmatprep.subr.mxu0 0.0
  %10020 = vmatpush1.msra.mxu0 %v38
  %10021 = vmatprep.subr.mxu0 0.0
  %10022 = vmatpush1.msra.mxu0 %v39
  %10023 = vmatprep.subr.mxu0 0.0
  %10024 = vmatpush1.msra.mxu0 0.0
  %10025 = vmatprep.subr.mxu0 0.0
  %10026 = vmatpush1.msra.mxu0 0.0
  %10027 = vmatprep.subr.mxu0 0.0
  %10028 = vmatpush1.msra.mxu0 0.0
  %10029 = vmatprep.subr.mxu0 0.0
  %10030 = vmatpush1.msra.mxu0 0.0
  %10031 = vmatprep.subr.mxu0 0.0
  %10032 = vmatpush1.msra.mxu0 0.0
  %10033 = vmatprep.subr.mxu0 0.0
  %10034 = vmatpush1.msra.mxu0 0.0
  %10035 = vmatprep.subr.mxu0 0.0
  %10036 = vmatpush1.msra.mxu0 0.0
  %10037 = vmatprep.subr.mxu0 0.0
  %10038 = vmatpush1.msra.mxu0 0.0
  %10039 = vmatprep.subr.mxu0 0.0
  %10040 = vmatpush1.msra.mxu0 0.0
  %10041 = vmatprep.subr.mxu0 0.0
  %10042 = vmatpush1.msra.mxu0 0.0
  %10043 = vmatprep.subr.mxu0 0.0
  %10044 = vmatpush1.msra.mxu0 0.0
  %10045 = vmatprep.subr.mxu0 0.0
  %10046 = vmatpush1.msra.mxu0 0.0
  %10047 = vmatprep.subr.mxu0 0.0
  %10048 = vmatpush1.msra.mxu0 0.0
  %10049 = vmatprep.subr.mxu0 0.0
  %10050 = vmatpush1.msra.mxu0 0.0
  %10051 = vmatprep.subr.mxu0 0.0
  %10052 = vmatpush1.msra.mxu0 0.0
  %10053 = vmatprep.subr.mxu0 0.0
  %10054 = vmatpush1.msra.mxu0 0.0
  %10055 = vmatprep.subr.mxu0 0.0
  %10056 = vmatpush1.msra.mxu0 0.0
  %10057 = vmatprep.subr.mxu0 0.0
  %10058 = vmatpush1.msra.mxu0 0.0
  %10059 = vmatprep.subr.mxu0 0.0
  %10060 = vmatpush1.msra.mxu0 0.0
  %10061 = vmatprep.subr.mxu0 0.0
  %10062 = vmatpush1.msra.mxu0 0.0
  %10063 = vmatprep.subr.mxu0 0.0
  %10064 = vmatpush1.msra.mxu0 0.0
  %10065 = vmatprep.subr.mxu0 0.0
  %10066 = vmatpush1.msra.mxu0 0.0
  %10067 = vmatprep.subr.mxu0 0.0
  %10068 = vmatpush1.msra.mxu0 0.0
  %10069 = vmatprep.subr.mxu0 0.0
  %10070 = vmatpush1.msra.mxu0 0.0
  %10071 = vmatprep.subr.mxu0 0.0
  %10072 = vmatpush1.msra.mxu0 0.0
  %10073 = vmatprep.subr.mxu0 0.0
  %10074 = vmatpush1.msra.mxu0 0.0
  %10075 = vmatprep.subr.mxu0 0.0
  %10076 = vmatpush1.msra.mxu0 0.0
  %10077 = vmatprep.subr.mxu0 0.0
  %10078 = vmatpush1.msra.mxu0 0.0
  %10079 = vmatprep.subr.mxu0 0.0
  %10080 = vmatpush1.msra.mxu0 0.0
  %10081 = vmatprep.subr.mxu0 0.0
  %10082 = vmatpush1.msra.mxu0 0.0
  %10083 = vmatprep.mubr.f32.mxu0 0.0
  %10084 = vmatmul.mubr.f32.gmra.mrb[0].mxu0 %v10014
  %v10085 = vpop.f32.mrb[0].mxu0
  %v10086 = vadd.f32 0.0, %v10085
  %v10087 = vpop.f32.mrb[0].mxu0
  %10088 = vmatprep.mubr.f32.mxu0 0.0
  %10089 = vmatmul.mubr.f32.gmra.mrb[0].mxu0 %v10017
  %v10090 = vpop.f32.mrb[0].mxu0
  %v10091 = vadd.f32 0.0, %v10090
  %v10092 = vpop.f32.mrb[0].mxu0
  %10093 = vdwg.mxu0
  %v10095 = vsel %vm412, %v9035, 0
  %v10098 = vsel %vm412, %v9036, 0
  %10100 = vmatprep.subr.mxu0 0.0
  %10101 = vmatpush1.msra.mxu0 %v40
  %10102 = vmatprep.subr.mxu0 0.0
  %10103 = vmatpush1.msra.mxu0 %v41
  %10104 = vmatprep.subr.mxu0 0.0
  %10105 = vmatpush1.msra.mxu0 0.0
  %10106 = vmatprep.subr.mxu0 0.0
  %10107 = vmatpush1.msra.mxu0 0.0
  %10108 = vmatprep.subr.mxu0 0.0
  %10109 = vmatpush1.msra.mxu0 0.0
  %10110 = vmatprep.subr.mxu0 0.0
  %10111 = vmatpush1.msra.mxu0 0.0
  %10112 = vmatprep.subr.mxu0 0.0
  %10113 = vmatpush1.msra.mxu0 0.0
  %10114 = vmatprep.subr.mxu0 0.0
  %10115 = vmatpush1.msra.mxu0 0.0
  %10116 = vmatprep.subr.mxu0 0.0
  %10117 = vmatpush1.msra.mxu0 0.0
  %10118 = vmatprep.subr.mxu0 0.0
  %10119 = vmatpush1.msra.mxu0 0.0
  %10120 = vmatprep.subr.mxu0 0.0
  %10121 = vmatpush1.msra.mxu0 0.0
  %10122 = vmatprep.subr.mxu0 0.0
  %10123 = vmatpush1.msra.mxu0 0.0
  %10124 = vmatprep.subr.mxu0 0.0
  %10125 = vmatpush1.msra.mxu0 0.0
  %10126 = vmatprep.subr.mxu0 0.0
  %10127 = vmatpush1.msra.mxu0 0.0
  %10128 = vmatprep.subr.mxu0 0.0
  %10129 = vmatpush1.msra.mxu0 0.0
  %10130 = vmatprep.subr.mxu0 0.0
  %10131 = vmatpush1.msra.mxu0 0.0
  %10132 = vmatprep.subr.mxu0 0.0
  %10133 = vmatpush1.msra.mxu0 0.0
  %10134 = vmatprep.subr.mxu0 0.0
  %10135 = vmatpush1.msra.mxu0 0.0
  %10136 = vmatprep.subr.mxu0 0.0
  %10137 = vmatpush1.msra.mxu0 0.0
  %10138 = vmatprep.subr.mxu0 0.0
  %10139 = vmatpush1.msra.mxu0 0.0
  %10140 = vmatprep.subr.mxu0 0.0
  %10141 = vmatpush1.msra.mxu0 0.0
  %10142 = vmatprep.subr.mxu0 0.0
  %10143 = vmatpush1.msra.mxu0 0.0
  %10144 = vmatprep.subr.mxu0 0.0
  %10145 = vmatpush1.msra.mxu0 0.0
  %10146 = vmatprep.subr.mxu0 0.0
  %10147 = vmatpush1.msra.mxu0 0.0
  %10148 = vmatprep.subr.mxu0 0.0
  %10149 = vmatpush1.msra.mxu0 0.0
  %10150 = vmatprep.subr.mxu0 0.0
  %10151 = vmatpush1.msra.mxu0 0.0
  %10152 = vmatprep.subr.mxu0 0.0
  %10153 = vmatpush1.msra.mxu0 0.0
  %10154 = vmatprep.subr.mxu0 0.0
  %10155 = vmatpush1.msra.mxu0 0.0
  %10156 = vmatprep.subr.mxu0 0.0
  %10157 = vmatpush1.msra.mxu0 0.0
  %10158 = vmatprep.subr.mxu0 0.0
  %10159 = vmatpush1.msra.mxu0 0.0
  %10160 = vmatprep.subr.mxu0 0.0
  %10161 = vmatpush1.msra.mxu0 0.0
  %10162 = vmatprep.subr.mxu0 0.0
  %10163 = vmatpush1.msra.mxu0 0.0
  %10164 = vmatprep.mubr.f32.mxu0 0.0
  %10165 = vmatmul.mubr.f32.gmra.mrb[0].mxu0 %v10095
  %v10166 = vpop.f32.mrb[0].mxu0
  %v10167 = vadd.f32 0.0, %v10166
  %v10168 = vpop.f32.mrb[0].mxu0
  %10169 = vmatprep.mubr.f32.mxu0 0.0
  %10170 = vmatmul.mubr.f32.gmra.mrb[0].mxu0 %v10098
  %v10171 = vpop.f32.mrb[0].mxu0
  %v10172 = vadd.f32 0.0, %v10171
  %v10173 = vpop.f32.mrb[0].mxu0
  %10174 = vdwg.mxu0
  %v10176 = vsel %vm412, %v9037, 0
  %v10179 = vsel %vm412, %v9038, 0
  %10181 = vmatprep.subr.mxu0 0.0
  %10182 = vmatpush1.msra.mxu0 %v42
  %10183 = vmatprep.subr.mxu0 0.0
  %10184 = vmatpush1.msra.mxu0 %v43
  %10185 = vmatprep.subr.mxu0 0.0
  %10186 = vmatpush1.msra.mxu0 0.0
  %10187 = vmatprep.subr.mxu0 0.0
  %10188 = vmatpush1.msra.mxu0 0.0
  %10189 = vmatprep.subr.mxu0 0.0
  %10190 = vmatpush1.msra.mxu0 0.0
  %10191 = vmatprep.subr.mxu0 0.0
  %10192 = vmatpush1.msra.mxu0 0.0
  %10193 = vmatprep.subr.mxu0 0.0
  %10194 = vmatpush1.msra.mxu0 0.0
  %10195 = vmatprep.subr.mxu0 0.0
  %10196 = vmatpush1.msra.mxu0 0.0
  %10197 = vmatprep.subr.mxu0 0.0
  %10198 = vmatpush1.msra.mxu0 0.0
  %10199 = vmatprep.subr.mxu0 0.0
  %10200 = vmatpush1.msra.mxu0 0.0
  %10201 = vmatprep.subr.mxu0 0.0
  %10202 = vmatpush1.msra.mxu0 0.0
  %10203 = vmatprep.subr.mxu0 0.0
  %10204 = vmatpush1.msra.mxu0 0.0
  %10205 = vmatprep.subr.mxu0 0.0
  %10206 = vmatpush1.msra.mxu0 0.0
  %10207 = vmatprep.subr.mxu0 0.0
  %10208 = vmatpush1.msra.mxu0 0.0
  %10209 = vmatprep.subr.mxu0 0.0
  %10210 = vmatpush1.msra.mxu0 0.0
  %10211 = vmatprep.subr.mxu0 0.0
  %10212 = vmatpush1.msra.mxu0 0.0
  %10213 = vmatprep.subr.mxu0 0.0
  %10214 = vmatpush1.msra.mxu0 0.0
  %10215 = vmatprep.subr.mxu0 0.0
  %10216 = vmatpush1.msra.mxu0 0.0
  %10217 = vmatprep.subr.mxu0 0.0
  %10218 = vmatpush1.msra.mxu0 0.0
  %10219 = vmatprep.subr.mxu0 0.0
  %10220 = vmatpush1.msra.mxu0 0.0
  %10221 = vmatprep.subr.mxu0 0.0
  %10222 = vmatpush1.msra.mxu0 0.0
  %10223 = vmatprep.subr.mxu0 0.0
  %10224 = vmatpush1.msra.mxu0 0.0
  %10225 = vmatprep.subr.mxu0 0.0
  %10226 = vmatpush1.msra.mxu0 0.0
  %10227 = vmatprep.subr.mxu0 0.0
  %10228 = vmatpush1.msra.mxu0 0.0
  %10229 = vmatprep.subr.mxu0 0.0
  %10230 = vmatpush1.msra.mxu0 0.0
  %10231 = vmatprep.subr.mxu0 0.0
  %10232 = vmatpush1.msra.mxu0 0.0
  %10233 = vmatprep.subr.mxu0 0.0
  %10234 = vmatpush1.msra.mxu0 0.0
  %10235 = vmatprep.subr.mxu0 0.0
  %10236 = vmatpush1.msra.mxu0 0.0
  %10237 = vmatprep.subr.mxu0 0.0
  %10238 = vmatpush1.msra.mxu0 0.0
  %10239 = vmatprep.subr.mxu0 0.0
  %10240 = vmatpush1.msra.mxu0 0.0
  %10241 = vmatprep.subr.mxu0 0.0
  %10242 = vmatpush1.msra.mxu0 0.0
  %10243 = vmatprep.subr.mxu0 0.0
  %10244 = vmatpush1.msra.mxu0 0.0
  %10245 = vmatprep.mubr.f32.mxu0 0.0
  %10246 = vmatmul.mubr.f32.gmra.mrb[0].mxu0 %v10176
  %v10247 = vpop.f32.mrb[0].mxu0
  %v10248 = vadd.f32 0.0, %v10247
  %v10249 = vpop.f32.mrb[0].mxu0
  %10250 = vmatprep.mubr.f32.mxu0 0.0
  %10251 = vmatmul.mubr.f32.gmra.mrb[0].mxu0 %v10179
  %v10252 = vpop.f32.mrb[0].mxu0
  %v10253 = vadd.f32 0.0, %v10252
  %v10254 = vpop.f32.mrb[0].mxu0
  %10255 = vdwg.mxu0
  %v10257 = vsel %vm412, %v9039, 0
  %v10260 = vsel %vm412, %v9040, 0
  %10262 = vmatprep.subr.mxu0 0.0
  %10263 = vmatpush1.msra.mxu0 %v44
  %10264 = vmatprep.subr.mxu0 0.0
  %10265 = vmatpush1.msra.mxu0 %v45
  %10266 = vmatprep.subr.mxu0 0.0
  %10267 = vmatpush1.msra.mxu0 0.0
  %10268 = vmatprep.subr.mxu0 0.0
  %10269 = vmatpush1.msra.mxu0 0.0
  %10270 = vmatprep.subr.mxu0 0.0
  %10271 = vmatpush1.msra.mxu0 0.0
  %10272 = vmatprep.subr.mxu0 0.0
  %10273 = vmatpush1.msra.mxu0 0.0
  %10274 = vmatprep.subr.mxu0 0.0
  %10275 = vmatpush1.msra.mxu0 0.0
  %10276 = vmatprep.subr.mxu0 0.0
  %10277 = vmatpush1.msra.mxu0 0.0
  %10278 = vmatprep.subr.mxu0 0.0
  %10279 = vmatpush1.msra.mxu0 0.0
  %10280 = vmatprep.subr.mxu0 0.0
  %10281 = vmatpush1.msra.mxu0 0.0
  %10282 = vmatprep.subr.mxu0 0.0
  %10283 = vmatpush1.msra.mxu0 0.0
  %10284 = vmatprep.subr.mxu0 0.0
  %10285 = vmatpush1.msra.mxu0 0.0
  %10286 = vmatprep.subr.mxu0 0.0
  %10287 = vmatpush1.msra.mxu0 0.0
  %10288 = vmatprep.subr.mxu0 0.0
  %10289 = vmatpush1.msra.mxu0 0.0
  %10290 = vmatprep.subr.mxu0 0.0
  %10291 = vmatpush1.msra.mxu0 0.0
  %10292 = vmatprep.subr.mxu0 0.0
  %10293 = vmatpush1.msra.mxu0 0.0
  %10294 = vmatprep.subr.mxu0 0.0
  %10295 = vmatpush1.msra.mxu0 0.0
  %10296 = vmatprep.subr.mxu0 0.0
  %10297 = vmatpush1.msra.mxu0 0.0
  %10298 = vmatprep.subr.mxu0 0.0
  %10299 = vmatpush1.msra.mxu0 0.0
  %10300 = vmatprep.subr.mxu0 0.0
  %10301 = vmatpush1.msra.mxu0 0.0
  %10302 = vmatprep.subr.mxu0 0.0
  %10303 = vmatpush1.msra.mxu0 0.0
  %10304 = vmatprep.subr.mxu0 0.0
  %10305 = vmatpush1.msra.mxu0 0.0
  %10306 = vmatprep.subr.mxu0 0.0
  %10307 = vmatpush1.msra.mxu0 0.0
  %10308 = vmatprep.subr.mxu0 0.0
  %10309 = vmatpush1.msra.mxu0 0.0
  %10310 = vmatprep.subr.mxu0 0.0
  %10311 = vmatpush1.msra.mxu0 0.0
  %10312 = vmatprep.subr.mxu0 0.0
  %10313 = vmatpush1.msra.mxu0 0.0
  %10314 = vmatprep.subr.mxu0 0.0
  %10315 = vmatpush1.msra.mxu0 0.0
  %10316 = vmatprep.subr.mxu0 0.0
  %10317 = vmatpush1.msra.mxu0 0.0
  %10318 = vmatprep.subr.mxu0 0.0
  %10319 = vmatpush1.msra.mxu0 0.0
  %10320 = vmatprep.subr.mxu0 0.0
  %10321 = vmatpush1.msra.mxu0 0.0
  %10322 = vmatprep.subr.mxu0 0.0
  %10323 = vmatpush1.msra.mxu0 0.0
  %10324 = vmatprep.subr.mxu0 0.0
  %10325 = vmatpush1.msra.mxu0 0.0
  %10326 = vmatprep.mubr.f32.mxu0 0.0
  %10327 = vmatmul.mubr.f32.gmra.mrb[0].mxu0 %v10257
  %v10328 = vpop.f32.mrb[0].mxu0
  %v10329 = vadd.f32 0.0, %v10328
  %v10330 = vpop.f32.mrb[0].mxu0
  %10331 = vmatprep.mubr.f32.mxu0 0.0
  %10332 = vmatmul.mubr.f32.gmra.mrb[0].mxu0 %v10260
  %v10333 = vpop.f32.mrb[0].mxu0
  %v10334 = vadd.f32 0.0, %v10333
  %v10335 = vpop.f32.mrb[0].mxu0
  %10336 = vdwg.mxu0
  %v10337 = vld [vmem:[%s2 + $0x40] sm:$0xff]
  %v10338 = vld [vmem:[%s2 + $0x48] sm:$0xff]
  %v10339 = vld [vmem:[%s2 + $0x50] sm:$0xff]
  %v10340 = vld [vmem:[%s2 + $0x58] sm:$0xff]
  %v10342 = vsel %vm52, %v9114, 0
  %v10345 = vsel %vm52, %v9119, 0
  %v10348 = vsel %vm52, %v9195, 0
  %v10351 = vsel %vm52, %v9200, 0
  %v10354 = vsel %vm52, %v9276, 0
  %v10357 = vsel %vm52, %v9281, 0
  %v10360 = vsel %vm52, %v9357, 0
  %v10363 = vsel %vm52, %v9362, 0
  %v10366 = vsel %vm52, %v9438, 0
  %v10369 = vsel %vm52, %v9443, 0
  %v10372 = vsel %vm52, %v9519, 0
  %v10375 = vsel %vm52, %v9524, 0
  %v10378 = vsel %vm52, %v9600, 0
  %v10381 = vsel %vm52, %v9605, 0
  %v10384 = vsel %vm52, %v9681, 0
  %v10387 = vsel %vm52, %v9686, 0
  %v10390 = vsel %vm52, %v9762, 0
  %v10393 = vsel %vm52, %v9767, 0
  %v10396 = vsel %vm52, %v9843, 0
  %v10399 = vsel %vm52, %v9848, 0
  %v10402 = vsel %vm52, %v9924, 0
  %v10405 = vsel %vm52, %v9929, 0
  %v10408 = vsel %vm52, %v10005, 0
  %v10411 = vsel %vm52, %v10010, 0
  %v10414 = vsel %vm52, %v10086, 0
  %v10417 = vsel %vm52, %v10091, 0
  %v10420 = vsel %vm52, %v10167, 0
  %v10423 = vsel %vm52, %v10172, 0
  %v10426 = vsel %vm52, %v10248, 0
  %v10429 = vsel %vm52, %v10253, 0
  %v10432 = vsel %vm52, %v10329, 0
  %v10435 = vsel %vm52, %v10334, 0
  %10437 = vmatprep.subr.mxu0 0.0
  %10438 = vmatpush1.msra.mxu0 %v10337
  %10439 = vmatprep.subr.mxu0 0.0
  %10440 = vmatpush1.msra.mxu0 %v10338
  %10441 = vmatprep.subr.mxu0 0.0
  %10442 = vmatpush1.msra.mxu0 %v10339
  %10443 = vmatprep.subr.mxu0 0.0
  %10444 = vmatpush1.msra.mxu0 %v10340
  %10445 = vmatprep.subr.mxu0 0.0
  %10446 = vmatpush1.msra.mxu0 0.0
  %10447 = vmatprep.subr.mxu0 0.0
  %10448 = vmatpush1.msra.mxu0 0.0
  %10449 = vmatprep.subr.mxu0 0.0
  %10450 = vmatpush1.msra.mxu0 0.0
  %10451 = vmatprep.subr.mxu0 0.0
  %10452 = vmatpush1.msra.mxu0 0.0
  %10453 = vmatprep.subr.mxu0 0.0
  %10454 = vmatpush1.msra.mxu0 0.0
  %10455 = vmatprep.subr.mxu0 0.0
  %10456 = vmatpush1.msra.mxu0 0.0
  %10457 = vmatprep.subr.mxu0 0.0
  %10458 = vmatpush1.msra.mxu0 0.0
  %10459 = vmatprep.subr.mxu0 0.0
  %10460 = vmatpush1.msra.mxu0 0.0
  %10461 = vmatprep.subr.mxu0 0.0
  %10462 = vmatpush1.msra.mxu0 0.0
  %10463 = vmatprep.subr.mxu0 0.0
  %10464 = vmatpush1.msra.mxu0 0.0
  %10465 = vmatprep.subr.mxu0 0.0
  %10466 = vmatpush1.msra.mxu0 0.0
  %10467 = vmatprep.subr.mxu0 0.0
  %10468 = vmatpush1.msra.mxu0 0.0
  %10469 = vmatprep.subr.mxu0 0.0
  %10470 = vmatpush1.msra.mxu0 0.0
  %10471 = vmatprep.subr.mxu0 0.0
  %10472 = vmatpush1.msra.mxu0 0.0
  %10473 = vmatprep.subr.mxu0 0.0
  %10474 = vmatpush1.msra.mxu0 0.0
  %10475 = vmatprep.subr.mxu0 0.0
  %10476 = vmatpush1.msra.mxu0 0.0
  %10477 = vmatprep.subr.mxu0 0.0
  %10478 = vmatpush1.msra.mxu0 0.0
  %10479 = vmatprep.subr.mxu0 0.0
  %10480 = vmatpush1.msra.mxu0 0.0
  %10481 = vmatprep.subr.mxu0 0.0
  %10482 = vmatpush1.msra.mxu0 0.0
  %10483 = vmatprep.subr.mxu0 0.0
  %10484 = vmatpush1.msra.mxu0 0.0
  %10485 = vmatprep.subr.mxu0 0.0
  %10486 = vmatpush1.msra.mxu0 0.0
  %10487 = vmatprep.subr.mxu0 0.0
  %10488 = vmatpush1.msra.mxu0 0.0
  %10489 = vmatprep.subr.mxu0 0.0
  %10490 = vmatpush1.msra.mxu0 0.0
  %10491 = vmatprep.subr.mxu0 0.0
  %10492 = vmatpush1.msra.mxu0 0.0
  %10493 = vmatprep.subr.mxu0 0.0
  %10494 = vmatpush1.msra.mxu0 0.0
  %10495 = vmatprep.subr.mxu0 0.0
  %10496 = vmatpush1.msra.mxu0 0.0
  %10497 = vmatprep.subr.mxu0 0.0
  %10498 = vmatpush1.msra.mxu0 0.0
  %10499 = vmatprep.subr.mxu0 0.0
  %10500 = vmatpush1.msra.mxu0 0.0
  %10501 = vmatprep.mubr.f32.mxu0 0.0
  %10502 = vmatmul.mubr.f32.gmra.mrb[0].mxu0 %v10342
  %v10503 = vpop.f32.mrb[0].mxu0
  %v10504 = vadd.f32 0.0, %v10503
  %v10505 = vpop.f32.mrb[0].mxu0
  %10506 = vmatprep.mubr.f32.mxu0 0.0
  %10507 = vmatmul.mubr.f32.gmra.mrb[0].mxu0 %v10345
  %v10508 = vpop.f32.mrb[0].mxu0
  %v10509 = vadd.f32 0.0, %v10508
  %v10510 = vpop.f32.mrb[0].mxu0
  %10511 = vmatprep.mubr.f32.mxu0 0.0
  %10512 = vmatmul.mubr.f32.gmra.mrb[0].mxu0 %v10348
  %v10513 = vpop.f32.mrb[0].mxu0
  %v10514 = vadd.f32 0.0, %v10513
  %v10515 = vpop.f32.mrb[0].mxu0
  %10516 = vmatprep.mubr.f32.mxu0 0.0
  %10517 = vmatmul.mubr.f32.gmra.mrb[0].mxu0 %v10351
  %v10518 = vpop.f32.mrb[0].mxu0
  %v10519 = vadd.f32 0.0, %v10518
  %v10520 = vpop.f32.mrb[0].mxu0
  %10521 = vmatprep.mubr.f32.mxu0 0.0
  %10522 = vmatmul.mubr.f32.gmra.mrb[0].mxu0 %v10354
  %v10523 = vpop.f32.mrb[0].mxu0
  %v10524 = vadd.f32 0.0, %v10523
  %v10525 = vpop.f32.mrb[0].mxu0
  %10526 = vmatprep.mubr.f32.mxu0 0.0
  %10527 = vmatmul.mubr.f32.gmra.mrb[0].mxu0 %v10357
  %v10528 = vpop.f32.mrb[0].mxu0
  %v10529 = vadd.f32 0.0, %v10528
  %v10530 = vpop.f32.mrb[0].mxu0
  %10531 = vmatprep.mubr.f32.mxu0 0.0
  %10532 = vmatmul.mubr.f32.gmra.mrb[0].mxu0 %v10360
  %v10533 = vpop.f32.mrb[0].mxu0
  %v10534 = vadd.f32 0.0, %v10533
  %v10535 = vpop.f32.mrb[0].mxu0
  %10536 = vmatprep.mubr.f32.mxu0 0.0
  %10537 = vmatmul.mubr.f32.gmra.mrb[0].mxu0 %v10363
  %v10538 = vpop.f32.mrb[0].mxu0
  %v10539 = vadd.f32 0.0, %v10538
  %v10540 = vpop.f32.mrb[0].mxu0
  %10541 = vmatprep.mubr.f32.mxu0 0.0
  %10542 = vmatmul.mubr.f32.gmra.mrb[0].mxu0 %v10366
  %v10543 = vpop.f32.mrb[0].mxu0
  %v10544 = vadd.f32 0.0, %v10543
  %v10545 = vpop.f32.mrb[0].mxu0
  %10546 = vmatprep.mubr.f32.mxu0 0.0
  %10547 = vmatmul.mubr.f32.gmra.mrb[0].mxu0 %v10369
  %v10548 = vpop.f32.mrb[0].mxu0
  %v10549 = vadd.f32 0.0, %v10548
  %v10550 = vpop.f32.mrb[0].mxu0
  %10551 = vmatprep.mubr.f32.mxu0 0.0
  %10552 = vmatmul.mubr.f32.gmra.mrb[0].mxu0 %v10372
  %v10553 = vpop.f32.mrb[0].mxu0
  %v10554 = vadd.f32 0.0, %v10553
  %v10555 = vpop.f32.mrb[0].mxu0
  %10556 = vmatprep.mubr.f32.mxu0 0.0
  %10557 = vmatmul.mubr.f32.gmra.mrb[0].mxu0 %v10375
  %v10558 = vpop.f32.mrb[0].mxu0
  %v10559 = vadd.f32 0.0, %v10558
  %v10560 = vpop.f32.mrb[0].mxu0
  %10561 = vmatprep.mubr.f32.mxu0 0.0
  %10562 = vmatmul.mubr.f32.gmra.mrb[0].mxu0 %v10378
  %v10563 = vpop.f32.mrb[0].mxu0
  %v10564 = vadd.f32 0.0, %v10563
  %v10565 = vpop.f32.mrb[0].mxu0
  %10566 = vmatprep.mubr.f32.mxu0 0.0
  %10567 = vmatmul.mubr.f32.gmra.mrb[0].mxu0 %v10381
  %v10568 = vpop.f32.mrb[0].mxu0
  %v10569 = vadd.f32 0.0, %v10568
  %v10570 = vpop.f32.mrb[0].mxu0
  %10571 = vmatprep.mubr.f32.mxu0 0.0
  %10572 = vmatmul.mubr.f32.gmra.mrb[0].mxu0 %v10384
  %v10573 = vpop.f32.mrb[0].mxu0
  %v10574 = vadd.f32 0.0, %v10573
  %v10575 = vpop.f32.mrb[0].mxu0
  %10576 = vmatprep.mubr.f32.mxu0 0.0
  %10577 = vmatmul.mubr.f32.gmra.mrb[0].mxu0 %v10387
  %v10578 = vpop.f32.mrb[0].mxu0
  %v10579 = vadd.f32 0.0, %v10578
  %v10580 = vpop.f32.mrb[0].mxu0
  %10581 = vmatprep.mubr.f32.mxu0 0.0
  %10582 = vmatmul.mubr.f32.gmra.mrb[0].mxu0 %v10390
  %v10583 = vpop.f32.mrb[0].mxu0
  %v10584 = vadd.f32 0.0, %v10583
  %v10585 = vpop.f32.mrb[0].mxu0
  %10586 = vmatprep.mubr.f32.mxu0 0.0
  %10587 = vmatmul.mubr.f32.gmra.mrb[0].mxu0 %v10393
  %v10588 = vpop.f32.mrb[0].mxu0
  %v10589 = vadd.f32 0.0, %v10588
  %v10590 = vpop.f32.mrb[0].mxu0
  %10591 = vmatprep.mubr.f32.mxu0 0.0
  %10592 = vmatmul.mubr.f32.gmra.mrb[0].mxu0 %v10396
  %v10593 = vpop.f32.mrb[0].mxu0
  %v10594 = vadd.f32 0.0, %v10593
  %v10595 = vpop.f32.mrb[0].mxu0
  %10596 = vmatprep.mubr.f32.mxu0 0.0
  %10597 = vmatmul.mubr.f32.gmra.mrb[0].mxu0 %v10399
  %v10598 = vpop.f32.mrb[0].mxu0
  %v10599 = vadd.f32 0.0, %v10598
  %v10600 = vpop.f32.mrb[0].mxu0
  %10601 = vmatprep.mubr.f32.mxu0 0.0
  %10602 = vmatmul.mubr.f32.gmra.mrb[0].mxu0 %v10402
  %v10603 = vpop.f32.mrb[0].mxu0
  %v10604 = vadd.f32 0.0, %v10603
  %v10605 = vpop.f32.mrb[0].mxu0
  %10606 = vmatprep.mubr.f32.mxu0 0.0
  %10607 = vmatmul.mubr.f32.gmra.mrb[0].mxu0 %v10405
  %v10608 = vpop.f32.mrb[0].mxu0
  %v10609 = vadd.f32 0.0, %v10608
  %v10610 = vpop.f32.mrb[0].mxu0
  %10611 = vmatprep.mubr.f32.mxu0 0.0
  %10612 = vmatmul.mubr.f32.gmra.mrb[0].mxu0 %v10408
  %v10613 = vpop.f32.mrb[0].mxu0
  %v10614 = vadd.f32 0.0, %v10613
  %v10615 = vpop.f32.mrb[0].mxu0
  %10616 = vmatprep.mubr.f32.mxu0 0.0
  %10617 = vmatmul.mubr.f32.gmra.mrb[0].mxu0 %v10411
  %v10618 = vpop.f32.mrb[0].mxu0
  %v10619 = vadd.f32 0.0, %v10618
  %v10620 = vpop.f32.mrb[0].mxu0
  %10621 = vmatprep.mubr.f32.mxu0 0.0
  %10622 = vmatmul.mubr.f32.gmra.mrb[0].mxu0 %v10414
  %v10623 = vpop.f32.mrb[0].mxu0
  %v10624 = vadd.f32 0.0, %v10623
  %v10625 = vpop.f32.mrb[0].mxu0
  %10626 = vmatprep.mubr.f32.mxu0 0.0
  %10627 = vmatmul.mubr.f32.gmra.mrb[0].mxu0 %v10417
  %v10628 = vpop.f32.mrb[0].mxu0
  %v10629 = vadd.f32 0.0, %v10628
  %v10630 = vpop.f32.mrb[0].mxu0
  %10631 = vmatprep.mubr.f32.mxu0 0.0
  %10632 = vmatmul.mubr.f32.gmra.mrb[0].mxu0 %v10420
  %v10633 = vpop.f32.mrb[0].mxu0
  %v10634 = vadd.f32 0.0, %v10633
  %v10635 = vpop.f32.mrb[0].mxu0
  %10636 = vmatprep.mubr.f32.mxu0 0.0
  %10637 = vmatmul.mubr.f32.gmra.mrb[0].mxu0 %v10423
  %v10638 = vpop.f32.mrb[0].mxu0
  %v10639 = vadd.f32 0.0, %v10638
  %v10640 = vpop.f32.mrb[0].mxu0
  %10641 = vmatprep.mubr.f32.mxu0 0.0
  %10642 = vmatmul.mubr.f32.gmra.mrb[0].mxu0 %v10426
  %v10643 = vpop.f32.mrb[0].mxu0
  %v10644 = vadd.f32 0.0, %v10643
  %v10645 = vpop.f32.mrb[0].mxu0
  %10646 = vmatprep.mubr.f32.mxu0 0.0
  %10647 = vmatmul.mubr.f32.gmra.mrb[0].mxu0 %v10429
  %v10648 = vpop.f32.mrb[0].mxu0
  %v10649 = vadd.f32 0.0, %v10648
  %v10650 = vpop.f32.mrb[0].mxu0
  %10651 = vmatprep.mubr.f32.mxu0 0.0
  %10652 = vmatmul.mubr.f32.gmra.mrb[0].mxu0 %v10432
  %v10653 = vpop.f32.mrb[0].mxu0
  %v10654 = vadd.f32 0.0, %v10653
  %v10655 = vpop.f32.mrb[0].mxu0
  %10656 = vmatprep.mubr.f32.mxu0 0.0
  %10657 = vmatmul.mubr.f32.gmra.mrb[0].mxu0 %v10435
  %v10658 = vpop.f32.mrb[0].mxu0
  %v10659 = vadd.f32 0.0, %v10658
  %v10660 = vpop.f32.mrb[0].mxu0
  %10661 = vdwg.mxu0
  %v10662 = vadd.f32 %v7075, %v10504
  %v10663 = vadd.f32 %v7080, %v10509
  %v10664 = vadd.f32 %v7085, %v10514
  %v10665 = vadd.f32 %v7090, %v10519
  %v10666 = vadd.f32 %v7095, %v10524
  %v10667 = vadd.f32 %v7100, %v10529
  %v10668 = vadd.f32 %v7105, %v10534
  %v10669 = vadd.f32 %v7110, %v10539
  %v10670 = vadd.f32 %v7115, %v10544
  %v10671 = vadd.f32 %v7120, %v10549
  %v10672 = vadd.f32 %v7125, %v10554
  %v10673 = vadd.f32 %v7130, %v10559
  %v10674 = vadd.f32 %v7135, %v10564
  %v10675 = vadd.f32 %v7140, %v10569
  %v10676 = vadd.f32 %v7145, %v10574
  %v10677 = vadd.f32 %v7150, %v10579
  %v10678 = vadd.f32 %v7155, %v10584
  %v10679 = vadd.f32 %v7160, %v10589
  %v10680 = vadd.f32 %v7165, %v10594
  %v10681 = vadd.f32 %v7170, %v10599
  %v10682 = vadd.f32 %v7175, %v10604
  %v10683 = vadd.f32 %v7180, %v10609
  %v10684 = vadd.f32 %v7185, %v10614
  %v10685 = vadd.f32 %v7190, %v10619
  %v10686 = vadd.f32 %v7195, %v10624
  %v10687 = vadd.f32 %v7200, %v10629
  %v10688 = vadd.f32 %v7205, %v10634
  %v10689 = vadd.f32 %v7210, %v10639
  %v10690 = vadd.f32 %v7215, %v10644
  %v10691 = vadd.f32 %v7220, %v10649
  %v10692 = vadd.f32 %v7225, %v10654
  %v10693 = vadd.f32 %v7230, %v10659
  %v10694 = vsel %vm52, %v14, 0.0
  %v10695 = vsel %vm52, %v15, 0.0
  %v10696 = vadd.f32 %v10694, %v10695
  %v10697 = vrot.slane %v10696, 4
  %v10698 = vadd.f32 %v10696, %v10697
  %v10699 = vrot.slane %v10698, 2
  %v10700 = vadd.f32 %v10698, %v10699
  %v10701 = vrot.slane %v10700, 1
  %v10702 = vadd.f32 %v10700, %v10701
  %v10703 = vsel %vm52, %v16, 0.0
  %v10704 = vsel %vm52, %v17, 0.0
  %v10705 = vadd.f32 %v10703, %v10704
  %v10706 = vrot.slane %v10705, 4
  %v10707 = vadd.f32 %v10705, %v10706
  %v10708 = vrot.slane %v10707, 2
  %v10709 = vadd.f32 %v10707, %v10708
  %v10710 = vrot.slane %v10709, 1
  %v10711 = vadd.f32 %v10709, %v10710
  %v10712 = vsel %vm52, %v18, 0.0
  %v10713 = vsel %vm52, %v19, 0.0
  %v10714 = vadd.f32 %v10712, %v10713
  %v10715 = vrot.slane %v10714, 4
  %v10716 = vadd.f32 %v10714, %v10715
  %v10717 = vrot.slane %v10716, 2
  %v10718 = vadd.f32 %v10716, %v10717
  %v10719 = vrot.slane %v10718, 1
  %v10720 = vadd.f32 %v10718, %v10719
  %v10721 = vsel %vm52, %v20, 0.0
  %v10722 = vsel %vm52, %v21, 0.0
  %v10723 = vadd.f32 %v10721, %v10722
  %v10724 = vrot.slane %v10723, 4
  %v10725 = vadd.f32 %v10723, %v10724
  %v10726 = vrot.slane %v10725, 2
  %v10727 = vadd.f32 %v10725, %v10726
  %v10728 = vrot.slane %v10727, 1
  %v10729 = vadd.f32 %v10727, %v10728
  %v10730 = vsel %vm52, %v22, 0.0
  %v10731 = vsel %vm52, %v23, 0.0
  %v10732 = vadd.f32 %v10730, %v10731
  %v10733 = vrot.slane %v10732, 4
  %v10734 = vadd.f32 %v10732, %v10733
  %v10735 = vrot.slane %v10734, 2
  %v10736 = vadd.f32 %v10734, %v10735
  %v10737 = vrot.slane %v10736, 1
  %v10738 = vadd.f32 %v10736, %v10737
  %v10739 = vsel %vm52, %v24, 0.0
  %v10740 = vsel %vm52, %v25, 0.0
  %v10741 = vadd.f32 %v10739, %v10740
  %v10742 = vrot.slane %v10741, 4
  %v10743 = vadd.f32 %v10741, %v10742
  %v10744 = vrot.slane %v10743, 2
  %v10745 = vadd.f32 %v10743, %v10744
  %v10746 = vrot.slane %v10745, 1
  %v10747 = vadd.f32 %v10745, %v10746
  %v10748 = vsel %vm52, %v26, 0.0
  %v10749 = vsel %vm52, %v27, 0.0
  %v10750 = vadd.f32 %v10748, %v10749
  %v10751 = vrot.slane %v10750, 4
  %v10752 = vadd.f32 %v10750, %v10751
  %v10753 = vrot.slane %v10752, 2
  %v10754 = vadd.f32 %v10752, %v10753
  %v10755 = vrot.slane %v10754, 1
  %v10756 = vadd.f32 %v10754, %v10755
  %v10757 = vsel %vm52, %v28, 0.0
  %v10758 = vsel %vm52, %v29, 0.0
  %v10759 = vadd.f32 %v10757, %v10758
  %v10760 = vrot.slane %v10759, 4
  %v10761 = vadd.f32 %v10759, %v10760
  %v10762 = vrot.slane %v10761, 2
  %v10763 = vadd.f32 %v10761, %v10762
  %v10764 = vrot.slane %v10763, 1
  %v10765 = vadd.f32 %v10763, %v10764
  %v10766 = vsel %vm52, %v30, 0.0
  %v10767 = vsel %vm52, %v31, 0.0
  %v10768 = vadd.f32 %v10766, %v10767
  %v10769 = vrot.slane %v10768, 4
  %v10770 = vadd.f32 %v10768, %v10769
  %v10771 = vrot.slane %v10770, 2
  %v10772 = vadd.f32 %v10770, %v10771
  %v10773 = vrot.slane %v10772, 1
  %v10774 = vadd.f32 %v10772, %v10773
  %v10775 = vsel %vm52, %v32, 0.0
  %v10776 = vsel %vm52, %v33, 0.0
  %v10777 = vadd.f32 %v10775, %v10776
  %v10778 = vrot.slane %v10777, 4
  %v10779 = vadd.f32 %v10777, %v10778
  %v10780 = vrot.slane %v10779, 2
  %v10781 = vadd.f32 %v10779, %v10780
  %v10782 = vrot.slane %v10781, 1
  %v10783 = vadd.f32 %v10781, %v10782
  %v10784 = vsel %vm52, %v34, 0.0
  %v10785 = vsel %vm52, %v35, 0.0
  %v10786 = vadd.f32 %v10784, %v10785
  %v10787 = vrot.slane %v10786, 4
  %v10788 = vadd.f32 %v10786, %v10787
  %v10789 = vrot.slane %v10788, 2
  %v10790 = vadd.f32 %v10788, %v10789
  %v10791 = vrot.slane %v10790, 1
  %v10792 = vadd.f32 %v10790, %v10791
  %v10793 = vsel %vm52, %v36, 0.0
  %v10794 = vsel %vm52, %v37, 0.0
  %v10795 = vadd.f32 %v10793, %v10794
  %v10796 = vrot.slane %v10795, 4
  %v10797 = vadd.f32 %v10795, %v10796
  %v10798 = vrot.slane %v10797, 2
  %v10799 = vadd.f32 %v10797, %v10798
  %v10800 = vrot.slane %v10799, 1
  %v10801 = vadd.f32 %v10799, %v10800
  %v10802 = vsel %vm52, %v38, 0.0
  %v10803 = vsel %vm52, %v39, 0.0
  %v10804 = vadd.f32 %v10802, %v10803
  %v10805 = vrot.slane %v10804, 4
  %v10806 = vadd.f32 %v10804, %v10805
  %v10807 = vrot.slane %v10806, 2
  %v10808 = vadd.f32 %v10806, %v10807
  %v10809 = vrot.slane %v10808, 1
  %v10810 = vadd.f32 %v10808, %v10809
  %v10811 = vsel %vm52, %v40, 0.0
  %v10812 = vsel %vm52, %v41, 0.0
  %v10813 = vadd.f32 %v10811, %v10812
  %v10814 = vrot.slane %v10813, 4
  %v10815 = vadd.f32 %v10813, %v10814
  %v10816 = vrot.slane %v10815, 2
  %v10817 = vadd.f32 %v10815, %v10816
  %v10818 = vrot.slane %v10817, 1
  %v10819 = vadd.f32 %v10817, %v10818
  %v10820 = vsel %vm52, %v42, 0.0
  %v10821 = vsel %vm52, %v43, 0.0
  %v10822 = vadd.f32 %v10820, %v10821
  %v10823 = vrot.slane %v10822, 4
  %v10824 = vadd.f32 %v10822, %v10823
  %v10825 = vrot.slane %v10824, 2
  %v10826 = vadd.f32 %v10824, %v10825
  %v10827 = vrot.slane %v10826, 1
  %v10828 = vadd.f32 %v10826, %v10827
  %v10829 = vsel %vm52, %v44, 0.0
  %v10830 = vsel %vm52, %v45, 0.0
  %v10831 = vadd.f32 %v10829, %v10830
  %v10832 = vrot.slane %v10831, 4
  %v10833 = vadd.f32 %v10831, %v10832
  %v10834 = vrot.slane %v10833, 2
  %v10835 = vadd.f32 %v10833, %v10834
  %v10836 = vrot.slane %v10835, 1
  %v10837 = vadd.f32 %v10835, %v10836
  %v10838 = vld [vmem:[%s2 + $0x60] sm:$0xff]
  %v10839 = vld [vmem:[%s2 + $0x68] sm:$0xff]
  %v10840 = vld [vmem:[%s2 + $0x70] sm:$0xff]
  %v10841 = vld [vmem:[%s2 + $0x78] sm:$0xff]
  %v10842 = vld [vmem:[%s2 + $0x80] sm:$0x1]
  %v10843 = vlaneseq
  %v10844 = vshrl.u32 %v10843, 7
  %v10845 = vsub.s32 0, %v10844
  %v10846 = vrot.slane %v10842, %v10845
  %vm10863 = vcmask 1041409
  %v10864 = vsel %vm10863, %v10711, %v10702
  %vm10865 = vcmask 1042434
  %v10866 = vsel %vm10865, %v10720, %v10864
  %vm10867 = vcmask 1043459
  %v10868 = vsel %vm10867, %v10729, %v10866
  %vm10869 = vcmask 1044484
  %v10870 = vsel %vm10869, %v10738, %v10868
  %vm10871 = vcmask 1045509
  %v10872 = vsel %vm10871, %v10747, %v10870
  %vm10873 = vcmask 1046534
  %v10874 = vsel %vm10873, %v10756, %v10872
  %vm10875 = vcmask 1047559
  %v10876 = vsel %vm10875, %v10765, %v10874
  %v10877 = vsel %vm10863, %v10783, %v10774
  %v10878 = vsel %vm10865, %v10792, %v10877
  %v10879 = vsel %vm10867, %v10801, %v10878
  %v10880 = vsel %vm10869, %v10810, %v10879
  %v10881 = vsel %vm10871, %v10819, %v10880
  %v10882 = vsel %vm10873, %v10828, %v10881
  %v10883 = vsel %vm10875, %v10837, %v10882
  %v10884 = vsel %vm52, %v10876, 0
  %v10886 = vsel %vm52, %v10883, 0
  %10888 = vmatprep.subr.mxu0 0.0
  %10889 = vmatpush1.msra.mxu0 %v10838
  %10890 = vmatprep.subr.mxu0 0.0
  %10891 = vmatpush1.msra.mxu0 %v10839
  %10892 = vmatprep.subr.mxu0 0.0
  %10893 = vmatpush1.msra.mxu0 %v10840
  %10894 = vmatprep.subr.mxu0 0.0
  %10895 = vmatpush1.msra.mxu0 %v10841
  %10896 = vmatprep.subr.mxu0 0.0
  %10897 = vmatpush1.msra.mxu0 0.0
  %10898 = vmatprep.subr.mxu0 0.0
  %10899 = vmatpush1.msra.mxu0 0.0
  %10900 = vmatprep.subr.mxu0 0.0
  %10901 = vmatpush1.msra.mxu0 0.0
  %10902 = vmatprep.subr.mxu0 0.0
  %10903 = vmatpush1.msra.mxu0 0.0
  %10904 = vmatprep.subr.mxu0 0.0
  %10905 = vmatpush1.msra.mxu0 0.0
  %10906 = vmatprep.subr.mxu0 0.0
  %10907 = vmatpush1.msra.mxu0 0.0
  %10908 = vmatprep.subr.mxu0 0.0
  %10909 = vmatpush1.msra.mxu0 0.0
  %10910 = vmatprep.subr.mxu0 0.0
  %10911 = vmatpush1.msra.mxu0 0.0
  %10912 = vmatprep.subr.mxu0 0.0
  %10913 = vmatpush1.msra.mxu0 0.0
  %10914 = vmatprep.subr.mxu0 0.0
  %10915 = vmatpush1.msra.mxu0 0.0
  %10916 = vmatprep.subr.mxu0 0.0
  %10917 = vmatpush1.msra.mxu0 0.0
  %10918 = vmatprep.subr.mxu0 0.0
  %10919 = vmatpush1.msra.mxu0 0.0
  %10920 = vmatprep.subr.mxu0 0.0
  %10921 = vmatpush1.msra.mxu0 0.0
  %10922 = vmatprep.subr.mxu0 0.0
  %10923 = vmatpush1.msra.mxu0 0.0
  %10924 = vmatprep.subr.mxu0 0.0
  %10925 = vmatpush1.msra.mxu0 0.0
  %10926 = vmatprep.subr.mxu0 0.0
  %10927 = vmatpush1.msra.mxu0 0.0
  %10928 = vmatprep.subr.mxu0 0.0
  %10929 = vmatpush1.msra.mxu0 0.0
  %10930 = vmatprep.subr.mxu0 0.0
  %10931 = vmatpush1.msra.mxu0 0.0
  %10932 = vmatprep.subr.mxu0 0.0
  %10933 = vmatpush1.msra.mxu0 0.0
  %10934 = vmatprep.subr.mxu0 0.0
  %10935 = vmatpush1.msra.mxu0 0.0
  %10936 = vmatprep.subr.mxu0 0.0
  %10937 = vmatpush1.msra.mxu0 0.0
  %10938 = vmatprep.subr.mxu0 0.0
  %10939 = vmatpush1.msra.mxu0 0.0
  %10940 = vmatprep.subr.mxu0 0.0
  %10941 = vmatpush1.msra.mxu0 0.0
  %10942 = vmatprep.subr.mxu0 0.0
  %10943 = vmatpush1.msra.mxu0 0.0
  %10944 = vmatprep.subr.mxu0 0.0
  %10945 = vmatpush1.msra.mxu0 0.0
  %10946 = vmatprep.subr.mxu0 0.0
  %10947 = vmatpush1.msra.mxu0 0.0
  %10948 = vmatprep.subr.mxu0 0.0
  %10949 = vmatpush1.msra.mxu0 0.0
  %10950 = vmatprep.subr.mxu0 0.0
  %10951 = vmatpush1.msra.mxu0 0.0
  %10952 = vmatprep.mubr.f32.mxu0 0.0
  %10953 = vmatmul.mubr.f32.gmra.mrb[0].mxu0 %v10884
  %v10954 = vpop.f32.mrb[0].mxu0
  %v10955 = vadd.f32 %v10846, %v10954
  %v10956 = vpop.f32.mrb[0].mxu0
  %10957 = vmatprep.mubr.f32.mxu0 0.0
  %10958 = vmatmul.mubr.f32.gmra.mrb[0].mxu0 %v10886
  %v10959 = vpop.f32.mrb[0].mxu0
  %v10960 = vadd.f32 %v10846, %v10959
  %v10961 = vpop.f32.mrb[0].mxu0
  %10962 = vdwg.mxu0
  %v10965 = vcombine.high %v10955, %v10955
  %v10967 = vunpack.c.l.s4 1966171168
  %v10968 = vunpack.c.0.s8 %v10967
  %v10969 = vlaneseq
  %v10970 = vshrl.u32 %v10969, 7
  %v10971 = vsub.s32 %v10968, %v10970
  %v10972 = vrot.slane %v10955, %v10971
  %v10974 = vunpack.c.l.s4 1966171168
  %v10975 = vunpack.c.0.s8 %v10974
  %v10976 = vlaneseq
  %v10977 = vshrl.u32 %v10976, 7
  %v10978 = vsub.s32 %v10975, %v10977
  %v10979 = vrot.slane %v10965, %v10978
  %v10980 = vcombine.high %v10972, %v10972
  %v10981 = vcombine.high %v10979, %v10979
  %v10983 = vunpack.c.l.s4 1966171168
  %v10984 = vunpack.c.0.s8 %v10983
  %v10985 = vlaneseq
  %v10986 = vshrl.u32 %v10985, 7
  %v10987 = vsub.s32 %v10984, %v10986
  %v10988 = vrot.slane %v10972, %v10987
  %v10990 = vunpack.c.l.s4 1966171168
  %v10991 = vunpack.c.0.s8 %v10990
  %v10992 = vlaneseq
  %v10993 = vshrl.u32 %v10992, 7
  %v10994 = vsub.s32 %v10991, %v10993
  %v10995 = vrot.slane %v10979, %v10994
  %v10997 = vunpack.c.l.s4 1966171168
  %v10998 = vunpack.c.0.s8 %v10997
  %v10999 = vlaneseq
  %v11000 = vshrl.u32 %v10999, 7
  %v11001 = vsub.s32 %v10998, %v11000
  %v11002 = vrot.slane %v10980, %v11001
  %v11004 = vunpack.c.l.s4 1966171168
  %v11005 = vunpack.c.0.s8 %v11004
  %v11006 = vlaneseq
  %v11007 = vshrl.u32 %v11006, 7
  %v11008 = vsub.s32 %v11005, %v11007
  %v11009 = vrot.slane %v10981, %v11008
  %v11010 = vcombine.high %v10988, %v10988
  %v11011 = vcombine.high %v10995, %v10995
  %v11012 = vcombine.high %v11002, %v11002
  %v11013 = vcombine.high %v11009, %v11009
  %v11014 = vcombine.high %v10960, %v10960
  %v11016 = vunpack.c.l.s4 1966171168
  %v11017 = vunpack.c.0.s8 %v11016
  %v11018 = vlaneseq
  %v11019 = vshrl.u32 %v11018, 7
  %v11020 = vsub.s32 %v11017, %v11019
  %v11021 = vrot.slane %v10960, %v11020
  %v11023 = vunpack.c.l.s4 1966171168
  %v11024 = vunpack.c.0.s8 %v11023
  %v11025 = vlaneseq
  %v11026 = vshrl.u32 %v11025, 7
  %v11027 = vsub.s32 %v11024, %v11026
  %v11028 = vrot.slane %v11014, %v11027
  %v11029 = vcombine.high %v11021, %v11021
  %v11030 = vcombine.high %v11028, %v11028
  %v11032 = vunpack.c.l.s4 1966171168
  %v11033 = vunpack.c.0.s8 %v11032
  %v11034 = vlaneseq
  %v11035 = vshrl.u32 %v11034, 7
  %v11036 = vsub.s32 %v11033, %v11035
  %v11037 = vrot.slane %v11021, %v11036
  %v11039 = vunpack.c.l.s4 1966171168
  %v11040 = vunpack.c.0.s8 %v11039
  %v11041 = vlaneseq
  %v11042 = vshrl.u32 %v11041, 7
  %v11043 = vsub.s32 %v11040, %v11042
  %v11044 = vrot.slane %v11028, %v11043
  %v11046 = vunpack.c.l.s4 1966171168
  %v11047 = vunpack.c.0.s8 %v11046
  %v11048 = vlaneseq
  %v11049 = vshrl.u32 %v11048, 7
  %v11050 = vsub.s32 %v11047, %v11049
  %v11051 = vrot.slane %v11029, %v11050
  %v11053 = vunpack.c.l.s4 1966171168
  %v11054 = vunpack.c.0.s8 %v11053
  %v11055 = vlaneseq
  %v11056 = vshrl.u32 %v11055, 7
  %v11057 = vsub.s32 %v11054, %v11056
  %v11058 = vrot.slane %v11030, %v11057
  %v11059 = vcombine.high %v11037, %v11037
  %v11060 = vcombine.high %v11044, %v11044
  %v11061 = vcombine.high %v11051, %v11051
  %v11062 = vcombine.high %v11058, %v11058
  %v11063 = vlaneseq
  %v11064 = vshrl.u32 %v11063, 7
  %v11065 = vsub.s32 0, %v11064
  %v11066 = vrot.slane %v10988, %v11065
  %v11067 = vlaneseq
  %v11068 = vshrl.u32 %v11067, 7
  %v11069 = vsub.s32 0, %v11068
  %v11070 = vrot.slane %v11002, %v11069
  %v11071 = vlaneseq
  %v11072 = vshrl.u32 %v11071, 7
  %v11073 = vsub.s32 0, %v11072
  %v11074 = vrot.slane %v11010, %v11073
  %v11075 = vlaneseq
  %v11076 = vshrl.u32 %v11075, 7
  %v11077 = vsub.s32 0, %v11076
  %v11078 = vrot.slane %v11012, %v11077
  %v11079 = vlaneseq
  %v11080 = vshrl.u32 %v11079, 7
  %v11081 = vsub.s32 0, %v11080
  %v11082 = vrot.slane %v10995, %v11081
  %v11083 = vlaneseq
  %v11084 = vshrl.u32 %v11083, 7
  %v11085 = vsub.s32 0, %v11084
  %v11086 = vrot.slane %v11009, %v11085
  %v11087 = vlaneseq
  %v11088 = vshrl.u32 %v11087, 7
  %v11089 = vsub.s32 0, %v11088
  %v11090 = vrot.slane %v11011, %v11089
  %v11091 = vlaneseq
  %v11092 = vshrl.u32 %v11091, 7
  %v11093 = vsub.s32 0, %v11092
  %v11094 = vrot.slane %v11013, %v11093
  %v11095 = vlaneseq
  %v11096 = vshrl.u32 %v11095, 7
  %v11097 = vsub.s32 0, %v11096
  %v11098 = vrot.slane %v11037, %v11097
  %v11099 = vlaneseq
  %v11100 = vshrl.u32 %v11099, 7
  %v11101 = vsub.s32 0, %v11100
  %v11102 = vrot.slane %v11051, %v11101
  %v11103 = vlaneseq
  %v11104 = vshrl.u32 %v11103, 7
  %v11105 = vsub.s32 0, %v11104
  %v11106 = vrot.slane %v11059, %v11105
  %v11107 = vlaneseq
  %v11108 = vshrl.u32 %v11107, 7
  %v11109 = vsub.s32 0, %v11108
  %v11110 = vrot.slane %v11061, %v11109
  %v11111 = vlaneseq
  %v11112 = vshrl.u32 %v11111, 7
  %v11113 = vsub.s32 0, %v11112
  %v11114 = vrot.slane %v11044, %v11113
  %v11115 = vlaneseq
  %v11116 = vshrl.u32 %v11115, 7
  %v11117 = vsub.s32 0, %v11116
  %v11118 = vrot.slane %v11058, %v11117
  %v11119 = vlaneseq
  %v11120 = vshrl.u32 %v11119, 7
  %v11121 = vsub.s32 0, %v11120
  %v11122 = vrot.slane %v11060, %v11121
  %v11123 = vlaneseq
  %v11124 = vshrl.u32 %v11123, 7
  %v11125 = vsub.s32 0, %v11124
  %v11126 = vrot.slane %v11062, %v11125
  %v11143 = vadd.f32 %v10662, %v11066
  %v11144 = vadd.f32 %v10663, %v11066
  %v11145 = vadd.f32 %v10664, %v11070
  %v11146 = vadd.f32 %v10665, %v11070
  %v11147 = vadd.f32 %v10666, %v11074
  %v11148 = vadd.f32 %v10667, %v11074
  %v11149 = vadd.f32 %v10668, %v11078
  %v11150 = vadd.f32 %v10669, %v11078
  %v11151 = vadd.f32 %v10670, %v11082
  %v11152 = vadd.f32 %v10671, %v11082
  %v11153 = vadd.f32 %v10672, %v11086
  %v11154 = vadd.f32 %v10673, %v11086
  %v11155 = vadd.f32 %v10674, %v11090
  %v11156 = vadd.f32 %v10675, %v11090
  %v11157 = vadd.f32 %v10676, %v11094
  %v11158 = vadd.f32 %v10677, %v11094
  %v11159 = vadd.f32 %v10678, %v11098
  %v11160 = vadd.f32 %v10679, %v11098
  %v11161 = vadd.f32 %v10680, %v11102
  %v11162 = vadd.f32 %v10681, %v11102
  %v11163 = vadd.f32 %v10682, %v11106
  %v11164 = vadd.f32 %v10683, %v11106
  %v11165 = vadd.f32 %v10684, %v11110
  %v11166 = vadd.f32 %v10685, %v11110
  %v11167 = vadd.f32 %v10686, %v11114
  %v11168 = vadd.f32 %v10687, %v11114
  %v11169 = vadd.f32 %v10688, %v11118
  %v11170 = vadd.f32 %v10689, %v11118
  %v11171 = vadd.f32 %v10690, %v11122
  %v11172 = vadd.f32 %v10691, %v11122
  %v11173 = vadd.f32 %v10692, %v11126
  %v11174 = vadd.f32 %v10693, %v11126
  %v11175 = vadd.f32 %v14, %v11143
  %v11176 = vadd.f32 %v15, %v11144
  %v11177 = vadd.f32 %v16, %v11145
  %v11178 = vadd.f32 %v17, %v11146
  %v11179 = vadd.f32 %v18, %v11147
  %v11180 = vadd.f32 %v19, %v11148
  %v11181 = vadd.f32 %v20, %v11149
  %v11182 = vadd.f32 %v21, %v11150
  %v11183 = vadd.f32 %v22, %v11151
  %v11184 = vadd.f32 %v23, %v11152
  %v11185 = vadd.f32 %v24, %v11153
  %v11186 = vadd.f32 %v25, %v11154
  %v11187 = vadd.f32 %v26, %v11155
  %v11188 = vadd.f32 %v27, %v11156
  %v11189 = vadd.f32 %v28, %v11157
  %v11190 = vadd.f32 %v29, %v11158
  %v11191 = vadd.f32 %v30, %v11159
  %v11192 = vadd.f32 %v31, %v11160
  %v11193 = vadd.f32 %v32, %v11161
  %v11194 = vadd.f32 %v33, %v11162
  %v11195 = vadd.f32 %v34, %v11163
  %v11196 = vadd.f32 %v35, %v11164
  %v11197 = vadd.f32 %v36, %v11165
  %v11198 = vadd.f32 %v37, %v11166
  %v11199 = vadd.f32 %v38, %v11167
  %v11200 = vadd.f32 %v39, %v11168
  %v11201 = vadd.f32 %v40, %v11169
  %v11202 = vadd.f32 %v41, %v11170
  %v11203 = vadd.f32 %v42, %v11171
  %v11204 = vadd.f32 %v43, %v11172
  %v11205 = vadd.f32 %v44, %v11173
  %v11206 = vadd.f32 %v45, %v11174
  %v11207 = vmax.f32 %v11175, 0.0
  %v11208 = vmax.f32 %v11176, 0.0
  %v11209 = vmax.f32 %v11177, 0.0
  %v11210 = vmax.f32 %v11178, 0.0
  %v11211 = vmax.f32 %v11179, 0.0
  %v11212 = vmax.f32 %v11180, 0.0
  %v11213 = vmax.f32 %v11181, 0.0
  %v11214 = vmax.f32 %v11182, 0.0
  %v11215 = vmax.f32 %v11183, 0.0
  %v11216 = vmax.f32 %v11184, 0.0
  %v11217 = vmax.f32 %v11185, 0.0
  %v11218 = vmax.f32 %v11186, 0.0
  %v11219 = vmax.f32 %v11187, 0.0
  %v11220 = vmax.f32 %v11188, 0.0
  %v11221 = vmax.f32 %v11189, 0.0
  %v11222 = vmax.f32 %v11190, 0.0
  %v11223 = vmax.f32 %v11191, 0.0
  %v11224 = vmax.f32 %v11192, 0.0
  %v11225 = vmax.f32 %v11193, 0.0
  %v11226 = vmax.f32 %v11194, 0.0
  %v11227 = vmax.f32 %v11195, 0.0
  %v11228 = vmax.f32 %v11196, 0.0
  %v11229 = vmax.f32 %v11197, 0.0
  %v11230 = vmax.f32 %v11198, 0.0
  %v11231 = vmax.f32 %v11199, 0.0
  %v11232 = vmax.f32 %v11200, 0.0
  %v11233 = vmax.f32 %v11201, 0.0
  %v11234 = vmax.f32 %v11202, 0.0
  %v11235 = vmax.f32 %v11203, 0.0
  %v11236 = vmax.f32 %v11204, 0.0
  %v11237 = vmax.f32 %v11205, 0.0
  %v11238 = vmax.f32 %v11206, 0.0
  %11239 = vst.msk [vmem:[%s3] sm:$0xff] %vm52, %v11207
  %11240 = vst.msk [vmem:[%s3 + $0x8] sm:$0xff] %vm52, %v11208
  %11241 = vst.msk [vmem:[%s3 + $0x10] sm:$0xff] %vm52, %v11209
  %11242 = vst.msk [vmem:[%s3 + $0x18] sm:$0xff] %vm52, %v11210
  %11243 = vst.msk [vmem:[%s3 + $0x20] sm:$0xff] %vm52, %v11211
  %11244 = vst.msk [vmem:[%s3 + $0x28] sm:$0xff] %vm52, %v11212
  %11245 = vst.msk [vmem:[%s3 + $0x30] sm:$0xff] %vm52, %v11213
  %11246 = vst.msk [vmem:[%s3 + $0x38] sm:$0xff] %vm52, %v11214
  %11247 = vst.msk [vmem:[%s3 + $0x40] sm:$0xff] %vm52, %v11215
  %11248 = vst.msk [vmem:[%s3 + $0x48] sm:$0xff] %vm52, %v11216
  %11249 = vst.msk [vmem:[%s3 + $0x50] sm:$0xff] %vm52, %v11217
  %11250 = vst.msk [vmem:[%s3 + $0x58] sm:$0xff] %vm52, %v11218
  %11251 = vst.msk [vmem:[%s3 + $0x60] sm:$0xff] %vm52, %v11219
  %11252 = vst.msk [vmem:[%s3 + $0x68] sm:$0xff] %vm52, %v11220
  %11253 = vst.msk [vmem:[%s3 + $0x70] sm:$0xff] %vm52, %v11221
  %11254 = vst.msk [vmem:[%s3 + $0x78] sm:$0xff] %vm52, %v11222
  %11255 = vst.msk [vmem:[%s3 + $0x80] sm:$0xff] %vm52, %v11223
  %11256 = vst.msk [vmem:[%s3 + $0x88] sm:$0xff] %vm52, %v11224
  %11257 = vst.msk [vmem:[%s3 + $0x90] sm:$0xff] %vm52, %v11225
  %11258 = vst.msk [vmem:[%s3 + $0x98] sm:$0xff] %vm52, %v11226
  %11259 = vst.msk [vmem:[%s3 + $0xa0] sm:$0xff] %vm52, %v11227
  %11260 = vst.msk [vmem:[%s3 + $0xa8] sm:$0xff] %vm52, %v11228
  %11261 = vst.msk [vmem:[%s3 + $0xb0] sm:$0xff] %vm52, %v11229
  %11262 = vst.msk [vmem:[%s3 + $0xb8] sm:$0xff] %vm52, %v11230
  %11263 = vst.msk [vmem:[%s3 + $0xc0] sm:$0xff] %vm52, %v11231
  %11264 = vst.msk [vmem:[%s3 + $0xc8] sm:$0xff] %vm52, %v11232
  %11265 = vst.msk [vmem:[%s3 + $0xd0] sm:$0xff] %vm52, %v11233
  %11266 = vst.msk [vmem:[%s3 + $0xd8] sm:$0xff] %vm52, %v11234
  %11267 = vst.msk [vmem:[%s3 + $0xe0] sm:$0xff] %vm52, %v11235
  %11268 = vst.msk [vmem:[%s3 + $0xe8] sm:$0xff] %vm52, %v11236
  %11269 = vst.msk [vmem:[%s3 + $0xf0] sm:$0xff] %vm52, %v11237
  %11270 = vst.msk [vmem:[%s3 + $0xf8] sm:$0xff] %vm52, %v11238
  // Predicated region
  $region14: #{tpu_custom_call.1} parent=0 // pred_check
    _
  $region15: #{tpu_custom_call.1} parent=0 // pred_check_branch
    %11272 = sbr.rel (0) target = $region17
  $region16: #{tpu_custom_call.1} parent=0 // pred_region
    _
  $region17: #{tpu_custom_call.1} parent=0 // pred_fallthru
    _
  // Predicated region
  $region18: #{tpu_custom_call.1} parent=0 // pred_check
    _
  $region19: #{tpu_custom_call.1} parent=0 // pred_check_branch
    %11274 = sbr.rel (0) target = $region21
  $region20: #{tpu_custom_call.1} parent=0 // pred_region
    _
  $region21: #{tpu_custom_call.1} parent=0 // pred_fallthru
    _

</llo_original>
